<compile_context>
chip_gen: v6e
topology: v6e:2x2x1
jax: 0.10.0
libtpu: 0.0.40
codegen_flags: <defaults>
</compile_context>

<pallas_src>
import math

import jax
import jax.numpy as jnp
from jax import lax
from jax.experimental import pallas as pl
from jax.experimental.pallas import tpu as pltpu


# ----------------------------------------------------------------------------
# Chip-derived knobs
# ----------------------------------------------------------------------------
def _round_up(x, m):
    return -(-x // m) * m


def _chip_vmem_budgets():
    """(vmem_limit_bytes, per-grid-step tile budget) derived from chip VMEM."""
    vmem_bytes = None
    try:
        vmem_bytes = int(pltpu.get_tpu_info().vmem_capacity_bytes)
    except Exception:
        vmem_bytes = None
    if vmem_bytes is None:
        try:
            kind = jax.devices()[0].device_kind.lower()
            vmem_bytes = (128 * 1024 * 1024 if ('v5' in kind or 'v6' in kind)
                          else 64 * 1024 * 1024)
        except Exception:
            vmem_bytes = 64 * 1024 * 1024            # conservative (v7x-sized)
    limit = min(vmem_bytes * 3 // 4, 100 * 1024 * 1024)
    return limit, limit // 3


def _bf16_valu_ok():
    """bf16 VPU products are only a win on v6e/v7x; v5e keeps f32 math."""
    try:
        kind = jax.devices()[0].device_kind.lower()
    except Exception:
        return False
    return ('v6' in kind) or ('v7' in kind)


# ----------------------------------------------------------------------------
# Plain-JAX glue
# ----------------------------------------------------------------------------
def interp_nearest(x, size):
    """F.interpolate(x, size=size, mode='nearest') for NCHW (legacy nearest)."""
    _, _, h_in, w_in = x.shape
    h_out, w_out = size
    hi = jnp.floor(jnp.arange(h_out) * (h_in / h_out)).astype(jnp.int32)
    wi = jnp.floor(jnp.arange(w_out) * (w_in / w_out)).astype(jnp.int32)
    return x[:, :, hi[:, None], wi[None, :]]


def _pick_tile_h(h, w_out, cf, pad, budget_bytes, compute_bytes):
    """Largest row tile whose pipelined working set fits the chip-derived budget.

    Per halo row: double-buffered bf16 input (2*2 B/elem), ~3 live compute-dtype
    feature slices, plus int32 GT, norm map and a few f32 temporaries.
    """
    wp = w_out + 2 * pad
    bytes_per_row = cf * wp * (4 + 3 * compute_bytes) + 32 * wp
    max_center_rows = budget_bytes // bytes_per_row - 2 * pad
    tile_h = int(min(h, max(max_center_rows, 8)))
    if tile_h >= h:
        return _round_up(h, 8)                  # single tile, sublane-aligned
    return max(8, tile_h - tile_h % 8)


def _build_halo_tiles(x, tile_h, pad, w_out, pad_value=0):
    """(B, C, H, W) -> ((B*NT, C, tile_h + 2*pad, w_out + 2*pad), NT).

    Row tiles carry a `pad`-wide halo so the k*k taps are formed in-kernel with
    static slices.  pad_value=0 matches nn.Unfold's zero padding; the extra
    lane-alignment columns on the right are also zeros (excluded downstream).
    """
    b, c, h, w = x.shape
    nt = -(-h // tile_h)
    hp = nt * tile_h
    wp = w_out + 2 * pad
    xp = jnp.pad(x, ((0, 0), (0, 0), (pad, pad + hp - h), (pad, wp - w - pad)),
                 constant_values=pad_value)
    if nt == 1:                                  # no duplicated HBM copy needed
        return xp, nt
    # TODO(synk): for NT > 1 this stack duplicates rows in HBM; a manual
    # make_async_copy halo window from a single padded map (memory_space=pl.ANY)
    # would remove that extra HBM pass.
    tiles = jnp.stack(
        [xp[:, :, t * tile_h:t * tile_h + tile_h + 2 * pad, :] for t in range(nt)],
        axis=1)                                  # (B, NT, C, THP, Wp)
    return tiles.reshape(b * nt, c, tile_h + 2 * pad, wp), nt


def _build_center_tiles(x2d, tile_h, w_out, pad_value):
    """(B, H, W) -> (B*NT, tile_h, w_out); pad rows/cols filled with pad_value."""
    b, h, w = x2d.shape
    nt = -(-h // tile_h)
    hp = nt * tile_h
    xp = jnp.pad(x2d, ((0, 0), (0, hp - h), (0, w_out - w)),
                 constant_values=pad_value)
    return xp.reshape(b * nt, tile_h, w_out)


# ----------------------------------------------------------------------------
# In-kernel tap similarities (center pixel vs. each of its k*k dilated taps)
# ----------------------------------------------------------------------------
def _make_sim(sim_type, sigma):
    eps2 = 1e-16                     # (1e-8)^2 per-norm clamp, like F.cosine_similarity
    inv_sig2 = 1.0 / float(sigma) ** 2
    if sim_type == 'cosine':
        def sim(dot, cn2, nn2):
            return dot * lax.rsqrt(jnp.maximum(cn2, eps2) * jnp.maximum(nn2, eps2))
    elif sim_type == 'gaussian':
        def sim(dot, cn2, nn2):
            d2 = jnp.maximum(cn2 + nn2 - 2.0 * dot, 0.0)       # ||c - n||^2
            return jnp.exp(-d2 * inv_sig2)
    else:
        raise ValueError(sim_type)
    return sim


def _make_tap_sims(kernel_size, dilation, tile_h, w_out, sim_type, sigma,
                   compute_f32):
    """Generator over ((i, j), sim) with the column (lane) shift hoisted to the
    outer j loop.  Channel products run in bf16 on v6e/v7x (compute_f32=False)
    with f32 accumulation; everything f32 on v5e."""
    pad = (kernel_size // 2) * dilation
    sim_of = _make_sim(sim_type, sigma)
    # TODO(synk): a channel-last (pixels x Cf) layout with an MXU ones-matvec
    # channel reduce would move these dot products off the VPU entirely.

    def taps(feat):
        if compute_f32:
            feat = feat.astype(jnp.float32)
        n2 = jnp.sum(feat * feat, axis=0, dtype=jnp.float32)        # (THP, Wp)
        center = feat[:, pad:pad + tile_h, pad:pad + w_out]          # (Cf, TH, W_out)
        cn2 = n2[pad:pad + tile_h, pad:pad + w_out]
        for j in range(kernel_size):
            fj = feat[:, :, j * dilation:j * dilation + w_out]       # lane shift once per j
            nj = n2[:, j * dilation:j * dilation + w_out]
            for i in range(kernel_size):
                nb = fj[:, i * dilation:i * dilation + tile_h, :]    # sublane slice only
                nn2 = nj[i * dilation:i * dilation + tile_h, :]
                dot = jnp.sum(center * nb, axis=0, dtype=jnp.float32)
                yield (i, j), sim_of(dot, cn2, nn2)

    return taps


# ----------------------------------------------------------------------------
# Pallas kernel 1: fused sim + masked pos/neg sum/count (src path)
# ----------------------------------------------------------------------------
def src_pos_neg_sums_pallas(feat_tiles, gt_halo_tiles, gt_center_tiles, *,
                            kernel_size, dilation, sim_type, sigma,
                            compute_f32, vmem_limit):
    """Returns (4,) f32 = [pos_sum, pos_cnt, neg_sum, neg_cnt] over the batch."""
    bg, cf, thp, wp = feat_tiles.shape
    _, tile_h, w_out = gt_center_tiles.shape
    k2 = kernel_size * kernel_size
    taps = _make_tap_sims(kernel_size, dilation, tile_h, w_out,
                          sim_type, sigma, compute_f32)

    def kernel(feat_ref, gth_ref, gtc_ref, out_ref):
        gt_h = gth_ref[0]                            # (THP, Wp) int32, zero-padded
        gt_c = gtc_ref[0]                            # (TH, W_out) int32, 255-padded
        valid = gt_c != 255                          # ignore_mask_src & real pixels
        valid_cnt = jnp.sum(valid.astype(jnp.float32))

        pos_sum = jnp.zeros((), jnp.float32)
        pos_cnt = jnp.zeros((), jnp.float32)
        sim_acc = jnp.zeros((tile_h, w_out), jnp.float32)
        for (i, j), sim in taps(feat_ref[0]):
            gt_n = gt_h[i * dilation:i * dilation + tile_h,
                        j * dilation:j * dilation + w_out]
            pos_m = jnp.logical_and(gt_n == gt_c, valid)
            sim_acc = sim_acc + sim
            pos_sum = pos_sum + jnp.sum(jnp.where(pos_m, sim, 0.0))
            pos_cnt = pos_cnt + jnp.sum(pos_m.astype(jnp.float32))

        # neg derived from pos: pos U neg == valid for every tap
        valid_sim_sum = jnp.sum(jnp.where(valid, sim_acc, 0.0))
        neg_sum = valid_sim_sum - pos_sum
        neg_cnt = float(k2) * valid_cnt - pos_cnt

        lane = lax.broadcasted_iota(jnp.int32, (8, 128), 1)
        out_ref[0] = (jnp.where(lane == 0, pos_sum, 0.0)
                      + jnp.where(lane == 1, pos_cnt, 0.0)
                      + jnp.where(lane == 2, neg_sum, 0.0)
                      + jnp.where(lane == 3, neg_cnt, 0.0))

    partials = pl.pallas_call(
        kernel,
        out_shape=jax.ShapeDtypeStruct((bg, 8, 128), jnp.float32),
        grid=(bg,),
        in_specs=[
            pl.BlockSpec((1, cf, thp, wp), lambda g: (g, 0, 0, 0)),
            pl.BlockSpec((1, thp, wp), lambda g: (g, 0, 0)),
            pl.BlockSpec((1, tile_h, w_out), lambda g: (g, 0, 0)),
        ],
        out_specs=pl.BlockSpec((1, 8, 128), lambda g: (g, 0, 0)),
        compiler_params=pltpu.CompilerParams(
            dimension_semantics=("parallel",),       # per-tile partials -> megacore OK
            vmem_limit_bytes=vmem_limit),
    )(feat_tiles, gt_halo_tiles, gt_center_tiles)

    return jnp.sum(partials[:, 0, :4], axis=0)       # [pos_sum, pos_cnt, neg_sum, neg_cnt]


# ----------------------------------------------------------------------------
# Pallas kernel 2: fused sim + K2-mean (ema path / vis density)
# ----------------------------------------------------------------------------
def sim_k2_mean_pallas(feat_tiles, *, kernel_size, dilation, sim_type, sigma,
                       tile_h, w_out, compute_f32, vmem_limit):
    """(B*NT, Cf, THP, Wp) bf16 -> (B*NT, tile_h, W_out) f32 = mean over k*k taps."""
    bg, cf, thp, wp = feat_tiles.shape
    k2 = kernel_size * kernel_size
    taps = _make_tap_sims(kernel_size, dilation, tile_h, w_out,
                          sim_type, sigma, compute_f32)

    def kernel(feat_ref, out_ref):
        acc = jnp.zeros((tile_h, w_out), jnp.float32)
        for _, sim in taps(feat_ref[0]):
            acc = acc + sim
        out_ref[0] = acc * (1.0 / k2)                # lane-dense (W_out % 128 == 0)

    return pl.pallas_call(
        kernel,
        out_shape=jax.ShapeDtypeStruct((bg, tile_h, w_out), jnp.float32),
        grid=(bg,),
        in_specs=[pl.BlockSpec((1, cf, thp, wp), lambda g: (g, 0, 0, 0))],
        out_specs=pl.BlockSpec((1, tile_h, w_out), lambda g: (g, 0, 0)),
        compiler_params=pltpu.CompilerParams(
            dimension_semantics=("parallel",),
            vmem_limit_bytes=vmem_limit),
    )(feat_tiles)


# ----------------------------------------------------------------------------
# Module port
# ----------------------------------------------------------------------------
class LocalPseudoFeatLossPallas:
    def __init__(self, top_k, dilation, kernel_size, weights, num_classes,
                 sigma=30, mean_sim=0.6, feat_level=2, sim_type='cosine',
                 feat_dtype=jnp.bfloat16):
        self.top_k = top_k
        self.dilation = dilation
        self.kernel_size = kernel_size
        self.weights = weights
        self.sim_type = sim_type
        self.feat_level = feat_level
        self.sigma = sigma
        self.mean_sim = mean_sim
        self.pad = (kernel_size // 2) * dilation
        self.feat_dtype = feat_dtype

        # Chip-derived knobs (128 MiB parts get bigger tiles, v7x stays < 64 MiB).
        self.vmem_limit, self.tile_budget = _chip_vmem_budgets()
        self.compute_f32 = not _bf16_valu_ok()       # bf16 products on v6e/v7x only
        self.compute_bytes = 4 if self.compute_f32 else 2

        # nn.Linear(num_classes + kernel_size**2, 1) parity params
        # (the reference forward() never uses loc_pseudo_net).
        fan_in = num_classes + kernel_size ** 2
        bound = 1.0 / math.sqrt(fan_in)
        k_w, k_b = jax.random.split(jax.random.PRNGKey(42))
        self.loc_pseudo_w = jax.random.uniform(
            k_w, (1, fan_in), minval=-bound, maxval=bound, dtype=jnp.float32)
        self.loc_pseudo_b = jax.random.uniform(
            k_b, (1,), minval=-bound, maxval=bound, dtype=jnp.float32)

    # -- helpers --------------------------------------------------------------
    def _feat_halo_tiles(self, x, size, tile_h, w_out):
        feats = interp_nearest(x, size).astype(self.feat_dtype)
        tiles, _ = _build_halo_tiles(feats, tile_h, self.pad, w_out, 0)
        return tiles

    # -- forward --------------------------------------------------------------
    def forward(self, tensors):
        logits_trg = tensors['logits_trg']
        gt_src = tensors['gt_src']
        x_ema = tensors['x_ema'][self.feat_level] if self.feat_level is not None else tensors['x_ema']
        x_src = tensors['x_src'][self.feat_level] if self.feat_level is not None else tensors['x_src']
        img_trg = tensors['img_trg']

        losses = {}
        B, C, H, W = logits_trg.shape
        cf = x_src.shape[1]
        w_out = _round_up(W, 128)                    # lane-dense center/output width
        tile_h = _pick_tile_h(H, w_out, cf, self.pad,
                              self.tile_budget, self.compute_bytes)

        # target-side ignore mask (only consumed by the vis tuple)
        ignore_mask_trg = 1.0 - tensors['mix_masks'].astype(jnp.float32)
        ignore_mask_trg = interp_nearest(ignore_mask_trg, (H, W)) > 0.5

        # source GT at logits resolution (nearest, like the reference)
        gt_src_ = interp_nearest(gt_src.astype(jnp.float32), (H, W))    # (B,1,H,W)
        gt_int = gt_src_[:, 0].astype(jnp.int32)                        # (B,H,W)

        # --- src path: sim + pos/neg masked reductions fused in-kernel.
        # GT halo is zero-padded exactly like nn.Unfold; fake lane-pad columns
        # and pad rows are excluded via the 255-padded center GT.
        src_feat_tiles = self._feat_halo_tiles(x_src, (H, W), tile_h, w_out)
        gt_halo_tiles, _ = _build_halo_tiles(gt_int[:, None], tile_h, self.pad,
                                             w_out, 0)
        gt_halo_tiles = gt_halo_tiles[:, 0]                             # (B*NT, THP, Wp)
        gt_center_tiles = _build_center_tiles(gt_int, tile_h, w_out, 255)

        sums = src_pos_neg_sums_pallas(
            src_feat_tiles, gt_halo_tiles, gt_center_tiles,
            kernel_size=self.kernel_size, dilation=self.dilation,
            sim_type=self.sim_type, sigma=self.sigma,
            compute_f32=self.compute_f32, vmem_limit=self.vmem_limit)
        # guard empty selections (the reference .mean() would NaN there)
        src_pos_mean = sums[0] / jnp.maximum(sums[1], 1.0)
        src_neg_mean = sums[2] / jnp.maximum(sums[3], 1.0)

        # --- ema path: forward() only consumes 1 - mean_k2(sim), so the kernel
        #     emits the K2-mean directly (no (B,K2,H,W) HBM round-trip).
        ema_feat_tiles = self._feat_halo_tiles(x_ema, (H, W), tile_h, w_out)
        ema_mean = sim_k2_mean_pallas(
            ema_feat_tiles, kernel_size=self.kernel_size,
            dilation=self.dilation, sim_type=self.sim_type, sigma=self.sigma,
            tile_h=tile_h, w_out=w_out,
            compute_f32=self.compute_f32, vmem_limit=self.vmem_limit)
        ema_mean = ema_mean.reshape(B, -1, w_out)[:, :H, :W]            # drop pads
        density = 1.0 - ema_mean[:, None]                               # (B,1,H,W)

        # TODO(synk): loss_sim_pos / loss_sim_neg (get_sim_losses) reference
        # undefined names (cross_prob_map_diag, top_aug_sim_feat, self.expo) and
        # the original forward() hits pdb.set_trace(); they cannot be reproduced
        # faithfully, so the unfolded logits_trg they would consume is skipped too.

        losses.update({
            'loss_src_pos': -src_pos_mean * self.weights['src_pos'],
            'loss_src_neg': src_neg_mean * self.weights['src_neg'],
            'vis|density_sim_feat': (img_trg, density, ignore_mask_trg),
        })
        return losses


# ----------------------------------------------------------------------------
# Demo
# ----------------------------------------------------------------------------
if __name__ == "__main__":
    key = jax.random.PRNGKey(0)
    k_logits, k_gt, k_mix, k_feat0, k_feat1, k_feat2s, k_feat2e, k_img = \
        jax.random.split(key, 8)

    B, C, H, W = 2, 4, 16, 16          # logits_trg
    Cf = 32                            # feature channels at feat_level=2
    k_size, dil = 3, 1

    logits_trg = jax.random.normal(k_logits, (B, C, H, W), dtype=jnp.float32)

    # gt_src at 2x resolution with some 255 (ignore) pixels
    gt_src = jax.random.randint(k_gt, (B, 1, 2 * H, 2 * W), 0, C).astype(jnp.float32)
    ignore = jax.random.bernoulli(k_gt, 0.1, (B, 1, 2 * H, 2 * W))
    gt_src = jnp.where(ignore, 255.0, gt_src)

    mix_masks = jax.random.bernoulli(k_mix, 0.5, (B, 1, 2 * H, 2 * W)).astype(jnp.float32)

    # feature pyramid; only feat_level=2 is used
    x_src = [
        jax.random.normal(k_feat0, (B, 16, 32, 32), dtype=jnp.float32),
        jax.random.normal(k_feat1, (B, 24, 16, 16), dtype=jnp.float32),
        jax.random.normal(k_feat2s, (B, Cf, 8, 8), dtype=jnp.float32),
    ]
    x_ema = [
        x_src[0] + 0.01,
        x_src[1] + 0.01,
        jax.random.normal(k_feat2e, (B, Cf, 8, 8), dtype=jnp.float32),
    ]
    img_trg = jax.random.normal(k_img, (B, 3, 64, 64), dtype=jnp.float32)

    weights = {'src_pos': 1.0, 'src_neg': 0.5, 'sim_pos': 1.0, 'sim_neg': 0.5}

    loss_mod = LocalPseudoFeatLossPallas(
        top_k=2, dilation=dil, kernel_size=k_size, weights=weights,
        num_classes=C, sigma=30, feat_level=2, sim_type='cosine')

    tensors = {
        'logits_trg': logits_trg,
        'gt_src': gt_src,
        'mix_masks': mix_masks,
        'x_src': x_src,
        'x_ema': x_ema,
        'img_trg': img_trg,
    }

    losses = loss_mod.forward(tensors)
    jax.block_until_ready(losses)
    print("KERNEL_OK")
</pallas_src>

<mosaic_0001>
module attributes {stable_mosaic.version = 11 : i64} {
  func.func @kernel(%arg0: i32, %arg1: memref<1x32x18x130xbf16, #tpu.memory_space<vmem>>, %arg2: memref<1x18x130xi32, #tpu.memory_space<vmem>>, %arg3: memref<1x16x128xi32, #tpu.memory_space<vmem>>, %arg4: memref<1x8x128xf32, #tpu.memory_space<vmem>>) attributes {dimension_semantics = [#tpu.dimension_semantics<parallel>], iteration_bounds = array<i64: 2>, scalar_prefetch = 0 : i64, scratch_operands = 0 : i64, tpu.core_type = #tpu.core_type<tc>, window_params = [{transform_indices = @transform_0, window_bounds = array<i64: 1, 32, 18, 130>}, {transform_indices = @transform_1, window_bounds = array<i64: 1, 18, 130>}, {transform_indices = @transform_2, window_bounds = array<i64: 1, 16, 128>}, {transform_indices = @transform_3, window_bounds = array<i64: 1, 8, 128>}]} {
    %c0 = arith.constant 0 : index
    %c0_0 = arith.constant 0 : index
    %c0_1 = arith.constant 0 : index
    %0 = vector.load %arg2[%c0, %c0_0, %c0_1] : memref<1x18x130xi32, #tpu.memory_space<vmem>>, vector<1x18x130xi32>
    %1 = vector.shape_cast %0 : vector<1x18x130xi32> to vector<18x130xi32>
    %c0_2 = arith.constant 0 : index
    %c0_3 = arith.constant 0 : index
    %c0_4 = arith.constant 0 : index
    %2 = vector.load %arg3[%c0_2, %c0_3, %c0_4] : memref<1x16x128xi32, #tpu.memory_space<vmem>>, vector<1x16x128xi32>
    %3 = vector.shape_cast %2 : vector<1x16x128xi32> to vector<16x128xi32>
    %c255_i32 = arith.constant 255 : i32
    %4 = vector.broadcast %c255_i32 : i32 to vector<16x128xi32>
    %5 = arith.cmpi ne, %3, %4 : vector<16x128xi32>
    %6 = arith.extui %5 : vector<16x128xi1> to vector<16x128xi32>
    %7 = arith.sitofp %6 : vector<16x128xi32> to vector<16x128xf32>
    %8 = vector.shape_cast %7 : vector<16x128xf32> to vector<1x16x128xf32>
    %cst = arith.constant dense<0.000000e+00> : vector<1xf32>
    %9 = vector.multi_reduction <add>, %8, %cst [1, 2] : vector<1x16x128xf32> to vector<1xf32>
    %10 = vector.shape_cast %9 : vector<1xf32> to vector<1x1x1xf32>
    %11 = vector.extract %10[0, 0, 0] : f32 from vector<1x1x1xf32>
    %cst_5 = arith.constant 0.000000e+00 : f32
    %12 = vector.broadcast %cst_5 : f32 to vector<16x128xf32>
    %c0_6 = arith.constant 0 : index
    %c0_7 = arith.constant 0 : index
    %c0_8 = arith.constant 0 : index
    %c0_9 = arith.constant 0 : index
    %13 = vector.load %arg1[%c0_6, %c0_7, %c0_8, %c0_9] : memref<1x32x18x130xbf16, #tpu.memory_space<vmem>>, vector<1x32x18x130xbf16>
    %14 = vector.shape_cast %13 : vector<1x32x18x130xbf16> to vector<32x18x130xbf16>
    %15 = arith.extf %14 : vector<32x18x130xbf16> to vector<32x18x130xf32>
    %16 = arith.mulf %15, %15 : vector<32x18x130xf32>
    %cst_10 = arith.constant dense<0.000000e+00> : vector<18x130xf32>
    %17 = vector.multi_reduction <add>, %16, %cst_10 [0] : vector<32x18x130xf32> to vector<18x130xf32>
    %18 = vector.extract_strided_slice %15 {offsets = [0, 1, 1], sizes = [32, 16, 128], strides = [1, 1, 1]} : vector<32x18x130xf32> to vector<32x16x128xf32>
    %19 = vector.extract_strided_slice %17 {offsets = [1, 1], sizes = [16, 128], strides = [1, 1]} : vector<18x130xf32> to vector<16x128xf32>
    %20 = vector.extract_strided_slice %15 {offsets = [0, 0, 0], sizes = [32, 18, 128], strides = [1, 1, 1]} : vector<32x18x130xf32> to vector<32x18x128xf32>
    %21 = vector.extract_strided_slice %17 {offsets = [0, 0], sizes = [18, 128], strides = [1, 1]} : vector<18x130xf32> to vector<18x128xf32>
    %22 = vector.extract_strided_slice %20 {offsets = [0, 0, 0], sizes = [32, 16, 128], strides = [1, 1, 1]} : vector<32x18x128xf32> to vector<32x16x128xf32>
    %23 = vector.extract_strided_slice %21 {offsets = [0, 0], sizes = [16, 128], strides = [1, 1]} : vector<18x128xf32> to vector<16x128xf32>
    %24 = arith.mulf %18, %22 : vector<32x16x128xf32>
    %cst_11 = arith.constant dense<0.000000e+00> : vector<16x128xf32>
    %25 = vector.multi_reduction <add>, %24, %cst_11 [0] : vector<32x16x128xf32> to vector<16x128xf32>
    %cst_12 = arith.constant 1.000000e-16 : f32
    %26 = vector.broadcast %cst_12 : f32 to vector<16x128xf32>
    %27 = arith.maximumf %19, %26 : vector<16x128xf32>
    %cst_13 = arith.constant 1.000000e-16 : f32
    %28 = vector.broadcast %cst_13 : f32 to vector<16x128xf32>
    %29 = arith.maximumf %23, %28 : vector<16x128xf32>
    %30 = arith.mulf %27, %29 : vector<16x128xf32>
    %31 = math.rsqrt %30 : vector<16x128xf32>
    %32 = arith.mulf %25, %31 : vector<16x128xf32>
    %33 = vector.extract_strided_slice %1 {offsets = [0, 0], sizes = [16, 128], strides = [1, 1]} : vector<18x130xi32> to vector<16x128xi32>
    %34 = arith.cmpi eq, %33, %3 : vector<16x128xi32>
    %35 = arith.andi %34, %5 : vector<16x128xi1>
    %36 = arith.addf %12, %32 : vector<16x128xf32>
    %cst_14 = arith.constant 0.000000e+00 : f32
    %37 = vector.broadcast %cst_14 : f32 to vector<16x128xf32>
    %38 = arith.select %35, %32, %37 : vector<16x128xi1>, vector<16x128xf32>
    %39 = vector.shape_cast %38 : vector<16x128xf32> to vector<1x16x128xf32>
    %cst_15 = arith.constant dense<0.000000e+00> : vector<1xf32>
    %40 = vector.multi_reduction <add>, %39, %cst_15 [1, 2] : vector<1x16x128xf32> to vector<1xf32>
    %41 = vector.shape_cast %40 : vector<1xf32> to vector<1x1x1xf32>
    %42 = vector.extract %41[0, 0, 0] : f32 from vector<1x1x1xf32>
    %cst_16 = arith.constant 0.000000e+00 : f32
    %43 = arith.addf %cst_16, %42 : f32
    %44 = arith.extui %35 : vector<16x128xi1> to vector<16x128xi32>
    %45 = arith.sitofp %44 : vector<16x128xi32> to vector<16x128xf32>
    %46 = vector.shape_cast %45 : vector<16x128xf32> to vector<1x16x128xf32>
    %cst_17 = arith.constant dense<0.000000e+00> : vector<1xf32>
    %47 = vector.multi_reduction <add>, %46, %cst_17 [1, 2] : vector<1x16x128xf32> to vector<1xf32>
    %48 = vector.shape_cast %47 : vector<1xf32> to vector<1x1x1xf32>
    %49 = vector.extract %48[0, 0, 0] : f32 from vector<1x1x1xf32>
    %cst_18 = arith.constant 0.000000e+00 : f32
    %50 = arith.addf %cst_18, %49 : f32
    %51 = vector.extract_strided_slice %20 {offsets = [0, 1, 0], sizes = [32, 16, 128], strides = [1, 1, 1]} : vector<32x18x128xf32> to vector<32x16x128xf32>
    %52 = vector.extract_strided_slice %21 {offsets = [1, 0], sizes = [16, 128], strides = [1, 1]} : vector<18x128xf32> to vector<16x128xf32>
    %53 = arith.mulf %18, %51 : vector<32x16x128xf32>
    %cst_19 = arith.constant dense<0.000000e+00> : vector<16x128xf32>
    %54 = vector.multi_reduction <add>, %53, %cst_19 [0] : vector<32x16x128xf32> to vector<16x128xf32>
    %cst_20 = arith.constant 1.000000e-16 : f32
    %55 = vector.broadcast %cst_20 : f32 to vector<16x128xf32>
    %56 = arith.maximumf %19, %55 : vector<16x128xf32>
    %cst_21 = arith.constant 1.000000e-16 : f32
    %57 = vector.broadcast %cst_21 : f32 to vector<16x128xf32>
    %58 = arith.maximumf %52, %57 : vector<16x128xf32>
    %59 = arith.mulf %56, %58 : vector<16x128xf32>
    %60 = math.rsqrt %59 : vector<16x128xf32>
    %61 = arith.mulf %54, %60 : vector<16x128xf32>
    %62 = vector.extract_strided_slice %1 {offsets = [1, 0], sizes = [16, 128], strides = [1, 1]} : vector<18x130xi32> to vector<16x128xi32>
    %63 = arith.cmpi eq, %62, %3 : vector<16x128xi32>
    %64 = arith.andi %63, %5 : vector<16x128xi1>
    %65 = arith.addf %36, %61 : vector<16x128xf32>
    %cst_22 = arith.constant 0.000000e+00 : f32
    %66 = vector.broadcast %cst_22 : f32 to vector<16x128xf32>
    %67 = arith.select %64, %61, %66 : vector<16x128xi1>, vector<16x128xf32>
    %68 = vector.shape_cast %67 : vector<16x128xf32> to vector<1x16x128xf32>
    %cst_23 = arith.constant dense<0.000000e+00> : vector<1xf32>
    %69 = vector.multi_reduction <add>, %68, %cst_23 [1, 2] : vector<1x16x128xf32> to vector<1xf32>
    %70 = vector.shape_cast %69 : vector<1xf32> to vector<1x1x1xf32>
    %71 = vector.extract %70[0, 0, 0] : f32 from vector<1x1x1xf32>
    %72 = arith.addf %43, %71 : f32
    %73 = arith.extui %64 : vector<16x128xi1> to vector<16x128xi32>
    %74 = arith.sitofp %73 : vector<16x128xi32> to vector<16x128xf32>
    %75 = vector.shape_cast %74 : vector<16x128xf32> to vector<1x16x128xf32>
    %cst_24 = arith.constant dense<0.000000e+00> : vector<1xf32>
    %76 = vector.multi_reduction <add>, %75, %cst_24 [1, 2] : vector<1x16x128xf32> to vector<1xf32>
    %77 = vector.shape_cast %76 : vector<1xf32> to vector<1x1x1xf32>
    %78 = vector.extract %77[0, 0, 0] : f32 from vector<1x1x1xf32>
    %79 = arith.addf %50, %78 : f32
    %80 = vector.extract_strided_slice %20 {offsets = [0, 2, 0], sizes = [32, 16, 128], strides = [1, 1, 1]} : vector<32x18x128xf32> to vector<32x16x128xf32>
    %81 = vector.extract_strided_slice %21 {offsets = [2, 0], sizes = [16, 128], strides = [1, 1]} : vector<18x128xf32> to vector<16x128xf32>
    %82 = arith.mulf %18, %80 : vector<32x16x128xf32>
    %cst_25 = arith.constant dense<0.000000e+00> : vector<16x128xf32>
    %83 = vector.multi_reduction <add>, %82, %cst_25 [0] : vector<32x16x128xf32> to vector<16x128xf32>
    %cst_26 = arith.constant 1.000000e-16 : f32
    %84 = vector.broadcast %cst_26 : f32 to vector<16x128xf32>
    %85 = arith.maximumf %19, %84 : vector<16x128xf32>
    %cst_27 = arith.constant 1.000000e-16 : f32
    %86 = vector.broadcast %cst_27 : f32 to vector<16x128xf32>
    %87 = arith.maximumf %81, %86 : vector<16x128xf32>
    %88 = arith.mulf %85, %87 : vector<16x128xf32>
    %89 = math.rsqrt %88 : vector<16x128xf32>
    %90 = arith.mulf %83, %89 : vector<16x128xf32>
    %91 = vector.extract_strided_slice %1 {offsets = [2, 0], sizes = [16, 128], strides = [1, 1]} : vector<18x130xi32> to vector<16x128xi32>
    %92 = arith.cmpi eq, %91, %3 : vector<16x128xi32>
    %93 = arith.andi %92, %5 : vector<16x128xi1>
    %94 = arith.addf %65, %90 : vector<16x128xf32>
    %cst_28 = arith.constant 0.000000e+00 : f32
    %95 = vector.broadcast %cst_28 : f32 to vector<16x128xf32>
    %96 = arith.select %93, %90, %95 : vector<16x128xi1>, vector<16x128xf32>
    %97 = vector.shape_cast %96 : vector<16x128xf32> to vector<1x16x128xf32>
    %cst_29 = arith.constant dense<0.000000e+00> : vector<1xf32>
    %98 = vector.multi_reduction <add>, %97, %cst_29 [1, 2] : vector<1x16x128xf32> to vector<1xf32>
    %99 = vector.shape_cast %98 : vector<1xf32> to vector<1x1x1xf32>
    %100 = vector.extract %99[0, 0, 0] : f32 from vector<1x1x1xf32>
    %101 = arith.addf %72, %100 : f32
    %102 = arith.extui %93 : vector<16x128xi1> to vector<16x128xi32>
    %103 = arith.sitofp %102 : vector<16x128xi32> to vector<16x128xf32>
    %104 = vector.shape_cast %103 : vector<16x128xf32> to vector<1x16x128xf32>
    %cst_30 = arith.constant dense<0.000000e+00> : vector<1xf32>
    %105 = vector.multi_reduction <add>, %104, %cst_30 [1, 2] : vector<1x16x128xf32> to vector<1xf32>
    %106 = vector.shape_cast %105 : vector<1xf32> to vector<1x1x1xf32>
    %107 = vector.extract %106[0, 0, 0] : f32 from vector<1x1x1xf32>
    %108 = arith.addf %79, %107 : f32
    %109 = vector.extract_strided_slice %15 {offsets = [0, 0, 1], sizes = [32, 18, 128], strides = [1, 1, 1]} : vector<32x18x130xf32> to vector<32x18x128xf32>
    %110 = vector.extract_strided_slice %17 {offsets = [0, 1], sizes = [18, 128], strides = [1, 1]} : vector<18x130xf32> to vector<18x128xf32>
    %111 = vector.extract_strided_slice %109 {offsets = [0, 0, 0], sizes = [32, 16, 128], strides = [1, 1, 1]} : vector<32x18x128xf32> to vector<32x16x128xf32>
    %112 = vector.extract_strided_slice %110 {offsets = [0, 0], sizes = [16, 128], strides = [1, 1]} : vector<18x128xf32> to vector<16x128xf32>
    %113 = arith.mulf %18, %111 : vector<32x16x128xf32>
    %cst_31 = arith.constant dense<0.000000e+00> : vector<16x128xf32>
    %114 = vector.multi_reduction <add>, %113, %cst_31 [0] : vector<32x16x128xf32> to vector<16x128xf32>
    %cst_32 = arith.constant 1.000000e-16 : f32
    %115 = vector.broadcast %cst_32 : f32 to vector<16x128xf32>
    %116 = arith.maximumf %19, %115 : vector<16x128xf32>
    %cst_33 = arith.constant 1.000000e-16 : f32
    %117 = vector.broadcast %cst_33 : f32 to vector<16x128xf32>
    %118 = arith.maximumf %112, %117 : vector<16x128xf32>
    %119 = arith.mulf %116, %118 : vector<16x128xf32>
    %120 = math.rsqrt %119 : vector<16x128xf32>
    %121 = arith.mulf %114, %120 : vector<16x128xf32>
    %122 = vector.extract_strided_slice %1 {offsets = [0, 1], sizes = [16, 128], strides = [1, 1]} : vector<18x130xi32> to vector<16x128xi32>
    %123 = arith.cmpi eq, %122, %3 : vector<16x128xi32>
    %124 = arith.andi %123, %5 : vector<16x128xi1>
    %125 = arith.addf %94, %121 : vector<16x128xf32>
    %cst_34 = arith.constant 0.000000e+00 : f32
    %126 = vector.broadcast %cst_34 : f32 to vector<16x128xf32>
    %127 = arith.select %124, %121, %126 : vector<16x128xi1>, vector<16x128xf32>
    %128 = vector.shape_cast %127 : vector<16x128xf32> to vector<1x16x128xf32>
    %cst_35 = arith.constant dense<0.000000e+00> : vector<1xf32>
    %129 = vector.multi_reduction <add>, %128, %cst_35 [1, 2] : vector<1x16x128xf32> to vector<1xf32>
    %130 = vector.shape_cast %129 : vector<1xf32> to vector<1x1x1xf32>
    %131 = vector.extract %130[0, 0, 0] : f32 from vector<1x1x1xf32>
    %132 = arith.addf %101, %131 : f32
    %133 = arith.extui %124 : vector<16x128xi1> to vector<16x128xi32>
    %134 = arith.sitofp %133 : vector<16x128xi32> to vector<16x128xf32>
    %135 = vector.shape_cast %134 : vector<16x128xf32> to vector<1x16x128xf32>
    %cst_36 = arith.constant dense<0.000000e+00> : vector<1xf32>
    %136 = vector.multi_reduction <add>, %135, %cst_36 [1, 2] : vector<1x16x128xf32> to vector<1xf32>
    %137 = vector.shape_cast %136 : vector<1xf32> to vector<1x1x1xf32>
    %138 = vector.extract %137[0, 0, 0] : f32 from vector<1x1x1xf32>
    %139 = arith.addf %108, %138 : f32
    %140 = vector.extract_strided_slice %109 {offsets = [0, 1, 0], sizes = [32, 16, 128], strides = [1, 1, 1]} : vector<32x18x128xf32> to vector<32x16x128xf32>
    %141 = vector.extract_strided_slice %110 {offsets = [1, 0], sizes = [16, 128], strides = [1, 1]} : vector<18x128xf32> to vector<16x128xf32>
    %142 = arith.mulf %18, %140 : vector<32x16x128xf32>
    %cst_37 = arith.constant dense<0.000000e+00> : vector<16x128xf32>
    %143 = vector.multi_reduction <add>, %142, %cst_37 [0] : vector<32x16x128xf32> to vector<16x128xf32>
    %cst_38 = arith.constant 1.000000e-16 : f32
    %144 = vector.broadcast %cst_38 : f32 to vector<16x128xf32>
    %145 = arith.maximumf %19, %144 : vector<16x128xf32>
    %cst_39 = arith.constant 1.000000e-16 : f32
    %146 = vector.broadcast %cst_39 : f32 to vector<16x128xf32>
    %147 = arith.maximumf %141, %146 : vector<16x128xf32>
    %148 = arith.mulf %145, %147 : vector<16x128xf32>
    %149 = math.rsqrt %148 : vector<16x128xf32>
    %150 = arith.mulf %143, %149 : vector<16x128xf32>
    %151 = vector.extract_strided_slice %1 {offsets = [1, 1], sizes = [16, 128], strides = [1, 1]} : vector<18x130xi32> to vector<16x128xi32>
    %152 = arith.cmpi eq, %151, %3 : vector<16x128xi32>
    %153 = arith.andi %152, %5 : vector<16x128xi1>
    %154 = arith.addf %125, %150 : vector<16x128xf32>
    %cst_40 = arith.constant 0.000000e+00 : f32
    %155 = vector.broadcast %cst_40 : f32 to vector<16x128xf32>
    %156 = arith.select %153, %150, %155 : vector<16x128xi1>, vector<16x128xf32>
    %157 = vector.shape_cast %156 : vector<16x128xf32> to vector<1x16x128xf32>
    %cst_41 = arith.constant dense<0.000000e+00> : vector<1xf32>
    %158 = vector.multi_reduction <add>, %157, %cst_41 [1, 2] : vector<1x16x128xf32> to vector<1xf32>
    %159 = vector.shape_cast %158 : vector<1xf32> to vector<1x1x1xf32>
    %160 = vector.extract %159[0, 0, 0] : f32 from vector<1x1x1xf32>
    %161 = arith.addf %132, %160 : f32
    %162 = arith.extui %153 : vector<16x128xi1> to vector<16x128xi32>
    %163 = arith.sitofp %162 : vector<16x128xi32> to vector<16x128xf32>
    %164 = vector.shape_cast %163 : vector<16x128xf32> to vector<1x16x128xf32>
    %cst_42 = arith.constant dense<0.000000e+00> : vector<1xf32>
    %165 = vector.multi_reduction <add>, %164, %cst_42 [1, 2] : vector<1x16x128xf32> to vector<1xf32>
    %166 = vector.shape_cast %165 : vector<1xf32> to vector<1x1x1xf32>
    %167 = vector.extract %166[0, 0, 0] : f32 from vector<1x1x1xf32>
    %168 = arith.addf %139, %167 : f32
    %169 = vector.extract_strided_slice %109 {offsets = [0, 2, 0], sizes = [32, 16, 128], strides = [1, 1, 1]} : vector<32x18x128xf32> to vector<32x16x128xf32>
    %170 = vector.extract_strided_slice %110 {offsets = [2, 0], sizes = [16, 128], strides = [1, 1]} : vector<18x128xf32> to vector<16x128xf32>
    %171 = arith.mulf %18, %169 : vector<32x16x128xf32>
    %cst_43 = arith.constant dense<0.000000e+00> : vector<16x128xf32>
    %172 = vector.multi_reduction <add>, %171, %cst_43 [0] : vector<32x16x128xf32> to vector<16x128xf32>
    %cst_44 = arith.constant 1.000000e-16 : f32
    %173 = vector.broadcast %cst_44 : f32 to vector<16x128xf32>
    %174 = arith.maximumf %19, %173 : vector<16x128xf32>
    %cst_45 = arith.constant 1.000000e-16 : f32
    %175 = vector.broadcast %cst_45 : f32 to vector<16x128xf32>
    %176 = arith.maximumf %170, %175 : vector<16x128xf32>
    %177 = arith.mulf %174, %176 : vector<16x128xf32>
    %178 = math.rsqrt %177 : vector<16x128xf32>
    %179 = arith.mulf %172, %178 : vector<16x128xf32>
    %180 = vector.extract_strided_slice %1 {offsets = [2, 1], sizes = [16, 128], strides = [1, 1]} : vector<18x130xi32> to vector<16x128xi32>
    %181 = arith.cmpi eq, %180, %3 : vector<16x128xi32>
    %182 = arith.andi %181, %5 : vector<16x128xi1>
    %183 = arith.addf %154, %179 : vector<16x128xf32>
    %cst_46 = arith.constant 0.000000e+00 : f32
    %184 = vector.broadcast %cst_46 : f32 to vector<16x128xf32>
    %185 = arith.select %182, %179, %184 : vector<16x128xi1>, vector<16x128xf32>
    %186 = vector.shape_cast %185 : vector<16x128xf32> to vector<1x16x128xf32>
    %cst_47 = arith.constant dense<0.000000e+00> : vector<1xf32>
    %187 = vector.multi_reduction <add>, %186, %cst_47 [1, 2] : vector<1x16x128xf32> to vector<1xf32>
    %188 = vector.shape_cast %187 : vector<1xf32> to vector<1x1x1xf32>
    %189 = vector.extract %188[0, 0, 0] : f32 from vector<1x1x1xf32>
    %190 = arith.addf %161, %189 : f32
    %191 = arith.extui %182 : vector<16x128xi1> to vector<16x128xi32>
    %192 = arith.sitofp %191 : vector<16x128xi32> to vector<16x128xf32>
    %193 = vector.shape_cast %192 : vector<16x128xf32> to vector<1x16x128xf32>
    %cst_48 = arith.constant dense<0.000000e+00> : vector<1xf32>
    %194 = vector.multi_reduction <add>, %193, %cst_48 [1, 2] : vector<1x16x128xf32> to vector<1xf32>
    %195 = vector.shape_cast %194 : vector<1xf32> to vector<1x1x1xf32>
    %196 = vector.extract %195[0, 0, 0] : f32 from vector<1x1x1xf32>
    %197 = arith.addf %168, %196 : f32
    %198 = vector.extract_strided_slice %15 {offsets = [0, 0, 2], sizes = [32, 18, 128], strides = [1, 1, 1]} : vector<32x18x130xf32> to vector<32x18x128xf32>
    %199 = vector.extract_strided_slice %17 {offsets = [0, 2], sizes = [18, 128], strides = [1, 1]} : vector<18x130xf32> to vector<18x128xf32>
    %200 = vector.extract_strided_slice %198 {offsets = [0, 0, 0], sizes = [32, 16, 128], strides = [1, 1, 1]} : vector<32x18x128xf32> to vector<32x16x128xf32>
    %201 = vector.extract_strided_slice %199 {offsets = [0, 0], sizes = [16, 128], strides = [1, 1]} : vector<18x128xf32> to vector<16x128xf32>
    %202 = arith.mulf %18, %200 : vector<32x16x128xf32>
    %cst_49 = arith.constant dense<0.000000e+00> : vector<16x128xf32>
    %203 = vector.multi_reduction <add>, %202, %cst_49 [0] : vector<32x16x128xf32> to vector<16x128xf32>
    %cst_50 = arith.constant 1.000000e-16 : f32
    %204 = vector.broadcast %cst_50 : f32 to vector<16x128xf32>
    %205 = arith.maximumf %19, %204 : vector<16x128xf32>
    %cst_51 = arith.constant 1.000000e-16 : f32
    %206 = vector.broadcast %cst_51 : f32 to vector<16x128xf32>
    %207 = arith.maximumf %201, %206 : vector<16x128xf32>
    %208 = arith.mulf %205, %207 : vector<16x128xf32>
    %209 = math.rsqrt %208 : vector<16x128xf32>
    %210 = arith.mulf %203, %209 : vector<16x128xf32>
    %211 = vector.extract_strided_slice %1 {offsets = [0, 2], sizes = [16, 128], strides = [1, 1]} : vector<18x130xi32> to vector<16x128xi32>
    %212 = arith.cmpi eq, %211, %3 : vector<16x128xi32>
    %213 = arith.andi %212, %5 : vector<16x128xi1>
    %214 = arith.addf %183, %210 : vector<16x128xf32>
    %cst_52 = arith.constant 0.000000e+00 : f32
    %215 = vector.broadcast %cst_52 : f32 to vector<16x128xf32>
    %216 = arith.select %213, %210, %215 : vector<16x128xi1>, vector<16x128xf32>
    %217 = vector.shape_cast %216 : vector<16x128xf32> to vector<1x16x128xf32>
    %cst_53 = arith.constant dense<0.000000e+00> : vector<1xf32>
    %218 = vector.multi_reduction <add>, %217, %cst_53 [1, 2] : vector<1x16x128xf32> to vector<1xf32>
    %219 = vector.shape_cast %218 : vector<1xf32> to vector<1x1x1xf32>
    %220 = vector.extract %219[0, 0, 0] : f32 from vector<1x1x1xf32>
    %221 = arith.addf %190, %220 : f32
    %222 = arith.extui %213 : vector<16x128xi1> to vector<16x128xi32>
    %223 = arith.sitofp %222 : vector<16x128xi32> to vector<16x128xf32>
    %224 = vector.shape_cast %223 : vector<16x128xf32> to vector<1x16x128xf32>
    %cst_54 = arith.constant dense<0.000000e+00> : vector<1xf32>
    %225 = vector.multi_reduction <add>, %224, %cst_54 [1, 2] : vector<1x16x128xf32> to vector<1xf32>
    %226 = vector.shape_cast %225 : vector<1xf32> to vector<1x1x1xf32>
    %227 = vector.extract %226[0, 0, 0] : f32 from vector<1x1x1xf32>
    %228 = arith.addf %197, %227 : f32
    %229 = vector.extract_strided_slice %198 {offsets = [0, 1, 0], sizes = [32, 16, 128], strides = [1, 1, 1]} : vector<32x18x128xf32> to vector<32x16x128xf32>
    %230 = vector.extract_strided_slice %199 {offsets = [1, 0], sizes = [16, 128], strides = [1, 1]} : vector<18x128xf32> to vector<16x128xf32>
    %231 = arith.mulf %18, %229 : vector<32x16x128xf32>
    %cst_55 = arith.constant dense<0.000000e+00> : vector<16x128xf32>
    %232 = vector.multi_reduction <add>, %231, %cst_55 [0] : vector<32x16x128xf32> to vector<16x128xf32>
    %cst_56 = arith.constant 1.000000e-16 : f32
    %233 = vector.broadcast %cst_56 : f32 to vector<16x128xf32>
    %234 = arith.maximumf %19, %233 : vector<16x128xf32>
    %cst_57 = arith.constant 1.000000e-16 : f32
    %235 = vector.broadcast %cst_57 : f32 to vector<16x128xf32>
    %236 = arith.maximumf %230, %235 : vector<16x128xf32>
    %237 = arith.mulf %234, %236 : vector<16x128xf32>
    %238 = math.rsqrt %237 : vector<16x128xf32>
    %239 = arith.mulf %232, %238 : vector<16x128xf32>
    %240 = vector.extract_strided_slice %1 {offsets = [1, 2], sizes = [16, 128], strides = [1, 1]} : vector<18x130xi32> to vector<16x128xi32>
    %241 = arith.cmpi eq, %240, %3 : vector<16x128xi32>
    %242 = arith.andi %241, %5 : vector<16x128xi1>
    %243 = arith.addf %214, %239 : vector<16x128xf32>
    %cst_58 = arith.constant 0.000000e+00 : f32
    %244 = vector.broadcast %cst_58 : f32 to vector<16x128xf32>
    %245 = arith.select %242, %239, %244 : vector<16x128xi1>, vector<16x128xf32>
    %246 = vector.shape_cast %245 : vector<16x128xf32> to vector<1x16x128xf32>
    %cst_59 = arith.constant dense<0.000000e+00> : vector<1xf32>
    %247 = vector.multi_reduction <add>, %246, %cst_59 [1, 2] : vector<1x16x128xf32> to vector<1xf32>
    %248 = vector.shape_cast %247 : vector<1xf32> to vector<1x1x1xf32>
    %249 = vector.extract %248[0, 0, 0] : f32 from vector<1x1x1xf32>
    %250 = arith.addf %221, %249 : f32
    %251 = arith.extui %242 : vector<16x128xi1> to vector<16x128xi32>
    %252 = arith.sitofp %251 : vector<16x128xi32> to vector<16x128xf32>
    %253 = vector.shape_cast %252 : vector<16x128xf32> to vector<1x16x128xf32>
    %cst_60 = arith.constant dense<0.000000e+00> : vector<1xf32>
    %254 = vector.multi_reduction <add>, %253, %cst_60 [1, 2] : vector<1x16x128xf32> to vector<1xf32>
    %255 = vector.shape_cast %254 : vector<1xf32> to vector<1x1x1xf32>
    %256 = vector.extract %255[0, 0, 0] : f32 from vector<1x1x1xf32>
    %257 = arith.addf %228, %256 : f32
    %258 = vector.extract_strided_slice %198 {offsets = [0, 2, 0], sizes = [32, 16, 128], strides = [1, 1, 1]} : vector<32x18x128xf32> to vector<32x16x128xf32>
    %259 = vector.extract_strided_slice %199 {offsets = [2, 0], sizes = [16, 128], strides = [1, 1]} : vector<18x128xf32> to vector<16x128xf32>
    %260 = arith.mulf %18, %258 : vector<32x16x128xf32>
    %cst_61 = arith.constant dense<0.000000e+00> : vector<16x128xf32>
    %261 = vector.multi_reduction <add>, %260, %cst_61 [0] : vector<32x16x128xf32> to vector<16x128xf32>
    %cst_62 = arith.constant 1.000000e-16 : f32
    %262 = vector.broadcast %cst_62 : f32 to vector<16x128xf32>
    %263 = arith.maximumf %19, %262 : vector<16x128xf32>
    %cst_63 = arith.constant 1.000000e-16 : f32
    %264 = vector.broadcast %cst_63 : f32 to vector<16x128xf32>
    %265 = arith.maximumf %259, %264 : vector<16x128xf32>
    %266 = arith.mulf %263, %265 : vector<16x128xf32>
    %267 = math.rsqrt %266 : vector<16x128xf32>
    %268 = arith.mulf %261, %267 : vector<16x128xf32>
    %269 = vector.extract_strided_slice %1 {offsets = [2, 2], sizes = [16, 128], strides = [1, 1]} : vector<18x130xi32> to vector<16x128xi32>
    %270 = arith.cmpi eq, %269, %3 : vector<16x128xi32>
    %271 = arith.andi %270, %5 : vector<16x128xi1>
    %272 = arith.addf %243, %268 : vector<16x128xf32>
    %cst_64 = arith.constant 0.000000e+00 : f32
    %273 = vector.broadcast %cst_64 : f32 to vector<16x128xf32>
    %274 = arith.select %271, %268, %273 : vector<16x128xi1>, vector<16x128xf32>
    %275 = vector.shape_cast %274 : vector<16x128xf32> to vector<1x16x128xf32>
    %cst_65 = arith.constant dense<0.000000e+00> : vector<1xf32>
    %276 = vector.multi_reduction <add>, %275, %cst_65 [1, 2] : vector<1x16x128xf32> to vector<1xf32>
    %277 = vector.shape_cast %276 : vector<1xf32> to vector<1x1x1xf32>
    %278 = vector.extract %277[0, 0, 0] : f32 from vector<1x1x1xf32>
    %279 = arith.addf %250, %278 : f32
    %280 = arith.extui %271 : vector<16x128xi1> to vector<16x128xi32>
    %281 = arith.sitofp %280 : vector<16x128xi32> to vector<16x128xf32>
    %282 = vector.shape_cast %281 : vector<16x128xf32> to vector<1x16x128xf32>
    %cst_66 = arith.constant dense<0.000000e+00> : vector<1xf32>
    %283 = vector.multi_reduction <add>, %282, %cst_66 [1, 2] : vector<1x16x128xf32> to vector<1xf32>
    %284 = vector.shape_cast %283 : vector<1xf32> to vector<1x1x1xf32>
    %285 = vector.extract %284[0, 0, 0] : f32 from vector<1x1x1xf32>
    %286 = arith.addf %257, %285 : f32
    %cst_67 = arith.constant 0.000000e+00 : f32
    %287 = vector.broadcast %cst_67 : f32 to vector<16x128xf32>
    %288 = arith.select %5, %272, %287 : vector<16x128xi1>, vector<16x128xf32>
    %289 = vector.shape_cast %288 : vector<16x128xf32> to vector<1x16x128xf32>
    %cst_68 = arith.constant dense<0.000000e+00> : vector<1xf32>
    %290 = vector.multi_reduction <add>, %289, %cst_68 [1, 2] : vector<1x16x128xf32> to vector<1xf32>
    %291 = vector.shape_cast %290 : vector<1xf32> to vector<1x1x1xf32>
    %292 = vector.extract %291[0, 0, 0] : f32 from vector<1x1x1xf32>
    %293 = arith.subf %292, %279 : f32
    %cst_69 = arith.constant 9.000000e+00 : f32
    %294 = arith.mulf %cst_69, %11 : f32
    %295 = arith.subf %294, %286 : f32
    %296 = tpu.iota {dimensions = array<i32: 1>} : vector<8x128xi32>
    %c0_i32 = arith.constant 0 : i32
    %297 = vector.broadcast %c0_i32 : i32 to vector<8x128xi32>
    %298 = arith.cmpi eq, %296, %297 : vector<8x128xi32>
    %cst_70 = arith.constant 0.000000e+00 : f32
    %299 = vector.broadcast %279 : f32 to vector<8x128xf32>
    %300 = vector.broadcast %cst_70 : f32 to vector<8x128xf32>
    %301 = arith.select %298, %299, %300 : vector<8x128xi1>, vector<8x128xf32>
    %c1_i32 = arith.constant 1 : i32
    %302 = vector.broadcast %c1_i32 : i32 to vector<8x128xi32>
    %303 = arith.cmpi eq, %296, %302 : vector<8x128xi32>
    %cst_71 = arith.constant 0.000000e+00 : f32
    %304 = vector.broadcast %286 : f32 to vector<8x128xf32>
    %305 = vector.broadcast %cst_71 : f32 to vector<8x128xf32>
    %306 = arith.select %303, %304, %305 : vector<8x128xi1>, vector<8x128xf32>
    %307 = arith.addf %301, %306 : vector<8x128xf32>
    %c2_i32 = arith.constant 2 : i32
    %308 = vector.broadcast %c2_i32 : i32 to vector<8x128xi32>
    %309 = arith.cmpi eq, %296, %308 : vector<8x128xi32>
    %cst_72 = arith.constant 0.000000e+00 : f32
    %310 = vector.broadcast %293 : f32 to vector<8x128xf32>
    %311 = vector.broadcast %cst_72 : f32 to vector<8x128xf32>
    %312 = arith.select %309, %310, %311 : vector<8x128xi1>, vector<8x128xf32>
    %313 = arith.addf %307, %312 : vector<8x128xf32>
    %c3_i32 = arith.constant 3 : i32
    %314 = vector.broadcast %c3_i32 : i32 to vector<8x128xi32>
    %315 = arith.cmpi eq, %296, %314 : vector<8x128xi32>
    %cst_73 = arith.constant 0.000000e+00 : f32
    %316 = vector.broadcast %295 : f32 to vector<8x128xf32>
    %317 = vector.broadcast %cst_73 : f32 to vector<8x128xf32>
    %318 = arith.select %315, %316, %317 : vector<8x128xi1>, vector<8x128xf32>
    %319 = arith.addf %313, %318 : vector<8x128xf32>
    %c0_74 = arith.constant 0 : index
    %c0_75 = arith.constant 0 : index
    %c0_76 = arith.constant 0 : index
    %320 = vector.load %arg4[%c0_74, %c0_75, %c0_76] : memref<1x8x128xf32, #tpu.memory_space<vmem>>, vector<1x8x128xf32>
    %321 = vector.shape_cast %320 : vector<1x8x128xf32> to vector<8x128xf32>
    %322 = vector.shape_cast %319 : vector<8x128xf32> to vector<1x8x128xf32>
    tpu.vector_store %arg4[%c0_74, %c0_75, %c0_76], %322 {strides = array<i32>} : memref<1x8x128xf32, #tpu.memory_space<vmem>>, vector<1x8x128xf32>,
    return
  }
  func.func @transform_0(%arg0: i32) -> (i32, i32, i32, i32) {
    %c0_i32 = arith.constant 0 : i32
    %c0_i32_0 = arith.constant 0 : i32
    %c0_i32_1 = arith.constant 0 : i32
    %c0_i32_2 = arith.constant 0 : i32
    return %arg0, %c0_i32, %c0_i32_0, %c0_i32_1 : i32, i32, i32, i32
  }
  func.func @transform_1(%arg0: i32) -> (i32, i32, i32) {
    %c0_i32 = arith.constant 0 : i32
    %c0_i32_0 = arith.constant 0 : i32
    %c0_i32_1 = arith.constant 0 : i32
    return %arg0, %c0_i32, %c0_i32_0 : i32, i32, i32
  }
  func.func @transform_2(%arg0: i32) -> (i32, i32, i32) {
    %c0_i32 = arith.constant 0 : i32
    %c0_i32_0 = arith.constant 0 : i32
    %c0_i32_1 = arith.constant 0 : i32
    return %arg0, %c0_i32, %c0_i32_0 : i32, i32, i32
  }
  func.func @transform_3(%arg0: i32) -> (i32, i32, i32) {
    %c0_i32 = arith.constant 0 : i32
    %c0_i32_0 = arith.constant 0 : i32
    %c0_i32_1 = arith.constant 0 : i32
    return %arg0, %c0_i32, %c0_i32_0 : i32, i32, i32
  }
}

</mosaic_0001>

<llo_original>
// kernel: tpu_custom_call.1
$region0: #{tpu_custom_call.1}
  #allocation0 [shape = 'u32[]', space=smem, size = 0x4, offset = 0x4, fixed_abs, tag = 'smem constant byte address 0x4 - core index']
  #allocation1 [shape = 'u32[144,128]{1,0:T(1,128)}', space=vmem, size = 0x12000, scoped, tag = 'internal scratch']
  %s0 = inlined_call_operand.vmem [shape: bf16[2,32,18,130], index: 0, kind: input, shape index: {}]
  %s1 = inlined_call_operand.vmem [shape: s32[2,18,130], index: 1, kind: input, shape index: {}]
  %s2 = inlined_call_operand.vmem [shape: s32[2,16,128], index: 2, kind: input, shape index: {}]
  %s3 = inlined_call_operand.hbm [shape: f32[2,8,128], index: 3, kind: output, shape index: {}]
  %s4 = sld [smem:[#allocation0]]
  $region45: #{tpu_custom_call.1} parent=0
    _
  %s6 = ssub.s32 1, %s4
  %s7 = scalar_select 0, %s6, %s4
  $region1: #{tpu_custom_call.1} parent=0
    #allocation2 [shape = 'u8[8192]{0}', space=vmem, size = 0x2000, scoped, tag = 'output window, operand 0']
    #allocation3 [shape = 's32[2]{0}', space=sflag, size = 0x8, scoped, tag = 'scoped memory for tpu_custom_call.1']
    %8 = vsyncpa [#allocation3], 0
    %s9 = scalar_lea.sflag [#allocation3], 1
    %10 = vsyncpa %s9, 0
    loop: start=0, step=1, limit=4
    $region2: #{tpu_custom_call.1} parent=1 // loop_pre_header
      _
    $region3: #{tpu_custom_call.1} parent=1 // loop_header
      %s12 = sphi 0, %s16
      %p13 = scmp.ge.s32.totalorder %s12, 4
      %s22 = sphi 0, %s24
      %s25 = sphi 0, %s22
      %s26 = sphi 0, %s25
      %s42 = sphi 0, %s26
      %s48 = sphi 0, %s50
      %s51 = sphi 0, %s48
      %s52 = sphi 0, %s51
      %s68 = sphi 0, %s52
      %s74 = sphi 0, %s76
      %s77 = sphi 0, %s74
      %s78 = sphi 0, %s77
      %s94 = sphi 0, %s78
      %s100 = sphi 0, %s102
      %s103 = sphi 0, %s100
      %s104 = sphi 0, %s103
      %s120 = sphi 0, %s104
    $region4: #{tpu_custom_call.1} parent=1 // loop_header_branch
      %15 = sbr.rel (%p13) target = $region8
    $region5: #{tpu_custom_call.1} parent=1 // loop_body
      %s17 = ssub.s32 %s12, 1
      %s18 = ssub.s32 %s12, 2
      %s19 = sadd.s32 %s12, 1
      %s20 = ssub.s32 %s12, %s19
      %p21 = scmp.eq.s32.totalorder %s20, 0
      %s23 = sadd.s32 %s22, 1
      %s24 = scalar_select %p21, %s22, %s23
      %p27 = pneg %p21
      %p28 = scmp.eq.s32.totalorder %s12, 1
      %p29 = por %p27, %p28
      %p30 = scmp.ne.s32.totalorder %s22, %s25
      %p31 = scmp.eq.s32.totalorder %s12, 0
      %p32 = por %p30, %p31
      %p33 = scmp.ne.s32.totalorder %s22, %s25
      %p34 = scmp.eq.s32.totalorder %s17, 1
      %p35 = por %p33, %p34
      %p36 = scmp.ne.s32.totalorder %s25, %s26
      %p37 = scmp.eq.s32.totalorder %s17, 0
      %p38 = por %p36, %p37
      %p39 = scmp.ne.s32.totalorder %s25, %s26
      %p40 = scmp.eq.s32.totalorder %s18, 1
      %p41 = por %p39, %p40
      %p43 = scmp.ne.s32.totalorder %s26, %s42
      %p44 = scmp.eq.s32.totalorder %s18, 0
      %p45 = por %p43, %p44
      %s46 = ssub.s32 %s12, %s19
      %p47 = scmp.eq.s32.totalorder %s46, 0
      %s49 = sadd.s32 %s48, 1
      %s50 = scalar_select %p47, %s48, %s49
      %p53 = pneg %p47
      %p54 = scmp.eq.s32.totalorder %s12, 1
      %p55 = por %p53, %p54
      %p56 = scmp.ne.s32.totalorder %s48, %s51
      %p57 = scmp.eq.s32.totalorder %s12, 0
      %p58 = por %p56, %p57
      %p59 = scmp.ne.s32.totalorder %s48, %s51
      %p60 = scmp.eq.s32.totalorder %s17, 1
      %p61 = por %p59, %p60
      %p62 = scmp.ne.s32.totalorder %s51, %s52
      %p63 = scmp.eq.s32.totalorder %s17, 0
      %p64 = por %p62, %p63
      %p65 = scmp.ne.s32.totalorder %s51, %s52
      %p66 = scmp.eq.s32.totalorder %s18, 1
      %p67 = por %p65, %p66
      %p69 = scmp.ne.s32.totalorder %s52, %s68
      %p70 = scmp.eq.s32.totalorder %s18, 0
      %p71 = por %p69, %p70
      %s72 = ssub.s32 %s12, %s19
      %p73 = scmp.eq.s32.totalorder %s72, 0
      %s75 = sadd.s32 %s74, 1
      %s76 = scalar_select %p73, %s74, %s75
      %p79 = pneg %p73
      %p80 = scmp.eq.s32.totalorder %s12, 1
      %p81 = por %p79, %p80
      %p82 = scmp.ne.s32.totalorder %s74, %s77
      %p83 = scmp.eq.s32.totalorder %s12, 0
      %p84 = por %p82, %p83
      %p85 = scmp.ne.s32.totalorder %s74, %s77
      %p86 = scmp.eq.s32.totalorder %s17, 1
      %p87 = por %p85, %p86
      %p88 = scmp.ne.s32.totalorder %s77, %s78
      %p89 = scmp.eq.s32.totalorder %s17, 0
      %p90 = por %p88, %p89
      %p91 = scmp.ne.s32.totalorder %s77, %s78
      %p92 = scmp.eq.s32.totalorder %s18, 1
      %p93 = por %p91, %p92
      %p95 = scmp.ne.s32.totalorder %s78, %s94
      %p96 = scmp.eq.s32.totalorder %s18, 0
      %p97 = por %p95, %p96
      %s98 = ssub.s32 %s12, %s19
      %p99 = scmp.eq.s32.totalorder %s98, 0
      %s101 = sadd.s32 %s100, 1
      %s102 = scalar_select %p99, %s100, %s101
      %p105 = pneg %p99
      %p106 = scmp.eq.s32.totalorder %s12, 1
      %p107 = por %p105, %p106
      %p108 = scmp.ne.s32.totalorder %s100, %s103
      %p109 = scmp.eq.s32.totalorder %s12, 0
      %p110 = por %p108, %p109
      %p111 = scmp.ne.s32.totalorder %s100, %s103
      %p112 = scmp.eq.s32.totalorder %s17, 1
      %p113 = por %p111, %p112
      %p114 = scmp.ne.s32.totalorder %s103, %s104
      %p115 = scmp.eq.s32.totalorder %s17, 0
      %p116 = por %p114, %p115
      %p117 = scmp.ne.s32.totalorder %s103, %s104
      %p118 = scmp.eq.s32.totalorder %s18, 1
      %p119 = por %p117, %p118
      %p121 = scmp.ne.s32.totalorder %s104, %s120
      %p122 = scmp.eq.s32.totalorder %s18, 0
      %p123 = por %p121, %p122
      %p124 = scmp.le.s32.totalorder 1, %s12
      %p125 = scmp.lt.s32.totalorder %s12, 3
      %p126 = pnand %p124, %p125
      %p127 = pneg %p126
      // Predicated region
      $region9: #{tpu_custom_call.1} parent=5 // pred_check
        _
      $region10: #{tpu_custom_call.1} parent=5 // pred_check_branch
        %129 = sbr.rel (%p126) target = $region12
      $region11: #{tpu_custom_call.1} parent=5 // pred_region
        %s130 = ssub.s32 %s12, 1
      $region12: #{tpu_custom_call.1} parent=5 // pred_fallthru
        _
      %p131 = scmp.lt.s32.totalorder %s12, 2
      // Predicated region
      $region13: #{tpu_custom_call.1} parent=5 // pred_check
        %p132 = pneg %p131
      $region14: #{tpu_custom_call.1} parent=5 // pred_check_branch
        %134 = sbr.rel (%p132) target = $region16
      $region15: #{tpu_custom_call.1} parent=5 // pred_region
        // Predicated region
        $region17: #{tpu_custom_call.1} parent=15 // pred_check
          %p135 = pneg %p32
        $region18: #{tpu_custom_call.1} parent=15 // pred_check_branch
          %137 = sbr.rel (%p135) target = $region20
        $region19: #{tpu_custom_call.1} parent=15 // pred_region
          %p138 = scmp.lt.s32.totalorder %s12, 1
          %s139 = scalar_select %p138, %s12, 1
          %s140 = smul.addr %s139, 192
          %s141 = smul.addr %s140, 4
          %s142 = scalar_lea.vmem %s0, %s141
        $region20: #{tpu_custom_call.1} parent=15 // pred_fallthru
          _
        // Predicated region
        $region21: #{tpu_custom_call.1} parent=15 // pred_check
          %p143 = pneg %p58
        $region22: #{tpu_custom_call.1} parent=15 // pred_check_branch
          %145 = sbr.rel (%p143) target = $region24
        $region23: #{tpu_custom_call.1} parent=15 // pred_region
          %p146 = scmp.lt.s32.totalorder %s12, 1
          %s147 = scalar_select %p146, %s12, 1
          %s148 = smul.addr %s147, 6
          %s149 = smul.addr %s148, 8
          %s150 = scalar_lea.vmem %s1, %s149
        $region24: #{tpu_custom_call.1} parent=15 // pred_fallthru
          _
        // Predicated region
        $region25: #{tpu_custom_call.1} parent=15 // pred_check
          %p151 = pneg %p84
        $region26: #{tpu_custom_call.1} parent=15 // pred_check_branch
          %153 = sbr.rel (%p151) target = $region28
        $region27: #{tpu_custom_call.1} parent=15 // pred_region
          %p154 = scmp.lt.s32.totalorder %s12, 1
          %s155 = scalar_select %p154, %s12, 1
          %s156 = smul.addr %s155, 2
          %s157 = smul.addr %s156, 8
          %s158 = scalar_lea.vmem %s2, %s157
        $region28: #{tpu_custom_call.1} parent=15 // pred_fallthru
          _
      $region16: #{tpu_custom_call.1} parent=5 // pred_fallthru
        _
      %p159 = scmp.le.s32.totalorder 1, %s12
      %p160 = scmp.lt.s32.totalorder %s12, 3
      %p161 = pnand %p159, %p160
      %p162 = pneg %p161
      // Predicated region
      $region29: #{tpu_custom_call.1} parent=5 // pred_check
        _
      $region30: #{tpu_custom_call.1} parent=5 // pred_check_branch
        %164 = sbr.rel (%p161) target = $region32
      $region31: #{tpu_custom_call.1} parent=5 // pred_region
        %s165 = ssub.s32 %s12, 1
        %p166 = scmp.lt.s32.totalorder %s17, 1
        %s167 = scalar_select %p166, %s17, 1
        %s168 = smul.addr %s167, 192
        %s169 = smul.addr %s168, 4
        %s170 = scalar_lea.vmem %s0, %s169
        %p171 = pneg %p38
        %p172 = pneg %p35
        %p173 = scmp.lt.s32.totalorder %s17, 1
        %s174 = scalar_select %p173, %s17, 1
        %s175 = smul.addr %s174, 6
        %s176 = smul.addr %s175, 8
        %s177 = scalar_lea.vmem %s1, %s176
        %p178 = pneg %p64
        %p179 = pneg %p61
        %p180 = scmp.lt.s32.totalorder %s17, 1
        %s181 = scalar_select %p180, %s17, 1
        %s182 = smul.addr %s181, 2
        %s183 = smul.addr %s182, 8
        %s184 = scalar_lea.vmem %s2, %s183
        %p185 = pneg %p90
        %p186 = pneg %p87
        %p187 = pneg %p116
        %p188 = pneg %p113
        %s189 = sand.u32 %s103, 1
        %s190 = scalar_lea.sflag [#allocation3], %s189
        %s191 = sand.u32 %s103, 1
        %s192 = smul.addr %s191, 8
        %s193 = scalar_lea.vmem [#allocation2], %s192
        %p194 = scmp.lt.s32.totalorder %s17, 1
        %s195 = scalar_select %p194, %s17, 1
        %s196 = smul.addr %s195, 192
        %s197 = smul.addr %s196, 4
        %s198 = scalar_lea.vmem %s0, %s197
        %p199 = scmp.lt.s32.totalorder %s17, 1
        %s200 = scalar_select %p199, %s17, 1
        %s201 = smul.addr %s200, 6
        %s202 = smul.addr %s201, 8
        %s203 = scalar_lea.vmem %s1, %s202
        %p204 = scmp.lt.s32.totalorder %s17, 1
        %s205 = scalar_select %p204, %s17, 1
        %s206 = smul.addr %s205, 2
        %s207 = smul.addr %s206, 8
        %s208 = scalar_lea.vmem %s2, %s207
        %v209 = vld [vmem:[%s203] sm:$0xff]
        %v210 = vld [vmem:[%s203 + $0x8] sm:$0xff]
        %v211 = vld [vmem:[%s203 + $0x10] sm:$0xff]
        %v212 = vld [vmem:[%s203 + $0x18] sm:$0xff]
        %v213 = vld [vmem:[%s203 + $0x20] sm:$0x3]
        %v214 = vld [vmem:[%s203 + $0x28] sm:$0x3]
        %v215 = vld [vmem:[%s208] sm:$0xff]
        %v216 = vld [vmem:[%s208 + $0x8] sm:$0xff]
        %vm217 = vcmp.ne.s32.totalorder %v215, 255
        %vm218 = vcmp.ne.s32.totalorder %v216, 255
        %v219 = vsel %vm217, 1, 0
        %v220 = vsel %vm218, 1, 0
        %v221 = vcvt.s32.f32 %v219
        %v222 = vcvt.s32.f32 %v220
        %v223 = vadd.f32 %v221, %v222
        %224 = vadd.xlane.f32.xlu0 %v223
        %v225 = vpop.xlane.xlu0 %224
        %v226 = vrot.slane %v225, 4
        %v227 = vadd.f32 %v225, %v226
        %v228 = vrot.slane %v227, 2
        %v229 = vadd.f32 %v227, %v228
        %v230 = vrot.slane %v229, 1
        %v231 = vadd.f32 %v229, %v230
        %s232 = vtos %v231
        %v233 = vld [vmem:[%s198] sm:$0xff]
        %v234 = vld [vmem:[%s198 + $0x8] sm:$0xff]
        %v235 = vld [vmem:[%s198 + $0x10] sm:$0x11]
        %v236 = vld [vmem:[%s198 + $0x18] sm:$0xff]
        %v237 = vld [vmem:[%s198 + $0x20] sm:$0xff]
        %v238 = vld [vmem:[%s198 + $0x28] sm:$0x11]
        %v239 = vld [vmem:[%s198 + $0x30] sm:$0xff]
        %v240 = vld [vmem:[%s198 + $0x38] sm:$0xff]
        %v241 = vld [vmem:[%s198 + $0x40] sm:$0x11]
        %v242 = vld [vmem:[%s198 + $0x48] sm:$0xff]
        %v243 = vld [vmem:[%s198 + $0x50] sm:$0xff]
        %v244 = vld [vmem:[%s198 + $0x58] sm:$0x11]
        %v245 = vld [vmem:[%s198 + $0x60] sm:$0xff]
        %v246 = vld [vmem:[%s198 + $0x68] sm:$0xff]
        %v247 = vld [vmem:[%s198 + $0x70] sm:$0x11]
        %v248 = vld [vmem:[%s198 + $0x78] sm:$0xff]
        %v249 = vld [vmem:[%s198 + $0x80] sm:$0xff]
        %v250 = vld [vmem:[%s198 + $0x88] sm:$0x11]
        %v251 = vld [vmem:[%s198 + $0x90] sm:$0xff]
        %v252 = vld [vmem:[%s198 + $0x98] sm:$0xff]
        %v253 = vld [vmem:[%s198 + $0xa0] sm:$0x11]
        %v254 = vld [vmem:[%s198 + $0xa8] sm:$0xff]
        %v255 = vld [vmem:[%s198 + $0xb0] sm:$0xff]
        %v256 = vld [vmem:[%s198 + $0xb8] sm:$0x11]
        %v257 = vld [vmem:[%s198 + $0xc0] sm:$0xff]
        %v258 = vld [vmem:[%s198 + $0xc8] sm:$0xff]
        %v259 = vld [vmem:[%s198 + $0xd0] sm:$0x11]
        %v260 = vld [vmem:[%s198 + $0xd8] sm:$0xff]
        %v261 = vld [vmem:[%s198 + $0xe0] sm:$0xff]
        %v262 = vld [vmem:[%s198 + $0xe8] sm:$0x11]
        %v263 = vld [vmem:[%s198 + $0xf0] sm:$0xff]
        %v264 = vld [vmem:[%s198 + $0xf8] sm:$0xff]
        %v265 = vld [vmem:[%s198 + $0x100] sm:$0x11]
        %v266 = vld [vmem:[%s198 + $0x108] sm:$0xff]
        %v267 = vld [vmem:[%s198 + $0x110] sm:$0xff]
        %v268 = vld [vmem:[%s198 + $0x118] sm:$0x11]
        %v269 = vld [vmem:[%s198 + $0x120] sm:$0xff]
        %v270 = vld [vmem:[%s198 + $0x128] sm:$0xff]
        %v271 = vld [vmem:[%s198 + $0x130] sm:$0x11]
        %v272 = vld [vmem:[%s198 + $0x138] sm:$0xff]
        %v273 = vld [vmem:[%s198 + $0x140] sm:$0xff]
        %v274 = vld [vmem:[%s198 + $0x148] sm:$0x11]
        %v275 = vld [vmem:[%s198 + $0x150] sm:$0xff]
        %v276 = vld [vmem:[%s198 + $0x158] sm:$0xff]
        %v277 = vld [vmem:[%s198 + $0x160] sm:$0x11]
        %v278 = vld [vmem:[%s198 + $0x168] sm:$0xff]
        %v279 = vld [vmem:[%s198 + $0x170] sm:$0xff]
        %v280 = vld [vmem:[%s198 + $0x178] sm:$0x11]
        %v281 = vld [vmem:[%s198 + $0x180] sm:$0xff]
        %v282 = vld [vmem:[%s198 + $0x188] sm:$0xff]
        %v283 = vld [vmem:[%s198 + $0x190] sm:$0x11]
        %v284 = vld [vmem:[%s198 + $0x198] sm:$0xff]
        %v285 = vld [vmem:[%s198 + $0x1a0] sm:$0xff]
        %v286 = vld [vmem:[%s198 + $0x1a8] sm:$0x11]
        %v287 = vld [vmem:[%s198 + $0x1b0] sm:$0xff]
        %v288 = vld [vmem:[%s198 + $0x1b8] sm:$0xff]
        %v289 = vld [vmem:[%s198 + $0x1c0] sm:$0x11]
        %v290 = vld [vmem:[%s198 + $0x1c8] sm:$0xff]
        %v291 = vld [vmem:[%s198 + $0x1d0] sm:$0xff]
        %v292 = vld [vmem:[%s198 + $0x1d8] sm:$0x11]
        %v293 = vld [vmem:[%s198 + $0x1e0] sm:$0xff]
        %v294 = vld [vmem:[%s198 + $0x1e8] sm:$0xff]
        %v295 = vld [vmem:[%s198 + $0x1f0] sm:$0x11]
        %v296 = vld [vmem:[%s198 + $0x1f8] sm:$0xff]
        %v297 = vld [vmem:[%s198 + $0x200] sm:$0xff]
        %v298 = vld [vmem:[%s198 + $0x208] sm:$0x11]
        %v299 = vld [vmem:[%s198 + $0x210] sm:$0xff]
        %v300 = vld [vmem:[%s198 + $0x218] sm:$0xff]
        %v301 = vld [vmem:[%s198 + $0x220] sm:$0x11]
        %v302 = vld [vmem:[%s198 + $0x228] sm:$0xff]
        %v303 = vld [vmem:[%s198 + $0x230] sm:$0xff]
        %v304 = vld [vmem:[%s198 + $0x238] sm:$0x11]
        %v305 = vld [vmem:[%s198 + $0x240] sm:$0xff]
        %v306 = vld [vmem:[%s198 + $0x248] sm:$0xff]
        %v307 = vld [vmem:[%s198 + $0x250] sm:$0x11]
        %v308 = vld [vmem:[%s198 + $0x258] sm:$0xff]
        %v309 = vld [vmem:[%s198 + $0x260] sm:$0xff]
        %v310 = vld [vmem:[%s198 + $0x268] sm:$0x11]
        %v311 = vld [vmem:[%s198 + $0x270] sm:$0xff]
        %v312 = vld [vmem:[%s198 + $0x278] sm:$0xff]
        %v313 = vld [vmem:[%s198 + $0x280] sm:$0x11]
        %v314 = vld [vmem:[%s198 + $0x288] sm:$0xff]
        %v315 = vld [vmem:[%s198 + $0x290] sm:$0xff]
        %v316 = vld [vmem:[%s198 + $0x298] sm:$0x11]
        %v317 = vld [vmem:[%s198 + $0x2a0] sm:$0xff]
        %v318 = vld [vmem:[%s198 + $0x2a8] sm:$0xff]
        %v319 = vld [vmem:[%s198 + $0x2b0] sm:$0x11]
        %v320 = vld [vmem:[%s198 + $0x2b8] sm:$0xff]
        %v321 = vld [vmem:[%s198 + $0x2c0] sm:$0xff]
        %v322 = vld [vmem:[%s198 + $0x2c8] sm:$0x11]
        %v323 = vld [vmem:[%s198 + $0x2d0] sm:$0xff]
        %v324 = vld [vmem:[%s198 + $0x2d8] sm:$0xff]
        %v325 = vld [vmem:[%s198 + $0x2e0] sm:$0x11]
        %v326 = vld [vmem:[%s198 + $0x2e8] sm:$0xff]
        %v327 = vld [vmem:[%s198 + $0x2f0] sm:$0xff]
        %v328 = vld [vmem:[%s198 + $0x2f8] sm:$0x11]
        %v329 = vunpack.c.l.bf16 %v233
        %v330 = vunpack.c.h.bf16 %v233
        %v331 = vunpack.c.l.bf16 %v234
        %v332 = vunpack.c.h.bf16 %v234
        %v333 = vunpack.c.l.bf16 %v235
        %v334 = vunpack.c.h.bf16 %v235
        %v335 = vunpack.c.l.bf16 %v236
        %v336 = vunpack.c.h.bf16 %v236
        %v337 = vunpack.c.l.bf16 %v237
        %v338 = vunpack.c.h.bf16 %v237
        %v339 = vunpack.c.l.bf16 %v238
        %v340 = vunpack.c.h.bf16 %v238
        %v341 = vunpack.c.l.bf16 %v239
        %v342 = vunpack.c.h.bf16 %v239
        %v343 = vunpack.c.l.bf16 %v240
        %v344 = vunpack.c.h.bf16 %v240
        %v345 = vunpack.c.l.bf16 %v241
        %v346 = vunpack.c.h.bf16 %v241
        %v347 = vunpack.c.l.bf16 %v242
        %v348 = vunpack.c.h.bf16 %v242
        %v349 = vunpack.c.l.bf16 %v243
        %v350 = vunpack.c.h.bf16 %v243
        %v351 = vunpack.c.l.bf16 %v244
        %v352 = vunpack.c.h.bf16 %v244
        %v353 = vunpack.c.l.bf16 %v245
        %v354 = vunpack.c.h.bf16 %v245
        %v355 = vunpack.c.l.bf16 %v246
        %v356 = vunpack.c.h.bf16 %v246
        %v357 = vunpack.c.l.bf16 %v247
        %v358 = vunpack.c.h.bf16 %v247
        %v359 = vunpack.c.l.bf16 %v248
        %v360 = vunpack.c.h.bf16 %v248
        %v361 = vunpack.c.l.bf16 %v249
        %v362 = vunpack.c.h.bf16 %v249
        %v363 = vunpack.c.l.bf16 %v250
        %v364 = vunpack.c.h.bf16 %v250
        %v365 = vunpack.c.l.bf16 %v251
        %v366 = vunpack.c.h.bf16 %v251
        %v367 = vunpack.c.l.bf16 %v252
        %v368 = vunpack.c.h.bf16 %v252
        %v369 = vunpack.c.l.bf16 %v253
        %v370 = vunpack.c.h.bf16 %v253
        %v371 = vunpack.c.l.bf16 %v254
        %v372 = vunpack.c.h.bf16 %v254
        %v373 = vunpack.c.l.bf16 %v255
        %v374 = vunpack.c.h.bf16 %v255
        %v375 = vunpack.c.l.bf16 %v256
        %v376 = vunpack.c.h.bf16 %v256
        %v377 = vunpack.c.l.bf16 %v257
        %v378 = vunpack.c.h.bf16 %v257
        %v379 = vunpack.c.l.bf16 %v258
        %v380 = vunpack.c.h.bf16 %v258
        %v381 = vunpack.c.l.bf16 %v259
        %v382 = vunpack.c.h.bf16 %v259
        %v383 = vunpack.c.l.bf16 %v260
        %v384 = vunpack.c.h.bf16 %v260
        %v385 = vunpack.c.l.bf16 %v261
        %v386 = vunpack.c.h.bf16 %v261
        %v387 = vunpack.c.l.bf16 %v262
        %v388 = vunpack.c.h.bf16 %v262
        %v389 = vunpack.c.l.bf16 %v263
        %v390 = vunpack.c.h.bf16 %v263
        %v391 = vunpack.c.l.bf16 %v264
        %v392 = vunpack.c.h.bf16 %v264
        %v393 = vunpack.c.l.bf16 %v265
        %v394 = vunpack.c.h.bf16 %v265
        %v395 = vunpack.c.l.bf16 %v266
        %v396 = vunpack.c.h.bf16 %v266
        %v397 = vunpack.c.l.bf16 %v267
        %v398 = vunpack.c.h.bf16 %v267
        %v399 = vunpack.c.l.bf16 %v268
        %v400 = vunpack.c.h.bf16 %v268
        %v401 = vunpack.c.l.bf16 %v269
        %v402 = vunpack.c.h.bf16 %v269
        %v403 = vunpack.c.l.bf16 %v270
        %v404 = vunpack.c.h.bf16 %v270
        %v405 = vunpack.c.l.bf16 %v271
        %v406 = vunpack.c.h.bf16 %v271
        %v407 = vunpack.c.l.bf16 %v272
        %v408 = vunpack.c.h.bf16 %v272
        %v409 = vunpack.c.l.bf16 %v273
        %v410 = vunpack.c.h.bf16 %v273
        %v411 = vunpack.c.l.bf16 %v274
        %v412 = vunpack.c.h.bf16 %v274
        %v413 = vunpack.c.l.bf16 %v275
        %v414 = vunpack.c.h.bf16 %v275
        %v415 = vunpack.c.l.bf16 %v276
        %v416 = vunpack.c.h.bf16 %v276
        %v417 = vunpack.c.l.bf16 %v277
        %v418 = vunpack.c.h.bf16 %v277
        %v419 = vunpack.c.l.bf16 %v278
        %v420 = vunpack.c.h.bf16 %v278
        %v421 = vunpack.c.l.bf16 %v279
        %v422 = vunpack.c.h.bf16 %v279
        %v423 = vunpack.c.l.bf16 %v280
        %v424 = vunpack.c.h.bf16 %v280
        %v425 = vunpack.c.l.bf16 %v281
        %v426 = vunpack.c.h.bf16 %v281
        %v427 = vunpack.c.l.bf16 %v282
        %v428 = vunpack.c.h.bf16 %v282
        %v429 = vunpack.c.l.bf16 %v283
        %v430 = vunpack.c.h.bf16 %v283
        %v431 = vunpack.c.l.bf16 %v284
        %v432 = vunpack.c.h.bf16 %v284
        %v433 = vunpack.c.l.bf16 %v285
        %v434 = vunpack.c.h.bf16 %v285
        %v435 = vunpack.c.l.bf16 %v286
        %v436 = vunpack.c.h.bf16 %v286
        %v437 = vunpack.c.l.bf16 %v287
        %v438 = vunpack.c.h.bf16 %v287
        %v439 = vunpack.c.l.bf16 %v288
        %v440 = vunpack.c.h.bf16 %v288
        %v441 = vunpack.c.l.bf16 %v289
        %v442 = vunpack.c.h.bf16 %v289
        %v443 = vunpack.c.l.bf16 %v290
        %v444 = vunpack.c.h.bf16 %v290
        %v445 = vunpack.c.l.bf16 %v291
        %v446 = vunpack.c.h.bf16 %v291
        %v447 = vunpack.c.l.bf16 %v292
        %v448 = vunpack.c.h.bf16 %v292
        %v449 = vunpack.c.l.bf16 %v293
        %v450 = vunpack.c.h.bf16 %v293
        %v451 = vunpack.c.l.bf16 %v294
        %v452 = vunpack.c.h.bf16 %v294
        %v453 = vunpack.c.l.bf16 %v295
        %v454 = vunpack.c.h.bf16 %v295
        %v455 = vunpack.c.l.bf16 %v296
        %v456 = vunpack.c.h.bf16 %v296
        %v457 = vunpack.c.l.bf16 %v297
        %v458 = vunpack.c.h.bf16 %v297
        %v459 = vunpack.c.l.bf16 %v298
        %v460 = vunpack.c.h.bf16 %v298
        %v461 = vunpack.c.l.bf16 %v299
        %v462 = vunpack.c.h.bf16 %v299
        %v463 = vunpack.c.l.bf16 %v300
        %v464 = vunpack.c.h.bf16 %v300
        %v465 = vunpack.c.l.bf16 %v301
        %v466 = vunpack.c.h.bf16 %v301
        %v467 = vunpack.c.l.bf16 %v302
        %v468 = vunpack.c.h.bf16 %v302
        %v469 = vunpack.c.l.bf16 %v303
        %v470 = vunpack.c.h.bf16 %v303
        %v471 = vunpack.c.l.bf16 %v304
        %v472 = vunpack.c.h.bf16 %v304
        %v473 = vunpack.c.l.bf16 %v305
        %v474 = vunpack.c.h.bf16 %v305
        %v475 = vunpack.c.l.bf16 %v306
        %v476 = vunpack.c.h.bf16 %v306
        %v477 = vunpack.c.l.bf16 %v307
        %v478 = vunpack.c.h.bf16 %v307
        %v479 = vunpack.c.l.bf16 %v308
        %v480 = vunpack.c.h.bf16 %v308
        %v481 = vunpack.c.l.bf16 %v309
        %v482 = vunpack.c.h.bf16 %v309
        %v483 = vunpack.c.l.bf16 %v310
        %v484 = vunpack.c.h.bf16 %v310
        %v485 = vunpack.c.l.bf16 %v311
        %v486 = vunpack.c.h.bf16 %v311
        %v487 = vunpack.c.l.bf16 %v312
        %v488 = vunpack.c.h.bf16 %v312
        %v489 = vunpack.c.l.bf16 %v313
        %v490 = vunpack.c.h.bf16 %v313
        %v491 = vunpack.c.l.bf16 %v314
        %v492 = vunpack.c.h.bf16 %v314
        %v493 = vunpack.c.l.bf16 %v315
        %v494 = vunpack.c.h.bf16 %v315
        %v495 = vunpack.c.l.bf16 %v316
        %v496 = vunpack.c.h.bf16 %v316
        %v497 = vunpack.c.l.bf16 %v317
        %v498 = vunpack.c.h.bf16 %v317
        %v499 = vunpack.c.l.bf16 %v318
        %v500 = vunpack.c.h.bf16 %v318
        %v501 = vunpack.c.l.bf16 %v319
        %v502 = vunpack.c.h.bf16 %v319
        %v503 = vunpack.c.l.bf16 %v320
        %v504 = vunpack.c.h.bf16 %v320
        %v505 = vunpack.c.l.bf16 %v321
        %v506 = vunpack.c.h.bf16 %v321
        %v507 = vunpack.c.l.bf16 %v322
        %v508 = vunpack.c.h.bf16 %v322
        %v509 = vunpack.c.l.bf16 %v323
        %v510 = vunpack.c.h.bf16 %v323
        %v511 = vunpack.c.l.bf16 %v324
        %v512 = vunpack.c.h.bf16 %v324
        %v513 = vunpack.c.l.bf16 %v325
        %v514 = vunpack.c.h.bf16 %v325
        %v515 = vunpack.c.l.bf16 %v326
        %v516 = vunpack.c.h.bf16 %v326
        %v517 = vunpack.c.l.bf16 %v327
        %v518 = vunpack.c.h.bf16 %v327
        %v519 = vunpack.c.l.bf16 %v328
        %v520 = vunpack.c.h.bf16 %v328
        %v521 = vmul.f32 %v329, %v329
        %v522 = vmul.f32 %v330, %v330
        %v523 = vmul.f32 %v331, %v331
        %v524 = vmul.f32 %v332, %v332
        %v525 = vmul.f32 %v333, %v333
        %v526 = vmul.f32 %v334, %v334
        %v527 = vmul.f32 %v335, %v335
        %v528 = vmul.f32 %v336, %v336
        %v529 = vmul.f32 %v337, %v337
        %v530 = vmul.f32 %v338, %v338
        %v531 = vmul.f32 %v339, %v339
        %v532 = vmul.f32 %v340, %v340
        %v533 = vmul.f32 %v341, %v341
        %v534 = vmul.f32 %v342, %v342
        %v535 = vmul.f32 %v343, %v343
        %v536 = vmul.f32 %v344, %v344
        %v537 = vmul.f32 %v345, %v345
        %v538 = vmul.f32 %v346, %v346
        %v539 = vmul.f32 %v347, %v347
        %v540 = vmul.f32 %v348, %v348
        %v541 = vmul.f32 %v349, %v349
        %v542 = vmul.f32 %v350, %v350
        %v543 = vmul.f32 %v351, %v351
        %v544 = vmul.f32 %v352, %v352
        %v545 = vmul.f32 %v353, %v353
        %v546 = vmul.f32 %v354, %v354
        %v547 = vmul.f32 %v355, %v355
        %v548 = vmul.f32 %v356, %v356
        %v549 = vmul.f32 %v357, %v357
        %v550 = vmul.f32 %v358, %v358
        %v551 = vmul.f32 %v359, %v359
        %v552 = vmul.f32 %v360, %v360
        %v553 = vmul.f32 %v361, %v361
        %v554 = vmul.f32 %v362, %v362
        %v555 = vmul.f32 %v363, %v363
        %v556 = vmul.f32 %v364, %v364
        %v557 = vmul.f32 %v365, %v365
        %v558 = vmul.f32 %v366, %v366
        %v559 = vmul.f32 %v367, %v367
        %v560 = vmul.f32 %v368, %v368
        %v561 = vmul.f32 %v369, %v369
        %v562 = vmul.f32 %v370, %v370
        %v563 = vmul.f32 %v371, %v371
        %v564 = vmul.f32 %v372, %v372
        %v565 = vmul.f32 %v373, %v373
        %v566 = vmul.f32 %v374, %v374
        %v567 = vmul.f32 %v375, %v375
        %v568 = vmul.f32 %v376, %v376
        %v569 = vmul.f32 %v377, %v377
        %v570 = vmul.f32 %v378, %v378
        %v571 = vmul.f32 %v379, %v379
        %v572 = vmul.f32 %v380, %v380
        %v573 = vmul.f32 %v381, %v381
        %v574 = vmul.f32 %v382, %v382
        %v575 = vmul.f32 %v383, %v383
        %v576 = vmul.f32 %v384, %v384
        %v577 = vmul.f32 %v385, %v385
        %v578 = vmul.f32 %v386, %v386
        %v579 = vmul.f32 %v387, %v387
        %v580 = vmul.f32 %v388, %v388
        %v581 = vmul.f32 %v389, %v389
        %v582 = vmul.f32 %v390, %v390
        %v583 = vmul.f32 %v391, %v391
        %v584 = vmul.f32 %v392, %v392
        %v585 = vmul.f32 %v393, %v393
        %v586 = vmul.f32 %v394, %v394
        %v587 = vmul.f32 %v395, %v395
        %v588 = vmul.f32 %v396, %v396
        %v589 = vmul.f32 %v397, %v397
        %v590 = vmul.f32 %v398, %v398
        %v591 = vmul.f32 %v399, %v399
        %v592 = vmul.f32 %v400, %v400
        %v593 = vmul.f32 %v401, %v401
        %v594 = vmul.f32 %v402, %v402
        %v595 = vmul.f32 %v403, %v403
        %v596 = vmul.f32 %v404, %v404
        %v597 = vmul.f32 %v405, %v405
        %v598 = vmul.f32 %v406, %v406
        %v599 = vmul.f32 %v407, %v407
        %v600 = vmul.f32 %v408, %v408
        %v601 = vmul.f32 %v409, %v409
        %v602 = vmul.f32 %v410, %v410
        %v603 = vmul.f32 %v411, %v411
        %v604 = vmul.f32 %v412, %v412
        %v605 = vmul.f32 %v413, %v413
        %v606 = vmul.f32 %v414, %v414
        %v607 = vmul.f32 %v415, %v415
        %v608 = vmul.f32 %v416, %v416
        %v609 = vmul.f32 %v417, %v417
        %v610 = vmul.f32 %v418, %v418
        %v611 = vmul.f32 %v419, %v419
        %v612 = vmul.f32 %v420, %v420
        %v613 = vmul.f32 %v421, %v421
        %v614 = vmul.f32 %v422, %v422
        %v615 = vmul.f32 %v423, %v423
        %v616 = vmul.f32 %v424, %v424
        %v617 = vmul.f32 %v425, %v425
        %v618 = vmul.f32 %v426, %v426
        %v619 = vmul.f32 %v427, %v427
        %v620 = vmul.f32 %v428, %v428
        %v621 = vmul.f32 %v429, %v429
        %v622 = vmul.f32 %v430, %v430
        %v623 = vmul.f32 %v431, %v431
        %v624 = vmul.f32 %v432, %v432
        %v625 = vmul.f32 %v433, %v433
        %v626 = vmul.f32 %v434, %v434
        %v627 = vmul.f32 %v435, %v435
        %v628 = vmul.f32 %v436, %v436
        %v629 = vmul.f32 %v437, %v437
        %v630 = vmul.f32 %v438, %v438
        %v631 = vmul.f32 %v439, %v439
        %v632 = vmul.f32 %v440, %v440
        %v633 = vmul.f32 %v441, %v441
        %v634 = vmul.f32 %v442, %v442
        %v635 = vmul.f32 %v443, %v443
        %v636 = vmul.f32 %v444, %v444
        %v637 = vmul.f32 %v445, %v445
        %v638 = vmul.f32 %v446, %v446
        %v639 = vmul.f32 %v447, %v447
        %v640 = vmul.f32 %v448, %v448
        %v641 = vmul.f32 %v449, %v449
        %v642 = vmul.f32 %v450, %v450
        %v643 = vmul.f32 %v451, %v451
        %v644 = vmul.f32 %v452, %v452
        %v645 = vmul.f32 %v453, %v453
        %v646 = vmul.f32 %v454, %v454
        %v647 = vmul.f32 %v455, %v455
        %v648 = vmul.f32 %v456, %v456
        %v649 = vmul.f32 %v457, %v457
        %v650 = vmul.f32 %v458, %v458
        %v651 = vmul.f32 %v459, %v459
        %v652 = vmul.f32 %v460, %v460
        %v653 = vmul.f32 %v461, %v461
        %v654 = vmul.f32 %v462, %v462
        %v655 = vmul.f32 %v463, %v463
        %v656 = vmul.f32 %v464, %v464
        %v657 = vmul.f32 %v465, %v465
        %v658 = vmul.f32 %v466, %v466
        %v659 = vmul.f32 %v467, %v467
        %v660 = vmul.f32 %v468, %v468
        %v661 = vmul.f32 %v469, %v469
        %v662 = vmul.f32 %v470, %v470
        %v663 = vmul.f32 %v471, %v471
        %v664 = vmul.f32 %v472, %v472
        %v665 = vmul.f32 %v473, %v473
        %v666 = vmul.f32 %v474, %v474
        %v667 = vmul.f32 %v475, %v475
        %v668 = vmul.f32 %v476, %v476
        %v669 = vmul.f32 %v477, %v477
        %v670 = vmul.f32 %v478, %v478
        %v671 = vmul.f32 %v479, %v479
        %v672 = vmul.f32 %v480, %v480
        %v673 = vmul.f32 %v481, %v481
        %v674 = vmul.f32 %v482, %v482
        %v675 = vmul.f32 %v483, %v483
        %v676 = vmul.f32 %v484, %v484
        %v677 = vmul.f32 %v485, %v485
        %v678 = vmul.f32 %v486, %v486
        %v679 = vmul.f32 %v487, %v487
        %v680 = vmul.f32 %v488, %v488
        %v681 = vmul.f32 %v489, %v489
        %v682 = vmul.f32 %v490, %v490
        %v683 = vmul.f32 %v491, %v491
        %v684 = vmul.f32 %v492, %v492
        %v685 = vmul.f32 %v493, %v493
        %v686 = vmul.f32 %v494, %v494
        %v687 = vmul.f32 %v495, %v495
        %v688 = vmul.f32 %v496, %v496
        %v689 = vmul.f32 %v497, %v497
        %v690 = vmul.f32 %v498, %v498
        %v691 = vmul.f32 %v499, %v499
        %v692 = vmul.f32 %v500, %v500
        %v693 = vmul.f32 %v501, %v501
        %v694 = vmul.f32 %v502, %v502
        %v695 = vmul.f32 %v503, %v503
        %v696 = vmul.f32 %v504, %v504
        %v697 = vmul.f32 %v505, %v505
        %v698 = vmul.f32 %v506, %v506
        %v699 = vmul.f32 %v507, %v507
        %v700 = vmul.f32 %v508, %v508
        %v701 = vmul.f32 %v509, %v509
        %v702 = vmul.f32 %v510, %v510
        %v703 = vmul.f32 %v511, %v511
        %v704 = vmul.f32 %v512, %v512
        %v705 = vmul.f32 %v513, %v513
        %v706 = vmul.f32 %v514, %v514
        %v707 = vmul.f32 %v515, %v515
        %v708 = vmul.f32 %v516, %v516
        %v709 = vmul.f32 %v517, %v517
        %v710 = vmul.f32 %v518, %v518
        %v711 = vmul.f32 %v519, %v519
        %v712 = vmul.f32 %v520, %v520
        %v713 = vadd.f32 %v521, %v527
        %v714 = vadd.f32 %v713, %v533
        %v715 = vadd.f32 %v714, %v539
        %v716 = vadd.f32 %v715, %v545
        %v717 = vadd.f32 %v716, %v551
        %v718 = vadd.f32 %v717, %v557
        %v719 = vadd.f32 %v718, %v563
        %v720 = vadd.f32 %v719, %v569
        %v721 = vadd.f32 %v720, %v575
        %v722 = vadd.f32 %v721, %v581
        %v723 = vadd.f32 %v722, %v587
        %v724 = vadd.f32 %v723, %v593
        %v725 = vadd.f32 %v724, %v599
        %v726 = vadd.f32 %v725, %v605
        %v727 = vadd.f32 %v726, %v611
        %v728 = vadd.f32 %v727, %v617
        %v729 = vadd.f32 %v728, %v623
        %v730 = vadd.f32 %v729, %v629
        %v731 = vadd.f32 %v730, %v635
        %v732 = vadd.f32 %v731, %v641
        %v733 = vadd.f32 %v732, %v647
        %v734 = vadd.f32 %v733, %v653
        %v735 = vadd.f32 %v734, %v659
        %v736 = vadd.f32 %v735, %v665
        %v737 = vadd.f32 %v736, %v671
        %v738 = vadd.f32 %v737, %v677
        %v739 = vadd.f32 %v738, %v683
        %v740 = vadd.f32 %v739, %v689
        %v741 = vadd.f32 %v740, %v695
        %v742 = vadd.f32 %v741, %v701
        %v743 = vadd.f32 %v742, %v707
        %vm744 = vcmask 15360
        %v745 = vsel %vm744, %v522, 0.0
        %v746 = vsel %vm744, %v528, 0.0
        %v747 = vadd.f32 %v745, %v746
        %v748 = vsel %vm744, %v534, 0.0
        %v749 = vadd.f32 %v747, %v748
        %v750 = vsel %vm744, %v540, 0.0
        %v751 = vadd.f32 %v749, %v750
        %v752 = vsel %vm744, %v546, 0.0
        %v753 = vadd.f32 %v751, %v752
        %v754 = vsel %vm744, %v552, 0.0
        %v755 = vadd.f32 %v753, %v754
        %v756 = vsel %vm744, %v558, 0.0
        %v757 = vadd.f32 %v755, %v756
        %v758 = vsel %vm744, %v564, 0.0
        %v759 = vadd.f32 %v757, %v758
        %v760 = vsel %vm744, %v570, 0.0
        %v761 = vadd.f32 %v759, %v760
        %v762 = vsel %vm744, %v576, 0.0
        %v763 = vadd.f32 %v761, %v762
        %v764 = vsel %vm744, %v582, 0.0
        %v765 = vadd.f32 %v763, %v764
        %v766 = vsel %vm744, %v588, 0.0
        %v767 = vadd.f32 %v765, %v766
        %v768 = vsel %vm744, %v594, 0.0
        %v769 = vadd.f32 %v767, %v768
        %v770 = vsel %vm744, %v600, 0.0
        %v771 = vadd.f32 %v769, %v770
        %v772 = vsel %vm744, %v606, 0.0
        %v773 = vadd.f32 %v771, %v772
        %v774 = vsel %vm744, %v612, 0.0
        %v775 = vadd.f32 %v773, %v774
        %v776 = vsel %vm744, %v618, 0.0
        %v777 = vadd.f32 %v775, %v776
        %v778 = vsel %vm744, %v624, 0.0
        %v779 = vadd.f32 %v777, %v778
        %v780 = vsel %vm744, %v630, 0.0
        %v781 = vadd.f32 %v779, %v780
        %v782 = vsel %vm744, %v636, 0.0
        %v783 = vadd.f32 %v781, %v782
        %v784 = vsel %vm744, %v642, 0.0
        %v785 = vadd.f32 %v783, %v784
        %v786 = vsel %vm744, %v648, 0.0
        %v787 = vadd.f32 %v785, %v786
        %v788 = vsel %vm744, %v654, 0.0
        %v789 = vadd.f32 %v787, %v788
        %v790 = vsel %vm744, %v660, 0.0
        %v791 = vadd.f32 %v789, %v790
        %v792 = vsel %vm744, %v666, 0.0
        %v793 = vadd.f32 %v791, %v792
        %v794 = vsel %vm744, %v672, 0.0
        %v795 = vadd.f32 %v793, %v794
        %v796 = vsel %vm744, %v678, 0.0
        %v797 = vadd.f32 %v795, %v796
        %v798 = vsel %vm744, %v684, 0.0
        %v799 = vadd.f32 %v797, %v798
        %v800 = vsel %vm744, %v690, 0.0
        %v801 = vadd.f32 %v799, %v800
        %v802 = vsel %vm744, %v696, 0.0
        %v803 = vadd.f32 %v801, %v802
        %v804 = vsel %vm744, %v702, 0.0
        %v805 = vadd.f32 %v803, %v804
        %v806 = vsel %vm744, %v708, 0.0
        %v807 = vadd.f32 %v805, %v806
        %v808 = vadd.f32 %v523, %v529
        %v809 = vadd.f32 %v808, %v535
        %v810 = vadd.f32 %v809, %v541
        %v811 = vadd.f32 %v810, %v547
        %v812 = vadd.f32 %v811, %v553
        %v813 = vadd.f32 %v812, %v559
        %v814 = vadd.f32 %v813, %v565
        %v815 = vadd.f32 %v814, %v571
        %v816 = vadd.f32 %v815, %v577
        %v817 = vadd.f32 %v816, %v583
        %v818 = vadd.f32 %v817, %v589
        %v819 = vadd.f32 %v818, %v595
        %v820 = vadd.f32 %v819, %v601
        %v821 = vadd.f32 %v820, %v607
        %v822 = vadd.f32 %v821, %v613
        %v823 = vadd.f32 %v822, %v619
        %v824 = vadd.f32 %v823, %v625
        %v825 = vadd.f32 %v824, %v631
        %v826 = vadd.f32 %v825, %v637
        %v827 = vadd.f32 %v826, %v643
        %v828 = vadd.f32 %v827, %v649
        %v829 = vadd.f32 %v828, %v655
        %v830 = vadd.f32 %v829, %v661
        %v831 = vadd.f32 %v830, %v667
        %v832 = vadd.f32 %v831, %v673
        %v833 = vadd.f32 %v832, %v679
        %v834 = vadd.f32 %v833, %v685
        %v835 = vadd.f32 %v834, %v691
        %v836 = vadd.f32 %v835, %v697
        %v837 = vadd.f32 %v836, %v703
        %v838 = vadd.f32 %v837, %v709
        %v839 = vsel %vm744, %v524, 0.0
        %v840 = vsel %vm744, %v530, 0.0
        %v841 = vadd.f32 %v839, %v840
        %v842 = vsel %vm744, %v536, 0.0
        %v843 = vadd.f32 %v841, %v842
        %v844 = vsel %vm744, %v542, 0.0
        %v845 = vadd.f32 %v843, %v844
        %v846 = vsel %vm744, %v548, 0.0
        %v847 = vadd.f32 %v845, %v846
        %v848 = vsel %vm744, %v554, 0.0
        %v849 = vadd.f32 %v847, %v848
        %v850 = vsel %vm744, %v560, 0.0
        %v851 = vadd.f32 %v849, %v850
        %v852 = vsel %vm744, %v566, 0.0
        %v853 = vadd.f32 %v851, %v852
        %v854 = vsel %vm744, %v572, 0.0
        %v855 = vadd.f32 %v853, %v854
        %v856 = vsel %vm744, %v578, 0.0
        %v857 = vadd.f32 %v855, %v856
        %v858 = vsel %vm744, %v584, 0.0
        %v859 = vadd.f32 %v857, %v858
        %v860 = vsel %vm744, %v590, 0.0
        %v861 = vadd.f32 %v859, %v860
        %v862 = vsel %vm744, %v596, 0.0
        %v863 = vadd.f32 %v861, %v862
        %v864 = vsel %vm744, %v602, 0.0
        %v865 = vadd.f32 %v863, %v864
        %v866 = vsel %vm744, %v608, 0.0
        %v867 = vadd.f32 %v865, %v866
        %v868 = vsel %vm744, %v614, 0.0
        %v869 = vadd.f32 %v867, %v868
        %v870 = vsel %vm744, %v620, 0.0
        %v871 = vadd.f32 %v869, %v870
        %v872 = vsel %vm744, %v626, 0.0
        %v873 = vadd.f32 %v871, %v872
        %v874 = vsel %vm744, %v632, 0.0
        %v875 = vadd.f32 %v873, %v874
        %v876 = vsel %vm744, %v638, 0.0
        %v877 = vadd.f32 %v875, %v876
        %v878 = vsel %vm744, %v644, 0.0
        %v879 = vadd.f32 %v877, %v878
        %v880 = vsel %vm744, %v650, 0.0
        %v881 = vadd.f32 %v879, %v880
        %v882 = vsel %vm744, %v656, 0.0
        %v883 = vadd.f32 %v881, %v882
        %v884 = vsel %vm744, %v662, 0.0
        %v885 = vadd.f32 %v883, %v884
        %v886 = vsel %vm744, %v668, 0.0
        %v887 = vadd.f32 %v885, %v886
        %v888 = vsel %vm744, %v674, 0.0
        %v889 = vadd.f32 %v887, %v888
        %v890 = vsel %vm744, %v680, 0.0
        %v891 = vadd.f32 %v889, %v890
        %v892 = vsel %vm744, %v686, 0.0
        %v893 = vadd.f32 %v891, %v892
        %v894 = vsel %vm744, %v692, 0.0
        %v895 = vadd.f32 %v893, %v894
        %v896 = vsel %vm744, %v698, 0.0
        %v897 = vadd.f32 %v895, %v896
        %v898 = vsel %vm744, %v704, 0.0
        %v899 = vadd.f32 %v897, %v898
        %v900 = vsel %vm744, %v710, 0.0
        %v901 = vadd.f32 %v899, %v900
        %vm902 = vcmask 1041408
        %v903 = vsel %vm902, %v525, 0.0
        %v904 = vsel %vm902, %v531, 0.0
        %v905 = vadd.f32 %v903, %v904
        %v906 = vsel %vm902, %v537, 0.0
        %v907 = vadd.f32 %v905, %v906
        %v908 = vsel %vm902, %v543, 0.0
        %v909 = vadd.f32 %v907, %v908
        %v910 = vsel %vm902, %v549, 0.0
        %v911 = vadd.f32 %v909, %v910
        %v912 = vsel %vm902, %v555, 0.0
        %v913 = vadd.f32 %v911, %v912
        %v914 = vsel %vm902, %v561, 0.0
        %v915 = vadd.f32 %v913, %v914
        %v916 = vsel %vm902, %v567, 0.0
        %v917 = vadd.f32 %v915, %v916
        %v918 = vsel %vm902, %v573, 0.0
        %v919 = vadd.f32 %v917, %v918
        %v920 = vsel %vm902, %v579, 0.0
        %v921 = vadd.f32 %v919, %v920
        %v922 = vsel %vm902, %v585, 0.0
        %v923 = vadd.f32 %v921, %v922
        %v924 = vsel %vm902, %v591, 0.0
        %v925 = vadd.f32 %v923, %v924
        %v926 = vsel %vm902, %v597, 0.0
        %v927 = vadd.f32 %v925, %v926
        %v928 = vsel %vm902, %v603, 0.0
        %v929 = vadd.f32 %v927, %v928
        %v930 = vsel %vm902, %v609, 0.0
        %v931 = vadd.f32 %v929, %v930
        %v932 = vsel %vm902, %v615, 0.0
        %v933 = vadd.f32 %v931, %v932
        %v934 = vsel %vm902, %v621, 0.0
        %v935 = vadd.f32 %v933, %v934
        %v936 = vsel %vm902, %v627, 0.0
        %v937 = vadd.f32 %v935, %v936
        %v938 = vsel %vm902, %v633, 0.0
        %v939 = vadd.f32 %v937, %v938
        %v940 = vsel %vm902, %v639, 0.0
        %v941 = vadd.f32 %v939, %v940
        %v942 = vsel %vm902, %v645, 0.0
        %v943 = vadd.f32 %v941, %v942
        %v944 = vsel %vm902, %v651, 0.0
        %v945 = vadd.f32 %v943, %v944
        %v946 = vsel %vm902, %v657, 0.0
        %v947 = vadd.f32 %v945, %v946
        %v948 = vsel %vm902, %v663, 0.0
        %v949 = vadd.f32 %v947, %v948
        %v950 = vsel %vm902, %v669, 0.0
        %v951 = vadd.f32 %v949, %v950
        %v952 = vsel %vm902, %v675, 0.0
        %v953 = vadd.f32 %v951, %v952
        %v954 = vsel %vm902, %v681, 0.0
        %v955 = vadd.f32 %v953, %v954
        %v956 = vsel %vm902, %v687, 0.0
        %v957 = vadd.f32 %v955, %v956
        %v958 = vsel %vm902, %v693, 0.0
        %v959 = vadd.f32 %v957, %v958
        %v960 = vsel %vm902, %v699, 0.0
        %v961 = vadd.f32 %v959, %v960
        %v962 = vsel %vm902, %v705, 0.0
        %v963 = vadd.f32 %v961, %v962
        %v964 = vsel %vm902, %v711, 0.0
        %v965 = vadd.f32 %v963, %v964
        %vm966 = vcmask 9216
        %v967 = vsel %vm966, %v526, 0.0
        %v968 = vsel %vm966, %v532, 0.0
        %v969 = vadd.f32 %v967, %v968
        %v970 = vsel %vm966, %v538, 0.0
        %v971 = vadd.f32 %v969, %v970
        %v972 = vsel %vm966, %v544, 0.0
        %v973 = vadd.f32 %v971, %v972
        %v974 = vsel %vm966, %v550, 0.0
        %v975 = vadd.f32 %v973, %v974
        %v976 = vsel %vm966, %v556, 0.0
        %v977 = vadd.f32 %v975, %v976
        %v978 = vsel %vm966, %v562, 0.0
        %v979 = vadd.f32 %v977, %v978
        %v980 = vsel %vm966, %v568, 0.0
        %v981 = vadd.f32 %v979, %v980
        %v982 = vsel %vm966, %v574, 0.0
        %v983 = vadd.f32 %v981, %v982
        %v984 = vsel %vm966, %v580, 0.0
        %v985 = vadd.f32 %v983, %v984
        %v986 = vsel %vm966, %v586, 0.0
        %v987 = vadd.f32 %v985, %v986
        %v988 = vsel %vm966, %v592, 0.0
        %v989 = vadd.f32 %v987, %v988
        %v990 = vsel %vm966, %v598, 0.0
        %v991 = vadd.f32 %v989, %v990
        %v992 = vsel %vm966, %v604, 0.0
        %v993 = vadd.f32 %v991, %v992
        %v994 = vsel %vm966, %v610, 0.0
        %v995 = vadd.f32 %v993, %v994
        %v996 = vsel %vm966, %v616, 0.0
        %v997 = vadd.f32 %v995, %v996
        %v998 = vsel %vm966, %v622, 0.0
        %v999 = vadd.f32 %v997, %v998
        %v1000 = vsel %vm966, %v628, 0.0
        %v1001 = vadd.f32 %v999, %v1000
        %v1002 = vsel %vm966, %v634, 0.0
        %v1003 = vadd.f32 %v1001, %v1002
        %v1004 = vsel %vm966, %v640, 0.0
        %v1005 = vadd.f32 %v1003, %v1004
        %v1006 = vsel %vm966, %v646, 0.0
        %v1007 = vadd.f32 %v1005, %v1006
        %v1008 = vsel %vm966, %v652, 0.0
        %v1009 = vadd.f32 %v1007, %v1008
        %v1010 = vsel %vm966, %v658, 0.0
        %v1011 = vadd.f32 %v1009, %v1010
        %v1012 = vsel %vm966, %v664, 0.0
        %v1013 = vadd.f32 %v1011, %v1012
        %v1014 = vsel %vm966, %v670, 0.0
        %v1015 = vadd.f32 %v1013, %v1014
        %v1016 = vsel %vm966, %v676, 0.0
        %v1017 = vadd.f32 %v1015, %v1016
        %v1018 = vsel %vm966, %v682, 0.0
        %v1019 = vadd.f32 %v1017, %v1018
        %v1020 = vsel %vm966, %v688, 0.0
        %v1021 = vadd.f32 %v1019, %v1020
        %v1022 = vsel %vm966, %v694, 0.0
        %v1023 = vadd.f32 %v1021, %v1022
        %v1024 = vsel %vm966, %v700, 0.0
        %v1025 = vadd.f32 %v1023, %v1024
        %v1026 = vsel %vm966, %v706, 0.0
        %v1027 = vadd.f32 %v1025, %v1026
        %v1028 = vsel %vm966, %v712, 0.0
        %v1029 = vadd.f32 %v1027, %v1028
        %vm1094 = vcmask 1040384
        %v1095 = vrot.slane %v329, 7
        %v1096 = vrot.slane %v331, 7
        %v1097 = vsel %vm1094, %v1095, %v1096
        %v1098 = vrot.slane %v335, 7
        %v1099 = vrot.slane %v337, 7
        %v1100 = vsel %vm1094, %v1098, %v1099
        %v1101 = vrot.slane %v341, 7
        %v1102 = vrot.slane %v343, 7
        %v1103 = vsel %vm1094, %v1101, %v1102
        %v1104 = vrot.slane %v347, 7
        %v1105 = vrot.slane %v349, 7
        %v1106 = vsel %vm1094, %v1104, %v1105
        %v1107 = vrot.slane %v353, 7
        %v1108 = vrot.slane %v355, 7
        %v1109 = vsel %vm1094, %v1107, %v1108
        %v1110 = vrot.slane %v359, 7
        %v1111 = vrot.slane %v361, 7
        %v1112 = vsel %vm1094, %v1110, %v1111
        %v1113 = vrot.slane %v365, 7
        %v1114 = vrot.slane %v367, 7
        %v1115 = vsel %vm1094, %v1113, %v1114
        %v1116 = vrot.slane %v371, 7
        %v1117 = vrot.slane %v373, 7
        %v1118 = vsel %vm1094, %v1116, %v1117
        %v1119 = vrot.slane %v377, 7
        %v1120 = vrot.slane %v379, 7
        %v1121 = vsel %vm1094, %v1119, %v1120
        %v1122 = vrot.slane %v383, 7
        %v1123 = vrot.slane %v385, 7
        %v1124 = vsel %vm1094, %v1122, %v1123
        %v1125 = vrot.slane %v389, 7
        %v1126 = vrot.slane %v391, 7
        %v1127 = vsel %vm1094, %v1125, %v1126
        %v1128 = vrot.slane %v395, 7
        %v1129 = vrot.slane %v397, 7
        %v1130 = vsel %vm1094, %v1128, %v1129
        %v1131 = vrot.slane %v401, 7
        %v1132 = vrot.slane %v403, 7
        %v1133 = vsel %vm1094, %v1131, %v1132
        %v1134 = vrot.slane %v407, 7
        %v1135 = vrot.slane %v409, 7
        %v1136 = vsel %vm1094, %v1134, %v1135
        %v1137 = vrot.slane %v413, 7
        %v1138 = vrot.slane %v415, 7
        %v1139 = vsel %vm1094, %v1137, %v1138
        %v1140 = vrot.slane %v419, 7
        %v1141 = vrot.slane %v421, 7
        %v1142 = vsel %vm1094, %v1140, %v1141
        %v1143 = vrot.slane %v425, 7
        %v1144 = vrot.slane %v427, 7
        %v1145 = vsel %vm1094, %v1143, %v1144
        %v1146 = vrot.slane %v431, 7
        %v1147 = vrot.slane %v433, 7
        %v1148 = vsel %vm1094, %v1146, %v1147
        %v1149 = vrot.slane %v437, 7
        %v1150 = vrot.slane %v439, 7
        %v1151 = vsel %vm1094, %v1149, %v1150
        %v1152 = vrot.slane %v443, 7
        %v1153 = vrot.slane %v445, 7
        %v1154 = vsel %vm1094, %v1152, %v1153
        %v1155 = vrot.slane %v449, 7
        %v1156 = vrot.slane %v451, 7
        %v1157 = vsel %vm1094, %v1155, %v1156
        %v1158 = vrot.slane %v455, 7
        %v1159 = vrot.slane %v457, 7
        %v1160 = vsel %vm1094, %v1158, %v1159
        %v1161 = vrot.slane %v461, 7
        %v1162 = vrot.slane %v463, 7
        %v1163 = vsel %vm1094, %v1161, %v1162
        %v1164 = vrot.slane %v467, 7
        %v1165 = vrot.slane %v469, 7
        %v1166 = vsel %vm1094, %v1164, %v1165
        %v1167 = vrot.slane %v473, 7
        %v1168 = vrot.slane %v475, 7
        %v1169 = vsel %vm1094, %v1167, %v1168
        %v1170 = vrot.slane %v479, 7
        %v1171 = vrot.slane %v481, 7
        %v1172 = vsel %vm1094, %v1170, %v1171
        %v1173 = vrot.slane %v485, 7
        %v1174 = vrot.slane %v487, 7
        %v1175 = vsel %vm1094, %v1173, %v1174
        %v1176 = vrot.slane %v491, 7
        %v1177 = vrot.slane %v493, 7
        %v1178 = vsel %vm1094, %v1176, %v1177
        %v1179 = vrot.slane %v497, 7
        %v1180 = vrot.slane %v499, 7
        %v1181 = vsel %vm1094, %v1179, %v1180
        %v1182 = vrot.slane %v503, 7
        %v1183 = vrot.slane %v505, 7
        %v1184 = vsel %vm1094, %v1182, %v1183
        %v1185 = vrot.slane %v509, 7
        %v1186 = vrot.slane %v511, 7
        %v1187 = vsel %vm1094, %v1185, %v1186
        %v1188 = vrot.slane %v515, 7
        %v1189 = vrot.slane %v517, 7
        %v1190 = vsel %vm1094, %v1188, %v1189
        %1191 = vrot.lane.b32.xlu0 %v1095, 1
        %v1192 = vpop.permute.xlu0 %1191
        %1193 = vrot.lane.b32.xlu0 %v1097, 1
        %v1194 = vpop.permute.xlu0 %1193
        %1195 = vrot.lane.b32.xlu0 %v1096, 1
        %v1196 = vpop.permute.xlu0 %1195
        %1197 = vrot.lane.b32.xlu0 %v1098, 1
        %v1198 = vpop.permute.xlu0 %1197
        %1199 = vrot.lane.b32.xlu0 %v1100, 1
        %v1200 = vpop.permute.xlu0 %1199
        %1201 = vrot.lane.b32.xlu0 %v1099, 1
        %v1202 = vpop.permute.xlu0 %1201
        %1203 = vrot.lane.b32.xlu0 %v1101, 1
        %v1204 = vpop.permute.xlu0 %1203
        %1205 = vrot.lane.b32.xlu0 %v1103, 1
        %v1206 = vpop.permute.xlu0 %1205
        %1207 = vrot.lane.b32.xlu0 %v1102, 1
        %v1208 = vpop.permute.xlu0 %1207
        %1209 = vrot.lane.b32.xlu0 %v1104, 1
        %v1210 = vpop.permute.xlu0 %1209
        %1211 = vrot.lane.b32.xlu0 %v1106, 1
        %v1212 = vpop.permute.xlu0 %1211
        %1213 = vrot.lane.b32.xlu0 %v1105, 1
        %v1214 = vpop.permute.xlu0 %1213
        %1215 = vrot.lane.b32.xlu0 %v1107, 1
        %v1216 = vpop.permute.xlu0 %1215
        %1217 = vrot.lane.b32.xlu0 %v1109, 1
        %v1218 = vpop.permute.xlu0 %1217
        %1219 = vrot.lane.b32.xlu0 %v1108, 1
        %v1220 = vpop.permute.xlu0 %1219
        %1221 = vrot.lane.b32.xlu0 %v1110, 1
        %v1222 = vpop.permute.xlu0 %1221
        %1223 = vrot.lane.b32.xlu0 %v1112, 1
        %v1224 = vpop.permute.xlu0 %1223
        %1225 = vrot.lane.b32.xlu0 %v1111, 1
        %v1226 = vpop.permute.xlu0 %1225
        %1227 = vrot.lane.b32.xlu0 %v1113, 1
        %v1228 = vpop.permute.xlu0 %1227
        %1229 = vrot.lane.b32.xlu0 %v1115, 1
        %v1230 = vpop.permute.xlu0 %1229
        %1231 = vrot.lane.b32.xlu0 %v1114, 1
        %v1232 = vpop.permute.xlu0 %1231
        %1233 = vrot.lane.b32.xlu0 %v1116, 1
        %v1234 = vpop.permute.xlu0 %1233
        %1235 = vrot.lane.b32.xlu0 %v1118, 1
        %v1236 = vpop.permute.xlu0 %1235
        %1237 = vrot.lane.b32.xlu0 %v1117, 1
        %v1238 = vpop.permute.xlu0 %1237
        %1239 = vrot.lane.b32.xlu0 %v1119, 1
        %v1240 = vpop.permute.xlu0 %1239
        %1241 = vrot.lane.b32.xlu0 %v1121, 1
        %v1242 = vpop.permute.xlu0 %1241
        %1243 = vrot.lane.b32.xlu0 %v1120, 1
        %v1244 = vpop.permute.xlu0 %1243
        %1245 = vrot.lane.b32.xlu0 %v1122, 1
        %v1246 = vpop.permute.xlu0 %1245
        %1247 = vrot.lane.b32.xlu0 %v1124, 1
        %v1248 = vpop.permute.xlu0 %1247
        %1249 = vrot.lane.b32.xlu0 %v1123, 1
        %v1250 = vpop.permute.xlu0 %1249
        %1251 = vrot.lane.b32.xlu0 %v1125, 1
        %v1252 = vpop.permute.xlu0 %1251
        %1253 = vrot.lane.b32.xlu0 %v1127, 1
        %v1254 = vpop.permute.xlu0 %1253
        %1255 = vrot.lane.b32.xlu0 %v1126, 1
        %v1256 = vpop.permute.xlu0 %1255
        %1257 = vrot.lane.b32.xlu0 %v1128, 1
        %v1258 = vpop.permute.xlu0 %1257
        %1259 = vrot.lane.b32.xlu0 %v1130, 1
        %v1260 = vpop.permute.xlu0 %1259
        %1261 = vrot.lane.b32.xlu0 %v1129, 1
        %v1262 = vpop.permute.xlu0 %1261
        %1263 = vrot.lane.b32.xlu0 %v1131, 1
        %v1264 = vpop.permute.xlu0 %1263
        %1265 = vrot.lane.b32.xlu0 %v1133, 1
        %v1266 = vpop.permute.xlu0 %1265
        %1267 = vrot.lane.b32.xlu0 %v1132, 1
        %v1268 = vpop.permute.xlu0 %1267
        %1269 = vrot.lane.b32.xlu0 %v1134, 1
        %v1270 = vpop.permute.xlu0 %1269
        %1271 = vrot.lane.b32.xlu0 %v1136, 1
        %v1272 = vpop.permute.xlu0 %1271
        %1273 = vrot.lane.b32.xlu0 %v1135, 1
        %v1274 = vpop.permute.xlu0 %1273
        %1275 = vrot.lane.b32.xlu0 %v1137, 1
        %v1276 = vpop.permute.xlu0 %1275
        %1277 = vrot.lane.b32.xlu0 %v1139, 1
        %v1278 = vpop.permute.xlu0 %1277
        %1279 = vrot.lane.b32.xlu0 %v1138, 1
        %v1280 = vpop.permute.xlu0 %1279
        %1281 = vrot.lane.b32.xlu0 %v1140, 1
        %v1282 = vpop.permute.xlu0 %1281
        %1283 = vrot.lane.b32.xlu0 %v1142, 1
        %v1284 = vpop.permute.xlu0 %1283
        %1285 = vrot.lane.b32.xlu0 %v1141, 1
        %v1286 = vpop.permute.xlu0 %1285
        %1287 = vrot.lane.b32.xlu0 %v1143, 1
        %v1288 = vpop.permute.xlu0 %1287
        %1289 = vrot.lane.b32.xlu0 %v1145, 1
        %v1290 = vpop.permute.xlu0 %1289
        %1291 = vrot.lane.b32.xlu0 %v1144, 1
        %v1292 = vpop.permute.xlu0 %1291
        %1293 = vrot.lane.b32.xlu0 %v1146, 1
        %v1294 = vpop.permute.xlu0 %1293
        %1295 = vrot.lane.b32.xlu0 %v1148, 1
        %v1296 = vpop.permute.xlu0 %1295
        %1297 = vrot.lane.b32.xlu0 %v1147, 1
        %v1298 = vpop.permute.xlu0 %1297
        %1299 = vrot.lane.b32.xlu0 %v1149, 1
        %v1300 = vpop.permute.xlu0 %1299
        %1301 = vrot.lane.b32.xlu0 %v1151, 1
        %v1302 = vpop.permute.xlu0 %1301
        %1303 = vrot.lane.b32.xlu0 %v1150, 1
        %v1304 = vpop.permute.xlu0 %1303
        %1305 = vrot.lane.b32.xlu0 %v1152, 1
        %v1306 = vpop.permute.xlu0 %1305
        %1307 = vrot.lane.b32.xlu0 %v1154, 1
        %v1308 = vpop.permute.xlu0 %1307
        %1309 = vrot.lane.b32.xlu0 %v1153, 1
        %v1310 = vpop.permute.xlu0 %1309
        %1311 = vrot.lane.b32.xlu0 %v1155, 1
        %v1312 = vpop.permute.xlu0 %1311
        %1313 = vrot.lane.b32.xlu0 %v1157, 1
        %v1314 = vpop.permute.xlu0 %1313
        %1315 = vrot.lane.b32.xlu0 %v1156, 1
        %v1316 = vpop.permute.xlu0 %1315
        %1317 = vrot.lane.b32.xlu0 %v1158, 1
        %v1318 = vpop.permute.xlu0 %1317
        %1319 = vrot.lane.b32.xlu0 %v1160, 1
        %v1320 = vpop.permute.xlu0 %1319
        %1321 = vrot.lane.b32.xlu0 %v1159, 1
        %v1322 = vpop.permute.xlu0 %1321
        %1323 = vrot.lane.b32.xlu0 %v1161, 1
        %v1324 = vpop.permute.xlu0 %1323
        %1325 = vrot.lane.b32.xlu0 %v1163, 1
        %v1326 = vpop.permute.xlu0 %1325
        %1327 = vrot.lane.b32.xlu0 %v1162, 1
        %v1328 = vpop.permute.xlu0 %1327
        %1329 = vrot.lane.b32.xlu0 %v1164, 1
        %v1330 = vpop.permute.xlu0 %1329
        %1331 = vrot.lane.b32.xlu0 %v1166, 1
        %v1332 = vpop.permute.xlu0 %1331
        %1333 = vrot.lane.b32.xlu0 %v1165, 1
        %v1334 = vpop.permute.xlu0 %1333
        %1335 = vrot.lane.b32.xlu0 %v1167, 1
        %v1336 = vpop.permute.xlu0 %1335
        %1337 = vrot.lane.b32.xlu0 %v1169, 1
        %v1338 = vpop.permute.xlu0 %1337
        %1339 = vrot.lane.b32.xlu0 %v1168, 1
        %v1340 = vpop.permute.xlu0 %1339
        %1341 = vrot.lane.b32.xlu0 %v1170, 1
        %v1342 = vpop.permute.xlu0 %1341
        %1343 = vrot.lane.b32.xlu0 %v1172, 1
        %v1344 = vpop.permute.xlu0 %1343
        %1345 = vrot.lane.b32.xlu0 %v1171, 1
        %v1346 = vpop.permute.xlu0 %1345
        %1347 = vrot.lane.b32.xlu0 %v1173, 1
        %v1348 = vpop.permute.xlu0 %1347
        %1349 = vrot.lane.b32.xlu0 %v1175, 1
        %v1350 = vpop.permute.xlu0 %1349
        %1351 = vrot.lane.b32.xlu0 %v1174, 1
        %v1352 = vpop.permute.xlu0 %1351
        %1353 = vrot.lane.b32.xlu0 %v1176, 1
        %v1354 = vpop.permute.xlu0 %1353
        %1355 = vrot.lane.b32.xlu0 %v1178, 1
        %v1356 = vpop.permute.xlu0 %1355
        %1357 = vrot.lane.b32.xlu0 %v1177, 1
        %v1358 = vpop.permute.xlu0 %1357
        %1359 = vrot.lane.b32.xlu0 %v1179, 1
        %v1360 = vpop.permute.xlu0 %1359
        %1361 = vrot.lane.b32.xlu0 %v1181, 1
        %v1362 = vpop.permute.xlu0 %1361
        %1363 = vrot.lane.b32.xlu0 %v1180, 1
        %v1364 = vpop.permute.xlu0 %1363
        %1365 = vrot.lane.b32.xlu0 %v1182, 1
        %v1366 = vpop.permute.xlu0 %1365
        %1367 = vrot.lane.b32.xlu0 %v1184, 1
        %v1368 = vpop.permute.xlu0 %1367
        %1369 = vrot.lane.b32.xlu0 %v1183, 1
        %v1370 = vpop.permute.xlu0 %1369
        %1371 = vrot.lane.b32.xlu0 %v1185, 1
        %v1372 = vpop.permute.xlu0 %1371
        %1373 = vrot.lane.b32.xlu0 %v1187, 1
        %v1374 = vpop.permute.xlu0 %1373
        %1375 = vrot.lane.b32.xlu0 %v1186, 1
        %v1376 = vpop.permute.xlu0 %1375
        %1377 = vrot.lane.b32.xlu0 %v1188, 1
        %v1378 = vpop.permute.xlu0 %1377
        %1379 = vrot.lane.b32.xlu0 %v1190, 1
        %v1380 = vpop.permute.xlu0 %1379
        %1381 = vrot.lane.b32.xlu0 %v1189, 1
        %v1382 = vpop.permute.xlu0 %1381
        %v1479 = vmul.f32 %v329, %v1192
        %v1480 = vmul.f32 %v330, %v1192
        %v1481 = vmul.f32 %v331, %v1194
        %v1482 = vmul.f32 %v332, %v1194
        %v1483 = vmul.f32 %v333, %v1196
        %v1484 = vmul.f32 %v334, %v1196
        %v1485 = vmul.f32 %v335, %v1198
        %v1486 = vmul.f32 %v336, %v1198
        %v1487 = vmul.f32 %v337, %v1200
        %v1488 = vmul.f32 %v338, %v1200
        %v1489 = vmul.f32 %v339, %v1202
        %v1490 = vmul.f32 %v340, %v1202
        %v1491 = vmul.f32 %v341, %v1204
        %v1492 = vmul.f32 %v342, %v1204
        %v1493 = vmul.f32 %v343, %v1206
        %v1494 = vmul.f32 %v344, %v1206
        %v1495 = vmul.f32 %v345, %v1208
        %v1496 = vmul.f32 %v346, %v1208
        %v1497 = vmul.f32 %v347, %v1210
        %v1498 = vmul.f32 %v348, %v1210
        %v1499 = vmul.f32 %v349, %v1212
        %v1500 = vmul.f32 %v350, %v1212
        %v1501 = vmul.f32 %v351, %v1214
        %v1502 = vmul.f32 %v352, %v1214
        %v1503 = vmul.f32 %v353, %v1216
        %v1504 = vmul.f32 %v354, %v1216
        %v1505 = vmul.f32 %v355, %v1218
        %v1506 = vmul.f32 %v356, %v1218
        %v1507 = vmul.f32 %v357, %v1220
        %v1508 = vmul.f32 %v358, %v1220
        %v1509 = vmul.f32 %v359, %v1222
        %v1510 = vmul.f32 %v360, %v1222
        %v1511 = vmul.f32 %v361, %v1224
        %v1512 = vmul.f32 %v362, %v1224
        %v1513 = vmul.f32 %v363, %v1226
        %v1514 = vmul.f32 %v364, %v1226
        %v1515 = vmul.f32 %v365, %v1228
        %v1516 = vmul.f32 %v366, %v1228
        %v1517 = vmul.f32 %v367, %v1230
        %v1518 = vmul.f32 %v368, %v1230
        %v1519 = vmul.f32 %v369, %v1232
        %v1520 = vmul.f32 %v370, %v1232
        %v1521 = vmul.f32 %v371, %v1234
        %v1522 = vmul.f32 %v372, %v1234
        %v1523 = vmul.f32 %v373, %v1236
        %v1524 = vmul.f32 %v374, %v1236
        %v1525 = vmul.f32 %v375, %v1238
        %v1526 = vmul.f32 %v376, %v1238
        %v1527 = vmul.f32 %v377, %v1240
        %v1528 = vmul.f32 %v378, %v1240
        %v1529 = vmul.f32 %v379, %v1242
        %v1530 = vmul.f32 %v380, %v1242
        %v1531 = vmul.f32 %v381, %v1244
        %v1532 = vmul.f32 %v382, %v1244
        %v1533 = vmul.f32 %v383, %v1246
        %v1534 = vmul.f32 %v384, %v1246
        %v1535 = vmul.f32 %v385, %v1248
        %v1536 = vmul.f32 %v386, %v1248
        %v1537 = vmul.f32 %v387, %v1250
        %v1538 = vmul.f32 %v388, %v1250
        %v1539 = vmul.f32 %v389, %v1252
        %v1540 = vmul.f32 %v390, %v1252
        %v1541 = vmul.f32 %v391, %v1254
        %v1542 = vmul.f32 %v392, %v1254
        %v1543 = vmul.f32 %v393, %v1256
        %v1544 = vmul.f32 %v394, %v1256
        %v1545 = vmul.f32 %v395, %v1258
        %v1546 = vmul.f32 %v396, %v1258
        %v1547 = vmul.f32 %v397, %v1260
        %v1548 = vmul.f32 %v398, %v1260
        %v1549 = vmul.f32 %v399, %v1262
        %v1550 = vmul.f32 %v400, %v1262
        %v1551 = vmul.f32 %v401, %v1264
        %v1552 = vmul.f32 %v402, %v1264
        %v1553 = vmul.f32 %v403, %v1266
        %v1554 = vmul.f32 %v404, %v1266
        %v1555 = vmul.f32 %v405, %v1268
        %v1556 = vmul.f32 %v406, %v1268
        %v1557 = vmul.f32 %v407, %v1270
        %v1558 = vmul.f32 %v408, %v1270
        %v1559 = vmul.f32 %v409, %v1272
        %v1560 = vmul.f32 %v410, %v1272
        %v1561 = vmul.f32 %v411, %v1274
        %v1562 = vmul.f32 %v412, %v1274
        %v1563 = vmul.f32 %v413, %v1276
        %v1564 = vmul.f32 %v414, %v1276
        %v1565 = vmul.f32 %v415, %v1278
        %v1566 = vmul.f32 %v416, %v1278
        %v1567 = vmul.f32 %v417, %v1280
        %v1568 = vmul.f32 %v418, %v1280
        %v1569 = vmul.f32 %v419, %v1282
        %v1570 = vmul.f32 %v420, %v1282
        %v1571 = vmul.f32 %v421, %v1284
        %v1572 = vmul.f32 %v422, %v1284
        %v1573 = vmul.f32 %v423, %v1286
        %v1574 = vmul.f32 %v424, %v1286
        %v1575 = vmul.f32 %v425, %v1288
        %v1576 = vmul.f32 %v426, %v1288
        %v1577 = vmul.f32 %v427, %v1290
        %v1578 = vmul.f32 %v428, %v1290
        %v1579 = vmul.f32 %v429, %v1292
        %v1580 = vmul.f32 %v430, %v1292
        %v1581 = vmul.f32 %v431, %v1294
        %v1582 = vmul.f32 %v432, %v1294
        %v1583 = vmul.f32 %v433, %v1296
        %v1584 = vmul.f32 %v434, %v1296
        %v1585 = vmul.f32 %v435, %v1298
        %v1586 = vmul.f32 %v436, %v1298
        %v1587 = vmul.f32 %v437, %v1300
        %v1588 = vmul.f32 %v438, %v1300
        %v1589 = vmul.f32 %v439, %v1302
        %v1590 = vmul.f32 %v440, %v1302
        %v1591 = vmul.f32 %v441, %v1304
        %v1592 = vmul.f32 %v442, %v1304
        %v1593 = vmul.f32 %v443, %v1306
        %v1594 = vmul.f32 %v444, %v1306
        %v1595 = vmul.f32 %v445, %v1308
        %v1596 = vmul.f32 %v446, %v1308
        %v1597 = vmul.f32 %v447, %v1310
        %v1598 = vmul.f32 %v448, %v1310
        %v1599 = vmul.f32 %v449, %v1312
        %v1600 = vmul.f32 %v450, %v1312
        %v1601 = vmul.f32 %v451, %v1314
        %v1602 = vmul.f32 %v452, %v1314
        %v1603 = vmul.f32 %v453, %v1316
        %v1604 = vmul.f32 %v454, %v1316
        %v1605 = vmul.f32 %v455, %v1318
        %v1606 = vmul.f32 %v456, %v1318
        %v1607 = vmul.f32 %v457, %v1320
        %v1608 = vmul.f32 %v458, %v1320
        %v1609 = vmul.f32 %v459, %v1322
        %v1610 = vmul.f32 %v460, %v1322
        %v1611 = vmul.f32 %v461, %v1324
        %v1612 = vmul.f32 %v462, %v1324
        %v1613 = vmul.f32 %v463, %v1326
        %v1614 = vmul.f32 %v464, %v1326
        %v1615 = vmul.f32 %v465, %v1328
        %v1616 = vmul.f32 %v466, %v1328
        %v1617 = vmul.f32 %v467, %v1330
        %v1618 = vmul.f32 %v468, %v1330
        %v1619 = vmul.f32 %v469, %v1332
        %v1620 = vmul.f32 %v470, %v1332
        %v1621 = vmul.f32 %v471, %v1334
        %v1622 = vmul.f32 %v472, %v1334
        %v1623 = vmul.f32 %v473, %v1336
        %v1624 = vmul.f32 %v474, %v1336
        %v1625 = vmul.f32 %v475, %v1338
        %v1626 = vmul.f32 %v476, %v1338
        %v1627 = vmul.f32 %v477, %v1340
        %v1628 = vmul.f32 %v478, %v1340
        %v1629 = vmul.f32 %v479, %v1342
        %v1630 = vmul.f32 %v480, %v1342
        %v1631 = vmul.f32 %v481, %v1344
        %v1632 = vmul.f32 %v482, %v1344
        %v1633 = vmul.f32 %v483, %v1346
        %v1634 = vmul.f32 %v484, %v1346
        %v1635 = vmul.f32 %v485, %v1348
        %v1636 = vmul.f32 %v486, %v1348
        %v1637 = vmul.f32 %v487, %v1350
        %v1638 = vmul.f32 %v488, %v1350
        %v1639 = vmul.f32 %v489, %v1352
        %v1640 = vmul.f32 %v490, %v1352
        %v1641 = vmul.f32 %v491, %v1354
        %v1642 = vmul.f32 %v492, %v1354
        %v1643 = vmul.f32 %v493, %v1356
        %v1644 = vmul.f32 %v494, %v1356
        %v1645 = vmul.f32 %v495, %v1358
        %v1646 = vmul.f32 %v496, %v1358
        %v1647 = vmul.f32 %v497, %v1360
        %v1648 = vmul.f32 %v498, %v1360
        %v1649 = vmul.f32 %v499, %v1362
        %v1650 = vmul.f32 %v500, %v1362
        %v1651 = vmul.f32 %v501, %v1364
        %v1652 = vmul.f32 %v502, %v1364
        %v1653 = vmul.f32 %v503, %v1366
        %v1654 = vmul.f32 %v504, %v1366
        %v1655 = vmul.f32 %v505, %v1368
        %v1656 = vmul.f32 %v506, %v1368
        %v1657 = vmul.f32 %v507, %v1370
        %v1658 = vmul.f32 %v508, %v1370
        %v1659 = vmul.f32 %v509, %v1372
        %v1660 = vmul.f32 %v510, %v1372
        %v1661 = vmul.f32 %v511, %v1374
        %v1662 = vmul.f32 %v512, %v1374
        %v1663 = vmul.f32 %v513, %v1376
        %v1664 = vmul.f32 %v514, %v1376
        %v1665 = vmul.f32 %v515, %v1378
        %v1666 = vmul.f32 %v516, %v1378
        %v1667 = vmul.f32 %v517, %v1380
        %v1668 = vmul.f32 %v518, %v1380
        %v1669 = vmul.f32 %v519, %v1382
        %v1670 = vmul.f32 %v520, %v1382
        %vm1671 = vcmask 1047561
        %v1672 = vsel %vm1671, %v1479, 0.0
        %v1673 = vsel %vm1671, %v1485, 0.0
        %v1674 = vadd.f32 %v1672, %v1673
        %v1675 = vsel %vm1671, %v1491, 0.0
        %v1676 = vadd.f32 %v1674, %v1675
        %v1677 = vsel %vm1671, %v1497, 0.0
        %v1678 = vadd.f32 %v1676, %v1677
        %v1679 = vsel %vm1671, %v1503, 0.0
        %v1680 = vadd.f32 %v1678, %v1679
        %v1681 = vsel %vm1671, %v1509, 0.0
        %v1682 = vadd.f32 %v1680, %v1681
        %v1683 = vsel %vm1671, %v1515, 0.0
        %v1684 = vadd.f32 %v1682, %v1683
        %v1685 = vsel %vm1671, %v1521, 0.0
        %v1686 = vadd.f32 %v1684, %v1685
        %v1687 = vsel %vm1671, %v1527, 0.0
        %v1688 = vadd.f32 %v1686, %v1687
        %v1689 = vsel %vm1671, %v1533, 0.0
        %v1690 = vadd.f32 %v1688, %v1689
        %v1691 = vsel %vm1671, %v1539, 0.0
        %v1692 = vadd.f32 %v1690, %v1691
        %v1693 = vsel %vm1671, %v1545, 0.0
        %v1694 = vadd.f32 %v1692, %v1693
        %v1695 = vsel %vm1671, %v1551, 0.0
        %v1696 = vadd.f32 %v1694, %v1695
        %v1697 = vsel %vm1671, %v1557, 0.0
        %v1698 = vadd.f32 %v1696, %v1697
        %v1699 = vsel %vm1671, %v1563, 0.0
        %v1700 = vadd.f32 %v1698, %v1699
        %v1701 = vsel %vm1671, %v1569, 0.0
        %v1702 = vadd.f32 %v1700, %v1701
        %v1703 = vsel %vm1671, %v1575, 0.0
        %v1704 = vadd.f32 %v1702, %v1703
        %v1705 = vsel %vm1671, %v1581, 0.0
        %v1706 = vadd.f32 %v1704, %v1705
        %v1707 = vsel %vm1671, %v1587, 0.0
        %v1708 = vadd.f32 %v1706, %v1707
        %v1709 = vsel %vm1671, %v1593, 0.0
        %v1710 = vadd.f32 %v1708, %v1709
        %v1711 = vsel %vm1671, %v1599, 0.0
        %v1712 = vadd.f32 %v1710, %v1711
        %v1713 = vsel %vm1671, %v1605, 0.0
        %v1714 = vadd.f32 %v1712, %v1713
        %v1715 = vsel %vm1671, %v1611, 0.0
        %v1716 = vadd.f32 %v1714, %v1715
        %v1717 = vsel %vm1671, %v1617, 0.0
        %v1718 = vadd.f32 %v1716, %v1717
        %v1719 = vsel %vm1671, %v1623, 0.0
        %v1720 = vadd.f32 %v1718, %v1719
        %v1721 = vsel %vm1671, %v1629, 0.0
        %v1722 = vadd.f32 %v1720, %v1721
        %v1723 = vsel %vm1671, %v1635, 0.0
        %v1724 = vadd.f32 %v1722, %v1723
        %v1725 = vsel %vm1671, %v1641, 0.0
        %v1726 = vadd.f32 %v1724, %v1725
        %v1727 = vsel %vm1671, %v1647, 0.0
        %v1728 = vadd.f32 %v1726, %v1727
        %v1729 = vsel %vm1671, %v1653, 0.0
        %v1730 = vadd.f32 %v1728, %v1729
        %v1731 = vsel %vm1671, %v1659, 0.0
        %v1732 = vadd.f32 %v1730, %v1731
        %v1733 = vsel %vm1671, %v1665, 0.0
        %v1734 = vadd.f32 %v1732, %v1733
        %vm1735 = vcmask 7169
        %v1736 = vsel %vm1735, %v1480, 0.0
        %v1737 = vsel %vm1735, %v1486, 0.0
        %v1738 = vadd.f32 %v1736, %v1737
        %v1739 = vsel %vm1735, %v1492, 0.0
        %v1740 = vadd.f32 %v1738, %v1739
        %v1741 = vsel %vm1735, %v1498, 0.0
        %v1742 = vadd.f32 %v1740, %v1741
        %v1743 = vsel %vm1735, %v1504, 0.0
        %v1744 = vadd.f32 %v1742, %v1743
        %v1745 = vsel %vm1735, %v1510, 0.0
        %v1746 = vadd.f32 %v1744, %v1745
        %v1747 = vsel %vm1735, %v1516, 0.0
        %v1748 = vadd.f32 %v1746, %v1747
        %v1749 = vsel %vm1735, %v1522, 0.0
        %v1750 = vadd.f32 %v1748, %v1749
        %v1751 = vsel %vm1735, %v1528, 0.0
        %v1752 = vadd.f32 %v1750, %v1751
        %v1753 = vsel %vm1735, %v1534, 0.0
        %v1754 = vadd.f32 %v1752, %v1753
        %v1755 = vsel %vm1735, %v1540, 0.0
        %v1756 = vadd.f32 %v1754, %v1755
        %v1757 = vsel %vm1735, %v1546, 0.0
        %v1758 = vadd.f32 %v1756, %v1757
        %v1759 = vsel %vm1735, %v1552, 0.0
        %v1760 = vadd.f32 %v1758, %v1759
        %v1761 = vsel %vm1735, %v1558, 0.0
        %v1762 = vadd.f32 %v1760, %v1761
        %v1763 = vsel %vm1735, %v1564, 0.0
        %v1764 = vadd.f32 %v1762, %v1763
        %v1765 = vsel %vm1735, %v1570, 0.0
        %v1766 = vadd.f32 %v1764, %v1765
        %v1767 = vsel %vm1735, %v1576, 0.0
        %v1768 = vadd.f32 %v1766, %v1767
        %v1769 = vsel %vm1735, %v1582, 0.0
        %v1770 = vadd.f32 %v1768, %v1769
        %v1771 = vsel %vm1735, %v1588, 0.0
        %v1772 = vadd.f32 %v1770, %v1771
        %v1773 = vsel %vm1735, %v1594, 0.0
        %v1774 = vadd.f32 %v1772, %v1773
        %v1775 = vsel %vm1735, %v1600, 0.0
        %v1776 = vadd.f32 %v1774, %v1775
        %v1777 = vsel %vm1735, %v1606, 0.0
        %v1778 = vadd.f32 %v1776, %v1777
        %v1779 = vsel %vm1735, %v1612, 0.0
        %v1780 = vadd.f32 %v1778, %v1779
        %v1781 = vsel %vm1735, %v1618, 0.0
        %v1782 = vadd.f32 %v1780, %v1781
        %v1783 = vsel %vm1735, %v1624, 0.0
        %v1784 = vadd.f32 %v1782, %v1783
        %v1785 = vsel %vm1735, %v1630, 0.0
        %v1786 = vadd.f32 %v1784, %v1785
        %v1787 = vsel %vm1735, %v1636, 0.0
        %v1788 = vadd.f32 %v1786, %v1787
        %v1789 = vsel %vm1735, %v1642, 0.0
        %v1790 = vadd.f32 %v1788, %v1789
        %v1791 = vsel %vm1735, %v1648, 0.0
        %v1792 = vadd.f32 %v1790, %v1791
        %v1793 = vsel %vm1735, %v1654, 0.0
        %v1794 = vadd.f32 %v1792, %v1793
        %v1795 = vsel %vm1735, %v1660, 0.0
        %v1796 = vadd.f32 %v1794, %v1795
        %v1797 = vsel %vm1735, %v1666, 0.0
        %v1798 = vadd.f32 %v1796, %v1797
        %vm1799 = vcmask 1047560
        %v1800 = vsel %vm1799, %v1481, 0.0
        %v1801 = vsel %vm1799, %v1487, 0.0
        %v1802 = vadd.f32 %v1800, %v1801
        %v1803 = vsel %vm1799, %v1493, 0.0
        %v1804 = vadd.f32 %v1802, %v1803
        %v1805 = vsel %vm1799, %v1499, 0.0
        %v1806 = vadd.f32 %v1804, %v1805
        %v1807 = vsel %vm1799, %v1505, 0.0
        %v1808 = vadd.f32 %v1806, %v1807
        %v1809 = vsel %vm1799, %v1511, 0.0
        %v1810 = vadd.f32 %v1808, %v1809
        %v1811 = vsel %vm1799, %v1517, 0.0
        %v1812 = vadd.f32 %v1810, %v1811
        %v1813 = vsel %vm1799, %v1523, 0.0
        %v1814 = vadd.f32 %v1812, %v1813
        %v1815 = vsel %vm1799, %v1529, 0.0
        %v1816 = vadd.f32 %v1814, %v1815
        %v1817 = vsel %vm1799, %v1535, 0.0
        %v1818 = vadd.f32 %v1816, %v1817
        %v1819 = vsel %vm1799, %v1541, 0.0
        %v1820 = vadd.f32 %v1818, %v1819
        %v1821 = vsel %vm1799, %v1547, 0.0
        %v1822 = vadd.f32 %v1820, %v1821
        %v1823 = vsel %vm1799, %v1553, 0.0
        %v1824 = vadd.f32 %v1822, %v1823
        %v1825 = vsel %vm1799, %v1559, 0.0
        %v1826 = vadd.f32 %v1824, %v1825
        %v1827 = vsel %vm1799, %v1565, 0.0
        %v1828 = vadd.f32 %v1826, %v1827
        %v1829 = vsel %vm1799, %v1571, 0.0
        %v1830 = vadd.f32 %v1828, %v1829
        %v1831 = vsel %vm1799, %v1577, 0.0
        %v1832 = vadd.f32 %v1830, %v1831
        %v1833 = vsel %vm1799, %v1583, 0.0
        %v1834 = vadd.f32 %v1832, %v1833
        %v1835 = vsel %vm1799, %v1589, 0.0
        %v1836 = vadd.f32 %v1834, %v1835
        %v1837 = vsel %vm1799, %v1595, 0.0
        %v1838 = vadd.f32 %v1836, %v1837
        %v1839 = vsel %vm1799, %v1601, 0.0
        %v1840 = vadd.f32 %v1838, %v1839
        %v1841 = vsel %vm1799, %v1607, 0.0
        %v1842 = vadd.f32 %v1840, %v1841
        %v1843 = vsel %vm1799, %v1613, 0.0
        %v1844 = vadd.f32 %v1842, %v1843
        %v1845 = vsel %vm1799, %v1619, 0.0
        %v1846 = vadd.f32 %v1844, %v1845
        %v1847 = vsel %vm1799, %v1625, 0.0
        %v1848 = vadd.f32 %v1846, %v1847
        %v1849 = vsel %vm1799, %v1631, 0.0
        %v1850 = vadd.f32 %v1848, %v1849
        %v1851 = vsel %vm1799, %v1637, 0.0
        %v1852 = vadd.f32 %v1850, %v1851
        %v1853 = vsel %vm1799, %v1643, 0.0
        %v1854 = vadd.f32 %v1852, %v1853
        %v1855 = vsel %vm1799, %v1649, 0.0
        %v1856 = vadd.f32 %v1854, %v1855
        %v1857 = vsel %vm1799, %v1655, 0.0
        %v1858 = vadd.f32 %v1856, %v1857
        %v1859 = vsel %vm1799, %v1661, 0.0
        %v1860 = vadd.f32 %v1858, %v1859
        %v1861 = vsel %vm1799, %v1667, 0.0
        %v1862 = vadd.f32 %v1860, %v1861
        %vm1863 = vcmask 7168
        %v1864 = vsel %vm1863, %v1482, 0.0
        %v1865 = vsel %vm1863, %v1488, 0.0
        %v1866 = vadd.f32 %v1864, %v1865
        %v1867 = vsel %vm1863, %v1494, 0.0
        %v1868 = vadd.f32 %v1866, %v1867
        %v1869 = vsel %vm1863, %v1500, 0.0
        %v1870 = vadd.f32 %v1868, %v1869
        %v1871 = vsel %vm1863, %v1506, 0.0
        %v1872 = vadd.f32 %v1870, %v1871
        %v1873 = vsel %vm1863, %v1512, 0.0
        %v1874 = vadd.f32 %v1872, %v1873
        %v1875 = vsel %vm1863, %v1518, 0.0
        %v1876 = vadd.f32 %v1874, %v1875
        %v1877 = vsel %vm1863, %v1524, 0.0
        %v1878 = vadd.f32 %v1876, %v1877
        %v1879 = vsel %vm1863, %v1530, 0.0
        %v1880 = vadd.f32 %v1878, %v1879
        %v1881 = vsel %vm1863, %v1536, 0.0
        %v1882 = vadd.f32 %v1880, %v1881
        %v1883 = vsel %vm1863, %v1542, 0.0
        %v1884 = vadd.f32 %v1882, %v1883
        %v1885 = vsel %vm1863, %v1548, 0.0
        %v1886 = vadd.f32 %v1884, %v1885
        %v1887 = vsel %vm1863, %v1554, 0.0
        %v1888 = vadd.f32 %v1886, %v1887
        %v1889 = vsel %vm1863, %v1560, 0.0
        %v1890 = vadd.f32 %v1888, %v1889
        %v1891 = vsel %vm1863, %v1566, 0.0
        %v1892 = vadd.f32 %v1890, %v1891
        %v1893 = vsel %vm1863, %v1572, 0.0
        %v1894 = vadd.f32 %v1892, %v1893
        %v1895 = vsel %vm1863, %v1578, 0.0
        %v1896 = vadd.f32 %v1894, %v1895
        %v1897 = vsel %vm1863, %v1584, 0.0
        %v1898 = vadd.f32 %v1896, %v1897
        %v1899 = vsel %vm1863, %v1590, 0.0
        %v1900 = vadd.f32 %v1898, %v1899
        %v1901 = vsel %vm1863, %v1596, 0.0
        %v1902 = vadd.f32 %v1900, %v1901
        %v1903 = vsel %vm1863, %v1602, 0.0
        %v1904 = vadd.f32 %v1902, %v1903
        %v1905 = vsel %vm1863, %v1608, 0.0
        %v1906 = vadd.f32 %v1904, %v1905
        %v1907 = vsel %vm1863, %v1614, 0.0
        %v1908 = vadd.f32 %v1906, %v1907
        %v1909 = vsel %vm1863, %v1620, 0.0
        %v1910 = vadd.f32 %v1908, %v1909
        %v1911 = vsel %vm1863, %v1626, 0.0
        %v1912 = vadd.f32 %v1910, %v1911
        %v1913 = vsel %vm1863, %v1632, 0.0
        %v1914 = vadd.f32 %v1912, %v1913
        %v1915 = vsel %vm1863, %v1638, 0.0
        %v1916 = vadd.f32 %v1914, %v1915
        %v1917 = vsel %vm1863, %v1644, 0.0
        %v1918 = vadd.f32 %v1916, %v1917
        %v1919 = vsel %vm1863, %v1650, 0.0
        %v1920 = vadd.f32 %v1918, %v1919
        %v1921 = vsel %vm1863, %v1656, 0.0
        %v1922 = vadd.f32 %v1920, %v1921
        %v1923 = vsel %vm1863, %v1662, 0.0
        %v1924 = vadd.f32 %v1922, %v1923
        %v1925 = vsel %vm1863, %v1668, 0.0
        %v1926 = vadd.f32 %v1924, %v1925
        %vm1927 = vcmask 1040392
        %v1928 = vsel %vm1927, %v1483, 0.0
        %v1929 = vsel %vm1927, %v1489, 0.0
        %v1930 = vadd.f32 %v1928, %v1929
        %v1931 = vsel %vm1927, %v1495, 0.0
        %v1932 = vadd.f32 %v1930, %v1931
        %v1933 = vsel %vm1927, %v1501, 0.0
        %v1934 = vadd.f32 %v1932, %v1933
        %v1935 = vsel %vm1927, %v1507, 0.0
        %v1936 = vadd.f32 %v1934, %v1935
        %v1937 = vsel %vm1927, %v1513, 0.0
        %v1938 = vadd.f32 %v1936, %v1937
        %v1939 = vsel %vm1927, %v1519, 0.0
        %v1940 = vadd.f32 %v1938, %v1939
        %v1941 = vsel %vm1927, %v1525, 0.0
        %v1942 = vadd.f32 %v1940, %v1941
        %v1943 = vsel %vm1927, %v1531, 0.0
        %v1944 = vadd.f32 %v1942, %v1943
        %v1945 = vsel %vm1927, %v1537, 0.0
        %v1946 = vadd.f32 %v1944, %v1945
        %v1947 = vsel %vm1927, %v1543, 0.0
        %v1948 = vadd.f32 %v1946, %v1947
        %v1949 = vsel %vm1927, %v1549, 0.0
        %v1950 = vadd.f32 %v1948, %v1949
        %v1951 = vsel %vm1927, %v1555, 0.0
        %v1952 = vadd.f32 %v1950, %v1951
        %v1953 = vsel %vm1927, %v1561, 0.0
        %v1954 = vadd.f32 %v1952, %v1953
        %v1955 = vsel %vm1927, %v1567, 0.0
        %v1956 = vadd.f32 %v1954, %v1955
        %v1957 = vsel %vm1927, %v1573, 0.0
        %v1958 = vadd.f32 %v1956, %v1957
        %v1959 = vsel %vm1927, %v1579, 0.0
        %v1960 = vadd.f32 %v1958, %v1959
        %v1961 = vsel %vm1927, %v1585, 0.0
        %v1962 = vadd.f32 %v1960, %v1961
        %v1963 = vsel %vm1927, %v1591, 0.0
        %v1964 = vadd.f32 %v1962, %v1963
        %v1965 = vsel %vm1927, %v1597, 0.0
        %v1966 = vadd.f32 %v1964, %v1965
        %v1967 = vsel %vm1927, %v1603, 0.0
        %v1968 = vadd.f32 %v1966, %v1967
        %v1969 = vsel %vm1927, %v1609, 0.0
        %v1970 = vadd.f32 %v1968, %v1969
        %v1971 = vsel %vm1927, %v1615, 0.0
        %v1972 = vadd.f32 %v1970, %v1971
        %v1973 = vsel %vm1927, %v1621, 0.0
        %v1974 = vadd.f32 %v1972, %v1973
        %v1975 = vsel %vm1927, %v1627, 0.0
        %v1976 = vadd.f32 %v1974, %v1975
        %v1977 = vsel %vm1927, %v1633, 0.0
        %v1978 = vadd.f32 %v1976, %v1977
        %v1979 = vsel %vm1927, %v1639, 0.0
        %v1980 = vadd.f32 %v1978, %v1979
        %v1981 = vsel %vm1927, %v1645, 0.0
        %v1982 = vadd.f32 %v1980, %v1981
        %v1983 = vsel %vm1927, %v1651, 0.0
        %v1984 = vadd.f32 %v1982, %v1983
        %v1985 = vsel %vm1927, %v1657, 0.0
        %v1986 = vadd.f32 %v1984, %v1985
        %v1987 = vsel %vm1927, %v1663, 0.0
        %v1988 = vadd.f32 %v1986, %v1987
        %v1989 = vsel %vm1927, %v1669, 0.0
        %v1990 = vadd.f32 %v1988, %v1989
        %vm1991 = vcmask 0
        %v1992 = vsel %vm1991, %v1484, 0.0
        %v1993 = vsel %vm1991, %v1490, 0.0
        %v1994 = vadd.f32 %v1992, %v1993
        %v1995 = vsel %vm1991, %v1496, 0.0
        %v1996 = vadd.f32 %v1994, %v1995
        %v1997 = vsel %vm1991, %v1502, 0.0
        %v1998 = vadd.f32 %v1996, %v1997
        %v1999 = vsel %vm1991, %v1508, 0.0
        %v2000 = vadd.f32 %v1998, %v1999
        %v2001 = vsel %vm1991, %v1514, 0.0
        %v2002 = vadd.f32 %v2000, %v2001
        %v2003 = vsel %vm1991, %v1520, 0.0
        %v2004 = vadd.f32 %v2002, %v2003
        %v2005 = vsel %vm1991, %v1526, 0.0
        %v2006 = vadd.f32 %v2004, %v2005
        %v2007 = vsel %vm1991, %v1532, 0.0
        %v2008 = vadd.f32 %v2006, %v2007
        %v2009 = vsel %vm1991, %v1538, 0.0
        %v2010 = vadd.f32 %v2008, %v2009
        %v2011 = vsel %vm1991, %v1544, 0.0
        %v2012 = vadd.f32 %v2010, %v2011
        %v2013 = vsel %vm1991, %v1550, 0.0
        %v2014 = vadd.f32 %v2012, %v2013
        %v2015 = vsel %vm1991, %v1556, 0.0
        %v2016 = vadd.f32 %v2014, %v2015
        %v2017 = vsel %vm1991, %v1562, 0.0
        %v2018 = vadd.f32 %v2016, %v2017
        %v2019 = vsel %vm1991, %v1568, 0.0
        %v2020 = vadd.f32 %v2018, %v2019
        %v2021 = vsel %vm1991, %v1574, 0.0
        %v2022 = vadd.f32 %v2020, %v2021
        %v2023 = vsel %vm1991, %v1580, 0.0
        %v2024 = vadd.f32 %v2022, %v2023
        %v2025 = vsel %vm1991, %v1586, 0.0
        %v2026 = vadd.f32 %v2024, %v2025
        %v2027 = vsel %vm1991, %v1592, 0.0
        %v2028 = vadd.f32 %v2026, %v2027
        %v2029 = vsel %vm1991, %v1598, 0.0
        %v2030 = vadd.f32 %v2028, %v2029
        %v2031 = vsel %vm1991, %v1604, 0.0
        %v2032 = vadd.f32 %v2030, %v2031
        %v2033 = vsel %vm1991, %v1610, 0.0
        %v2034 = vadd.f32 %v2032, %v2033
        %v2035 = vsel %vm1991, %v1616, 0.0
        %v2036 = vadd.f32 %v2034, %v2035
        %v2037 = vsel %vm1991, %v1622, 0.0
        %v2038 = vadd.f32 %v2036, %v2037
        %v2039 = vsel %vm1991, %v1628, 0.0
        %v2040 = vadd.f32 %v2038, %v2039
        %v2041 = vsel %vm1991, %v1634, 0.0
        %v2042 = vadd.f32 %v2040, %v2041
        %v2043 = vsel %vm1991, %v1640, 0.0
        %v2044 = vadd.f32 %v2042, %v2043
        %v2045 = vsel %vm1991, %v1646, 0.0
        %v2046 = vadd.f32 %v2044, %v2045
        %v2047 = vsel %vm1991, %v1652, 0.0
        %v2048 = vadd.f32 %v2046, %v2047
        %v2049 = vsel %vm1991, %v1658, 0.0
        %v2050 = vadd.f32 %v2048, %v2049
        %v2051 = vsel %vm1991, %v1664, 0.0
        %v2052 = vadd.f32 %v2050, %v2051
        %v2053 = vsel %vm1991, %v1670, 0.0
        %v2054 = vadd.f32 %v2052, %v2053
        %v2055 = vmax.f32 %v743, 1e-16
        %v2056 = vmax.f32 %v807, 1e-16
        %v2057 = vmax.f32 %v838, 1e-16
        %v2058 = vmax.f32 %v901, 1e-16
        %v2059 = vmax.f32 %v965, 1e-16
        %v2060 = vmax.f32 %v1029, 1e-16
        %v2063 = vrot.slane %v2055, 7
        %v2064 = vrot.slane %v2057, 7
        %v2065 = vsel %vm1094, %v2063, %v2064
        %2066 = vrot.lane.b32.xlu0 %v2063, 1
        %v2067 = vpop.permute.xlu0 %2066
        %2068 = vrot.lane.b32.xlu0 %v2065, 1
        %v2069 = vpop.permute.xlu0 %2068
        %2070 = vrot.lane.b32.xlu0 %v2064, 1
        %v2071 = vpop.permute.xlu0 %2070
        %v2075 = vmul.f32 %v2055, %v2067
        %v2076 = vmul.f32 %v2056, %v2067
        %v2077 = vmul.f32 %v2057, %v2069
        %v2078 = vmul.f32 %v2058, %v2069
        %v2079 = vmul.f32 %v2059, %v2071
        %v2080 = vmul.f32 %v2060, %v2071
        %v2081 = vrsqrt.pop %v2075
        %v2082 = vrsqrt.pop %v2076
        %v2083 = vrsqrt.pop %v2077
        %v2084 = vrsqrt.pop %v2078
        %v2085 = vrsqrt.pop %v2079
        %v2086 = vrsqrt.pop %v2080
        %v2087 = vmul.f32 %v1734, %v2081
        %v2088 = vmul.f32 %v1798, %v2082
        %v2089 = vmul.f32 %v1862, %v2083
        %v2090 = vmul.f32 %v1926, %v2084
        %v2091 = vmul.f32 %v1990, %v2085
        %v2092 = vmul.f32 %v2054, %v2086
        %vm2093 = vcmp.eq.s32.totalorder %v209, %v215
        %vm2094 = vcmp.eq.s32.totalorder %v211, %v216
        %vm2095 = vmand %vm2093, %vm217
        %vm2096 = vmand %vm2094, %vm218
        %v2097 = vadd.f32 %v2087, 0.0
        %v2098 = vadd.f32 %v2088, 0.0
        %v2099 = vadd.f32 %v2089, 0.0
        %v2100 = vadd.f32 %v2090, 0.0
        %v2101 = vadd.f32 %v2091, 0.0
        %v2102 = vadd.f32 %v2092, 0.0
        %vm2109 = vcmask 1046528
        %v2110 = vrot.slane %v2087, 1
        %v2111 = vrot.slane %v2089, 1
        %v2112 = vsel %vm2109, %v2110, %v2111
        %v2113 = vrot.slane %v2088, 1
        %v2114 = vrot.slane %v2090, 1
        %v2115 = vsel %vm2109, %v2113, %v2114
        %v2116 = vrot.slane %v2091, 1
        %v2117 = vsel %vm2109, %v2111, %v2116
        %v2118 = vrot.slane %v2092, 1
        %v2119 = vsel %vm2109, %v2114, %v2118
        %2120 = vrot.lane.b32.xlu0 %v2112, 127
        %v2121 = vpop.permute.xlu0 %2120
        %2122 = vrot.lane.b32.xlu0 %v2115, 127
        %v2123 = vpop.permute.xlu0 %2122
        %2124 = vrot.lane.b32.xlu0 %v2117, 127
        %v2125 = vpop.permute.xlu0 %2124
        %2126 = vrot.lane.b32.xlu0 %v2119, 127
        %v2127 = vpop.permute.xlu0 %2126
        %vm2128 = vcmask 1039360
        %v2129 = vsel %vm2128, %v2121, %v2123
        %v2130 = vsel %vm2128, %v2125, %v2127
        %v2133 = vsel %vm2095, %v2129, 0.0
        %v2134 = vsel %vm2096, %v2130, 0.0
        %v2135 = vadd.f32 %v2133, %v2134
        %2136 = vadd.xlane.f32.xlu0 %v2135
        %v2137 = vpop.xlane.xlu0 %2136
        %v2138 = vrot.slane %v2137, 4
        %v2139 = vadd.f32 %v2137, %v2138
        %v2140 = vrot.slane %v2139, 2
        %v2141 = vadd.f32 %v2139, %v2140
        %v2142 = vrot.slane %v2141, 1
        %v2143 = vadd.f32 %v2141, %v2142
        %s2144 = vtos %v2143
        %s2145 = sadd.f32 %s2144, 0.0
        %v2146 = vsel %vm2095, 1, 0
        %v2147 = vsel %vm2096, 1, 0
        %v2148 = vcvt.s32.f32 %v2146
        %v2149 = vcvt.s32.f32 %v2147
        %v2150 = vadd.f32 %v2148, %v2149
        %2151 = vadd.xlane.f32.xlu0 %v2150
        %v2152 = vpop.xlane.xlu0 %2151
        %v2153 = vrot.slane %v2152, 4
        %v2154 = vadd.f32 %v2152, %v2153
        %v2155 = vrot.slane %v2154, 2
        %v2156 = vadd.f32 %v2154, %v2155
        %v2157 = vrot.slane %v2156, 1
        %v2158 = vadd.f32 %v2156, %v2157
        %s2159 = vtos %v2158
        %s2160 = sadd.f32 %s2159, 0.0
        %2193 = vrot.lane.b32.xlu0 %v329, 1
        %v2194 = vpop.permute.xlu0 %2193
        %2195 = vrot.lane.b32.xlu0 %v331, 1
        %v2196 = vpop.permute.xlu0 %2195
        %2197 = vrot.lane.b32.xlu0 %v333, 1
        %v2198 = vpop.permute.xlu0 %2197
        %2199 = vrot.lane.b32.xlu0 %v335, 1
        %v2200 = vpop.permute.xlu0 %2199
        %2201 = vrot.lane.b32.xlu0 %v337, 1
        %v2202 = vpop.permute.xlu0 %2201
        %2203 = vrot.lane.b32.xlu0 %v339, 1
        %v2204 = vpop.permute.xlu0 %2203
        %2205 = vrot.lane.b32.xlu0 %v341, 1
        %v2206 = vpop.permute.xlu0 %2205
        %2207 = vrot.lane.b32.xlu0 %v343, 1
        %v2208 = vpop.permute.xlu0 %2207
        %2209 = vrot.lane.b32.xlu0 %v345, 1
        %v2210 = vpop.permute.xlu0 %2209
        %2211 = vrot.lane.b32.xlu0 %v347, 1
        %v2212 = vpop.permute.xlu0 %2211
        %2213 = vrot.lane.b32.xlu0 %v349, 1
        %v2214 = vpop.permute.xlu0 %2213
        %2215 = vrot.lane.b32.xlu0 %v351, 1
        %v2216 = vpop.permute.xlu0 %2215
        %2217 = vrot.lane.b32.xlu0 %v353, 1
        %v2218 = vpop.permute.xlu0 %2217
        %2219 = vrot.lane.b32.xlu0 %v355, 1
        %v2220 = vpop.permute.xlu0 %2219
        %2221 = vrot.lane.b32.xlu0 %v357, 1
        %v2222 = vpop.permute.xlu0 %2221
        %2223 = vrot.lane.b32.xlu0 %v359, 1
        %v2224 = vpop.permute.xlu0 %2223
        %2225 = vrot.lane.b32.xlu0 %v361, 1
        %v2226 = vpop.permute.xlu0 %2225
        %2227 = vrot.lane.b32.xlu0 %v363, 1
        %v2228 = vpop.permute.xlu0 %2227
        %2229 = vrot.lane.b32.xlu0 %v365, 1
        %v2230 = vpop.permute.xlu0 %2229
        %2231 = vrot.lane.b32.xlu0 %v367, 1
        %v2232 = vpop.permute.xlu0 %2231
        %2233 = vrot.lane.b32.xlu0 %v369, 1
        %v2234 = vpop.permute.xlu0 %2233
        %2235 = vrot.lane.b32.xlu0 %v371, 1
        %v2236 = vpop.permute.xlu0 %2235
        %2237 = vrot.lane.b32.xlu0 %v373, 1
        %v2238 = vpop.permute.xlu0 %2237
        %2239 = vrot.lane.b32.xlu0 %v375, 1
        %v2240 = vpop.permute.xlu0 %2239
        %2241 = vrot.lane.b32.xlu0 %v377, 1
        %v2242 = vpop.permute.xlu0 %2241
        %2243 = vrot.lane.b32.xlu0 %v379, 1
        %v2244 = vpop.permute.xlu0 %2243
        %2245 = vrot.lane.b32.xlu0 %v381, 1
        %v2246 = vpop.permute.xlu0 %2245
        %2247 = vrot.lane.b32.xlu0 %v383, 1
        %v2248 = vpop.permute.xlu0 %2247
        %2249 = vrot.lane.b32.xlu0 %v385, 1
        %v2250 = vpop.permute.xlu0 %2249
        %2251 = vrot.lane.b32.xlu0 %v387, 1
        %v2252 = vpop.permute.xlu0 %2251
        %2253 = vrot.lane.b32.xlu0 %v389, 1
        %v2254 = vpop.permute.xlu0 %2253
        %2255 = vrot.lane.b32.xlu0 %v391, 1
        %v2256 = vpop.permute.xlu0 %2255
        %2257 = vrot.lane.b32.xlu0 %v393, 1
        %v2258 = vpop.permute.xlu0 %2257
        %2259 = vrot.lane.b32.xlu0 %v395, 1
        %v2260 = vpop.permute.xlu0 %2259
        %2261 = vrot.lane.b32.xlu0 %v397, 1
        %v2262 = vpop.permute.xlu0 %2261
        %2263 = vrot.lane.b32.xlu0 %v399, 1
        %v2264 = vpop.permute.xlu0 %2263
        %2265 = vrot.lane.b32.xlu0 %v401, 1
        %v2266 = vpop.permute.xlu0 %2265
        %2267 = vrot.lane.b32.xlu0 %v403, 1
        %v2268 = vpop.permute.xlu0 %2267
        %2269 = vrot.lane.b32.xlu0 %v405, 1
        %v2270 = vpop.permute.xlu0 %2269
        %2271 = vrot.lane.b32.xlu0 %v407, 1
        %v2272 = vpop.permute.xlu0 %2271
        %2273 = vrot.lane.b32.xlu0 %v409, 1
        %v2274 = vpop.permute.xlu0 %2273
        %2275 = vrot.lane.b32.xlu0 %v411, 1
        %v2276 = vpop.permute.xlu0 %2275
        %2277 = vrot.lane.b32.xlu0 %v413, 1
        %v2278 = vpop.permute.xlu0 %2277
        %2279 = vrot.lane.b32.xlu0 %v415, 1
        %v2280 = vpop.permute.xlu0 %2279
        %2281 = vrot.lane.b32.xlu0 %v417, 1
        %v2282 = vpop.permute.xlu0 %2281
        %2283 = vrot.lane.b32.xlu0 %v419, 1
        %v2284 = vpop.permute.xlu0 %2283
        %2285 = vrot.lane.b32.xlu0 %v421, 1
        %v2286 = vpop.permute.xlu0 %2285
        %2287 = vrot.lane.b32.xlu0 %v423, 1
        %v2288 = vpop.permute.xlu0 %2287
        %2289 = vrot.lane.b32.xlu0 %v425, 1
        %v2290 = vpop.permute.xlu0 %2289
        %2291 = vrot.lane.b32.xlu0 %v427, 1
        %v2292 = vpop.permute.xlu0 %2291
        %2293 = vrot.lane.b32.xlu0 %v429, 1
        %v2294 = vpop.permute.xlu0 %2293
        %2295 = vrot.lane.b32.xlu0 %v431, 1
        %v2296 = vpop.permute.xlu0 %2295
        %2297 = vrot.lane.b32.xlu0 %v433, 1
        %v2298 = vpop.permute.xlu0 %2297
        %2299 = vrot.lane.b32.xlu0 %v435, 1
        %v2300 = vpop.permute.xlu0 %2299
        %2301 = vrot.lane.b32.xlu0 %v437, 1
        %v2302 = vpop.permute.xlu0 %2301
        %2303 = vrot.lane.b32.xlu0 %v439, 1
        %v2304 = vpop.permute.xlu0 %2303
        %2305 = vrot.lane.b32.xlu0 %v441, 1
        %v2306 = vpop.permute.xlu0 %2305
        %2307 = vrot.lane.b32.xlu0 %v443, 1
        %v2308 = vpop.permute.xlu0 %2307
        %2309 = vrot.lane.b32.xlu0 %v445, 1
        %v2310 = vpop.permute.xlu0 %2309
        %2311 = vrot.lane.b32.xlu0 %v447, 1
        %v2312 = vpop.permute.xlu0 %2311
        %2313 = vrot.lane.b32.xlu0 %v449, 1
        %v2314 = vpop.permute.xlu0 %2313
        %2315 = vrot.lane.b32.xlu0 %v451, 1
        %v2316 = vpop.permute.xlu0 %2315
        %2317 = vrot.lane.b32.xlu0 %v453, 1
        %v2318 = vpop.permute.xlu0 %2317
        %2319 = vrot.lane.b32.xlu0 %v455, 1
        %v2320 = vpop.permute.xlu0 %2319
        %2321 = vrot.lane.b32.xlu0 %v457, 1
        %v2322 = vpop.permute.xlu0 %2321
        %2323 = vrot.lane.b32.xlu0 %v459, 1
        %v2324 = vpop.permute.xlu0 %2323
        %2325 = vrot.lane.b32.xlu0 %v461, 1
        %v2326 = vpop.permute.xlu0 %2325
        %2327 = vrot.lane.b32.xlu0 %v463, 1
        %v2328 = vpop.permute.xlu0 %2327
        %2329 = vrot.lane.b32.xlu0 %v465, 1
        %v2330 = vpop.permute.xlu0 %2329
        %2331 = vrot.lane.b32.xlu0 %v467, 1
        %v2332 = vpop.permute.xlu0 %2331
        %2333 = vrot.lane.b32.xlu0 %v469, 1
        %v2334 = vpop.permute.xlu0 %2333
        %2335 = vrot.lane.b32.xlu0 %v471, 1
        %v2336 = vpop.permute.xlu0 %2335
        %2337 = vrot.lane.b32.xlu0 %v473, 1
        %v2338 = vpop.permute.xlu0 %2337
        %2339 = vrot.lane.b32.xlu0 %v475, 1
        %v2340 = vpop.permute.xlu0 %2339
        %2341 = vrot.lane.b32.xlu0 %v477, 1
        %v2342 = vpop.permute.xlu0 %2341
        %2343 = vrot.lane.b32.xlu0 %v479, 1
        %v2344 = vpop.permute.xlu0 %2343
        %2345 = vrot.lane.b32.xlu0 %v481, 1
        %v2346 = vpop.permute.xlu0 %2345
        %2347 = vrot.lane.b32.xlu0 %v483, 1
        %v2348 = vpop.permute.xlu0 %2347
        %2349 = vrot.lane.b32.xlu0 %v485, 1
        %v2350 = vpop.permute.xlu0 %2349
        %2351 = vrot.lane.b32.xlu0 %v487, 1
        %v2352 = vpop.permute.xlu0 %2351
        %2353 = vrot.lane.b32.xlu0 %v489, 1
        %v2354 = vpop.permute.xlu0 %2353
        %2355 = vrot.lane.b32.xlu0 %v491, 1
        %v2356 = vpop.permute.xlu0 %2355
        %2357 = vrot.lane.b32.xlu0 %v493, 1
        %v2358 = vpop.permute.xlu0 %2357
        %2359 = vrot.lane.b32.xlu0 %v495, 1
        %v2360 = vpop.permute.xlu0 %2359
        %2361 = vrot.lane.b32.xlu0 %v497, 1
        %v2362 = vpop.permute.xlu0 %2361
        %2363 = vrot.lane.b32.xlu0 %v499, 1
        %v2364 = vpop.permute.xlu0 %2363
        %2365 = vrot.lane.b32.xlu0 %v501, 1
        %v2366 = vpop.permute.xlu0 %2365
        %2367 = vrot.lane.b32.xlu0 %v503, 1
        %v2368 = vpop.permute.xlu0 %2367
        %2369 = vrot.lane.b32.xlu0 %v505, 1
        %v2370 = vpop.permute.xlu0 %2369
        %2371 = vrot.lane.b32.xlu0 %v507, 1
        %v2372 = vpop.permute.xlu0 %2371
        %2373 = vrot.lane.b32.xlu0 %v509, 1
        %v2374 = vpop.permute.xlu0 %2373
        %2375 = vrot.lane.b32.xlu0 %v511, 1
        %v2376 = vpop.permute.xlu0 %2375
        %2377 = vrot.lane.b32.xlu0 %v513, 1
        %v2378 = vpop.permute.xlu0 %2377
        %2379 = vrot.lane.b32.xlu0 %v515, 1
        %v2380 = vpop.permute.xlu0 %2379
        %2381 = vrot.lane.b32.xlu0 %v517, 1
        %v2382 = vpop.permute.xlu0 %2381
        %2383 = vrot.lane.b32.xlu0 %v519, 1
        %v2384 = vpop.permute.xlu0 %2383
        %v2481 = vmul.f32 %v329, %v2194
        %v2482 = vmul.f32 %v330, %v2194
        %v2483 = vmul.f32 %v331, %v2196
        %v2484 = vmul.f32 %v332, %v2196
        %v2485 = vmul.f32 %v333, %v2198
        %v2486 = vmul.f32 %v334, %v2198
        %v2487 = vmul.f32 %v335, %v2200
        %v2488 = vmul.f32 %v336, %v2200
        %v2489 = vmul.f32 %v337, %v2202
        %v2490 = vmul.f32 %v338, %v2202
        %v2491 = vmul.f32 %v339, %v2204
        %v2492 = vmul.f32 %v340, %v2204
        %v2493 = vmul.f32 %v341, %v2206
        %v2494 = vmul.f32 %v342, %v2206
        %v2495 = vmul.f32 %v343, %v2208
        %v2496 = vmul.f32 %v344, %v2208
        %v2497 = vmul.f32 %v345, %v2210
        %v2498 = vmul.f32 %v346, %v2210
        %v2499 = vmul.f32 %v347, %v2212
        %v2500 = vmul.f32 %v348, %v2212
        %v2501 = vmul.f32 %v349, %v2214
        %v2502 = vmul.f32 %v350, %v2214
        %v2503 = vmul.f32 %v351, %v2216
        %v2504 = vmul.f32 %v352, %v2216
        %v2505 = vmul.f32 %v353, %v2218
        %v2506 = vmul.f32 %v354, %v2218
        %v2507 = vmul.f32 %v355, %v2220
        %v2508 = vmul.f32 %v356, %v2220
        %v2509 = vmul.f32 %v357, %v2222
        %v2510 = vmul.f32 %v358, %v2222
        %v2511 = vmul.f32 %v359, %v2224
        %v2512 = vmul.f32 %v360, %v2224
        %v2513 = vmul.f32 %v361, %v2226
        %v2514 = vmul.f32 %v362, %v2226
        %v2515 = vmul.f32 %v363, %v2228
        %v2516 = vmul.f32 %v364, %v2228
        %v2517 = vmul.f32 %v365, %v2230
        %v2518 = vmul.f32 %v366, %v2230
        %v2519 = vmul.f32 %v367, %v2232
        %v2520 = vmul.f32 %v368, %v2232
        %v2521 = vmul.f32 %v369, %v2234
        %v2522 = vmul.f32 %v370, %v2234
        %v2523 = vmul.f32 %v371, %v2236
        %v2524 = vmul.f32 %v372, %v2236
        %v2525 = vmul.f32 %v373, %v2238
        %v2526 = vmul.f32 %v374, %v2238
        %v2527 = vmul.f32 %v375, %v2240
        %v2528 = vmul.f32 %v376, %v2240
        %v2529 = vmul.f32 %v377, %v2242
        %v2530 = vmul.f32 %v378, %v2242
        %v2531 = vmul.f32 %v379, %v2244
        %v2532 = vmul.f32 %v380, %v2244
        %v2533 = vmul.f32 %v381, %v2246
        %v2534 = vmul.f32 %v382, %v2246
        %v2535 = vmul.f32 %v383, %v2248
        %v2536 = vmul.f32 %v384, %v2248
        %v2537 = vmul.f32 %v385, %v2250
        %v2538 = vmul.f32 %v386, %v2250
        %v2539 = vmul.f32 %v387, %v2252
        %v2540 = vmul.f32 %v388, %v2252
        %v2541 = vmul.f32 %v389, %v2254
        %v2542 = vmul.f32 %v390, %v2254
        %v2543 = vmul.f32 %v391, %v2256
        %v2544 = vmul.f32 %v392, %v2256
        %v2545 = vmul.f32 %v393, %v2258
        %v2546 = vmul.f32 %v394, %v2258
        %v2547 = vmul.f32 %v395, %v2260
        %v2548 = vmul.f32 %v396, %v2260
        %v2549 = vmul.f32 %v397, %v2262
        %v2550 = vmul.f32 %v398, %v2262
        %v2551 = vmul.f32 %v399, %v2264
        %v2552 = vmul.f32 %v400, %v2264
        %v2553 = vmul.f32 %v401, %v2266
        %v2554 = vmul.f32 %v402, %v2266
        %v2555 = vmul.f32 %v403, %v2268
        %v2556 = vmul.f32 %v404, %v2268
        %v2557 = vmul.f32 %v405, %v2270
        %v2558 = vmul.f32 %v406, %v2270
        %v2559 = vmul.f32 %v407, %v2272
        %v2560 = vmul.f32 %v408, %v2272
        %v2561 = vmul.f32 %v409, %v2274
        %v2562 = vmul.f32 %v410, %v2274
        %v2563 = vmul.f32 %v411, %v2276
        %v2564 = vmul.f32 %v412, %v2276
        %v2565 = vmul.f32 %v413, %v2278
        %v2566 = vmul.f32 %v414, %v2278
        %v2567 = vmul.f32 %v415, %v2280
        %v2568 = vmul.f32 %v416, %v2280
        %v2569 = vmul.f32 %v417, %v2282
        %v2570 = vmul.f32 %v418, %v2282
        %v2571 = vmul.f32 %v419, %v2284
        %v2572 = vmul.f32 %v420, %v2284
        %v2573 = vmul.f32 %v421, %v2286
        %v2574 = vmul.f32 %v422, %v2286
        %v2575 = vmul.f32 %v423, %v2288
        %v2576 = vmul.f32 %v424, %v2288
        %v2577 = vmul.f32 %v425, %v2290
        %v2578 = vmul.f32 %v426, %v2290
        %v2579 = vmul.f32 %v427, %v2292
        %v2580 = vmul.f32 %v428, %v2292
        %v2581 = vmul.f32 %v429, %v2294
        %v2582 = vmul.f32 %v430, %v2294
        %v2583 = vmul.f32 %v431, %v2296
        %v2584 = vmul.f32 %v432, %v2296
        %v2585 = vmul.f32 %v433, %v2298
        %v2586 = vmul.f32 %v434, %v2298
        %v2587 = vmul.f32 %v435, %v2300
        %v2588 = vmul.f32 %v436, %v2300
        %v2589 = vmul.f32 %v437, %v2302
        %v2590 = vmul.f32 %v438, %v2302
        %v2591 = vmul.f32 %v439, %v2304
        %v2592 = vmul.f32 %v440, %v2304
        %v2593 = vmul.f32 %v441, %v2306
        %v2594 = vmul.f32 %v442, %v2306
        %v2595 = vmul.f32 %v443, %v2308
        %v2596 = vmul.f32 %v444, %v2308
        %v2597 = vmul.f32 %v445, %v2310
        %v2598 = vmul.f32 %v446, %v2310
        %v2599 = vmul.f32 %v447, %v2312
        %v2600 = vmul.f32 %v448, %v2312
        %v2601 = vmul.f32 %v449, %v2314
        %v2602 = vmul.f32 %v450, %v2314
        %v2603 = vmul.f32 %v451, %v2316
        %v2604 = vmul.f32 %v452, %v2316
        %v2605 = vmul.f32 %v453, %v2318
        %v2606 = vmul.f32 %v454, %v2318
        %v2607 = vmul.f32 %v455, %v2320
        %v2608 = vmul.f32 %v456, %v2320
        %v2609 = vmul.f32 %v457, %v2322
        %v2610 = vmul.f32 %v458, %v2322
        %v2611 = vmul.f32 %v459, %v2324
        %v2612 = vmul.f32 %v460, %v2324
        %v2613 = vmul.f32 %v461, %v2326
        %v2614 = vmul.f32 %v462, %v2326
        %v2615 = vmul.f32 %v463, %v2328
        %v2616 = vmul.f32 %v464, %v2328
        %v2617 = vmul.f32 %v465, %v2330
        %v2618 = vmul.f32 %v466, %v2330
        %v2619 = vmul.f32 %v467, %v2332
        %v2620 = vmul.f32 %v468, %v2332
        %v2621 = vmul.f32 %v469, %v2334
        %v2622 = vmul.f32 %v470, %v2334
        %v2623 = vmul.f32 %v471, %v2336
        %v2624 = vmul.f32 %v472, %v2336
        %v2625 = vmul.f32 %v473, %v2338
        %v2626 = vmul.f32 %v474, %v2338
        %v2627 = vmul.f32 %v475, %v2340
        %v2628 = vmul.f32 %v476, %v2340
        %v2629 = vmul.f32 %v477, %v2342
        %v2630 = vmul.f32 %v478, %v2342
        %v2631 = vmul.f32 %v479, %v2344
        %v2632 = vmul.f32 %v480, %v2344
        %v2633 = vmul.f32 %v481, %v2346
        %v2634 = vmul.f32 %v482, %v2346
        %v2635 = vmul.f32 %v483, %v2348
        %v2636 = vmul.f32 %v484, %v2348
        %v2637 = vmul.f32 %v485, %v2350
        %v2638 = vmul.f32 %v486, %v2350
        %v2639 = vmul.f32 %v487, %v2352
        %v2640 = vmul.f32 %v488, %v2352
        %v2641 = vmul.f32 %v489, %v2354
        %v2642 = vmul.f32 %v490, %v2354
        %v2643 = vmul.f32 %v491, %v2356
        %v2644 = vmul.f32 %v492, %v2356
        %v2645 = vmul.f32 %v493, %v2358
        %v2646 = vmul.f32 %v494, %v2358
        %v2647 = vmul.f32 %v495, %v2360
        %v2648 = vmul.f32 %v496, %v2360
        %v2649 = vmul.f32 %v497, %v2362
        %v2650 = vmul.f32 %v498, %v2362
        %v2651 = vmul.f32 %v499, %v2364
        %v2652 = vmul.f32 %v500, %v2364
        %v2653 = vmul.f32 %v501, %v2366
        %v2654 = vmul.f32 %v502, %v2366
        %v2655 = vmul.f32 %v503, %v2368
        %v2656 = vmul.f32 %v504, %v2368
        %v2657 = vmul.f32 %v505, %v2370
        %v2658 = vmul.f32 %v506, %v2370
        %v2659 = vmul.f32 %v507, %v2372
        %v2660 = vmul.f32 %v508, %v2372
        %v2661 = vmul.f32 %v509, %v2374
        %v2662 = vmul.f32 %v510, %v2374
        %v2663 = vmul.f32 %v511, %v2376
        %v2664 = vmul.f32 %v512, %v2376
        %v2665 = vmul.f32 %v513, %v2378
        %v2666 = vmul.f32 %v514, %v2378
        %v2667 = vmul.f32 %v515, %v2380
        %v2668 = vmul.f32 %v516, %v2380
        %v2669 = vmul.f32 %v517, %v2382
        %v2670 = vmul.f32 %v518, %v2382
        %v2671 = vmul.f32 %v519, %v2384
        %v2672 = vmul.f32 %v520, %v2384
        %v2673 = vsel %vm1671, %v2481, 0.0
        %v2674 = vsel %vm1671, %v2487, 0.0
        %v2675 = vadd.f32 %v2673, %v2674
        %v2676 = vsel %vm1671, %v2493, 0.0
        %v2677 = vadd.f32 %v2675, %v2676
        %v2678 = vsel %vm1671, %v2499, 0.0
        %v2679 = vadd.f32 %v2677, %v2678
        %v2680 = vsel %vm1671, %v2505, 0.0
        %v2681 = vadd.f32 %v2679, %v2680
        %v2682 = vsel %vm1671, %v2511, 0.0
        %v2683 = vadd.f32 %v2681, %v2682
        %v2684 = vsel %vm1671, %v2517, 0.0
        %v2685 = vadd.f32 %v2683, %v2684
        %v2686 = vsel %vm1671, %v2523, 0.0
        %v2687 = vadd.f32 %v2685, %v2686
        %v2688 = vsel %vm1671, %v2529, 0.0
        %v2689 = vadd.f32 %v2687, %v2688
        %v2690 = vsel %vm1671, %v2535, 0.0
        %v2691 = vadd.f32 %v2689, %v2690
        %v2692 = vsel %vm1671, %v2541, 0.0
        %v2693 = vadd.f32 %v2691, %v2692
        %v2694 = vsel %vm1671, %v2547, 0.0
        %v2695 = vadd.f32 %v2693, %v2694
        %v2696 = vsel %vm1671, %v2553, 0.0
        %v2697 = vadd.f32 %v2695, %v2696
        %v2698 = vsel %vm1671, %v2559, 0.0
        %v2699 = vadd.f32 %v2697, %v2698
        %v2700 = vsel %vm1671, %v2565, 0.0
        %v2701 = vadd.f32 %v2699, %v2700
        %v2702 = vsel %vm1671, %v2571, 0.0
        %v2703 = vadd.f32 %v2701, %v2702
        %v2704 = vsel %vm1671, %v2577, 0.0
        %v2705 = vadd.f32 %v2703, %v2704
        %v2706 = vsel %vm1671, %v2583, 0.0
        %v2707 = vadd.f32 %v2705, %v2706
        %v2708 = vsel %vm1671, %v2589, 0.0
        %v2709 = vadd.f32 %v2707, %v2708
        %v2710 = vsel %vm1671, %v2595, 0.0
        %v2711 = vadd.f32 %v2709, %v2710
        %v2712 = vsel %vm1671, %v2601, 0.0
        %v2713 = vadd.f32 %v2711, %v2712
        %v2714 = vsel %vm1671, %v2607, 0.0
        %v2715 = vadd.f32 %v2713, %v2714
        %v2716 = vsel %vm1671, %v2613, 0.0
        %v2717 = vadd.f32 %v2715, %v2716
        %v2718 = vsel %vm1671, %v2619, 0.0
        %v2719 = vadd.f32 %v2717, %v2718
        %v2720 = vsel %vm1671, %v2625, 0.0
        %v2721 = vadd.f32 %v2719, %v2720
        %v2722 = vsel %vm1671, %v2631, 0.0
        %v2723 = vadd.f32 %v2721, %v2722
        %v2724 = vsel %vm1671, %v2637, 0.0
        %v2725 = vadd.f32 %v2723, %v2724
        %v2726 = vsel %vm1671, %v2643, 0.0
        %v2727 = vadd.f32 %v2725, %v2726
        %v2728 = vsel %vm1671, %v2649, 0.0
        %v2729 = vadd.f32 %v2727, %v2728
        %v2730 = vsel %vm1671, %v2655, 0.0
        %v2731 = vadd.f32 %v2729, %v2730
        %v2732 = vsel %vm1671, %v2661, 0.0
        %v2733 = vadd.f32 %v2731, %v2732
        %v2734 = vsel %vm1671, %v2667, 0.0
        %v2735 = vadd.f32 %v2733, %v2734
        %v2736 = vsel %vm1735, %v2482, 0.0
        %v2737 = vsel %vm1735, %v2488, 0.0
        %v2738 = vadd.f32 %v2736, %v2737
        %v2739 = vsel %vm1735, %v2494, 0.0
        %v2740 = vadd.f32 %v2738, %v2739
        %v2741 = vsel %vm1735, %v2500, 0.0
        %v2742 = vadd.f32 %v2740, %v2741
        %v2743 = vsel %vm1735, %v2506, 0.0
        %v2744 = vadd.f32 %v2742, %v2743
        %v2745 = vsel %vm1735, %v2512, 0.0
        %v2746 = vadd.f32 %v2744, %v2745
        %v2747 = vsel %vm1735, %v2518, 0.0
        %v2748 = vadd.f32 %v2746, %v2747
        %v2749 = vsel %vm1735, %v2524, 0.0
        %v2750 = vadd.f32 %v2748, %v2749
        %v2751 = vsel %vm1735, %v2530, 0.0
        %v2752 = vadd.f32 %v2750, %v2751
        %v2753 = vsel %vm1735, %v2536, 0.0
        %v2754 = vadd.f32 %v2752, %v2753
        %v2755 = vsel %vm1735, %v2542, 0.0
        %v2756 = vadd.f32 %v2754, %v2755
        %v2757 = vsel %vm1735, %v2548, 0.0
        %v2758 = vadd.f32 %v2756, %v2757
        %v2759 = vsel %vm1735, %v2554, 0.0
        %v2760 = vadd.f32 %v2758, %v2759
        %v2761 = vsel %vm1735, %v2560, 0.0
        %v2762 = vadd.f32 %v2760, %v2761
        %v2763 = vsel %vm1735, %v2566, 0.0
        %v2764 = vadd.f32 %v2762, %v2763
        %v2765 = vsel %vm1735, %v2572, 0.0
        %v2766 = vadd.f32 %v2764, %v2765
        %v2767 = vsel %vm1735, %v2578, 0.0
        %v2768 = vadd.f32 %v2766, %v2767
        %v2769 = vsel %vm1735, %v2584, 0.0
        %v2770 = vadd.f32 %v2768, %v2769
        %v2771 = vsel %vm1735, %v2590, 0.0
        %v2772 = vadd.f32 %v2770, %v2771
        %v2773 = vsel %vm1735, %v2596, 0.0
        %v2774 = vadd.f32 %v2772, %v2773
        %v2775 = vsel %vm1735, %v2602, 0.0
        %v2776 = vadd.f32 %v2774, %v2775
        %v2777 = vsel %vm1735, %v2608, 0.0
        %v2778 = vadd.f32 %v2776, %v2777
        %v2779 = vsel %vm1735, %v2614, 0.0
        %v2780 = vadd.f32 %v2778, %v2779
        %v2781 = vsel %vm1735, %v2620, 0.0
        %v2782 = vadd.f32 %v2780, %v2781
        %v2783 = vsel %vm1735, %v2626, 0.0
        %v2784 = vadd.f32 %v2782, %v2783
        %v2785 = vsel %vm1735, %v2632, 0.0
        %v2786 = vadd.f32 %v2784, %v2785
        %v2787 = vsel %vm1735, %v2638, 0.0
        %v2788 = vadd.f32 %v2786, %v2787
        %v2789 = vsel %vm1735, %v2644, 0.0
        %v2790 = vadd.f32 %v2788, %v2789
        %v2791 = vsel %vm1735, %v2650, 0.0
        %v2792 = vadd.f32 %v2790, %v2791
        %v2793 = vsel %vm1735, %v2656, 0.0
        %v2794 = vadd.f32 %v2792, %v2793
        %v2795 = vsel %vm1735, %v2662, 0.0
        %v2796 = vadd.f32 %v2794, %v2795
        %v2797 = vsel %vm1735, %v2668, 0.0
        %v2798 = vadd.f32 %v2796, %v2797
        %v2799 = vsel %vm1799, %v2483, 0.0
        %v2800 = vsel %vm1799, %v2489, 0.0
        %v2801 = vadd.f32 %v2799, %v2800
        %v2802 = vsel %vm1799, %v2495, 0.0
        %v2803 = vadd.f32 %v2801, %v2802
        %v2804 = vsel %vm1799, %v2501, 0.0
        %v2805 = vadd.f32 %v2803, %v2804
        %v2806 = vsel %vm1799, %v2507, 0.0
        %v2807 = vadd.f32 %v2805, %v2806
        %v2808 = vsel %vm1799, %v2513, 0.0
        %v2809 = vadd.f32 %v2807, %v2808
        %v2810 = vsel %vm1799, %v2519, 0.0
        %v2811 = vadd.f32 %v2809, %v2810
        %v2812 = vsel %vm1799, %v2525, 0.0
        %v2813 = vadd.f32 %v2811, %v2812
        %v2814 = vsel %vm1799, %v2531, 0.0
        %v2815 = vadd.f32 %v2813, %v2814
        %v2816 = vsel %vm1799, %v2537, 0.0
        %v2817 = vadd.f32 %v2815, %v2816
        %v2818 = vsel %vm1799, %v2543, 0.0
        %v2819 = vadd.f32 %v2817, %v2818
        %v2820 = vsel %vm1799, %v2549, 0.0
        %v2821 = vadd.f32 %v2819, %v2820
        %v2822 = vsel %vm1799, %v2555, 0.0
        %v2823 = vadd.f32 %v2821, %v2822
        %v2824 = vsel %vm1799, %v2561, 0.0
        %v2825 = vadd.f32 %v2823, %v2824
        %v2826 = vsel %vm1799, %v2567, 0.0
        %v2827 = vadd.f32 %v2825, %v2826
        %v2828 = vsel %vm1799, %v2573, 0.0
        %v2829 = vadd.f32 %v2827, %v2828
        %v2830 = vsel %vm1799, %v2579, 0.0
        %v2831 = vadd.f32 %v2829, %v2830
        %v2832 = vsel %vm1799, %v2585, 0.0
        %v2833 = vadd.f32 %v2831, %v2832
        %v2834 = vsel %vm1799, %v2591, 0.0
        %v2835 = vadd.f32 %v2833, %v2834
        %v2836 = vsel %vm1799, %v2597, 0.0
        %v2837 = vadd.f32 %v2835, %v2836
        %v2838 = vsel %vm1799, %v2603, 0.0
        %v2839 = vadd.f32 %v2837, %v2838
        %v2840 = vsel %vm1799, %v2609, 0.0
        %v2841 = vadd.f32 %v2839, %v2840
        %v2842 = vsel %vm1799, %v2615, 0.0
        %v2843 = vadd.f32 %v2841, %v2842
        %v2844 = vsel %vm1799, %v2621, 0.0
        %v2845 = vadd.f32 %v2843, %v2844
        %v2846 = vsel %vm1799, %v2627, 0.0
        %v2847 = vadd.f32 %v2845, %v2846
        %v2848 = vsel %vm1799, %v2633, 0.0
        %v2849 = vadd.f32 %v2847, %v2848
        %v2850 = vsel %vm1799, %v2639, 0.0
        %v2851 = vadd.f32 %v2849, %v2850
        %v2852 = vsel %vm1799, %v2645, 0.0
        %v2853 = vadd.f32 %v2851, %v2852
        %v2854 = vsel %vm1799, %v2651, 0.0
        %v2855 = vadd.f32 %v2853, %v2854
        %v2856 = vsel %vm1799, %v2657, 0.0
        %v2857 = vadd.f32 %v2855, %v2856
        %v2858 = vsel %vm1799, %v2663, 0.0
        %v2859 = vadd.f32 %v2857, %v2858
        %v2860 = vsel %vm1799, %v2669, 0.0
        %v2861 = vadd.f32 %v2859, %v2860
        %v2862 = vsel %vm1863, %v2484, 0.0
        %v2863 = vsel %vm1863, %v2490, 0.0
        %v2864 = vadd.f32 %v2862, %v2863
        %v2865 = vsel %vm1863, %v2496, 0.0
        %v2866 = vadd.f32 %v2864, %v2865
        %v2867 = vsel %vm1863, %v2502, 0.0
        %v2868 = vadd.f32 %v2866, %v2867
        %v2869 = vsel %vm1863, %v2508, 0.0
        %v2870 = vadd.f32 %v2868, %v2869
        %v2871 = vsel %vm1863, %v2514, 0.0
        %v2872 = vadd.f32 %v2870, %v2871
        %v2873 = vsel %vm1863, %v2520, 0.0
        %v2874 = vadd.f32 %v2872, %v2873
        %v2875 = vsel %vm1863, %v2526, 0.0
        %v2876 = vadd.f32 %v2874, %v2875
        %v2877 = vsel %vm1863, %v2532, 0.0
        %v2878 = vadd.f32 %v2876, %v2877
        %v2879 = vsel %vm1863, %v2538, 0.0
        %v2880 = vadd.f32 %v2878, %v2879
        %v2881 = vsel %vm1863, %v2544, 0.0
        %v2882 = vadd.f32 %v2880, %v2881
        %v2883 = vsel %vm1863, %v2550, 0.0
        %v2884 = vadd.f32 %v2882, %v2883
        %v2885 = vsel %vm1863, %v2556, 0.0
        %v2886 = vadd.f32 %v2884, %v2885
        %v2887 = vsel %vm1863, %v2562, 0.0
        %v2888 = vadd.f32 %v2886, %v2887
        %v2889 = vsel %vm1863, %v2568, 0.0
        %v2890 = vadd.f32 %v2888, %v2889
        %v2891 = vsel %vm1863, %v2574, 0.0
        %v2892 = vadd.f32 %v2890, %v2891
        %v2893 = vsel %vm1863, %v2580, 0.0
        %v2894 = vadd.f32 %v2892, %v2893
        %v2895 = vsel %vm1863, %v2586, 0.0
        %v2896 = vadd.f32 %v2894, %v2895
        %v2897 = vsel %vm1863, %v2592, 0.0
        %v2898 = vadd.f32 %v2896, %v2897
        %v2899 = vsel %vm1863, %v2598, 0.0
        %v2900 = vadd.f32 %v2898, %v2899
        %v2901 = vsel %vm1863, %v2604, 0.0
        %v2902 = vadd.f32 %v2900, %v2901
        %v2903 = vsel %vm1863, %v2610, 0.0
        %v2904 = vadd.f32 %v2902, %v2903
        %v2905 = vsel %vm1863, %v2616, 0.0
        %v2906 = vadd.f32 %v2904, %v2905
        %v2907 = vsel %vm1863, %v2622, 0.0
        %v2908 = vadd.f32 %v2906, %v2907
        %v2909 = vsel %vm1863, %v2628, 0.0
        %v2910 = vadd.f32 %v2908, %v2909
        %v2911 = vsel %vm1863, %v2634, 0.0
        %v2912 = vadd.f32 %v2910, %v2911
        %v2913 = vsel %vm1863, %v2640, 0.0
        %v2914 = vadd.f32 %v2912, %v2913
        %v2915 = vsel %vm1863, %v2646, 0.0
        %v2916 = vadd.f32 %v2914, %v2915
        %v2917 = vsel %vm1863, %v2652, 0.0
        %v2918 = vadd.f32 %v2916, %v2917
        %v2919 = vsel %vm1863, %v2658, 0.0
        %v2920 = vadd.f32 %v2918, %v2919
        %v2921 = vsel %vm1863, %v2664, 0.0
        %v2922 = vadd.f32 %v2920, %v2921
        %v2923 = vsel %vm1863, %v2670, 0.0
        %v2924 = vadd.f32 %v2922, %v2923
        %v2925 = vsel %vm1927, %v2485, 0.0
        %v2926 = vsel %vm1927, %v2491, 0.0
        %v2927 = vadd.f32 %v2925, %v2926
        %v2928 = vsel %vm1927, %v2497, 0.0
        %v2929 = vadd.f32 %v2927, %v2928
        %v2930 = vsel %vm1927, %v2503, 0.0
        %v2931 = vadd.f32 %v2929, %v2930
        %v2932 = vsel %vm1927, %v2509, 0.0
        %v2933 = vadd.f32 %v2931, %v2932
        %v2934 = vsel %vm1927, %v2515, 0.0
        %v2935 = vadd.f32 %v2933, %v2934
        %v2936 = vsel %vm1927, %v2521, 0.0
        %v2937 = vadd.f32 %v2935, %v2936
        %v2938 = vsel %vm1927, %v2527, 0.0
        %v2939 = vadd.f32 %v2937, %v2938
        %v2940 = vsel %vm1927, %v2533, 0.0
        %v2941 = vadd.f32 %v2939, %v2940
        %v2942 = vsel %vm1927, %v2539, 0.0
        %v2943 = vadd.f32 %v2941, %v2942
        %v2944 = vsel %vm1927, %v2545, 0.0
        %v2945 = vadd.f32 %v2943, %v2944
        %v2946 = vsel %vm1927, %v2551, 0.0
        %v2947 = vadd.f32 %v2945, %v2946
        %v2948 = vsel %vm1927, %v2557, 0.0
        %v2949 = vadd.f32 %v2947, %v2948
        %v2950 = vsel %vm1927, %v2563, 0.0
        %v2951 = vadd.f32 %v2949, %v2950
        %v2952 = vsel %vm1927, %v2569, 0.0
        %v2953 = vadd.f32 %v2951, %v2952
        %v2954 = vsel %vm1927, %v2575, 0.0
        %v2955 = vadd.f32 %v2953, %v2954
        %v2956 = vsel %vm1927, %v2581, 0.0
        %v2957 = vadd.f32 %v2955, %v2956
        %v2958 = vsel %vm1927, %v2587, 0.0
        %v2959 = vadd.f32 %v2957, %v2958
        %v2960 = vsel %vm1927, %v2593, 0.0
        %v2961 = vadd.f32 %v2959, %v2960
        %v2962 = vsel %vm1927, %v2599, 0.0
        %v2963 = vadd.f32 %v2961, %v2962
        %v2964 = vsel %vm1927, %v2605, 0.0
        %v2965 = vadd.f32 %v2963, %v2964
        %v2966 = vsel %vm1927, %v2611, 0.0
        %v2967 = vadd.f32 %v2965, %v2966
        %v2968 = vsel %vm1927, %v2617, 0.0
        %v2969 = vadd.f32 %v2967, %v2968
        %v2970 = vsel %vm1927, %v2623, 0.0
        %v2971 = vadd.f32 %v2969, %v2970
        %v2972 = vsel %vm1927, %v2629, 0.0
        %v2973 = vadd.f32 %v2971, %v2972
        %v2974 = vsel %vm1927, %v2635, 0.0
        %v2975 = vadd.f32 %v2973, %v2974
        %v2976 = vsel %vm1927, %v2641, 0.0
        %v2977 = vadd.f32 %v2975, %v2976
        %v2978 = vsel %vm1927, %v2647, 0.0
        %v2979 = vadd.f32 %v2977, %v2978
        %v2980 = vsel %vm1927, %v2653, 0.0
        %v2981 = vadd.f32 %v2979, %v2980
        %v2982 = vsel %vm1927, %v2659, 0.0
        %v2983 = vadd.f32 %v2981, %v2982
        %v2984 = vsel %vm1927, %v2665, 0.0
        %v2985 = vadd.f32 %v2983, %v2984
        %v2986 = vsel %vm1927, %v2671, 0.0
        %v2987 = vadd.f32 %v2985, %v2986
        %v2988 = vsel %vm1991, %v2486, 0.0
        %v2989 = vsel %vm1991, %v2492, 0.0
        %v2990 = vadd.f32 %v2988, %v2989
        %v2991 = vsel %vm1991, %v2498, 0.0
        %v2992 = vadd.f32 %v2990, %v2991
        %v2993 = vsel %vm1991, %v2504, 0.0
        %v2994 = vadd.f32 %v2992, %v2993
        %v2995 = vsel %vm1991, %v2510, 0.0
        %v2996 = vadd.f32 %v2994, %v2995
        %v2997 = vsel %vm1991, %v2516, 0.0
        %v2998 = vadd.f32 %v2996, %v2997
        %v2999 = vsel %vm1991, %v2522, 0.0
        %v3000 = vadd.f32 %v2998, %v2999
        %v3001 = vsel %vm1991, %v2528, 0.0
        %v3002 = vadd.f32 %v3000, %v3001
        %v3003 = vsel %vm1991, %v2534, 0.0
        %v3004 = vadd.f32 %v3002, %v3003
        %v3005 = vsel %vm1991, %v2540, 0.0
        %v3006 = vadd.f32 %v3004, %v3005
        %v3007 = vsel %vm1991, %v2546, 0.0
        %v3008 = vadd.f32 %v3006, %v3007
        %v3009 = vsel %vm1991, %v2552, 0.0
        %v3010 = vadd.f32 %v3008, %v3009
        %v3011 = vsel %vm1991, %v2558, 0.0
        %v3012 = vadd.f32 %v3010, %v3011
        %v3013 = vsel %vm1991, %v2564, 0.0
        %v3014 = vadd.f32 %v3012, %v3013
        %v3015 = vsel %vm1991, %v2570, 0.0
        %v3016 = vadd.f32 %v3014, %v3015
        %v3017 = vsel %vm1991, %v2576, 0.0
        %v3018 = vadd.f32 %v3016, %v3017
        %v3019 = vsel %vm1991, %v2582, 0.0
        %v3020 = vadd.f32 %v3018, %v3019
        %v3021 = vsel %vm1991, %v2588, 0.0
        %v3022 = vadd.f32 %v3020, %v3021
        %v3023 = vsel %vm1991, %v2594, 0.0
        %v3024 = vadd.f32 %v3022, %v3023
        %v3025 = vsel %vm1991, %v2600, 0.0
        %v3026 = vadd.f32 %v3024, %v3025
        %v3027 = vsel %vm1991, %v2606, 0.0
        %v3028 = vadd.f32 %v3026, %v3027
        %v3029 = vsel %vm1991, %v2612, 0.0
        %v3030 = vadd.f32 %v3028, %v3029
        %v3031 = vsel %vm1991, %v2618, 0.0
        %v3032 = vadd.f32 %v3030, %v3031
        %v3033 = vsel %vm1991, %v2624, 0.0
        %v3034 = vadd.f32 %v3032, %v3033
        %v3035 = vsel %vm1991, %v2630, 0.0
        %v3036 = vadd.f32 %v3034, %v3035
        %v3037 = vsel %vm1991, %v2636, 0.0
        %v3038 = vadd.f32 %v3036, %v3037
        %v3039 = vsel %vm1991, %v2642, 0.0
        %v3040 = vadd.f32 %v3038, %v3039
        %v3041 = vsel %vm1991, %v2648, 0.0
        %v3042 = vadd.f32 %v3040, %v3041
        %v3043 = vsel %vm1991, %v2654, 0.0
        %v3044 = vadd.f32 %v3042, %v3043
        %v3045 = vsel %vm1991, %v2660, 0.0
        %v3046 = vadd.f32 %v3044, %v3045
        %v3047 = vsel %vm1991, %v2666, 0.0
        %v3048 = vadd.f32 %v3046, %v3047
        %v3049 = vsel %vm1991, %v2672, 0.0
        %v3050 = vadd.f32 %v3048, %v3049
        %3052 = vrot.lane.b32.xlu0 %v2055, 1
        %v3053 = vpop.permute.xlu0 %3052
        %3054 = vrot.lane.b32.xlu0 %v2057, 1
        %v3055 = vpop.permute.xlu0 %3054
        %3056 = vrot.lane.b32.xlu0 %v2059, 1
        %v3057 = vpop.permute.xlu0 %3056
        %v3061 = vmul.f32 %v2055, %v3053
        %v3062 = vmul.f32 %v2056, %v3053
        %v3063 = vmul.f32 %v2057, %v3055
        %v3064 = vmul.f32 %v2058, %v3055
        %v3065 = vmul.f32 %v2059, %v3057
        %v3066 = vmul.f32 %v2060, %v3057
        %v3067 = vrsqrt.pop %v3061
        %v3068 = vrsqrt.pop %v3062
        %v3069 = vrsqrt.pop %v3063
        %v3070 = vrsqrt.pop %v3064
        %v3071 = vrsqrt.pop %v3065
        %v3072 = vrsqrt.pop %v3066
        %v3073 = vmul.f32 %v2735, %v3067
        %v3074 = vmul.f32 %v2798, %v3068
        %v3075 = vmul.f32 %v2861, %v3069
        %v3076 = vmul.f32 %v2924, %v3070
        %v3077 = vmul.f32 %v2987, %v3071
        %v3078 = vmul.f32 %v3050, %v3072
        %v3079 = vrot.slane %v215, 7
        %v3080 = vrot.slane %v216, 7
        %v3081 = vsel %vm1094, %v3079, %v3080
        %vm3082 = vcmp.eq.s32.totalorder %v209, %v3079
        %vm3083 = vcmp.eq.s32.totalorder %v211, %v3081
        %vm3084 = vcmp.eq.s32.totalorder %v213, %v3080
        %v3085 = vrot.slane %v219, 7
        %v3086 = vrot.slane %v220, 7
        %v3087 = vsel %vm1094, %v3085, %v3086
        %vm3088 = vcmp.ne.s32.totalorder %v3085, 0
        %vm3089 = vcmp.ne.s32.totalorder %v3087, 0
        %vm3090 = vcmp.ne.s32.totalorder %v3086, 0
        %vm3091 = vmand %vm3082, %vm3088
        %vm3092 = vmand %vm3083, %vm3089
        %vm3093 = vmand %vm3084, %vm3090
        %v3094 = vadd.f32 %v2097, %v3073
        %v3095 = vadd.f32 %v2098, %v3074
        %v3096 = vadd.f32 %v2099, %v3075
        %v3097 = vadd.f32 %v2100, %v3076
        %v3098 = vadd.f32 %v2101, %v3077
        %v3099 = vadd.f32 %v2102, %v3078
        %3106 = vrot.lane.b32.xlu0 %v3073, 127
        %v3107 = vpop.permute.xlu0 %3106
        %3108 = vrot.lane.b32.xlu0 %v3074, 127
        %v3109 = vpop.permute.xlu0 %3108
        %3110 = vrot.lane.b32.xlu0 %v3075, 127
        %v3111 = vpop.permute.xlu0 %3110
        %3112 = vrot.lane.b32.xlu0 %v3076, 127
        %v3113 = vpop.permute.xlu0 %3112
        %3114 = vrot.lane.b32.xlu0 %v3077, 127
        %v3115 = vpop.permute.xlu0 %3114
        %3116 = vrot.lane.b32.xlu0 %v3078, 127
        %v3117 = vpop.permute.xlu0 %3116
        %v3118 = vsel %vm2128, %v3107, %v3109
        %v3119 = vsel %vm2128, %v3111, %v3113
        %v3120 = vsel %vm2128, %v3115, %v3117
        %v3124 = vsel %vm3091, %v3118, 0.0
        %v3125 = vsel %vm3092, %v3119, 0.0
        %v3126 = vsel %vm3093, %v3120, 0.0
        %v3130 = vrot.slane %v3124, 1
        %v3131 = vrot.slane %v3125, 1
        %v3132 = vsel %vm2109, %v3130, %v3131
        %v3133 = vrot.slane %v3126, 1
        %v3134 = vsel %vm2109, %v3131, %v3133
        %v3137 = vadd.f32 %v3132, %v3134
        %3138 = vadd.xlane.f32.xlu0 %v3137
        %v3139 = vpop.xlane.xlu0 %3138
        %v3140 = vrot.slane %v3139, 4
        %v3141 = vadd.f32 %v3139, %v3140
        %v3142 = vrot.slane %v3141, 2
        %v3143 = vadd.f32 %v3141, %v3142
        %v3144 = vrot.slane %v3143, 1
        %v3145 = vadd.f32 %v3143, %v3144
        %s3146 = vtos %v3145
        %s3147 = sadd.f32 %s2145, %s3146
        %v3148 = vsel %vm3091, 1, 0
        %v3149 = vsel %vm3092, 1, 0
        %v3150 = vsel %vm3093, 1, 0
        %v3151 = vcvt.s32.f32 %v3148
        %v3152 = vcvt.s32.f32 %v3149
        %v3153 = vcvt.s32.f32 %v3150
        %v3157 = vrot.slane %v3151, 1
        %v3158 = vrot.slane %v3152, 1
        %v3159 = vsel %vm2109, %v3157, %v3158
        %v3160 = vrot.slane %v3153, 1
        %v3161 = vsel %vm2109, %v3158, %v3160
        %v3164 = vadd.f32 %v3159, %v3161
        %3165 = vadd.xlane.f32.xlu0 %v3164
        %v3166 = vpop.xlane.xlu0 %3165
        %v3167 = vrot.slane %v3166, 4
        %v3168 = vadd.f32 %v3166, %v3167
        %v3169 = vrot.slane %v3168, 2
        %v3170 = vadd.f32 %v3168, %v3169
        %v3171 = vrot.slane %v3170, 1
        %v3172 = vadd.f32 %v3170, %v3171
        %s3173 = vtos %v3172
        %s3174 = sadd.f32 %s2160, %s3173
        %v3175 = vrot.slane %v329, 1
        %v3176 = vrot.slane %v331, 1
        %v3177 = vsel %vm2109, %v3175, %v3176
        %v3178 = vrot.slane %v333, 1
        %v3179 = vsel %vm2109, %v3176, %v3178
        %v3180 = vrot.slane %v335, 1
        %v3181 = vrot.slane %v337, 1
        %v3182 = vsel %vm2109, %v3180, %v3181
        %v3183 = vrot.slane %v339, 1
        %v3184 = vsel %vm2109, %v3181, %v3183
        %v3185 = vrot.slane %v341, 1
        %v3186 = vrot.slane %v343, 1
        %v3187 = vsel %vm2109, %v3185, %v3186
        %v3188 = vrot.slane %v345, 1
        %v3189 = vsel %vm2109, %v3186, %v3188
        %v3190 = vrot.slane %v347, 1
        %v3191 = vrot.slane %v349, 1
        %v3192 = vsel %vm2109, %v3190, %v3191
        %v3193 = vrot.slane %v351, 1
        %v3194 = vsel %vm2109, %v3191, %v3193
        %v3195 = vrot.slane %v353, 1
        %v3196 = vrot.slane %v355, 1
        %v3197 = vsel %vm2109, %v3195, %v3196
        %v3198 = vrot.slane %v357, 1
        %v3199 = vsel %vm2109, %v3196, %v3198
        %v3200 = vrot.slane %v359, 1
        %v3201 = vrot.slane %v361, 1
        %v3202 = vsel %vm2109, %v3200, %v3201
        %v3203 = vrot.slane %v363, 1
        %v3204 = vsel %vm2109, %v3201, %v3203
        %v3205 = vrot.slane %v365, 1
        %v3206 = vrot.slane %v367, 1
        %v3207 = vsel %vm2109, %v3205, %v3206
        %v3208 = vrot.slane %v369, 1
        %v3209 = vsel %vm2109, %v3206, %v3208
        %v3210 = vrot.slane %v371, 1
        %v3211 = vrot.slane %v373, 1
        %v3212 = vsel %vm2109, %v3210, %v3211
        %v3213 = vrot.slane %v375, 1
        %v3214 = vsel %vm2109, %v3211, %v3213
        %v3215 = vrot.slane %v377, 1
        %v3216 = vrot.slane %v379, 1
        %v3217 = vsel %vm2109, %v3215, %v3216
        %v3218 = vrot.slane %v381, 1
        %v3219 = vsel %vm2109, %v3216, %v3218
        %v3220 = vrot.slane %v383, 1
        %v3221 = vrot.slane %v385, 1
        %v3222 = vsel %vm2109, %v3220, %v3221
        %v3223 = vrot.slane %v387, 1
        %v3224 = vsel %vm2109, %v3221, %v3223
        %v3225 = vrot.slane %v389, 1
        %v3226 = vrot.slane %v391, 1
        %v3227 = vsel %vm2109, %v3225, %v3226
        %v3228 = vrot.slane %v393, 1
        %v3229 = vsel %vm2109, %v3226, %v3228
        %v3230 = vrot.slane %v395, 1
        %v3231 = vrot.slane %v397, 1
        %v3232 = vsel %vm2109, %v3230, %v3231
        %v3233 = vrot.slane %v399, 1
        %v3234 = vsel %vm2109, %v3231, %v3233
        %v3235 = vrot.slane %v401, 1
        %v3236 = vrot.slane %v403, 1
        %v3237 = vsel %vm2109, %v3235, %v3236
        %v3238 = vrot.slane %v405, 1
        %v3239 = vsel %vm2109, %v3236, %v3238
        %v3240 = vrot.slane %v407, 1
        %v3241 = vrot.slane %v409, 1
        %v3242 = vsel %vm2109, %v3240, %v3241
        %v3243 = vrot.slane %v411, 1
        %v3244 = vsel %vm2109, %v3241, %v3243
        %v3245 = vrot.slane %v413, 1
        %v3246 = vrot.slane %v415, 1
        %v3247 = vsel %vm2109, %v3245, %v3246
        %v3248 = vrot.slane %v417, 1
        %v3249 = vsel %vm2109, %v3246, %v3248
        %v3250 = vrot.slane %v419, 1
        %v3251 = vrot.slane %v421, 1
        %v3252 = vsel %vm2109, %v3250, %v3251
        %v3253 = vrot.slane %v423, 1
        %v3254 = vsel %vm2109, %v3251, %v3253
        %v3255 = vrot.slane %v425, 1
        %v3256 = vrot.slane %v427, 1
        %v3257 = vsel %vm2109, %v3255, %v3256
        %v3258 = vrot.slane %v429, 1
        %v3259 = vsel %vm2109, %v3256, %v3258
        %v3260 = vrot.slane %v431, 1
        %v3261 = vrot.slane %v433, 1
        %v3262 = vsel %vm2109, %v3260, %v3261
        %v3263 = vrot.slane %v435, 1
        %v3264 = vsel %vm2109, %v3261, %v3263
        %v3265 = vrot.slane %v437, 1
        %v3266 = vrot.slane %v439, 1
        %v3267 = vsel %vm2109, %v3265, %v3266
        %v3268 = vrot.slane %v441, 1
        %v3269 = vsel %vm2109, %v3266, %v3268
        %v3270 = vrot.slane %v443, 1
        %v3271 = vrot.slane %v445, 1
        %v3272 = vsel %vm2109, %v3270, %v3271
        %v3273 = vrot.slane %v447, 1
        %v3274 = vsel %vm2109, %v3271, %v3273
        %v3275 = vrot.slane %v449, 1
        %v3276 = vrot.slane %v451, 1
        %v3277 = vsel %vm2109, %v3275, %v3276
        %v3278 = vrot.slane %v453, 1
        %v3279 = vsel %vm2109, %v3276, %v3278
        %v3280 = vrot.slane %v455, 1
        %v3281 = vrot.slane %v457, 1
        %v3282 = vsel %vm2109, %v3280, %v3281
        %v3283 = vrot.slane %v459, 1
        %v3284 = vsel %vm2109, %v3281, %v3283
        %v3285 = vrot.slane %v461, 1
        %v3286 = vrot.slane %v463, 1
        %v3287 = vsel %vm2109, %v3285, %v3286
        %v3288 = vrot.slane %v465, 1
        %v3289 = vsel %vm2109, %v3286, %v3288
        %v3290 = vrot.slane %v467, 1
        %v3291 = vrot.slane %v469, 1
        %v3292 = vsel %vm2109, %v3290, %v3291
        %v3293 = vrot.slane %v471, 1
        %v3294 = vsel %vm2109, %v3291, %v3293
        %v3295 = vrot.slane %v473, 1
        %v3296 = vrot.slane %v475, 1
        %v3297 = vsel %vm2109, %v3295, %v3296
        %v3298 = vrot.slane %v477, 1
        %v3299 = vsel %vm2109, %v3296, %v3298
        %v3300 = vrot.slane %v479, 1
        %v3301 = vrot.slane %v481, 1
        %v3302 = vsel %vm2109, %v3300, %v3301
        %v3303 = vrot.slane %v483, 1
        %v3304 = vsel %vm2109, %v3301, %v3303
        %v3305 = vrot.slane %v485, 1
        %v3306 = vrot.slane %v487, 1
        %v3307 = vsel %vm2109, %v3305, %v3306
        %v3308 = vrot.slane %v489, 1
        %v3309 = vsel %vm2109, %v3306, %v3308
        %v3310 = vrot.slane %v491, 1
        %v3311 = vrot.slane %v493, 1
        %v3312 = vsel %vm2109, %v3310, %v3311
        %v3313 = vrot.slane %v495, 1
        %v3314 = vsel %vm2109, %v3311, %v3313
        %v3315 = vrot.slane %v497, 1
        %v3316 = vrot.slane %v499, 1
        %v3317 = vsel %vm2109, %v3315, %v3316
        %v3318 = vrot.slane %v501, 1
        %v3319 = vsel %vm2109, %v3316, %v3318
        %v3320 = vrot.slane %v503, 1
        %v3321 = vrot.slane %v505, 1
        %v3322 = vsel %vm2109, %v3320, %v3321
        %v3323 = vrot.slane %v507, 1
        %v3324 = vsel %vm2109, %v3321, %v3323
        %v3325 = vrot.slane %v509, 1
        %v3326 = vrot.slane %v511, 1
        %v3327 = vsel %vm2109, %v3325, %v3326
        %v3328 = vrot.slane %v513, 1
        %v3329 = vsel %vm2109, %v3326, %v3328
        %v3330 = vrot.slane %v515, 1
        %v3331 = vrot.slane %v517, 1
        %v3332 = vsel %vm2109, %v3330, %v3331
        %v3333 = vrot.slane %v519, 1
        %v3334 = vsel %vm2109, %v3331, %v3333
        %3335 = vrot.lane.b32.xlu0 %v3177, 1
        %v3336 = vpop.permute.xlu0 %3335
        %3337 = vrot.lane.b32.xlu0 %v3179, 1
        %v3338 = vpop.permute.xlu0 %3337
        %3339 = vrot.lane.b32.xlu0 %v3178, 1
        %v3340 = vpop.permute.xlu0 %3339
        %3341 = vrot.lane.b32.xlu0 %v3182, 1
        %v3342 = vpop.permute.xlu0 %3341
        %3343 = vrot.lane.b32.xlu0 %v3184, 1
        %v3344 = vpop.permute.xlu0 %3343
        %3345 = vrot.lane.b32.xlu0 %v3183, 1
        %v3346 = vpop.permute.xlu0 %3345
        %3347 = vrot.lane.b32.xlu0 %v3187, 1
        %v3348 = vpop.permute.xlu0 %3347
        %3349 = vrot.lane.b32.xlu0 %v3189, 1
        %v3350 = vpop.permute.xlu0 %3349
        %3351 = vrot.lane.b32.xlu0 %v3188, 1
        %v3352 = vpop.permute.xlu0 %3351
        %3353 = vrot.lane.b32.xlu0 %v3192, 1
        %v3354 = vpop.permute.xlu0 %3353
        %3355 = vrot.lane.b32.xlu0 %v3194, 1
        %v3356 = vpop.permute.xlu0 %3355
        %3357 = vrot.lane.b32.xlu0 %v3193, 1
        %v3358 = vpop.permute.xlu0 %3357
        %3359 = vrot.lane.b32.xlu0 %v3197, 1
        %v3360 = vpop.permute.xlu0 %3359
        %3361 = vrot.lane.b32.xlu0 %v3199, 1
        %v3362 = vpop.permute.xlu0 %3361
        %3363 = vrot.lane.b32.xlu0 %v3198, 1
        %v3364 = vpop.permute.xlu0 %3363
        %3365 = vrot.lane.b32.xlu0 %v3202, 1
        %v3366 = vpop.permute.xlu0 %3365
        %3367 = vrot.lane.b32.xlu0 %v3204, 1
        %v3368 = vpop.permute.xlu0 %3367
        %3369 = vrot.lane.b32.xlu0 %v3203, 1
        %v3370 = vpop.permute.xlu0 %3369
        %3371 = vrot.lane.b32.xlu0 %v3207, 1
        %v3372 = vpop.permute.xlu0 %3371
        %3373 = vrot.lane.b32.xlu0 %v3209, 1
        %v3374 = vpop.permute.xlu0 %3373
        %3375 = vrot.lane.b32.xlu0 %v3208, 1
        %v3376 = vpop.permute.xlu0 %3375
        %3377 = vrot.lane.b32.xlu0 %v3212, 1
        %v3378 = vpop.permute.xlu0 %3377
        %3379 = vrot.lane.b32.xlu0 %v3214, 1
        %v3380 = vpop.permute.xlu0 %3379
        %3381 = vrot.lane.b32.xlu0 %v3213, 1
        %v3382 = vpop.permute.xlu0 %3381
        %3383 = vrot.lane.b32.xlu0 %v3217, 1
        %v3384 = vpop.permute.xlu0 %3383
        %3385 = vrot.lane.b32.xlu0 %v3219, 1
        %v3386 = vpop.permute.xlu0 %3385
        %3387 = vrot.lane.b32.xlu0 %v3218, 1
        %v3388 = vpop.permute.xlu0 %3387
        %3389 = vrot.lane.b32.xlu0 %v3222, 1
        %v3390 = vpop.permute.xlu0 %3389
        %3391 = vrot.lane.b32.xlu0 %v3224, 1
        %v3392 = vpop.permute.xlu0 %3391
        %3393 = vrot.lane.b32.xlu0 %v3223, 1
        %v3394 = vpop.permute.xlu0 %3393
        %3395 = vrot.lane.b32.xlu0 %v3227, 1
        %v3396 = vpop.permute.xlu0 %3395
        %3397 = vrot.lane.b32.xlu0 %v3229, 1
        %v3398 = vpop.permute.xlu0 %3397
        %3399 = vrot.lane.b32.xlu0 %v3228, 1
        %v3400 = vpop.permute.xlu0 %3399
        %3401 = vrot.lane.b32.xlu0 %v3232, 1
        %v3402 = vpop.permute.xlu0 %3401
        %3403 = vrot.lane.b32.xlu0 %v3234, 1
        %v3404 = vpop.permute.xlu0 %3403
        %3405 = vrot.lane.b32.xlu0 %v3233, 1
        %v3406 = vpop.permute.xlu0 %3405
        %3407 = vrot.lane.b32.xlu0 %v3237, 1
        %v3408 = vpop.permute.xlu0 %3407
        %3409 = vrot.lane.b32.xlu0 %v3239, 1
        %v3410 = vpop.permute.xlu0 %3409
        %3411 = vrot.lane.b32.xlu0 %v3238, 1
        %v3412 = vpop.permute.xlu0 %3411
        %3413 = vrot.lane.b32.xlu0 %v3242, 1
        %v3414 = vpop.permute.xlu0 %3413
        %3415 = vrot.lane.b32.xlu0 %v3244, 1
        %v3416 = vpop.permute.xlu0 %3415
        %3417 = vrot.lane.b32.xlu0 %v3243, 1
        %v3418 = vpop.permute.xlu0 %3417
        %3419 = vrot.lane.b32.xlu0 %v3247, 1
        %v3420 = vpop.permute.xlu0 %3419
        %3421 = vrot.lane.b32.xlu0 %v3249, 1
        %v3422 = vpop.permute.xlu0 %3421
        %3423 = vrot.lane.b32.xlu0 %v3248, 1
        %v3424 = vpop.permute.xlu0 %3423
        %3425 = vrot.lane.b32.xlu0 %v3252, 1
        %v3426 = vpop.permute.xlu0 %3425
        %3427 = vrot.lane.b32.xlu0 %v3254, 1
        %v3428 = vpop.permute.xlu0 %3427
        %3429 = vrot.lane.b32.xlu0 %v3253, 1
        %v3430 = vpop.permute.xlu0 %3429
        %3431 = vrot.lane.b32.xlu0 %v3257, 1
        %v3432 = vpop.permute.xlu0 %3431
        %3433 = vrot.lane.b32.xlu0 %v3259, 1
        %v3434 = vpop.permute.xlu0 %3433
        %3435 = vrot.lane.b32.xlu0 %v3258, 1
        %v3436 = vpop.permute.xlu0 %3435
        %3437 = vrot.lane.b32.xlu0 %v3262, 1
        %v3438 = vpop.permute.xlu0 %3437
        %3439 = vrot.lane.b32.xlu0 %v3264, 1
        %v3440 = vpop.permute.xlu0 %3439
        %3441 = vrot.lane.b32.xlu0 %v3263, 1
        %v3442 = vpop.permute.xlu0 %3441
        %3443 = vrot.lane.b32.xlu0 %v3267, 1
        %v3444 = vpop.permute.xlu0 %3443
        %3445 = vrot.lane.b32.xlu0 %v3269, 1
        %v3446 = vpop.permute.xlu0 %3445
        %3447 = vrot.lane.b32.xlu0 %v3268, 1
        %v3448 = vpop.permute.xlu0 %3447
        %3449 = vrot.lane.b32.xlu0 %v3272, 1
        %v3450 = vpop.permute.xlu0 %3449
        %3451 = vrot.lane.b32.xlu0 %v3274, 1
        %v3452 = vpop.permute.xlu0 %3451
        %3453 = vrot.lane.b32.xlu0 %v3273, 1
        %v3454 = vpop.permute.xlu0 %3453
        %3455 = vrot.lane.b32.xlu0 %v3277, 1
        %v3456 = vpop.permute.xlu0 %3455
        %3457 = vrot.lane.b32.xlu0 %v3279, 1
        %v3458 = vpop.permute.xlu0 %3457
        %3459 = vrot.lane.b32.xlu0 %v3278, 1
        %v3460 = vpop.permute.xlu0 %3459
        %3461 = vrot.lane.b32.xlu0 %v3282, 1
        %v3462 = vpop.permute.xlu0 %3461
        %3463 = vrot.lane.b32.xlu0 %v3284, 1
        %v3464 = vpop.permute.xlu0 %3463
        %3465 = vrot.lane.b32.xlu0 %v3283, 1
        %v3466 = vpop.permute.xlu0 %3465
        %3467 = vrot.lane.b32.xlu0 %v3287, 1
        %v3468 = vpop.permute.xlu0 %3467
        %3469 = vrot.lane.b32.xlu0 %v3289, 1
        %v3470 = vpop.permute.xlu0 %3469
        %3471 = vrot.lane.b32.xlu0 %v3288, 1
        %v3472 = vpop.permute.xlu0 %3471
        %3473 = vrot.lane.b32.xlu0 %v3292, 1
        %v3474 = vpop.permute.xlu0 %3473
        %3475 = vrot.lane.b32.xlu0 %v3294, 1
        %v3476 = vpop.permute.xlu0 %3475
        %3477 = vrot.lane.b32.xlu0 %v3293, 1
        %v3478 = vpop.permute.xlu0 %3477
        %3479 = vrot.lane.b32.xlu0 %v3297, 1
        %v3480 = vpop.permute.xlu0 %3479
        %3481 = vrot.lane.b32.xlu0 %v3299, 1
        %v3482 = vpop.permute.xlu0 %3481
        %3483 = vrot.lane.b32.xlu0 %v3298, 1
        %v3484 = vpop.permute.xlu0 %3483
        %3485 = vrot.lane.b32.xlu0 %v3302, 1
        %v3486 = vpop.permute.xlu0 %3485
        %3487 = vrot.lane.b32.xlu0 %v3304, 1
        %v3488 = vpop.permute.xlu0 %3487
        %3489 = vrot.lane.b32.xlu0 %v3303, 1
        %v3490 = vpop.permute.xlu0 %3489
        %3491 = vrot.lane.b32.xlu0 %v3307, 1
        %v3492 = vpop.permute.xlu0 %3491
        %3493 = vrot.lane.b32.xlu0 %v3309, 1
        %v3494 = vpop.permute.xlu0 %3493
        %3495 = vrot.lane.b32.xlu0 %v3308, 1
        %v3496 = vpop.permute.xlu0 %3495
        %3497 = vrot.lane.b32.xlu0 %v3312, 1
        %v3498 = vpop.permute.xlu0 %3497
        %3499 = vrot.lane.b32.xlu0 %v3314, 1
        %v3500 = vpop.permute.xlu0 %3499
        %3501 = vrot.lane.b32.xlu0 %v3313, 1
        %v3502 = vpop.permute.xlu0 %3501
        %3503 = vrot.lane.b32.xlu0 %v3317, 1
        %v3504 = vpop.permute.xlu0 %3503
        %3505 = vrot.lane.b32.xlu0 %v3319, 1
        %v3506 = vpop.permute.xlu0 %3505
        %3507 = vrot.lane.b32.xlu0 %v3318, 1
        %v3508 = vpop.permute.xlu0 %3507
        %3509 = vrot.lane.b32.xlu0 %v3322, 1
        %v3510 = vpop.permute.xlu0 %3509
        %3511 = vrot.lane.b32.xlu0 %v3324, 1
        %v3512 = vpop.permute.xlu0 %3511
        %3513 = vrot.lane.b32.xlu0 %v3323, 1
        %v3514 = vpop.permute.xlu0 %3513
        %3515 = vrot.lane.b32.xlu0 %v3327, 1
        %v3516 = vpop.permute.xlu0 %3515
        %3517 = vrot.lane.b32.xlu0 %v3329, 1
        %v3518 = vpop.permute.xlu0 %3517
        %3519 = vrot.lane.b32.xlu0 %v3328, 1
        %v3520 = vpop.permute.xlu0 %3519
        %3521 = vrot.lane.b32.xlu0 %v3332, 1
        %v3522 = vpop.permute.xlu0 %3521
        %3523 = vrot.lane.b32.xlu0 %v3334, 1
        %v3524 = vpop.permute.xlu0 %3523
        %3525 = vrot.lane.b32.xlu0 %v3333, 1
        %v3526 = vpop.permute.xlu0 %3525
        %v3623 = vmul.f32 %v329, %v3336
        %v3624 = vmul.f32 %v330, %v3336
        %v3625 = vmul.f32 %v331, %v3338
        %v3626 = vmul.f32 %v332, %v3338
        %v3627 = vmul.f32 %v333, %v3340
        %v3628 = vmul.f32 %v334, %v3340
        %v3629 = vmul.f32 %v335, %v3342
        %v3630 = vmul.f32 %v336, %v3342
        %v3631 = vmul.f32 %v337, %v3344
        %v3632 = vmul.f32 %v338, %v3344
        %v3633 = vmul.f32 %v339, %v3346
        %v3634 = vmul.f32 %v340, %v3346
        %v3635 = vmul.f32 %v341, %v3348
        %v3636 = vmul.f32 %v342, %v3348
        %v3637 = vmul.f32 %v343, %v3350
        %v3638 = vmul.f32 %v344, %v3350
        %v3639 = vmul.f32 %v345, %v3352
        %v3640 = vmul.f32 %v346, %v3352
        %v3641 = vmul.f32 %v347, %v3354
        %v3642 = vmul.f32 %v348, %v3354
        %v3643 = vmul.f32 %v349, %v3356
        %v3644 = vmul.f32 %v350, %v3356
        %v3645 = vmul.f32 %v351, %v3358
        %v3646 = vmul.f32 %v352, %v3358
        %v3647 = vmul.f32 %v353, %v3360
        %v3648 = vmul.f32 %v354, %v3360
        %v3649 = vmul.f32 %v355, %v3362
        %v3650 = vmul.f32 %v356, %v3362
        %v3651 = vmul.f32 %v357, %v3364
        %v3652 = vmul.f32 %v358, %v3364
        %v3653 = vmul.f32 %v359, %v3366
        %v3654 = vmul.f32 %v360, %v3366
        %v3655 = vmul.f32 %v361, %v3368
        %v3656 = vmul.f32 %v362, %v3368
        %v3657 = vmul.f32 %v363, %v3370
        %v3658 = vmul.f32 %v364, %v3370
        %v3659 = vmul.f32 %v365, %v3372
        %v3660 = vmul.f32 %v366, %v3372
        %v3661 = vmul.f32 %v367, %v3374
        %v3662 = vmul.f32 %v368, %v3374
        %v3663 = vmul.f32 %v369, %v3376
        %v3664 = vmul.f32 %v370, %v3376
        %v3665 = vmul.f32 %v371, %v3378
        %v3666 = vmul.f32 %v372, %v3378
        %v3667 = vmul.f32 %v373, %v3380
        %v3668 = vmul.f32 %v374, %v3380
        %v3669 = vmul.f32 %v375, %v3382
        %v3670 = vmul.f32 %v376, %v3382
        %v3671 = vmul.f32 %v377, %v3384
        %v3672 = vmul.f32 %v378, %v3384
        %v3673 = vmul.f32 %v379, %v3386
        %v3674 = vmul.f32 %v380, %v3386
        %v3675 = vmul.f32 %v381, %v3388
        %v3676 = vmul.f32 %v382, %v3388
        %v3677 = vmul.f32 %v383, %v3390
        %v3678 = vmul.f32 %v384, %v3390
        %v3679 = vmul.f32 %v385, %v3392
        %v3680 = vmul.f32 %v386, %v3392
        %v3681 = vmul.f32 %v387, %v3394
        %v3682 = vmul.f32 %v388, %v3394
        %v3683 = vmul.f32 %v389, %v3396
        %v3684 = vmul.f32 %v390, %v3396
        %v3685 = vmul.f32 %v391, %v3398
        %v3686 = vmul.f32 %v392, %v3398
        %v3687 = vmul.f32 %v393, %v3400
        %v3688 = vmul.f32 %v394, %v3400
        %v3689 = vmul.f32 %v395, %v3402
        %v3690 = vmul.f32 %v396, %v3402
        %v3691 = vmul.f32 %v397, %v3404
        %v3692 = vmul.f32 %v398, %v3404
        %v3693 = vmul.f32 %v399, %v3406
        %v3694 = vmul.f32 %v400, %v3406
        %v3695 = vmul.f32 %v401, %v3408
        %v3696 = vmul.f32 %v402, %v3408
        %v3697 = vmul.f32 %v403, %v3410
        %v3698 = vmul.f32 %v404, %v3410
        %v3699 = vmul.f32 %v405, %v3412
        %v3700 = vmul.f32 %v406, %v3412
        %v3701 = vmul.f32 %v407, %v3414
        %v3702 = vmul.f32 %v408, %v3414
        %v3703 = vmul.f32 %v409, %v3416
        %v3704 = vmul.f32 %v410, %v3416
        %v3705 = vmul.f32 %v411, %v3418
        %v3706 = vmul.f32 %v412, %v3418
        %v3707 = vmul.f32 %v413, %v3420
        %v3708 = vmul.f32 %v414, %v3420
        %v3709 = vmul.f32 %v415, %v3422
        %v3710 = vmul.f32 %v416, %v3422
        %v3711 = vmul.f32 %v417, %v3424
        %v3712 = vmul.f32 %v418, %v3424
        %v3713 = vmul.f32 %v419, %v3426
        %v3714 = vmul.f32 %v420, %v3426
        %v3715 = vmul.f32 %v421, %v3428
        %v3716 = vmul.f32 %v422, %v3428
        %v3717 = vmul.f32 %v423, %v3430
        %v3718 = vmul.f32 %v424, %v3430
        %v3719 = vmul.f32 %v425, %v3432
        %v3720 = vmul.f32 %v426, %v3432
        %v3721 = vmul.f32 %v427, %v3434
        %v3722 = vmul.f32 %v428, %v3434
        %v3723 = vmul.f32 %v429, %v3436
        %v3724 = vmul.f32 %v430, %v3436
        %v3725 = vmul.f32 %v431, %v3438
        %v3726 = vmul.f32 %v432, %v3438
        %v3727 = vmul.f32 %v433, %v3440
        %v3728 = vmul.f32 %v434, %v3440
        %v3729 = vmul.f32 %v435, %v3442
        %v3730 = vmul.f32 %v436, %v3442
        %v3731 = vmul.f32 %v437, %v3444
        %v3732 = vmul.f32 %v438, %v3444
        %v3733 = vmul.f32 %v439, %v3446
        %v3734 = vmul.f32 %v440, %v3446
        %v3735 = vmul.f32 %v441, %v3448
        %v3736 = vmul.f32 %v442, %v3448
        %v3737 = vmul.f32 %v443, %v3450
        %v3738 = vmul.f32 %v444, %v3450
        %v3739 = vmul.f32 %v445, %v3452
        %v3740 = vmul.f32 %v446, %v3452
        %v3741 = vmul.f32 %v447, %v3454
        %v3742 = vmul.f32 %v448, %v3454
        %v3743 = vmul.f32 %v449, %v3456
        %v3744 = vmul.f32 %v450, %v3456
        %v3745 = vmul.f32 %v451, %v3458
        %v3746 = vmul.f32 %v452, %v3458
        %v3747 = vmul.f32 %v453, %v3460
        %v3748 = vmul.f32 %v454, %v3460
        %v3749 = vmul.f32 %v455, %v3462
        %v3750 = vmul.f32 %v456, %v3462
        %v3751 = vmul.f32 %v457, %v3464
        %v3752 = vmul.f32 %v458, %v3464
        %v3753 = vmul.f32 %v459, %v3466
        %v3754 = vmul.f32 %v460, %v3466
        %v3755 = vmul.f32 %v461, %v3468
        %v3756 = vmul.f32 %v462, %v3468
        %v3757 = vmul.f32 %v463, %v3470
        %v3758 = vmul.f32 %v464, %v3470
        %v3759 = vmul.f32 %v465, %v3472
        %v3760 = vmul.f32 %v466, %v3472
        %v3761 = vmul.f32 %v467, %v3474
        %v3762 = vmul.f32 %v468, %v3474
        %v3763 = vmul.f32 %v469, %v3476
        %v3764 = vmul.f32 %v470, %v3476
        %v3765 = vmul.f32 %v471, %v3478
        %v3766 = vmul.f32 %v472, %v3478
        %v3767 = vmul.f32 %v473, %v3480
        %v3768 = vmul.f32 %v474, %v3480
        %v3769 = vmul.f32 %v475, %v3482
        %v3770 = vmul.f32 %v476, %v3482
        %v3771 = vmul.f32 %v477, %v3484
        %v3772 = vmul.f32 %v478, %v3484
        %v3773 = vmul.f32 %v479, %v3486
        %v3774 = vmul.f32 %v480, %v3486
        %v3775 = vmul.f32 %v481, %v3488
        %v3776 = vmul.f32 %v482, %v3488
        %v3777 = vmul.f32 %v483, %v3490
        %v3778 = vmul.f32 %v484, %v3490
        %v3779 = vmul.f32 %v485, %v3492
        %v3780 = vmul.f32 %v486, %v3492
        %v3781 = vmul.f32 %v487, %v3494
        %v3782 = vmul.f32 %v488, %v3494
        %v3783 = vmul.f32 %v489, %v3496
        %v3784 = vmul.f32 %v490, %v3496
        %v3785 = vmul.f32 %v491, %v3498
        %v3786 = vmul.f32 %v492, %v3498
        %v3787 = vmul.f32 %v493, %v3500
        %v3788 = vmul.f32 %v494, %v3500
        %v3789 = vmul.f32 %v495, %v3502
        %v3790 = vmul.f32 %v496, %v3502
        %v3791 = vmul.f32 %v497, %v3504
        %v3792 = vmul.f32 %v498, %v3504
        %v3793 = vmul.f32 %v499, %v3506
        %v3794 = vmul.f32 %v500, %v3506
        %v3795 = vmul.f32 %v501, %v3508
        %v3796 = vmul.f32 %v502, %v3508
        %v3797 = vmul.f32 %v503, %v3510
        %v3798 = vmul.f32 %v504, %v3510
        %v3799 = vmul.f32 %v505, %v3512
        %v3800 = vmul.f32 %v506, %v3512
        %v3801 = vmul.f32 %v507, %v3514
        %v3802 = vmul.f32 %v508, %v3514
        %v3803 = vmul.f32 %v509, %v3516
        %v3804 = vmul.f32 %v510, %v3516
        %v3805 = vmul.f32 %v511, %v3518
        %v3806 = vmul.f32 %v512, %v3518
        %v3807 = vmul.f32 %v513, %v3520
        %v3808 = vmul.f32 %v514, %v3520
        %v3809 = vmul.f32 %v515, %v3522
        %v3810 = vmul.f32 %v516, %v3522
        %v3811 = vmul.f32 %v517, %v3524
        %v3812 = vmul.f32 %v518, %v3524
        %v3813 = vmul.f32 %v519, %v3526
        %v3814 = vmul.f32 %v520, %v3526
        %v3815 = vsel %vm1671, %v3623, 0.0
        %v3816 = vsel %vm1671, %v3629, 0.0
        %v3817 = vadd.f32 %v3815, %v3816
        %v3818 = vsel %vm1671, %v3635, 0.0
        %v3819 = vadd.f32 %v3817, %v3818
        %v3820 = vsel %vm1671, %v3641, 0.0
        %v3821 = vadd.f32 %v3819, %v3820
        %v3822 = vsel %vm1671, %v3647, 0.0
        %v3823 = vadd.f32 %v3821, %v3822
        %v3824 = vsel %vm1671, %v3653, 0.0
        %v3825 = vadd.f32 %v3823, %v3824
        %v3826 = vsel %vm1671, %v3659, 0.0
        %v3827 = vadd.f32 %v3825, %v3826
        %v3828 = vsel %vm1671, %v3665, 0.0
        %v3829 = vadd.f32 %v3827, %v3828
        %v3830 = vsel %vm1671, %v3671, 0.0
        %v3831 = vadd.f32 %v3829, %v3830
        %v3832 = vsel %vm1671, %v3677, 0.0
        %v3833 = vadd.f32 %v3831, %v3832
        %v3834 = vsel %vm1671, %v3683, 0.0
        %v3835 = vadd.f32 %v3833, %v3834
        %v3836 = vsel %vm1671, %v3689, 0.0
        %v3837 = vadd.f32 %v3835, %v3836
        %v3838 = vsel %vm1671, %v3695, 0.0
        %v3839 = vadd.f32 %v3837, %v3838
        %v3840 = vsel %vm1671, %v3701, 0.0
        %v3841 = vadd.f32 %v3839, %v3840
        %v3842 = vsel %vm1671, %v3707, 0.0
        %v3843 = vadd.f32 %v3841, %v3842
        %v3844 = vsel %vm1671, %v3713, 0.0
        %v3845 = vadd.f32 %v3843, %v3844
        %v3846 = vsel %vm1671, %v3719, 0.0
        %v3847 = vadd.f32 %v3845, %v3846
        %v3848 = vsel %vm1671, %v3725, 0.0
        %v3849 = vadd.f32 %v3847, %v3848
        %v3850 = vsel %vm1671, %v3731, 0.0
        %v3851 = vadd.f32 %v3849, %v3850
        %v3852 = vsel %vm1671, %v3737, 0.0
        %v3853 = vadd.f32 %v3851, %v3852
        %v3854 = vsel %vm1671, %v3743, 0.0
        %v3855 = vadd.f32 %v3853, %v3854
        %v3856 = vsel %vm1671, %v3749, 0.0
        %v3857 = vadd.f32 %v3855, %v3856
        %v3858 = vsel %vm1671, %v3755, 0.0
        %v3859 = vadd.f32 %v3857, %v3858
        %v3860 = vsel %vm1671, %v3761, 0.0
        %v3861 = vadd.f32 %v3859, %v3860
        %v3862 = vsel %vm1671, %v3767, 0.0
        %v3863 = vadd.f32 %v3861, %v3862
        %v3864 = vsel %vm1671, %v3773, 0.0
        %v3865 = vadd.f32 %v3863, %v3864
        %v3866 = vsel %vm1671, %v3779, 0.0
        %v3867 = vadd.f32 %v3865, %v3866
        %v3868 = vsel %vm1671, %v3785, 0.0
        %v3869 = vadd.f32 %v3867, %v3868
        %v3870 = vsel %vm1671, %v3791, 0.0
        %v3871 = vadd.f32 %v3869, %v3870
        %v3872 = vsel %vm1671, %v3797, 0.0
        %v3873 = vadd.f32 %v3871, %v3872
        %v3874 = vsel %vm1671, %v3803, 0.0
        %v3875 = vadd.f32 %v3873, %v3874
        %v3876 = vsel %vm1671, %v3809, 0.0
        %v3877 = vadd.f32 %v3875, %v3876
        %v3878 = vsel %vm1735, %v3624, 0.0
        %v3879 = vsel %vm1735, %v3630, 0.0
        %v3880 = vadd.f32 %v3878, %v3879
        %v3881 = vsel %vm1735, %v3636, 0.0
        %v3882 = vadd.f32 %v3880, %v3881
        %v3883 = vsel %vm1735, %v3642, 0.0
        %v3884 = vadd.f32 %v3882, %v3883
        %v3885 = vsel %vm1735, %v3648, 0.0
        %v3886 = vadd.f32 %v3884, %v3885
        %v3887 = vsel %vm1735, %v3654, 0.0
        %v3888 = vadd.f32 %v3886, %v3887
        %v3889 = vsel %vm1735, %v3660, 0.0
        %v3890 = vadd.f32 %v3888, %v3889
        %v3891 = vsel %vm1735, %v3666, 0.0
        %v3892 = vadd.f32 %v3890, %v3891
        %v3893 = vsel %vm1735, %v3672, 0.0
        %v3894 = vadd.f32 %v3892, %v3893
        %v3895 = vsel %vm1735, %v3678, 0.0
        %v3896 = vadd.f32 %v3894, %v3895
        %v3897 = vsel %vm1735, %v3684, 0.0
        %v3898 = vadd.f32 %v3896, %v3897
        %v3899 = vsel %vm1735, %v3690, 0.0
        %v3900 = vadd.f32 %v3898, %v3899
        %v3901 = vsel %vm1735, %v3696, 0.0
        %v3902 = vadd.f32 %v3900, %v3901
        %v3903 = vsel %vm1735, %v3702, 0.0
        %v3904 = vadd.f32 %v3902, %v3903
        %v3905 = vsel %vm1735, %v3708, 0.0
        %v3906 = vadd.f32 %v3904, %v3905
        %v3907 = vsel %vm1735, %v3714, 0.0
        %v3908 = vadd.f32 %v3906, %v3907
        %v3909 = vsel %vm1735, %v3720, 0.0
        %v3910 = vadd.f32 %v3908, %v3909
        %v3911 = vsel %vm1735, %v3726, 0.0
        %v3912 = vadd.f32 %v3910, %v3911
        %v3913 = vsel %vm1735, %v3732, 0.0
        %v3914 = vadd.f32 %v3912, %v3913
        %v3915 = vsel %vm1735, %v3738, 0.0
        %v3916 = vadd.f32 %v3914, %v3915
        %v3917 = vsel %vm1735, %v3744, 0.0
        %v3918 = vadd.f32 %v3916, %v3917
        %v3919 = vsel %vm1735, %v3750, 0.0
        %v3920 = vadd.f32 %v3918, %v3919
        %v3921 = vsel %vm1735, %v3756, 0.0
        %v3922 = vadd.f32 %v3920, %v3921
        %v3923 = vsel %vm1735, %v3762, 0.0
        %v3924 = vadd.f32 %v3922, %v3923
        %v3925 = vsel %vm1735, %v3768, 0.0
        %v3926 = vadd.f32 %v3924, %v3925
        %v3927 = vsel %vm1735, %v3774, 0.0
        %v3928 = vadd.f32 %v3926, %v3927
        %v3929 = vsel %vm1735, %v3780, 0.0
        %v3930 = vadd.f32 %v3928, %v3929
        %v3931 = vsel %vm1735, %v3786, 0.0
        %v3932 = vadd.f32 %v3930, %v3931
        %v3933 = vsel %vm1735, %v3792, 0.0
        %v3934 = vadd.f32 %v3932, %v3933
        %v3935 = vsel %vm1735, %v3798, 0.0
        %v3936 = vadd.f32 %v3934, %v3935
        %v3937 = vsel %vm1735, %v3804, 0.0
        %v3938 = vadd.f32 %v3936, %v3937
        %v3939 = vsel %vm1735, %v3810, 0.0
        %v3940 = vadd.f32 %v3938, %v3939
        %v3941 = vsel %vm1799, %v3625, 0.0
        %v3942 = vsel %vm1799, %v3631, 0.0
        %v3943 = vadd.f32 %v3941, %v3942
        %v3944 = vsel %vm1799, %v3637, 0.0
        %v3945 = vadd.f32 %v3943, %v3944
        %v3946 = vsel %vm1799, %v3643, 0.0
        %v3947 = vadd.f32 %v3945, %v3946
        %v3948 = vsel %vm1799, %v3649, 0.0
        %v3949 = vadd.f32 %v3947, %v3948
        %v3950 = vsel %vm1799, %v3655, 0.0
        %v3951 = vadd.f32 %v3949, %v3950
        %v3952 = vsel %vm1799, %v3661, 0.0
        %v3953 = vadd.f32 %v3951, %v3952
        %v3954 = vsel %vm1799, %v3667, 0.0
        %v3955 = vadd.f32 %v3953, %v3954
        %v3956 = vsel %vm1799, %v3673, 0.0
        %v3957 = vadd.f32 %v3955, %v3956
        %v3958 = vsel %vm1799, %v3679, 0.0
        %v3959 = vadd.f32 %v3957, %v3958
        %v3960 = vsel %vm1799, %v3685, 0.0
        %v3961 = vadd.f32 %v3959, %v3960
        %v3962 = vsel %vm1799, %v3691, 0.0
        %v3963 = vadd.f32 %v3961, %v3962
        %v3964 = vsel %vm1799, %v3697, 0.0
        %v3965 = vadd.f32 %v3963, %v3964
        %v3966 = vsel %vm1799, %v3703, 0.0
        %v3967 = vadd.f32 %v3965, %v3966
        %v3968 = vsel %vm1799, %v3709, 0.0
        %v3969 = vadd.f32 %v3967, %v3968
        %v3970 = vsel %vm1799, %v3715, 0.0
        %v3971 = vadd.f32 %v3969, %v3970
        %v3972 = vsel %vm1799, %v3721, 0.0
        %v3973 = vadd.f32 %v3971, %v3972
        %v3974 = vsel %vm1799, %v3727, 0.0
        %v3975 = vadd.f32 %v3973, %v3974
        %v3976 = vsel %vm1799, %v3733, 0.0
        %v3977 = vadd.f32 %v3975, %v3976
        %v3978 = vsel %vm1799, %v3739, 0.0
        %v3979 = vadd.f32 %v3977, %v3978
        %v3980 = vsel %vm1799, %v3745, 0.0
        %v3981 = vadd.f32 %v3979, %v3980
        %v3982 = vsel %vm1799, %v3751, 0.0
        %v3983 = vadd.f32 %v3981, %v3982
        %v3984 = vsel %vm1799, %v3757, 0.0
        %v3985 = vadd.f32 %v3983, %v3984
        %v3986 = vsel %vm1799, %v3763, 0.0
        %v3987 = vadd.f32 %v3985, %v3986
        %v3988 = vsel %vm1799, %v3769, 0.0
        %v3989 = vadd.f32 %v3987, %v3988
        %v3990 = vsel %vm1799, %v3775, 0.0
        %v3991 = vadd.f32 %v3989, %v3990
        %v3992 = vsel %vm1799, %v3781, 0.0
        %v3993 = vadd.f32 %v3991, %v3992
        %v3994 = vsel %vm1799, %v3787, 0.0
        %v3995 = vadd.f32 %v3993, %v3994
        %v3996 = vsel %vm1799, %v3793, 0.0
        %v3997 = vadd.f32 %v3995, %v3996
        %v3998 = vsel %vm1799, %v3799, 0.0
        %v3999 = vadd.f32 %v3997, %v3998
        %v4000 = vsel %vm1799, %v3805, 0.0
        %v4001 = vadd.f32 %v3999, %v4000
        %v4002 = vsel %vm1799, %v3811, 0.0
        %v4003 = vadd.f32 %v4001, %v4002
        %v4004 = vsel %vm1863, %v3626, 0.0
        %v4005 = vsel %vm1863, %v3632, 0.0
        %v4006 = vadd.f32 %v4004, %v4005
        %v4007 = vsel %vm1863, %v3638, 0.0
        %v4008 = vadd.f32 %v4006, %v4007
        %v4009 = vsel %vm1863, %v3644, 0.0
        %v4010 = vadd.f32 %v4008, %v4009
        %v4011 = vsel %vm1863, %v3650, 0.0
        %v4012 = vadd.f32 %v4010, %v4011
        %v4013 = vsel %vm1863, %v3656, 0.0
        %v4014 = vadd.f32 %v4012, %v4013
        %v4015 = vsel %vm1863, %v3662, 0.0
        %v4016 = vadd.f32 %v4014, %v4015
        %v4017 = vsel %vm1863, %v3668, 0.0
        %v4018 = vadd.f32 %v4016, %v4017
        %v4019 = vsel %vm1863, %v3674, 0.0
        %v4020 = vadd.f32 %v4018, %v4019
        %v4021 = vsel %vm1863, %v3680, 0.0
        %v4022 = vadd.f32 %v4020, %v4021
        %v4023 = vsel %vm1863, %v3686, 0.0
        %v4024 = vadd.f32 %v4022, %v4023
        %v4025 = vsel %vm1863, %v3692, 0.0
        %v4026 = vadd.f32 %v4024, %v4025
        %v4027 = vsel %vm1863, %v3698, 0.0
        %v4028 = vadd.f32 %v4026, %v4027
        %v4029 = vsel %vm1863, %v3704, 0.0
        %v4030 = vadd.f32 %v4028, %v4029
        %v4031 = vsel %vm1863, %v3710, 0.0
        %v4032 = vadd.f32 %v4030, %v4031
        %v4033 = vsel %vm1863, %v3716, 0.0
        %v4034 = vadd.f32 %v4032, %v4033
        %v4035 = vsel %vm1863, %v3722, 0.0
        %v4036 = vadd.f32 %v4034, %v4035
        %v4037 = vsel %vm1863, %v3728, 0.0
        %v4038 = vadd.f32 %v4036, %v4037
        %v4039 = vsel %vm1863, %v3734, 0.0
        %v4040 = vadd.f32 %v4038, %v4039
        %v4041 = vsel %vm1863, %v3740, 0.0
        %v4042 = vadd.f32 %v4040, %v4041
        %v4043 = vsel %vm1863, %v3746, 0.0
        %v4044 = vadd.f32 %v4042, %v4043
        %v4045 = vsel %vm1863, %v3752, 0.0
        %v4046 = vadd.f32 %v4044, %v4045
        %v4047 = vsel %vm1863, %v3758, 0.0
        %v4048 = vadd.f32 %v4046, %v4047
        %v4049 = vsel %vm1863, %v3764, 0.0
        %v4050 = vadd.f32 %v4048, %v4049
        %v4051 = vsel %vm1863, %v3770, 0.0
        %v4052 = vadd.f32 %v4050, %v4051
        %v4053 = vsel %vm1863, %v3776, 0.0
        %v4054 = vadd.f32 %v4052, %v4053
        %v4055 = vsel %vm1863, %v3782, 0.0
        %v4056 = vadd.f32 %v4054, %v4055
        %v4057 = vsel %vm1863, %v3788, 0.0
        %v4058 = vadd.f32 %v4056, %v4057
        %v4059 = vsel %vm1863, %v3794, 0.0
        %v4060 = vadd.f32 %v4058, %v4059
        %v4061 = vsel %vm1863, %v3800, 0.0
        %v4062 = vadd.f32 %v4060, %v4061
        %v4063 = vsel %vm1863, %v3806, 0.0
        %v4064 = vadd.f32 %v4062, %v4063
        %v4065 = vsel %vm1863, %v3812, 0.0
        %v4066 = vadd.f32 %v4064, %v4065
        %v4067 = vsel %vm1927, %v3627, 0.0
        %v4068 = vsel %vm1927, %v3633, 0.0
        %v4069 = vadd.f32 %v4067, %v4068
        %v4070 = vsel %vm1927, %v3639, 0.0
        %v4071 = vadd.f32 %v4069, %v4070
        %v4072 = vsel %vm1927, %v3645, 0.0
        %v4073 = vadd.f32 %v4071, %v4072
        %v4074 = vsel %vm1927, %v3651, 0.0
        %v4075 = vadd.f32 %v4073, %v4074
        %v4076 = vsel %vm1927, %v3657, 0.0
        %v4077 = vadd.f32 %v4075, %v4076
        %v4078 = vsel %vm1927, %v3663, 0.0
        %v4079 = vadd.f32 %v4077, %v4078
        %v4080 = vsel %vm1927, %v3669, 0.0
        %v4081 = vadd.f32 %v4079, %v4080
        %v4082 = vsel %vm1927, %v3675, 0.0
        %v4083 = vadd.f32 %v4081, %v4082
        %v4084 = vsel %vm1927, %v3681, 0.0
        %v4085 = vadd.f32 %v4083, %v4084
        %v4086 = vsel %vm1927, %v3687, 0.0
        %v4087 = vadd.f32 %v4085, %v4086
        %v4088 = vsel %vm1927, %v3693, 0.0
        %v4089 = vadd.f32 %v4087, %v4088
        %v4090 = vsel %vm1927, %v3699, 0.0
        %v4091 = vadd.f32 %v4089, %v4090
        %v4092 = vsel %vm1927, %v3705, 0.0
        %v4093 = vadd.f32 %v4091, %v4092
        %v4094 = vsel %vm1927, %v3711, 0.0
        %v4095 = vadd.f32 %v4093, %v4094
        %v4096 = vsel %vm1927, %v3717, 0.0
        %v4097 = vadd.f32 %v4095, %v4096
        %v4098 = vsel %vm1927, %v3723, 0.0
        %v4099 = vadd.f32 %v4097, %v4098
        %v4100 = vsel %vm1927, %v3729, 0.0
        %v4101 = vadd.f32 %v4099, %v4100
        %v4102 = vsel %vm1927, %v3735, 0.0
        %v4103 = vadd.f32 %v4101, %v4102
        %v4104 = vsel %vm1927, %v3741, 0.0
        %v4105 = vadd.f32 %v4103, %v4104
        %v4106 = vsel %vm1927, %v3747, 0.0
        %v4107 = vadd.f32 %v4105, %v4106
        %v4108 = vsel %vm1927, %v3753, 0.0
        %v4109 = vadd.f32 %v4107, %v4108
        %v4110 = vsel %vm1927, %v3759, 0.0
        %v4111 = vadd.f32 %v4109, %v4110
        %v4112 = vsel %vm1927, %v3765, 0.0
        %v4113 = vadd.f32 %v4111, %v4112
        %v4114 = vsel %vm1927, %v3771, 0.0
        %v4115 = vadd.f32 %v4113, %v4114
        %v4116 = vsel %vm1927, %v3777, 0.0
        %v4117 = vadd.f32 %v4115, %v4116
        %v4118 = vsel %vm1927, %v3783, 0.0
        %v4119 = vadd.f32 %v4117, %v4118
        %v4120 = vsel %vm1927, %v3789, 0.0
        %v4121 = vadd.f32 %v4119, %v4120
        %v4122 = vsel %vm1927, %v3795, 0.0
        %v4123 = vadd.f32 %v4121, %v4122
        %v4124 = vsel %vm1927, %v3801, 0.0
        %v4125 = vadd.f32 %v4123, %v4124
        %v4126 = vsel %vm1927, %v3807, 0.0
        %v4127 = vadd.f32 %v4125, %v4126
        %v4128 = vsel %vm1927, %v3813, 0.0
        %v4129 = vadd.f32 %v4127, %v4128
        %v4130 = vsel %vm1991, %v3628, 0.0
        %v4131 = vsel %vm1991, %v3634, 0.0
        %v4132 = vadd.f32 %v4130, %v4131
        %v4133 = vsel %vm1991, %v3640, 0.0
        %v4134 = vadd.f32 %v4132, %v4133
        %v4135 = vsel %vm1991, %v3646, 0.0
        %v4136 = vadd.f32 %v4134, %v4135
        %v4137 = vsel %vm1991, %v3652, 0.0
        %v4138 = vadd.f32 %v4136, %v4137
        %v4139 = vsel %vm1991, %v3658, 0.0
        %v4140 = vadd.f32 %v4138, %v4139
        %v4141 = vsel %vm1991, %v3664, 0.0
        %v4142 = vadd.f32 %v4140, %v4141
        %v4143 = vsel %vm1991, %v3670, 0.0
        %v4144 = vadd.f32 %v4142, %v4143
        %v4145 = vsel %vm1991, %v3676, 0.0
        %v4146 = vadd.f32 %v4144, %v4145
        %v4147 = vsel %vm1991, %v3682, 0.0
        %v4148 = vadd.f32 %v4146, %v4147
        %v4149 = vsel %vm1991, %v3688, 0.0
        %v4150 = vadd.f32 %v4148, %v4149
        %v4151 = vsel %vm1991, %v3694, 0.0
        %v4152 = vadd.f32 %v4150, %v4151
        %v4153 = vsel %vm1991, %v3700, 0.0
        %v4154 = vadd.f32 %v4152, %v4153
        %v4155 = vsel %vm1991, %v3706, 0.0
        %v4156 = vadd.f32 %v4154, %v4155
        %v4157 = vsel %vm1991, %v3712, 0.0
        %v4158 = vadd.f32 %v4156, %v4157
        %v4159 = vsel %vm1991, %v3718, 0.0
        %v4160 = vadd.f32 %v4158, %v4159
        %v4161 = vsel %vm1991, %v3724, 0.0
        %v4162 = vadd.f32 %v4160, %v4161
        %v4163 = vsel %vm1991, %v3730, 0.0
        %v4164 = vadd.f32 %v4162, %v4163
        %v4165 = vsel %vm1991, %v3736, 0.0
        %v4166 = vadd.f32 %v4164, %v4165
        %v4167 = vsel %vm1991, %v3742, 0.0
        %v4168 = vadd.f32 %v4166, %v4167
        %v4169 = vsel %vm1991, %v3748, 0.0
        %v4170 = vadd.f32 %v4168, %v4169
        %v4171 = vsel %vm1991, %v3754, 0.0
        %v4172 = vadd.f32 %v4170, %v4171
        %v4173 = vsel %vm1991, %v3760, 0.0
        %v4174 = vadd.f32 %v4172, %v4173
        %v4175 = vsel %vm1991, %v3766, 0.0
        %v4176 = vadd.f32 %v4174, %v4175
        %v4177 = vsel %vm1991, %v3772, 0.0
        %v4178 = vadd.f32 %v4176, %v4177
        %v4179 = vsel %vm1991, %v3778, 0.0
        %v4180 = vadd.f32 %v4178, %v4179
        %v4181 = vsel %vm1991, %v3784, 0.0
        %v4182 = vadd.f32 %v4180, %v4181
        %v4183 = vsel %vm1991, %v3790, 0.0
        %v4184 = vadd.f32 %v4182, %v4183
        %v4185 = vsel %vm1991, %v3796, 0.0
        %v4186 = vadd.f32 %v4184, %v4185
        %v4187 = vsel %vm1991, %v3802, 0.0
        %v4188 = vadd.f32 %v4186, %v4187
        %v4189 = vsel %vm1991, %v3808, 0.0
        %v4190 = vadd.f32 %v4188, %v4189
        %v4191 = vsel %vm1991, %v3814, 0.0
        %v4192 = vadd.f32 %v4190, %v4191
        %v4193 = vrot.slane %v2055, 1
        %v4194 = vrot.slane %v2057, 1
        %v4195 = vsel %vm2109, %v4193, %v4194
        %v4196 = vrot.slane %v2059, 1
        %v4197 = vsel %vm2109, %v4194, %v4196
        %4198 = vrot.lane.b32.xlu0 %v4195, 1
        %v4199 = vpop.permute.xlu0 %4198
        %4200 = vrot.lane.b32.xlu0 %v4197, 1
        %v4201 = vpop.permute.xlu0 %4200
        %4202 = vrot.lane.b32.xlu0 %v4196, 1
        %v4203 = vpop.permute.xlu0 %4202
        %v4207 = vmul.f32 %v2055, %v4199
        %v4208 = vmul.f32 %v2056, %v4199
        %v4209 = vmul.f32 %v2057, %v4201
        %v4210 = vmul.f32 %v2058, %v4201
        %v4211 = vmul.f32 %v2059, %v4203
        %v4212 = vmul.f32 %v2060, %v4203
        %v4213 = vrsqrt.pop %v4207
        %v4214 = vrsqrt.pop %v4208
        %v4215 = vrsqrt.pop %v4209
        %v4216 = vrsqrt.pop %v4210
        %v4217 = vrsqrt.pop %v4211
        %v4218 = vrsqrt.pop %v4212
        %v4219 = vmul.f32 %v3877, %v4213
        %v4220 = vmul.f32 %v3940, %v4214
        %v4221 = vmul.f32 %v4003, %v4215
        %v4222 = vmul.f32 %v4066, %v4216
        %v4223 = vmul.f32 %v4129, %v4217
        %v4224 = vmul.f32 %v4192, %v4218
        %v4225 = vrot.slane %v215, 6
        %v4226 = vrot.slane %v216, 6
        %v4227 = vsel %vm902, %v4225, %v4226
        %vm4228 = vcmp.eq.s32.totalorder %v209, %v4225
        %vm4229 = vcmp.eq.s32.totalorder %v211, %v4227
        %vm4230 = vcmp.eq.s32.totalorder %v213, %v4226
        %v4231 = vrot.slane %v219, 6
        %v4232 = vrot.slane %v220, 6
        %v4233 = vsel %vm902, %v4231, %v4232
        %vm4234 = vcmp.ne.s32.totalorder %v4231, 0
        %vm4235 = vcmp.ne.s32.totalorder %v4233, 0
        %vm4236 = vcmp.ne.s32.totalorder %v4232, 0
        %vm4237 = vmand %vm4228, %vm4234
        %vm4238 = vmand %vm4229, %vm4235
        %vm4239 = vmand %vm4230, %vm4236
        %v4240 = vadd.f32 %v3094, %v4219
        %v4241 = vadd.f32 %v3095, %v4220
        %v4242 = vadd.f32 %v3096, %v4221
        %v4243 = vadd.f32 %v3097, %v4222
        %v4244 = vadd.f32 %v3098, %v4223
        %v4245 = vadd.f32 %v3099, %v4224
        %v4252 = vrot.slane %v4219, 7
        %v4253 = vrot.slane %v4220, 7
        %v4254 = vrot.slane %v4221, 7
        %v4255 = vsel %vm1094, %v4252, %v4254
        %v4256 = vrot.slane %v4222, 7
        %v4257 = vsel %vm1094, %v4253, %v4256
        %v4258 = vrot.slane %v4223, 7
        %v4259 = vsel %vm1094, %v4254, %v4258
        %v4260 = vrot.slane %v4224, 7
        %v4261 = vsel %vm1094, %v4256, %v4260
        %4262 = vrot.lane.b32.xlu0 %v4252, 127
        %v4263 = vpop.permute.xlu0 %4262
        %4264 = vrot.lane.b32.xlu0 %v4253, 127
        %v4265 = vpop.permute.xlu0 %4264
        %4266 = vrot.lane.b32.xlu0 %v4255, 127
        %v4267 = vpop.permute.xlu0 %4266
        %4268 = vrot.lane.b32.xlu0 %v4257, 127
        %v4269 = vpop.permute.xlu0 %4268
        %4270 = vrot.lane.b32.xlu0 %v4259, 127
        %v4271 = vpop.permute.xlu0 %4270
        %4272 = vrot.lane.b32.xlu0 %v4261, 127
        %v4273 = vpop.permute.xlu0 %4272
        %v4274 = vsel %vm2128, %v4263, %v4265
        %v4275 = vsel %vm2128, %v4267, %v4269
        %v4276 = vsel %vm2128, %v4271, %v4273
        %v4280 = vsel %vm4237, %v4274, 0.0
        %v4281 = vsel %vm4238, %v4275, 0.0
        %v4282 = vsel %vm4239, %v4276, 0.0
        %vm4286 = vcmask 1045504
        %v4287 = vrot.slane %v4280, 2
        %v4288 = vrot.slane %v4281, 2
        %v4289 = vsel %vm4286, %v4287, %v4288
        %v4290 = vrot.slane %v4282, 2
        %v4291 = vsel %vm4286, %v4288, %v4290
        %v4294 = vadd.f32 %v4289, %v4291
        %4295 = vadd.xlane.f32.xlu0 %v4294
        %v4296 = vpop.xlane.xlu0 %4295
        %v4297 = vrot.slane %v4296, 4
        %v4298 = vadd.f32 %v4296, %v4297
        %v4299 = vrot.slane %v4298, 2
        %v4300 = vadd.f32 %v4298, %v4299
        %v4301 = vrot.slane %v4300, 1
        %v4302 = vadd.f32 %v4300, %v4301
        %s4303 = vtos %v4302
        %s4304 = sadd.f32 %s3147, %s4303
        %v4305 = vsel %vm4237, 1, 0
        %v4306 = vsel %vm4238, 1, 0
        %v4307 = vsel %vm4239, 1, 0
        %v4308 = vcvt.s32.f32 %v4305
        %v4309 = vcvt.s32.f32 %v4306
        %v4310 = vcvt.s32.f32 %v4307
        %v4314 = vrot.slane %v4308, 2
        %v4315 = vrot.slane %v4309, 2
        %v4316 = vsel %vm4286, %v4314, %v4315
        %v4317 = vrot.slane %v4310, 2
        %v4318 = vsel %vm4286, %v4315, %v4317
        %v4321 = vadd.f32 %v4316, %v4318
        %4322 = vadd.xlane.f32.xlu0 %v4321
        %v4323 = vpop.xlane.xlu0 %4322
        %v4324 = vrot.slane %v4323, 4
        %v4325 = vadd.f32 %v4323, %v4324
        %v4326 = vrot.slane %v4325, 2
        %v4327 = vadd.f32 %v4325, %v4326
        %v4328 = vrot.slane %v4327, 1
        %v4329 = vadd.f32 %v4327, %v4328
        %s4330 = vtos %v4329
        %s4331 = sadd.f32 %s3174, %s4330
        %v4396 = vrot.slane %v330, 7
        %v4397 = vrot.slane %v332, 7
        %v4398 = vsel %vm1094, %v4396, %v4397
        %v4399 = vrot.slane %v336, 7
        %v4400 = vrot.slane %v338, 7
        %v4401 = vsel %vm1094, %v4399, %v4400
        %v4402 = vrot.slane %v342, 7
        %v4403 = vrot.slane %v344, 7
        %v4404 = vsel %vm1094, %v4402, %v4403
        %v4405 = vrot.slane %v348, 7
        %v4406 = vrot.slane %v350, 7
        %v4407 = vsel %vm1094, %v4405, %v4406
        %v4408 = vrot.slane %v354, 7
        %v4409 = vrot.slane %v356, 7
        %v4410 = vsel %vm1094, %v4408, %v4409
        %v4411 = vrot.slane %v360, 7
        %v4412 = vrot.slane %v362, 7
        %v4413 = vsel %vm1094, %v4411, %v4412
        %v4414 = vrot.slane %v366, 7
        %v4415 = vrot.slane %v368, 7
        %v4416 = vsel %vm1094, %v4414, %v4415
        %v4417 = vrot.slane %v372, 7
        %v4418 = vrot.slane %v374, 7
        %v4419 = vsel %vm1094, %v4417, %v4418
        %v4420 = vrot.slane %v378, 7
        %v4421 = vrot.slane %v380, 7
        %v4422 = vsel %vm1094, %v4420, %v4421
        %v4423 = vrot.slane %v384, 7
        %v4424 = vrot.slane %v386, 7
        %v4425 = vsel %vm1094, %v4423, %v4424
        %v4426 = vrot.slane %v390, 7
        %v4427 = vrot.slane %v392, 7
        %v4428 = vsel %vm1094, %v4426, %v4427
        %v4429 = vrot.slane %v396, 7
        %v4430 = vrot.slane %v398, 7
        %v4431 = vsel %vm1094, %v4429, %v4430
        %v4432 = vrot.slane %v402, 7
        %v4433 = vrot.slane %v404, 7
        %v4434 = vsel %vm1094, %v4432, %v4433
        %v4435 = vrot.slane %v408, 7
        %v4436 = vrot.slane %v410, 7
        %v4437 = vsel %vm1094, %v4435, %v4436
        %v4438 = vrot.slane %v414, 7
        %v4439 = vrot.slane %v416, 7
        %v4440 = vsel %vm1094, %v4438, %v4439
        %v4441 = vrot.slane %v420, 7
        %v4442 = vrot.slane %v422, 7
        %v4443 = vsel %vm1094, %v4441, %v4442
        %v4444 = vrot.slane %v426, 7
        %v4445 = vrot.slane %v428, 7
        %v4446 = vsel %vm1094, %v4444, %v4445
        %v4447 = vrot.slane %v432, 7
        %v4448 = vrot.slane %v434, 7
        %v4449 = vsel %vm1094, %v4447, %v4448
        %v4450 = vrot.slane %v438, 7
        %v4451 = vrot.slane %v440, 7
        %v4452 = vsel %vm1094, %v4450, %v4451
        %v4453 = vrot.slane %v444, 7
        %v4454 = vrot.slane %v446, 7
        %v4455 = vsel %vm1094, %v4453, %v4454
        %v4456 = vrot.slane %v450, 7
        %v4457 = vrot.slane %v452, 7
        %v4458 = vsel %vm1094, %v4456, %v4457
        %v4459 = vrot.slane %v456, 7
        %v4460 = vrot.slane %v458, 7
        %v4461 = vsel %vm1094, %v4459, %v4460
        %v4462 = vrot.slane %v462, 7
        %v4463 = vrot.slane %v464, 7
        %v4464 = vsel %vm1094, %v4462, %v4463
        %v4465 = vrot.slane %v468, 7
        %v4466 = vrot.slane %v470, 7
        %v4467 = vsel %vm1094, %v4465, %v4466
        %v4468 = vrot.slane %v474, 7
        %v4469 = vrot.slane %v476, 7
        %v4470 = vsel %vm1094, %v4468, %v4469
        %v4471 = vrot.slane %v480, 7
        %v4472 = vrot.slane %v482, 7
        %v4473 = vsel %vm1094, %v4471, %v4472
        %v4474 = vrot.slane %v486, 7
        %v4475 = vrot.slane %v488, 7
        %v4476 = vsel %vm1094, %v4474, %v4475
        %v4477 = vrot.slane %v492, 7
        %v4478 = vrot.slane %v494, 7
        %v4479 = vsel %vm1094, %v4477, %v4478
        %v4480 = vrot.slane %v498, 7
        %v4481 = vrot.slane %v500, 7
        %v4482 = vsel %vm1094, %v4480, %v4481
        %v4483 = vrot.slane %v504, 7
        %v4484 = vrot.slane %v506, 7
        %v4485 = vsel %vm1094, %v4483, %v4484
        %v4486 = vrot.slane %v510, 7
        %v4487 = vrot.slane %v512, 7
        %v4488 = vsel %vm1094, %v4486, %v4487
        %v4489 = vrot.slane %v516, 7
        %v4490 = vrot.slane %v518, 7
        %v4491 = vsel %vm1094, %v4489, %v4490
        %v4684 = vmul.f32 %v329, %v1095
        %v4685 = vmul.f32 %v330, %v4396
        %v4686 = vmul.f32 %v331, %v1097
        %v4687 = vmul.f32 %v332, %v4398
        %v4688 = vmul.f32 %v333, %v1096
        %v4689 = vmul.f32 %v334, %v4397
        %v4690 = vmul.f32 %v335, %v1098
        %v4691 = vmul.f32 %v336, %v4399
        %v4692 = vmul.f32 %v337, %v1100
        %v4693 = vmul.f32 %v338, %v4401
        %v4694 = vmul.f32 %v339, %v1099
        %v4695 = vmul.f32 %v340, %v4400
        %v4696 = vmul.f32 %v341, %v1101
        %v4697 = vmul.f32 %v342, %v4402
        %v4698 = vmul.f32 %v343, %v1103
        %v4699 = vmul.f32 %v344, %v4404
        %v4700 = vmul.f32 %v345, %v1102
        %v4701 = vmul.f32 %v346, %v4403
        %v4702 = vmul.f32 %v347, %v1104
        %v4703 = vmul.f32 %v348, %v4405
        %v4704 = vmul.f32 %v349, %v1106
        %v4705 = vmul.f32 %v350, %v4407
        %v4706 = vmul.f32 %v351, %v1105
        %v4707 = vmul.f32 %v352, %v4406
        %v4708 = vmul.f32 %v353, %v1107
        %v4709 = vmul.f32 %v354, %v4408
        %v4710 = vmul.f32 %v355, %v1109
        %v4711 = vmul.f32 %v356, %v4410
        %v4712 = vmul.f32 %v357, %v1108
        %v4713 = vmul.f32 %v358, %v4409
        %v4714 = vmul.f32 %v359, %v1110
        %v4715 = vmul.f32 %v360, %v4411
        %v4716 = vmul.f32 %v361, %v1112
        %v4717 = vmul.f32 %v362, %v4413
        %v4718 = vmul.f32 %v363, %v1111
        %v4719 = vmul.f32 %v364, %v4412
        %v4720 = vmul.f32 %v365, %v1113
        %v4721 = vmul.f32 %v366, %v4414
        %v4722 = vmul.f32 %v367, %v1115
        %v4723 = vmul.f32 %v368, %v4416
        %v4724 = vmul.f32 %v369, %v1114
        %v4725 = vmul.f32 %v370, %v4415
        %v4726 = vmul.f32 %v371, %v1116
        %v4727 = vmul.f32 %v372, %v4417
        %v4728 = vmul.f32 %v373, %v1118
        %v4729 = vmul.f32 %v374, %v4419
        %v4730 = vmul.f32 %v375, %v1117
        %v4731 = vmul.f32 %v376, %v4418
        %v4732 = vmul.f32 %v377, %v1119
        %v4733 = vmul.f32 %v378, %v4420
        %v4734 = vmul.f32 %v379, %v1121
        %v4735 = vmul.f32 %v380, %v4422
        %v4736 = vmul.f32 %v381, %v1120
        %v4737 = vmul.f32 %v382, %v4421
        %v4738 = vmul.f32 %v383, %v1122
        %v4739 = vmul.f32 %v384, %v4423
        %v4740 = vmul.f32 %v385, %v1124
        %v4741 = vmul.f32 %v386, %v4425
        %v4742 = vmul.f32 %v387, %v1123
        %v4743 = vmul.f32 %v388, %v4424
        %v4744 = vmul.f32 %v389, %v1125
        %v4745 = vmul.f32 %v390, %v4426
        %v4746 = vmul.f32 %v391, %v1127
        %v4747 = vmul.f32 %v392, %v4428
        %v4748 = vmul.f32 %v393, %v1126
        %v4749 = vmul.f32 %v394, %v4427
        %v4750 = vmul.f32 %v395, %v1128
        %v4751 = vmul.f32 %v396, %v4429
        %v4752 = vmul.f32 %v397, %v1130
        %v4753 = vmul.f32 %v398, %v4431
        %v4754 = vmul.f32 %v399, %v1129
        %v4755 = vmul.f32 %v400, %v4430
        %v4756 = vmul.f32 %v401, %v1131
        %v4757 = vmul.f32 %v402, %v4432
        %v4758 = vmul.f32 %v403, %v1133
        %v4759 = vmul.f32 %v404, %v4434
        %v4760 = vmul.f32 %v405, %v1132
        %v4761 = vmul.f32 %v406, %v4433
        %v4762 = vmul.f32 %v407, %v1134
        %v4763 = vmul.f32 %v408, %v4435
        %v4764 = vmul.f32 %v409, %v1136
        %v4765 = vmul.f32 %v410, %v4437
        %v4766 = vmul.f32 %v411, %v1135
        %v4767 = vmul.f32 %v412, %v4436
        %v4768 = vmul.f32 %v413, %v1137
        %v4769 = vmul.f32 %v414, %v4438
        %v4770 = vmul.f32 %v415, %v1139
        %v4771 = vmul.f32 %v416, %v4440
        %v4772 = vmul.f32 %v417, %v1138
        %v4773 = vmul.f32 %v418, %v4439
        %v4774 = vmul.f32 %v419, %v1140
        %v4775 = vmul.f32 %v420, %v4441
        %v4776 = vmul.f32 %v421, %v1142
        %v4777 = vmul.f32 %v422, %v4443
        %v4778 = vmul.f32 %v423, %v1141
        %v4779 = vmul.f32 %v424, %v4442
        %v4780 = vmul.f32 %v425, %v1143
        %v4781 = vmul.f32 %v426, %v4444
        %v4782 = vmul.f32 %v427, %v1145
        %v4783 = vmul.f32 %v428, %v4446
        %v4784 = vmul.f32 %v429, %v1144
        %v4785 = vmul.f32 %v430, %v4445
        %v4786 = vmul.f32 %v431, %v1146
        %v4787 = vmul.f32 %v432, %v4447
        %v4788 = vmul.f32 %v433, %v1148
        %v4789 = vmul.f32 %v434, %v4449
        %v4790 = vmul.f32 %v435, %v1147
        %v4791 = vmul.f32 %v436, %v4448
        %v4792 = vmul.f32 %v437, %v1149
        %v4793 = vmul.f32 %v438, %v4450
        %v4794 = vmul.f32 %v439, %v1151
        %v4795 = vmul.f32 %v440, %v4452
        %v4796 = vmul.f32 %v441, %v1150
        %v4797 = vmul.f32 %v442, %v4451
        %v4798 = vmul.f32 %v443, %v1152
        %v4799 = vmul.f32 %v444, %v4453
        %v4800 = vmul.f32 %v445, %v1154
        %v4801 = vmul.f32 %v446, %v4455
        %v4802 = vmul.f32 %v447, %v1153
        %v4803 = vmul.f32 %v448, %v4454
        %v4804 = vmul.f32 %v449, %v1155
        %v4805 = vmul.f32 %v450, %v4456
        %v4806 = vmul.f32 %v451, %v1157
        %v4807 = vmul.f32 %v452, %v4458
        %v4808 = vmul.f32 %v453, %v1156
        %v4809 = vmul.f32 %v454, %v4457
        %v4810 = vmul.f32 %v455, %v1158
        %v4811 = vmul.f32 %v456, %v4459
        %v4812 = vmul.f32 %v457, %v1160
        %v4813 = vmul.f32 %v458, %v4461
        %v4814 = vmul.f32 %v459, %v1159
        %v4815 = vmul.f32 %v460, %v4460
        %v4816 = vmul.f32 %v461, %v1161
        %v4817 = vmul.f32 %v462, %v4462
        %v4818 = vmul.f32 %v463, %v1163
        %v4819 = vmul.f32 %v464, %v4464
        %v4820 = vmul.f32 %v465, %v1162
        %v4821 = vmul.f32 %v466, %v4463
        %v4822 = vmul.f32 %v467, %v1164
        %v4823 = vmul.f32 %v468, %v4465
        %v4824 = vmul.f32 %v469, %v1166
        %v4825 = vmul.f32 %v470, %v4467
        %v4826 = vmul.f32 %v471, %v1165
        %v4827 = vmul.f32 %v472, %v4466
        %v4828 = vmul.f32 %v473, %v1167
        %v4829 = vmul.f32 %v474, %v4468
        %v4830 = vmul.f32 %v475, %v1169
        %v4831 = vmul.f32 %v476, %v4470
        %v4832 = vmul.f32 %v477, %v1168
        %v4833 = vmul.f32 %v478, %v4469
        %v4834 = vmul.f32 %v479, %v1170
        %v4835 = vmul.f32 %v480, %v4471
        %v4836 = vmul.f32 %v481, %v1172
        %v4837 = vmul.f32 %v482, %v4473
        %v4838 = vmul.f32 %v483, %v1171
        %v4839 = vmul.f32 %v484, %v4472
        %v4840 = vmul.f32 %v485, %v1173
        %v4841 = vmul.f32 %v486, %v4474
        %v4842 = vmul.f32 %v487, %v1175
        %v4843 = vmul.f32 %v488, %v4476
        %v4844 = vmul.f32 %v489, %v1174
        %v4845 = vmul.f32 %v490, %v4475
        %v4846 = vmul.f32 %v491, %v1176
        %v4847 = vmul.f32 %v492, %v4477
        %v4848 = vmul.f32 %v493, %v1178
        %v4849 = vmul.f32 %v494, %v4479
        %v4850 = vmul.f32 %v495, %v1177
        %v4851 = vmul.f32 %v496, %v4478
        %v4852 = vmul.f32 %v497, %v1179
        %v4853 = vmul.f32 %v498, %v4480
        %v4854 = vmul.f32 %v499, %v1181
        %v4855 = vmul.f32 %v500, %v4482
        %v4856 = vmul.f32 %v501, %v1180
        %v4857 = vmul.f32 %v502, %v4481
        %v4858 = vmul.f32 %v503, %v1182
        %v4859 = vmul.f32 %v504, %v4483
        %v4860 = vmul.f32 %v505, %v1184
        %v4861 = vmul.f32 %v506, %v4485
        %v4862 = vmul.f32 %v507, %v1183
        %v4863 = vmul.f32 %v508, %v4484
        %v4864 = vmul.f32 %v509, %v1185
        %v4865 = vmul.f32 %v510, %v4486
        %v4866 = vmul.f32 %v511, %v1187
        %v4867 = vmul.f32 %v512, %v4488
        %v4868 = vmul.f32 %v513, %v1186
        %v4869 = vmul.f32 %v514, %v4487
        %v4870 = vmul.f32 %v515, %v1188
        %v4871 = vmul.f32 %v516, %v4489
        %v4872 = vmul.f32 %v517, %v1190
        %v4873 = vmul.f32 %v518, %v4491
        %v4874 = vmul.f32 %v519, %v1189
        %v4875 = vmul.f32 %v520, %v4490
        %v4876 = vsel %vm1671, %v4684, 0.0
        %v4877 = vsel %vm1671, %v4690, 0.0
        %v4878 = vadd.f32 %v4876, %v4877
        %v4879 = vsel %vm1671, %v4696, 0.0
        %v4880 = vadd.f32 %v4878, %v4879
        %v4881 = vsel %vm1671, %v4702, 0.0
        %v4882 = vadd.f32 %v4880, %v4881
        %v4883 = vsel %vm1671, %v4708, 0.0
        %v4884 = vadd.f32 %v4882, %v4883
        %v4885 = vsel %vm1671, %v4714, 0.0
        %v4886 = vadd.f32 %v4884, %v4885
        %v4887 = vsel %vm1671, %v4720, 0.0
        %v4888 = vadd.f32 %v4886, %v4887
        %v4889 = vsel %vm1671, %v4726, 0.0
        %v4890 = vadd.f32 %v4888, %v4889
        %v4891 = vsel %vm1671, %v4732, 0.0
        %v4892 = vadd.f32 %v4890, %v4891
        %v4893 = vsel %vm1671, %v4738, 0.0
        %v4894 = vadd.f32 %v4892, %v4893
        %v4895 = vsel %vm1671, %v4744, 0.0
        %v4896 = vadd.f32 %v4894, %v4895
        %v4897 = vsel %vm1671, %v4750, 0.0
        %v4898 = vadd.f32 %v4896, %v4897
        %v4899 = vsel %vm1671, %v4756, 0.0
        %v4900 = vadd.f32 %v4898, %v4899
        %v4901 = vsel %vm1671, %v4762, 0.0
        %v4902 = vadd.f32 %v4900, %v4901
        %v4903 = vsel %vm1671, %v4768, 0.0
        %v4904 = vadd.f32 %v4902, %v4903
        %v4905 = vsel %vm1671, %v4774, 0.0
        %v4906 = vadd.f32 %v4904, %v4905
        %v4907 = vsel %vm1671, %v4780, 0.0
        %v4908 = vadd.f32 %v4906, %v4907
        %v4909 = vsel %vm1671, %v4786, 0.0
        %v4910 = vadd.f32 %v4908, %v4909
        %v4911 = vsel %vm1671, %v4792, 0.0
        %v4912 = vadd.f32 %v4910, %v4911
        %v4913 = vsel %vm1671, %v4798, 0.0
        %v4914 = vadd.f32 %v4912, %v4913
        %v4915 = vsel %vm1671, %v4804, 0.0
        %v4916 = vadd.f32 %v4914, %v4915
        %v4917 = vsel %vm1671, %v4810, 0.0
        %v4918 = vadd.f32 %v4916, %v4917
        %v4919 = vsel %vm1671, %v4816, 0.0
        %v4920 = vadd.f32 %v4918, %v4919
        %v4921 = vsel %vm1671, %v4822, 0.0
        %v4922 = vadd.f32 %v4920, %v4921
        %v4923 = vsel %vm1671, %v4828, 0.0
        %v4924 = vadd.f32 %v4922, %v4923
        %v4925 = vsel %vm1671, %v4834, 0.0
        %v4926 = vadd.f32 %v4924, %v4925
        %v4927 = vsel %vm1671, %v4840, 0.0
        %v4928 = vadd.f32 %v4926, %v4927
        %v4929 = vsel %vm1671, %v4846, 0.0
        %v4930 = vadd.f32 %v4928, %v4929
        %v4931 = vsel %vm1671, %v4852, 0.0
        %v4932 = vadd.f32 %v4930, %v4931
        %v4933 = vsel %vm1671, %v4858, 0.0
        %v4934 = vadd.f32 %v4932, %v4933
        %v4935 = vsel %vm1671, %v4864, 0.0
        %v4936 = vadd.f32 %v4934, %v4935
        %v4937 = vsel %vm1671, %v4870, 0.0
        %v4938 = vadd.f32 %v4936, %v4937
        %v4939 = vsel %vm1735, %v4685, 0.0
        %v4940 = vsel %vm1735, %v4691, 0.0
        %v4941 = vadd.f32 %v4939, %v4940
        %v4942 = vsel %vm1735, %v4697, 0.0
        %v4943 = vadd.f32 %v4941, %v4942
        %v4944 = vsel %vm1735, %v4703, 0.0
        %v4945 = vadd.f32 %v4943, %v4944
        %v4946 = vsel %vm1735, %v4709, 0.0
        %v4947 = vadd.f32 %v4945, %v4946
        %v4948 = vsel %vm1735, %v4715, 0.0
        %v4949 = vadd.f32 %v4947, %v4948
        %v4950 = vsel %vm1735, %v4721, 0.0
        %v4951 = vadd.f32 %v4949, %v4950
        %v4952 = vsel %vm1735, %v4727, 0.0
        %v4953 = vadd.f32 %v4951, %v4952
        %v4954 = vsel %vm1735, %v4733, 0.0
        %v4955 = vadd.f32 %v4953, %v4954
        %v4956 = vsel %vm1735, %v4739, 0.0
        %v4957 = vadd.f32 %v4955, %v4956
        %v4958 = vsel %vm1735, %v4745, 0.0
        %v4959 = vadd.f32 %v4957, %v4958
        %v4960 = vsel %vm1735, %v4751, 0.0
        %v4961 = vadd.f32 %v4959, %v4960
        %v4962 = vsel %vm1735, %v4757, 0.0
        %v4963 = vadd.f32 %v4961, %v4962
        %v4964 = vsel %vm1735, %v4763, 0.0
        %v4965 = vadd.f32 %v4963, %v4964
        %v4966 = vsel %vm1735, %v4769, 0.0
        %v4967 = vadd.f32 %v4965, %v4966
        %v4968 = vsel %vm1735, %v4775, 0.0
        %v4969 = vadd.f32 %v4967, %v4968
        %v4970 = vsel %vm1735, %v4781, 0.0
        %v4971 = vadd.f32 %v4969, %v4970
        %v4972 = vsel %vm1735, %v4787, 0.0
        %v4973 = vadd.f32 %v4971, %v4972
        %v4974 = vsel %vm1735, %v4793, 0.0
        %v4975 = vadd.f32 %v4973, %v4974
        %v4976 = vsel %vm1735, %v4799, 0.0
        %v4977 = vadd.f32 %v4975, %v4976
        %v4978 = vsel %vm1735, %v4805, 0.0
        %v4979 = vadd.f32 %v4977, %v4978
        %v4980 = vsel %vm1735, %v4811, 0.0
        %v4981 = vadd.f32 %v4979, %v4980
        %v4982 = vsel %vm1735, %v4817, 0.0
        %v4983 = vadd.f32 %v4981, %v4982
        %v4984 = vsel %vm1735, %v4823, 0.0
        %v4985 = vadd.f32 %v4983, %v4984
        %v4986 = vsel %vm1735, %v4829, 0.0
        %v4987 = vadd.f32 %v4985, %v4986
        %v4988 = vsel %vm1735, %v4835, 0.0
        %v4989 = vadd.f32 %v4987, %v4988
        %v4990 = vsel %vm1735, %v4841, 0.0
        %v4991 = vadd.f32 %v4989, %v4990
        %v4992 = vsel %vm1735, %v4847, 0.0
        %v4993 = vadd.f32 %v4991, %v4992
        %v4994 = vsel %vm1735, %v4853, 0.0
        %v4995 = vadd.f32 %v4993, %v4994
        %v4996 = vsel %vm1735, %v4859, 0.0
        %v4997 = vadd.f32 %v4995, %v4996
        %v4998 = vsel %vm1735, %v4865, 0.0
        %v4999 = vadd.f32 %v4997, %v4998
        %v5000 = vsel %vm1735, %v4871, 0.0
        %v5001 = vadd.f32 %v4999, %v5000
        %v5002 = vsel %vm1799, %v4686, 0.0
        %v5003 = vsel %vm1799, %v4692, 0.0
        %v5004 = vadd.f32 %v5002, %v5003
        %v5005 = vsel %vm1799, %v4698, 0.0
        %v5006 = vadd.f32 %v5004, %v5005
        %v5007 = vsel %vm1799, %v4704, 0.0
        %v5008 = vadd.f32 %v5006, %v5007
        %v5009 = vsel %vm1799, %v4710, 0.0
        %v5010 = vadd.f32 %v5008, %v5009
        %v5011 = vsel %vm1799, %v4716, 0.0
        %v5012 = vadd.f32 %v5010, %v5011
        %v5013 = vsel %vm1799, %v4722, 0.0
        %v5014 = vadd.f32 %v5012, %v5013
        %v5015 = vsel %vm1799, %v4728, 0.0
        %v5016 = vadd.f32 %v5014, %v5015
        %v5017 = vsel %vm1799, %v4734, 0.0
        %v5018 = vadd.f32 %v5016, %v5017
        %v5019 = vsel %vm1799, %v4740, 0.0
        %v5020 = vadd.f32 %v5018, %v5019
        %v5021 = vsel %vm1799, %v4746, 0.0
        %v5022 = vadd.f32 %v5020, %v5021
        %v5023 = vsel %vm1799, %v4752, 0.0
        %v5024 = vadd.f32 %v5022, %v5023
        %v5025 = vsel %vm1799, %v4758, 0.0
        %v5026 = vadd.f32 %v5024, %v5025
        %v5027 = vsel %vm1799, %v4764, 0.0
        %v5028 = vadd.f32 %v5026, %v5027
        %v5029 = vsel %vm1799, %v4770, 0.0
        %v5030 = vadd.f32 %v5028, %v5029
        %v5031 = vsel %vm1799, %v4776, 0.0
        %v5032 = vadd.f32 %v5030, %v5031
        %v5033 = vsel %vm1799, %v4782, 0.0
        %v5034 = vadd.f32 %v5032, %v5033
        %v5035 = vsel %vm1799, %v4788, 0.0
        %v5036 = vadd.f32 %v5034, %v5035
        %v5037 = vsel %vm1799, %v4794, 0.0
        %v5038 = vadd.f32 %v5036, %v5037
        %v5039 = vsel %vm1799, %v4800, 0.0
        %v5040 = vadd.f32 %v5038, %v5039
        %v5041 = vsel %vm1799, %v4806, 0.0
        %v5042 = vadd.f32 %v5040, %v5041
        %v5043 = vsel %vm1799, %v4812, 0.0
        %v5044 = vadd.f32 %v5042, %v5043
        %v5045 = vsel %vm1799, %v4818, 0.0
        %v5046 = vadd.f32 %v5044, %v5045
        %v5047 = vsel %vm1799, %v4824, 0.0
        %v5048 = vadd.f32 %v5046, %v5047
        %v5049 = vsel %vm1799, %v4830, 0.0
        %v5050 = vadd.f32 %v5048, %v5049
        %v5051 = vsel %vm1799, %v4836, 0.0
        %v5052 = vadd.f32 %v5050, %v5051
        %v5053 = vsel %vm1799, %v4842, 0.0
        %v5054 = vadd.f32 %v5052, %v5053
        %v5055 = vsel %vm1799, %v4848, 0.0
        %v5056 = vadd.f32 %v5054, %v5055
        %v5057 = vsel %vm1799, %v4854, 0.0
        %v5058 = vadd.f32 %v5056, %v5057
        %v5059 = vsel %vm1799, %v4860, 0.0
        %v5060 = vadd.f32 %v5058, %v5059
        %v5061 = vsel %vm1799, %v4866, 0.0
        %v5062 = vadd.f32 %v5060, %v5061
        %v5063 = vsel %vm1799, %v4872, 0.0
        %v5064 = vadd.f32 %v5062, %v5063
        %v5065 = vsel %vm1863, %v4687, 0.0
        %v5066 = vsel %vm1863, %v4693, 0.0
        %v5067 = vadd.f32 %v5065, %v5066
        %v5068 = vsel %vm1863, %v4699, 0.0
        %v5069 = vadd.f32 %v5067, %v5068
        %v5070 = vsel %vm1863, %v4705, 0.0
        %v5071 = vadd.f32 %v5069, %v5070
        %v5072 = vsel %vm1863, %v4711, 0.0
        %v5073 = vadd.f32 %v5071, %v5072
        %v5074 = vsel %vm1863, %v4717, 0.0
        %v5075 = vadd.f32 %v5073, %v5074
        %v5076 = vsel %vm1863, %v4723, 0.0
        %v5077 = vadd.f32 %v5075, %v5076
        %v5078 = vsel %vm1863, %v4729, 0.0
        %v5079 = vadd.f32 %v5077, %v5078
        %v5080 = vsel %vm1863, %v4735, 0.0
        %v5081 = vadd.f32 %v5079, %v5080
        %v5082 = vsel %vm1863, %v4741, 0.0
        %v5083 = vadd.f32 %v5081, %v5082
        %v5084 = vsel %vm1863, %v4747, 0.0
        %v5085 = vadd.f32 %v5083, %v5084
        %v5086 = vsel %vm1863, %v4753, 0.0
        %v5087 = vadd.f32 %v5085, %v5086
        %v5088 = vsel %vm1863, %v4759, 0.0
        %v5089 = vadd.f32 %v5087, %v5088
        %v5090 = vsel %vm1863, %v4765, 0.0
        %v5091 = vadd.f32 %v5089, %v5090
        %v5092 = vsel %vm1863, %v4771, 0.0
        %v5093 = vadd.f32 %v5091, %v5092
        %v5094 = vsel %vm1863, %v4777, 0.0
        %v5095 = vadd.f32 %v5093, %v5094
        %v5096 = vsel %vm1863, %v4783, 0.0
        %v5097 = vadd.f32 %v5095, %v5096
        %v5098 = vsel %vm1863, %v4789, 0.0
        %v5099 = vadd.f32 %v5097, %v5098
        %v5100 = vsel %vm1863, %v4795, 0.0
        %v5101 = vadd.f32 %v5099, %v5100
        %v5102 = vsel %vm1863, %v4801, 0.0
        %v5103 = vadd.f32 %v5101, %v5102
        %v5104 = vsel %vm1863, %v4807, 0.0
        %v5105 = vadd.f32 %v5103, %v5104
        %v5106 = vsel %vm1863, %v4813, 0.0
        %v5107 = vadd.f32 %v5105, %v5106
        %v5108 = vsel %vm1863, %v4819, 0.0
        %v5109 = vadd.f32 %v5107, %v5108
        %v5110 = vsel %vm1863, %v4825, 0.0
        %v5111 = vadd.f32 %v5109, %v5110
        %v5112 = vsel %vm1863, %v4831, 0.0
        %v5113 = vadd.f32 %v5111, %v5112
        %v5114 = vsel %vm1863, %v4837, 0.0
        %v5115 = vadd.f32 %v5113, %v5114
        %v5116 = vsel %vm1863, %v4843, 0.0
        %v5117 = vadd.f32 %v5115, %v5116
        %v5118 = vsel %vm1863, %v4849, 0.0
        %v5119 = vadd.f32 %v5117, %v5118
        %v5120 = vsel %vm1863, %v4855, 0.0
        %v5121 = vadd.f32 %v5119, %v5120
        %v5122 = vsel %vm1863, %v4861, 0.0
        %v5123 = vadd.f32 %v5121, %v5122
        %v5124 = vsel %vm1863, %v4867, 0.0
        %v5125 = vadd.f32 %v5123, %v5124
        %v5126 = vsel %vm1863, %v4873, 0.0
        %v5127 = vadd.f32 %v5125, %v5126
        %v5128 = vsel %vm1927, %v4688, 0.0
        %v5129 = vsel %vm1927, %v4694, 0.0
        %v5130 = vadd.f32 %v5128, %v5129
        %v5131 = vsel %vm1927, %v4700, 0.0
        %v5132 = vadd.f32 %v5130, %v5131
        %v5133 = vsel %vm1927, %v4706, 0.0
        %v5134 = vadd.f32 %v5132, %v5133
        %v5135 = vsel %vm1927, %v4712, 0.0
        %v5136 = vadd.f32 %v5134, %v5135
        %v5137 = vsel %vm1927, %v4718, 0.0
        %v5138 = vadd.f32 %v5136, %v5137
        %v5139 = vsel %vm1927, %v4724, 0.0
        %v5140 = vadd.f32 %v5138, %v5139
        %v5141 = vsel %vm1927, %v4730, 0.0
        %v5142 = vadd.f32 %v5140, %v5141
        %v5143 = vsel %vm1927, %v4736, 0.0
        %v5144 = vadd.f32 %v5142, %v5143
        %v5145 = vsel %vm1927, %v4742, 0.0
        %v5146 = vadd.f32 %v5144, %v5145
        %v5147 = vsel %vm1927, %v4748, 0.0
        %v5148 = vadd.f32 %v5146, %v5147
        %v5149 = vsel %vm1927, %v4754, 0.0
        %v5150 = vadd.f32 %v5148, %v5149
        %v5151 = vsel %vm1927, %v4760, 0.0
        %v5152 = vadd.f32 %v5150, %v5151
        %v5153 = vsel %vm1927, %v4766, 0.0
        %v5154 = vadd.f32 %v5152, %v5153
        %v5155 = vsel %vm1927, %v4772, 0.0
        %v5156 = vadd.f32 %v5154, %v5155
        %v5157 = vsel %vm1927, %v4778, 0.0
        %v5158 = vadd.f32 %v5156, %v5157
        %v5159 = vsel %vm1927, %v4784, 0.0
        %v5160 = vadd.f32 %v5158, %v5159
        %v5161 = vsel %vm1927, %v4790, 0.0
        %v5162 = vadd.f32 %v5160, %v5161
        %v5163 = vsel %vm1927, %v4796, 0.0
        %v5164 = vadd.f32 %v5162, %v5163
        %v5165 = vsel %vm1927, %v4802, 0.0
        %v5166 = vadd.f32 %v5164, %v5165
        %v5167 = vsel %vm1927, %v4808, 0.0
        %v5168 = vadd.f32 %v5166, %v5167
        %v5169 = vsel %vm1927, %v4814, 0.0
        %v5170 = vadd.f32 %v5168, %v5169
        %v5171 = vsel %vm1927, %v4820, 0.0
        %v5172 = vadd.f32 %v5170, %v5171
        %v5173 = vsel %vm1927, %v4826, 0.0
        %v5174 = vadd.f32 %v5172, %v5173
        %v5175 = vsel %vm1927, %v4832, 0.0
        %v5176 = vadd.f32 %v5174, %v5175
        %v5177 = vsel %vm1927, %v4838, 0.0
        %v5178 = vadd.f32 %v5176, %v5177
        %v5179 = vsel %vm1927, %v4844, 0.0
        %v5180 = vadd.f32 %v5178, %v5179
        %v5181 = vsel %vm1927, %v4850, 0.0
        %v5182 = vadd.f32 %v5180, %v5181
        %v5183 = vsel %vm1927, %v4856, 0.0
        %v5184 = vadd.f32 %v5182, %v5183
        %v5185 = vsel %vm1927, %v4862, 0.0
        %v5186 = vadd.f32 %v5184, %v5185
        %v5187 = vsel %vm1927, %v4868, 0.0
        %v5188 = vadd.f32 %v5186, %v5187
        %v5189 = vsel %vm1927, %v4874, 0.0
        %v5190 = vadd.f32 %v5188, %v5189
        %v5191 = vsel %vm1991, %v4689, 0.0
        %v5192 = vsel %vm1991, %v4695, 0.0
        %v5193 = vadd.f32 %v5191, %v5192
        %v5194 = vsel %vm1991, %v4701, 0.0
        %v5195 = vadd.f32 %v5193, %v5194
        %v5196 = vsel %vm1991, %v4707, 0.0
        %v5197 = vadd.f32 %v5195, %v5196
        %v5198 = vsel %vm1991, %v4713, 0.0
        %v5199 = vadd.f32 %v5197, %v5198
        %v5200 = vsel %vm1991, %v4719, 0.0
        %v5201 = vadd.f32 %v5199, %v5200
        %v5202 = vsel %vm1991, %v4725, 0.0
        %v5203 = vadd.f32 %v5201, %v5202
        %v5204 = vsel %vm1991, %v4731, 0.0
        %v5205 = vadd.f32 %v5203, %v5204
        %v5206 = vsel %vm1991, %v4737, 0.0
        %v5207 = vadd.f32 %v5205, %v5206
        %v5208 = vsel %vm1991, %v4743, 0.0
        %v5209 = vadd.f32 %v5207, %v5208
        %v5210 = vsel %vm1991, %v4749, 0.0
        %v5211 = vadd.f32 %v5209, %v5210
        %v5212 = vsel %vm1991, %v4755, 0.0
        %v5213 = vadd.f32 %v5211, %v5212
        %v5214 = vsel %vm1991, %v4761, 0.0
        %v5215 = vadd.f32 %v5213, %v5214
        %v5216 = vsel %vm1991, %v4767, 0.0
        %v5217 = vadd.f32 %v5215, %v5216
        %v5218 = vsel %vm1991, %v4773, 0.0
        %v5219 = vadd.f32 %v5217, %v5218
        %v5220 = vsel %vm1991, %v4779, 0.0
        %v5221 = vadd.f32 %v5219, %v5220
        %v5222 = vsel %vm1991, %v4785, 0.0
        %v5223 = vadd.f32 %v5221, %v5222
        %v5224 = vsel %vm1991, %v4791, 0.0
        %v5225 = vadd.f32 %v5223, %v5224
        %v5226 = vsel %vm1991, %v4797, 0.0
        %v5227 = vadd.f32 %v5225, %v5226
        %v5228 = vsel %vm1991, %v4803, 0.0
        %v5229 = vadd.f32 %v5227, %v5228
        %v5230 = vsel %vm1991, %v4809, 0.0
        %v5231 = vadd.f32 %v5229, %v5230
        %v5232 = vsel %vm1991, %v4815, 0.0
        %v5233 = vadd.f32 %v5231, %v5232
        %v5234 = vsel %vm1991, %v4821, 0.0
        %v5235 = vadd.f32 %v5233, %v5234
        %v5236 = vsel %vm1991, %v4827, 0.0
        %v5237 = vadd.f32 %v5235, %v5236
        %v5238 = vsel %vm1991, %v4833, 0.0
        %v5239 = vadd.f32 %v5237, %v5238
        %v5240 = vsel %vm1991, %v4839, 0.0
        %v5241 = vadd.f32 %v5239, %v5240
        %v5242 = vsel %vm1991, %v4845, 0.0
        %v5243 = vadd.f32 %v5241, %v5242
        %v5244 = vsel %vm1991, %v4851, 0.0
        %v5245 = vadd.f32 %v5243, %v5244
        %v5246 = vsel %vm1991, %v4857, 0.0
        %v5247 = vadd.f32 %v5245, %v5246
        %v5248 = vsel %vm1991, %v4863, 0.0
        %v5249 = vadd.f32 %v5247, %v5248
        %v5250 = vsel %vm1991, %v4869, 0.0
        %v5251 = vadd.f32 %v5249, %v5250
        %v5252 = vsel %vm1991, %v4875, 0.0
        %v5253 = vadd.f32 %v5251, %v5252
        %v5256 = vrot.slane %v2056, 7
        %v5257 = vrot.slane %v2058, 7
        %v5258 = vsel %vm1094, %v5256, %v5257
        %v5265 = vmul.f32 %v2055, %v2063
        %v5266 = vmul.f32 %v2056, %v5256
        %v5267 = vmul.f32 %v2057, %v2065
        %v5268 = vmul.f32 %v2058, %v5258
        %v5269 = vmul.f32 %v2059, %v2064
        %v5270 = vmul.f32 %v2060, %v5257
        %v5271 = vrsqrt.pop %v5265
        %v5272 = vrsqrt.pop %v5266
        %v5273 = vrsqrt.pop %v5267
        %v5274 = vrsqrt.pop %v5268
        %v5275 = vrsqrt.pop %v5269
        %v5276 = vrsqrt.pop %v5270
        %v5277 = vmul.f32 %v4938, %v5271
        %v5278 = vmul.f32 %v5001, %v5272
        %v5279 = vmul.f32 %v5064, %v5273
        %v5280 = vmul.f32 %v5127, %v5274
        %v5281 = vmul.f32 %v5190, %v5275
        %v5282 = vmul.f32 %v5253, %v5276
        %5283 = vrot.lane.b32.xlu0 %v215, 1
        %v5284 = vpop.permute.xlu0 %5283
        %5285 = vrot.lane.b32.xlu0 %v216, 1
        %v5286 = vpop.permute.xlu0 %5285
        %vm5287 = vcmp.eq.s32.totalorder %v209, %v5284
        %vm5288 = vcmp.eq.s32.totalorder %v210, %v5284
        %vm5289 = vcmp.eq.s32.totalorder %v211, %v5286
        %vm5290 = vcmp.eq.s32.totalorder %v212, %v5286
        %5291 = vrot.lane.b32.xlu0 %v219, 1
        %v5292 = vpop.permute.xlu0 %5291
        %5293 = vrot.lane.b32.xlu0 %v220, 1
        %v5294 = vpop.permute.xlu0 %5293
        %vm5295 = vcmp.ne.s32.totalorder %v5292, 0
        %vm5296 = vcmp.ne.s32.totalorder %v5294, 0
        %vm5297 = vmand %vm5287, %vm5295
        %vm5298 = vmand %vm5288, %vm5295
        %vm5299 = vmand %vm5289, %vm5296
        %vm5300 = vmand %vm5290, %vm5296
        %v5301 = vadd.f32 %v4240, %v5277
        %v5302 = vadd.f32 %v4241, %v5278
        %v5303 = vadd.f32 %v4242, %v5279
        %v5304 = vadd.f32 %v4243, %v5280
        %v5305 = vadd.f32 %v4244, %v5281
        %v5306 = vadd.f32 %v4245, %v5282
        %v5313 = vrot.slane %v5277, 1
        %v5314 = vrot.slane %v5279, 1
        %v5315 = vsel %vm2109, %v5313, %v5314
        %v5316 = vrot.slane %v5278, 1
        %v5317 = vrot.slane %v5280, 1
        %v5318 = vsel %vm2109, %v5316, %v5317
        %v5319 = vrot.slane %v5281, 1
        %v5320 = vsel %vm2109, %v5314, %v5319
        %v5321 = vrot.slane %v5282, 1
        %v5322 = vsel %vm2109, %v5317, %v5321
        %v5327 = vsel %vm5297, %v5315, 0.0
        %v5328 = vsel %vm5298, %v5318, 0.0
        %v5329 = vsel %vm5299, %v5320, 0.0
        %v5330 = vsel %vm5300, %v5322, 0.0
        %5335 = vrot.lane.b32.xlu0 %v5327, 127
        %v5336 = vpop.permute.xlu0 %5335
        %5337 = vrot.lane.b32.xlu0 %v5328, 127
        %v5338 = vpop.permute.xlu0 %5337
        %5339 = vrot.lane.b32.xlu0 %v5329, 127
        %v5340 = vpop.permute.xlu0 %5339
        %5341 = vrot.lane.b32.xlu0 %v5330, 127
        %v5342 = vpop.permute.xlu0 %5341
        %v5343 = vsel %vm2128, %v5336, %v5338
        %v5344 = vsel %vm2128, %v5340, %v5342
        %v5347 = vadd.f32 %v5343, %v5344
        %5348 = vadd.xlane.f32.xlu0 %v5347
        %v5349 = vpop.xlane.xlu0 %5348
        %v5350 = vrot.slane %v5349, 4
        %v5351 = vadd.f32 %v5349, %v5350
        %v5352 = vrot.slane %v5351, 2
        %v5353 = vadd.f32 %v5351, %v5352
        %v5354 = vrot.slane %v5353, 1
        %v5355 = vadd.f32 %v5353, %v5354
        %s5356 = vtos %v5355
        %s5357 = sadd.f32 %s4304, %s5356
        %v5358 = vsel %vm5297, 1, 0
        %v5359 = vsel %vm5298, 1, 0
        %v5360 = vsel %vm5299, 1, 0
        %v5361 = vsel %vm5300, 1, 0
        %v5362 = vcvt.s32.f32 %v5358
        %v5363 = vcvt.s32.f32 %v5359
        %v5364 = vcvt.s32.f32 %v5360
        %v5365 = vcvt.s32.f32 %v5361
        %5370 = vrot.lane.b32.xlu0 %v5362, 127
        %v5371 = vpop.permute.xlu0 %5370
        %5372 = vrot.lane.b32.xlu0 %v5363, 127
        %v5373 = vpop.permute.xlu0 %5372
        %5374 = vrot.lane.b32.xlu0 %v5364, 127
        %v5375 = vpop.permute.xlu0 %5374
        %5376 = vrot.lane.b32.xlu0 %v5365, 127
        %v5377 = vpop.permute.xlu0 %5376
        %v5378 = vsel %vm2128, %v5371, %v5373
        %v5379 = vsel %vm2128, %v5375, %v5377
        %v5382 = vadd.f32 %v5378, %v5379
        %5383 = vadd.xlane.f32.xlu0 %v5382
        %v5384 = vpop.xlane.xlu0 %5383
        %v5385 = vrot.slane %v5384, 4
        %v5386 = vadd.f32 %v5384, %v5385
        %v5387 = vrot.slane %v5386, 2
        %v5388 = vadd.f32 %v5386, %v5387
        %v5389 = vrot.slane %v5388, 1
        %v5390 = vadd.f32 %v5388, %v5389
        %s5391 = vtos %v5390
        %s5392 = sadd.f32 %s4331, %s5391
        %v5393 = vsel %vm1671, %v521, 0.0
        %v5394 = vsel %vm1671, %v527, 0.0
        %v5395 = vadd.f32 %v5393, %v5394
        %v5396 = vsel %vm1671, %v533, 0.0
        %v5397 = vadd.f32 %v5395, %v5396
        %v5398 = vsel %vm1671, %v539, 0.0
        %v5399 = vadd.f32 %v5397, %v5398
        %v5400 = vsel %vm1671, %v545, 0.0
        %v5401 = vadd.f32 %v5399, %v5400
        %v5402 = vsel %vm1671, %v551, 0.0
        %v5403 = vadd.f32 %v5401, %v5402
        %v5404 = vsel %vm1671, %v557, 0.0
        %v5405 = vadd.f32 %v5403, %v5404
        %v5406 = vsel %vm1671, %v563, 0.0
        %v5407 = vadd.f32 %v5405, %v5406
        %v5408 = vsel %vm1671, %v569, 0.0
        %v5409 = vadd.f32 %v5407, %v5408
        %v5410 = vsel %vm1671, %v575, 0.0
        %v5411 = vadd.f32 %v5409, %v5410
        %v5412 = vsel %vm1671, %v581, 0.0
        %v5413 = vadd.f32 %v5411, %v5412
        %v5414 = vsel %vm1671, %v587, 0.0
        %v5415 = vadd.f32 %v5413, %v5414
        %v5416 = vsel %vm1671, %v593, 0.0
        %v5417 = vadd.f32 %v5415, %v5416
        %v5418 = vsel %vm1671, %v599, 0.0
        %v5419 = vadd.f32 %v5417, %v5418
        %v5420 = vsel %vm1671, %v605, 0.0
        %v5421 = vadd.f32 %v5419, %v5420
        %v5422 = vsel %vm1671, %v611, 0.0
        %v5423 = vadd.f32 %v5421, %v5422
        %v5424 = vsel %vm1671, %v617, 0.0
        %v5425 = vadd.f32 %v5423, %v5424
        %v5426 = vsel %vm1671, %v623, 0.0
        %v5427 = vadd.f32 %v5425, %v5426
        %v5428 = vsel %vm1671, %v629, 0.0
        %v5429 = vadd.f32 %v5427, %v5428
        %v5430 = vsel %vm1671, %v635, 0.0
        %v5431 = vadd.f32 %v5429, %v5430
        %v5432 = vsel %vm1671, %v641, 0.0
        %v5433 = vadd.f32 %v5431, %v5432
        %v5434 = vsel %vm1671, %v647, 0.0
        %v5435 = vadd.f32 %v5433, %v5434
        %v5436 = vsel %vm1671, %v653, 0.0
        %v5437 = vadd.f32 %v5435, %v5436
        %v5438 = vsel %vm1671, %v659, 0.0
        %v5439 = vadd.f32 %v5437, %v5438
        %v5440 = vsel %vm1671, %v665, 0.0
        %v5441 = vadd.f32 %v5439, %v5440
        %v5442 = vsel %vm1671, %v671, 0.0
        %v5443 = vadd.f32 %v5441, %v5442
        %v5444 = vsel %vm1671, %v677, 0.0
        %v5445 = vadd.f32 %v5443, %v5444
        %v5446 = vsel %vm1671, %v683, 0.0
        %v5447 = vadd.f32 %v5445, %v5446
        %v5448 = vsel %vm1671, %v689, 0.0
        %v5449 = vadd.f32 %v5447, %v5448
        %v5450 = vsel %vm1671, %v695, 0.0
        %v5451 = vadd.f32 %v5449, %v5450
        %v5452 = vsel %vm1671, %v701, 0.0
        %v5453 = vadd.f32 %v5451, %v5452
        %v5454 = vsel %vm1671, %v707, 0.0
        %v5455 = vadd.f32 %v5453, %v5454
        %v5456 = vsel %vm1735, %v522, 0.0
        %v5457 = vsel %vm1735, %v528, 0.0
        %v5458 = vadd.f32 %v5456, %v5457
        %v5459 = vsel %vm1735, %v534, 0.0
        %v5460 = vadd.f32 %v5458, %v5459
        %v5461 = vsel %vm1735, %v540, 0.0
        %v5462 = vadd.f32 %v5460, %v5461
        %v5463 = vsel %vm1735, %v546, 0.0
        %v5464 = vadd.f32 %v5462, %v5463
        %v5465 = vsel %vm1735, %v552, 0.0
        %v5466 = vadd.f32 %v5464, %v5465
        %v5467 = vsel %vm1735, %v558, 0.0
        %v5468 = vadd.f32 %v5466, %v5467
        %v5469 = vsel %vm1735, %v564, 0.0
        %v5470 = vadd.f32 %v5468, %v5469
        %v5471 = vsel %vm1735, %v570, 0.0
        %v5472 = vadd.f32 %v5470, %v5471
        %v5473 = vsel %vm1735, %v576, 0.0
        %v5474 = vadd.f32 %v5472, %v5473
        %v5475 = vsel %vm1735, %v582, 0.0
        %v5476 = vadd.f32 %v5474, %v5475
        %v5477 = vsel %vm1735, %v588, 0.0
        %v5478 = vadd.f32 %v5476, %v5477
        %v5479 = vsel %vm1735, %v594, 0.0
        %v5480 = vadd.f32 %v5478, %v5479
        %v5481 = vsel %vm1735, %v600, 0.0
        %v5482 = vadd.f32 %v5480, %v5481
        %v5483 = vsel %vm1735, %v606, 0.0
        %v5484 = vadd.f32 %v5482, %v5483
        %v5485 = vsel %vm1735, %v612, 0.0
        %v5486 = vadd.f32 %v5484, %v5485
        %v5487 = vsel %vm1735, %v618, 0.0
        %v5488 = vadd.f32 %v5486, %v5487
        %v5489 = vsel %vm1735, %v624, 0.0
        %v5490 = vadd.f32 %v5488, %v5489
        %v5491 = vsel %vm1735, %v630, 0.0
        %v5492 = vadd.f32 %v5490, %v5491
        %v5493 = vsel %vm1735, %v636, 0.0
        %v5494 = vadd.f32 %v5492, %v5493
        %v5495 = vsel %vm1735, %v642, 0.0
        %v5496 = vadd.f32 %v5494, %v5495
        %v5497 = vsel %vm1735, %v648, 0.0
        %v5498 = vadd.f32 %v5496, %v5497
        %v5499 = vsel %vm1735, %v654, 0.0
        %v5500 = vadd.f32 %v5498, %v5499
        %v5501 = vsel %vm1735, %v660, 0.0
        %v5502 = vadd.f32 %v5500, %v5501
        %v5503 = vsel %vm1735, %v666, 0.0
        %v5504 = vadd.f32 %v5502, %v5503
        %v5505 = vsel %vm1735, %v672, 0.0
        %v5506 = vadd.f32 %v5504, %v5505
        %v5507 = vsel %vm1735, %v678, 0.0
        %v5508 = vadd.f32 %v5506, %v5507
        %v5509 = vsel %vm1735, %v684, 0.0
        %v5510 = vadd.f32 %v5508, %v5509
        %v5511 = vsel %vm1735, %v690, 0.0
        %v5512 = vadd.f32 %v5510, %v5511
        %v5513 = vsel %vm1735, %v696, 0.0
        %v5514 = vadd.f32 %v5512, %v5513
        %v5515 = vsel %vm1735, %v702, 0.0
        %v5516 = vadd.f32 %v5514, %v5515
        %v5517 = vsel %vm1735, %v708, 0.0
        %v5518 = vadd.f32 %v5516, %v5517
        %v5519 = vsel %vm1799, %v523, 0.0
        %v5520 = vsel %vm1799, %v529, 0.0
        %v5521 = vadd.f32 %v5519, %v5520
        %v5522 = vsel %vm1799, %v535, 0.0
        %v5523 = vadd.f32 %v5521, %v5522
        %v5524 = vsel %vm1799, %v541, 0.0
        %v5525 = vadd.f32 %v5523, %v5524
        %v5526 = vsel %vm1799, %v547, 0.0
        %v5527 = vadd.f32 %v5525, %v5526
        %v5528 = vsel %vm1799, %v553, 0.0
        %v5529 = vadd.f32 %v5527, %v5528
        %v5530 = vsel %vm1799, %v559, 0.0
        %v5531 = vadd.f32 %v5529, %v5530
        %v5532 = vsel %vm1799, %v565, 0.0
        %v5533 = vadd.f32 %v5531, %v5532
        %v5534 = vsel %vm1799, %v571, 0.0
        %v5535 = vadd.f32 %v5533, %v5534
        %v5536 = vsel %vm1799, %v577, 0.0
        %v5537 = vadd.f32 %v5535, %v5536
        %v5538 = vsel %vm1799, %v583, 0.0
        %v5539 = vadd.f32 %v5537, %v5538
        %v5540 = vsel %vm1799, %v589, 0.0
        %v5541 = vadd.f32 %v5539, %v5540
        %v5542 = vsel %vm1799, %v595, 0.0
        %v5543 = vadd.f32 %v5541, %v5542
        %v5544 = vsel %vm1799, %v601, 0.0
        %v5545 = vadd.f32 %v5543, %v5544
        %v5546 = vsel %vm1799, %v607, 0.0
        %v5547 = vadd.f32 %v5545, %v5546
        %v5548 = vsel %vm1799, %v613, 0.0
        %v5549 = vadd.f32 %v5547, %v5548
        %v5550 = vsel %vm1799, %v619, 0.0
        %v5551 = vadd.f32 %v5549, %v5550
        %v5552 = vsel %vm1799, %v625, 0.0
        %v5553 = vadd.f32 %v5551, %v5552
        %v5554 = vsel %vm1799, %v631, 0.0
        %v5555 = vadd.f32 %v5553, %v5554
        %v5556 = vsel %vm1799, %v637, 0.0
        %v5557 = vadd.f32 %v5555, %v5556
        %v5558 = vsel %vm1799, %v643, 0.0
        %v5559 = vadd.f32 %v5557, %v5558
        %v5560 = vsel %vm1799, %v649, 0.0
        %v5561 = vadd.f32 %v5559, %v5560
        %v5562 = vsel %vm1799, %v655, 0.0
        %v5563 = vadd.f32 %v5561, %v5562
        %v5564 = vsel %vm1799, %v661, 0.0
        %v5565 = vadd.f32 %v5563, %v5564
        %v5566 = vsel %vm1799, %v667, 0.0
        %v5567 = vadd.f32 %v5565, %v5566
        %v5568 = vsel %vm1799, %v673, 0.0
        %v5569 = vadd.f32 %v5567, %v5568
        %v5570 = vsel %vm1799, %v679, 0.0
        %v5571 = vadd.f32 %v5569, %v5570
        %v5572 = vsel %vm1799, %v685, 0.0
        %v5573 = vadd.f32 %v5571, %v5572
        %v5574 = vsel %vm1799, %v691, 0.0
        %v5575 = vadd.f32 %v5573, %v5574
        %v5576 = vsel %vm1799, %v697, 0.0
        %v5577 = vadd.f32 %v5575, %v5576
        %v5578 = vsel %vm1799, %v703, 0.0
        %v5579 = vadd.f32 %v5577, %v5578
        %v5580 = vsel %vm1799, %v709, 0.0
        %v5581 = vadd.f32 %v5579, %v5580
        %v5582 = vsel %vm1863, %v524, 0.0
        %v5583 = vsel %vm1863, %v530, 0.0
        %v5584 = vadd.f32 %v5582, %v5583
        %v5585 = vsel %vm1863, %v536, 0.0
        %v5586 = vadd.f32 %v5584, %v5585
        %v5587 = vsel %vm1863, %v542, 0.0
        %v5588 = vadd.f32 %v5586, %v5587
        %v5589 = vsel %vm1863, %v548, 0.0
        %v5590 = vadd.f32 %v5588, %v5589
        %v5591 = vsel %vm1863, %v554, 0.0
        %v5592 = vadd.f32 %v5590, %v5591
        %v5593 = vsel %vm1863, %v560, 0.0
        %v5594 = vadd.f32 %v5592, %v5593
        %v5595 = vsel %vm1863, %v566, 0.0
        %v5596 = vadd.f32 %v5594, %v5595
        %v5597 = vsel %vm1863, %v572, 0.0
        %v5598 = vadd.f32 %v5596, %v5597
        %v5599 = vsel %vm1863, %v578, 0.0
        %v5600 = vadd.f32 %v5598, %v5599
        %v5601 = vsel %vm1863, %v584, 0.0
        %v5602 = vadd.f32 %v5600, %v5601
        %v5603 = vsel %vm1863, %v590, 0.0
        %v5604 = vadd.f32 %v5602, %v5603
        %v5605 = vsel %vm1863, %v596, 0.0
        %v5606 = vadd.f32 %v5604, %v5605
        %v5607 = vsel %vm1863, %v602, 0.0
        %v5608 = vadd.f32 %v5606, %v5607
        %v5609 = vsel %vm1863, %v608, 0.0
        %v5610 = vadd.f32 %v5608, %v5609
        %v5611 = vsel %vm1863, %v614, 0.0
        %v5612 = vadd.f32 %v5610, %v5611
        %v5613 = vsel %vm1863, %v620, 0.0
        %v5614 = vadd.f32 %v5612, %v5613
        %v5615 = vsel %vm1863, %v626, 0.0
        %v5616 = vadd.f32 %v5614, %v5615
        %v5617 = vsel %vm1863, %v632, 0.0
        %v5618 = vadd.f32 %v5616, %v5617
        %v5619 = vsel %vm1863, %v638, 0.0
        %v5620 = vadd.f32 %v5618, %v5619
        %v5621 = vsel %vm1863, %v644, 0.0
        %v5622 = vadd.f32 %v5620, %v5621
        %v5623 = vsel %vm1863, %v650, 0.0
        %v5624 = vadd.f32 %v5622, %v5623
        %v5625 = vsel %vm1863, %v656, 0.0
        %v5626 = vadd.f32 %v5624, %v5625
        %v5627 = vsel %vm1863, %v662, 0.0
        %v5628 = vadd.f32 %v5626, %v5627
        %v5629 = vsel %vm1863, %v668, 0.0
        %v5630 = vadd.f32 %v5628, %v5629
        %v5631 = vsel %vm1863, %v674, 0.0
        %v5632 = vadd.f32 %v5630, %v5631
        %v5633 = vsel %vm1863, %v680, 0.0
        %v5634 = vadd.f32 %v5632, %v5633
        %v5635 = vsel %vm1863, %v686, 0.0
        %v5636 = vadd.f32 %v5634, %v5635
        %v5637 = vsel %vm1863, %v692, 0.0
        %v5638 = vadd.f32 %v5636, %v5637
        %v5639 = vsel %vm1863, %v698, 0.0
        %v5640 = vadd.f32 %v5638, %v5639
        %v5641 = vsel %vm1863, %v704, 0.0
        %v5642 = vadd.f32 %v5640, %v5641
        %v5643 = vsel %vm1863, %v710, 0.0
        %v5644 = vadd.f32 %v5642, %v5643
        %v5645 = vsel %vm1927, %v525, 0.0
        %v5646 = vsel %vm1927, %v531, 0.0
        %v5647 = vadd.f32 %v5645, %v5646
        %v5648 = vsel %vm1927, %v537, 0.0
        %v5649 = vadd.f32 %v5647, %v5648
        %v5650 = vsel %vm1927, %v543, 0.0
        %v5651 = vadd.f32 %v5649, %v5650
        %v5652 = vsel %vm1927, %v549, 0.0
        %v5653 = vadd.f32 %v5651, %v5652
        %v5654 = vsel %vm1927, %v555, 0.0
        %v5655 = vadd.f32 %v5653, %v5654
        %v5656 = vsel %vm1927, %v561, 0.0
        %v5657 = vadd.f32 %v5655, %v5656
        %v5658 = vsel %vm1927, %v567, 0.0
        %v5659 = vadd.f32 %v5657, %v5658
        %v5660 = vsel %vm1927, %v573, 0.0
        %v5661 = vadd.f32 %v5659, %v5660
        %v5662 = vsel %vm1927, %v579, 0.0
        %v5663 = vadd.f32 %v5661, %v5662
        %v5664 = vsel %vm1927, %v585, 0.0
        %v5665 = vadd.f32 %v5663, %v5664
        %v5666 = vsel %vm1927, %v591, 0.0
        %v5667 = vadd.f32 %v5665, %v5666
        %v5668 = vsel %vm1927, %v597, 0.0
        %v5669 = vadd.f32 %v5667, %v5668
        %v5670 = vsel %vm1927, %v603, 0.0
        %v5671 = vadd.f32 %v5669, %v5670
        %v5672 = vsel %vm1927, %v609, 0.0
        %v5673 = vadd.f32 %v5671, %v5672
        %v5674 = vsel %vm1927, %v615, 0.0
        %v5675 = vadd.f32 %v5673, %v5674
        %v5676 = vsel %vm1927, %v621, 0.0
        %v5677 = vadd.f32 %v5675, %v5676
        %v5678 = vsel %vm1927, %v627, 0.0
        %v5679 = vadd.f32 %v5677, %v5678
        %v5680 = vsel %vm1927, %v633, 0.0
        %v5681 = vadd.f32 %v5679, %v5680
        %v5682 = vsel %vm1927, %v639, 0.0
        %v5683 = vadd.f32 %v5681, %v5682
        %v5684 = vsel %vm1927, %v645, 0.0
        %v5685 = vadd.f32 %v5683, %v5684
        %v5686 = vsel %vm1927, %v651, 0.0
        %v5687 = vadd.f32 %v5685, %v5686
        %v5688 = vsel %vm1927, %v657, 0.0
        %v5689 = vadd.f32 %v5687, %v5688
        %v5690 = vsel %vm1927, %v663, 0.0
        %v5691 = vadd.f32 %v5689, %v5690
        %v5692 = vsel %vm1927, %v669, 0.0
        %v5693 = vadd.f32 %v5691, %v5692
        %v5694 = vsel %vm1927, %v675, 0.0
        %v5695 = vadd.f32 %v5693, %v5694
        %v5696 = vsel %vm1927, %v681, 0.0
        %v5697 = vadd.f32 %v5695, %v5696
        %v5698 = vsel %vm1927, %v687, 0.0
        %v5699 = vadd.f32 %v5697, %v5698
        %v5700 = vsel %vm1927, %v693, 0.0
        %v5701 = vadd.f32 %v5699, %v5700
        %v5702 = vsel %vm1927, %v699, 0.0
        %v5703 = vadd.f32 %v5701, %v5702
        %v5704 = vsel %vm1927, %v705, 0.0
        %v5705 = vadd.f32 %v5703, %v5704
        %v5706 = vsel %vm1927, %v711, 0.0
        %v5707 = vadd.f32 %v5705, %v5706
        %v5708 = vsel %vm1991, %v526, 0.0
        %v5709 = vsel %vm1991, %v532, 0.0
        %v5710 = vadd.f32 %v5708, %v5709
        %v5711 = vsel %vm1991, %v538, 0.0
        %v5712 = vadd.f32 %v5710, %v5711
        %v5713 = vsel %vm1991, %v544, 0.0
        %v5714 = vadd.f32 %v5712, %v5713
        %v5715 = vsel %vm1991, %v550, 0.0
        %v5716 = vadd.f32 %v5714, %v5715
        %v5717 = vsel %vm1991, %v556, 0.0
        %v5718 = vadd.f32 %v5716, %v5717
        %v5719 = vsel %vm1991, %v562, 0.0
        %v5720 = vadd.f32 %v5718, %v5719
        %v5721 = vsel %vm1991, %v568, 0.0
        %v5722 = vadd.f32 %v5720, %v5721
        %v5723 = vsel %vm1991, %v574, 0.0
        %v5724 = vadd.f32 %v5722, %v5723
        %v5725 = vsel %vm1991, %v580, 0.0
        %v5726 = vadd.f32 %v5724, %v5725
        %v5727 = vsel %vm1991, %v586, 0.0
        %v5728 = vadd.f32 %v5726, %v5727
        %v5729 = vsel %vm1991, %v592, 0.0
        %v5730 = vadd.f32 %v5728, %v5729
        %v5731 = vsel %vm1991, %v598, 0.0
        %v5732 = vadd.f32 %v5730, %v5731
        %v5733 = vsel %vm1991, %v604, 0.0
        %v5734 = vadd.f32 %v5732, %v5733
        %v5735 = vsel %vm1991, %v610, 0.0
        %v5736 = vadd.f32 %v5734, %v5735
        %v5737 = vsel %vm1991, %v616, 0.0
        %v5738 = vadd.f32 %v5736, %v5737
        %v5739 = vsel %vm1991, %v622, 0.0
        %v5740 = vadd.f32 %v5738, %v5739
        %v5741 = vsel %vm1991, %v628, 0.0
        %v5742 = vadd.f32 %v5740, %v5741
        %v5743 = vsel %vm1991, %v634, 0.0
        %v5744 = vadd.f32 %v5742, %v5743
        %v5745 = vsel %vm1991, %v640, 0.0
        %v5746 = vadd.f32 %v5744, %v5745
        %v5747 = vsel %vm1991, %v646, 0.0
        %v5748 = vadd.f32 %v5746, %v5747
        %v5749 = vsel %vm1991, %v652, 0.0
        %v5750 = vadd.f32 %v5748, %v5749
        %v5751 = vsel %vm1991, %v658, 0.0
        %v5752 = vadd.f32 %v5750, %v5751
        %v5753 = vsel %vm1991, %v664, 0.0
        %v5754 = vadd.f32 %v5752, %v5753
        %v5755 = vsel %vm1991, %v670, 0.0
        %v5756 = vadd.f32 %v5754, %v5755
        %v5757 = vsel %vm1991, %v676, 0.0
        %v5758 = vadd.f32 %v5756, %v5757
        %v5759 = vsel %vm1991, %v682, 0.0
        %v5760 = vadd.f32 %v5758, %v5759
        %v5761 = vsel %vm1991, %v688, 0.0
        %v5762 = vadd.f32 %v5760, %v5761
        %v5763 = vsel %vm1991, %v694, 0.0
        %v5764 = vadd.f32 %v5762, %v5763
        %v5765 = vsel %vm1991, %v700, 0.0
        %v5766 = vadd.f32 %v5764, %v5765
        %v5767 = vsel %vm1991, %v706, 0.0
        %v5768 = vadd.f32 %v5766, %v5767
        %v5769 = vsel %vm1991, %v712, 0.0
        %v5770 = vadd.f32 %v5768, %v5769
        %v5771 = vmul.f32 %v2055, %v2055
        %v5772 = vmul.f32 %v2056, %v2056
        %v5773 = vmul.f32 %v2057, %v2057
        %v5774 = vmul.f32 %v2058, %v2058
        %v5775 = vmul.f32 %v2059, %v2059
        %v5776 = vmul.f32 %v2060, %v2060
        %v5777 = vrsqrt.pop %v5771
        %v5778 = vrsqrt.pop %v5772
        %v5779 = vrsqrt.pop %v5773
        %v5780 = vrsqrt.pop %v5774
        %v5781 = vrsqrt.pop %v5775
        %v5782 = vrsqrt.pop %v5776
        %v5783 = vmul.f32 %v5455, %v5777
        %v5784 = vmul.f32 %v5518, %v5778
        %v5785 = vmul.f32 %v5581, %v5779
        %v5786 = vmul.f32 %v5644, %v5780
        %v5787 = vmul.f32 %v5707, %v5781
        %v5788 = vmul.f32 %v5770, %v5782
        %5789 = vrot.lane.b32.xlu0 %v3079, 1
        %v5790 = vpop.permute.xlu0 %5789
        %5791 = vrot.lane.b32.xlu0 %v3081, 1
        %v5792 = vpop.permute.xlu0 %5791
        %5793 = vrot.lane.b32.xlu0 %v3080, 1
        %v5794 = vpop.permute.xlu0 %5793
        %vm5795 = vcmp.eq.s32.totalorder %v209, %v5790
        %vm5796 = vcmp.eq.s32.totalorder %v210, %v5790
        %vm5797 = vcmp.eq.s32.totalorder %v211, %v5792
        %vm5798 = vcmp.eq.s32.totalorder %v212, %v5792
        %vm5799 = vcmp.eq.s32.totalorder %v213, %v5794
        %vm5800 = vcmp.eq.s32.totalorder %v214, %v5794
        %5801 = vrot.lane.b32.xlu0 %v3085, 1
        %v5802 = vpop.permute.xlu0 %5801
        %5803 = vrot.lane.b32.xlu0 %v3087, 1
        %v5804 = vpop.permute.xlu0 %5803
        %5805 = vrot.lane.b32.xlu0 %v3086, 1
        %v5806 = vpop.permute.xlu0 %5805
        %vm5807 = vcmp.ne.s32.totalorder %v5802, 0
        %vm5808 = vcmp.ne.s32.totalorder %v5804, 0
        %vm5809 = vcmp.ne.s32.totalorder %v5806, 0
        %vm5810 = vmand %vm5795, %vm5807
        %vm5811 = vmand %vm5796, %vm5807
        %vm5812 = vmand %vm5797, %vm5808
        %vm5813 = vmand %vm5798, %vm5808
        %vm5814 = vmand %vm5799, %vm5809
        %vm5815 = vmand %vm5800, %vm5809
        %v5816 = vadd.f32 %v5301, %v5783
        %v5817 = vadd.f32 %v5302, %v5784
        %v5818 = vadd.f32 %v5303, %v5785
        %v5819 = vadd.f32 %v5304, %v5786
        %v5820 = vadd.f32 %v5305, %v5787
        %v5821 = vadd.f32 %v5306, %v5788
        %v5822 = vsel %vm5810, %v5783, 0.0
        %v5823 = vsel %vm5811, %v5784, 0.0
        %v5824 = vsel %vm5812, %v5785, 0.0
        %v5825 = vsel %vm5813, %v5786, 0.0
        %v5826 = vsel %vm5814, %v5787, 0.0
        %v5827 = vsel %vm5815, %v5788, 0.0
        %v5834 = vrot.slane %v5822, 1
        %v5835 = vrot.slane %v5824, 1
        %v5836 = vsel %vm2109, %v5834, %v5835
        %v5837 = vrot.slane %v5823, 1
        %v5838 = vrot.slane %v5825, 1
        %v5839 = vsel %vm2109, %v5837, %v5838
        %v5840 = vrot.slane %v5826, 1
        %v5841 = vsel %vm2109, %v5835, %v5840
        %v5842 = vrot.slane %v5827, 1
        %v5843 = vsel %vm2109, %v5838, %v5842
        %5844 = vrot.lane.b32.xlu0 %v5836, 127
        %v5845 = vpop.permute.xlu0 %5844
        %5846 = vrot.lane.b32.xlu0 %v5839, 127
        %v5847 = vpop.permute.xlu0 %5846
        %5848 = vrot.lane.b32.xlu0 %v5841, 127
        %v5849 = vpop.permute.xlu0 %5848
        %5850 = vrot.lane.b32.xlu0 %v5843, 127
        %v5851 = vpop.permute.xlu0 %5850
        %v5852 = vsel %vm2128, %v5845, %v5847
        %v5853 = vsel %vm2128, %v5849, %v5851
        %v5856 = vadd.f32 %v5852, %v5853
        %5857 = vadd.xlane.f32.xlu0 %v5856
        %v5858 = vpop.xlane.xlu0 %5857
        %v5859 = vrot.slane %v5858, 4
        %v5860 = vadd.f32 %v5858, %v5859
        %v5861 = vrot.slane %v5860, 2
        %v5862 = vadd.f32 %v5860, %v5861
        %v5863 = vrot.slane %v5862, 1
        %v5864 = vadd.f32 %v5862, %v5863
        %s5865 = vtos %v5864
        %s5866 = sadd.f32 %s5357, %s5865
        %v5867 = vsel %vm5810, 1, 0
        %v5868 = vsel %vm5811, 1, 0
        %v5869 = vsel %vm5812, 1, 0
        %v5870 = vsel %vm5813, 1, 0
        %v5871 = vsel %vm5814, 1, 0
        %v5872 = vsel %vm5815, 1, 0
        %v5873 = vcvt.s32.f32 %v5867
        %v5874 = vcvt.s32.f32 %v5868
        %v5875 = vcvt.s32.f32 %v5869
        %v5876 = vcvt.s32.f32 %v5870
        %v5877 = vcvt.s32.f32 %v5871
        %v5878 = vcvt.s32.f32 %v5872
        %v5885 = vrot.slane %v5873, 1
        %v5886 = vrot.slane %v5875, 1
        %v5887 = vsel %vm2109, %v5885, %v5886
        %v5888 = vrot.slane %v5874, 1
        %v5889 = vrot.slane %v5876, 1
        %v5890 = vsel %vm2109, %v5888, %v5889
        %v5891 = vrot.slane %v5877, 1
        %v5892 = vsel %vm2109, %v5886, %v5891
        %v5893 = vrot.slane %v5878, 1
        %v5894 = vsel %vm2109, %v5889, %v5893
        %5895 = vrot.lane.b32.xlu0 %v5887, 127
        %v5896 = vpop.permute.xlu0 %5895
        %5897 = vrot.lane.b32.xlu0 %v5890, 127
        %v5898 = vpop.permute.xlu0 %5897
        %5899 = vrot.lane.b32.xlu0 %v5892, 127
        %v5900 = vpop.permute.xlu0 %5899
        %5901 = vrot.lane.b32.xlu0 %v5894, 127
        %v5902 = vpop.permute.xlu0 %5901
        %v5903 = vsel %vm2128, %v5896, %v5898
        %v5904 = vsel %vm2128, %v5900, %v5902
        %v5907 = vadd.f32 %v5903, %v5904
        %5908 = vadd.xlane.f32.xlu0 %v5907
        %v5909 = vpop.xlane.xlu0 %5908
        %v5910 = vrot.slane %v5909, 4
        %v5911 = vadd.f32 %v5909, %v5910
        %v5912 = vrot.slane %v5911, 2
        %v5913 = vadd.f32 %v5911, %v5912
        %v5914 = vrot.slane %v5913, 1
        %v5915 = vadd.f32 %v5913, %v5914
        %s5916 = vtos %v5915
        %s5917 = sadd.f32 %s5392, %s5916
        %v5950 = vrot.slane %v330, 1
        %v5951 = vrot.slane %v332, 1
        %v5952 = vsel %vm2109, %v5950, %v5951
        %v5953 = vrot.slane %v334, 1
        %v5954 = vsel %vm2109, %v5951, %v5953
        %v5955 = vrot.slane %v336, 1
        %v5956 = vrot.slane %v338, 1
        %v5957 = vsel %vm2109, %v5955, %v5956
        %v5958 = vrot.slane %v340, 1
        %v5959 = vsel %vm2109, %v5956, %v5958
        %v5960 = vrot.slane %v342, 1
        %v5961 = vrot.slane %v344, 1
        %v5962 = vsel %vm2109, %v5960, %v5961
        %v5963 = vrot.slane %v346, 1
        %v5964 = vsel %vm2109, %v5961, %v5963
        %v5965 = vrot.slane %v348, 1
        %v5966 = vrot.slane %v350, 1
        %v5967 = vsel %vm2109, %v5965, %v5966
        %v5968 = vrot.slane %v352, 1
        %v5969 = vsel %vm2109, %v5966, %v5968
        %v5970 = vrot.slane %v354, 1
        %v5971 = vrot.slane %v356, 1
        %v5972 = vsel %vm2109, %v5970, %v5971
        %v5973 = vrot.slane %v358, 1
        %v5974 = vsel %vm2109, %v5971, %v5973
        %v5975 = vrot.slane %v360, 1
        %v5976 = vrot.slane %v362, 1
        %v5977 = vsel %vm2109, %v5975, %v5976
        %v5978 = vrot.slane %v364, 1
        %v5979 = vsel %vm2109, %v5976, %v5978
        %v5980 = vrot.slane %v366, 1
        %v5981 = vrot.slane %v368, 1
        %v5982 = vsel %vm2109, %v5980, %v5981
        %v5983 = vrot.slane %v370, 1
        %v5984 = vsel %vm2109, %v5981, %v5983
        %v5985 = vrot.slane %v372, 1
        %v5986 = vrot.slane %v374, 1
        %v5987 = vsel %vm2109, %v5985, %v5986
        %v5988 = vrot.slane %v376, 1
        %v5989 = vsel %vm2109, %v5986, %v5988
        %v5990 = vrot.slane %v378, 1
        %v5991 = vrot.slane %v380, 1
        %v5992 = vsel %vm2109, %v5990, %v5991
        %v5993 = vrot.slane %v382, 1
        %v5994 = vsel %vm2109, %v5991, %v5993
        %v5995 = vrot.slane %v384, 1
        %v5996 = vrot.slane %v386, 1
        %v5997 = vsel %vm2109, %v5995, %v5996
        %v5998 = vrot.slane %v388, 1
        %v5999 = vsel %vm2109, %v5996, %v5998
        %v6000 = vrot.slane %v390, 1
        %v6001 = vrot.slane %v392, 1
        %v6002 = vsel %vm2109, %v6000, %v6001
        %v6003 = vrot.slane %v394, 1
        %v6004 = vsel %vm2109, %v6001, %v6003
        %v6005 = vrot.slane %v396, 1
        %v6006 = vrot.slane %v398, 1
        %v6007 = vsel %vm2109, %v6005, %v6006
        %v6008 = vrot.slane %v400, 1
        %v6009 = vsel %vm2109, %v6006, %v6008
        %v6010 = vrot.slane %v402, 1
        %v6011 = vrot.slane %v404, 1
        %v6012 = vsel %vm2109, %v6010, %v6011
        %v6013 = vrot.slane %v406, 1
        %v6014 = vsel %vm2109, %v6011, %v6013
        %v6015 = vrot.slane %v408, 1
        %v6016 = vrot.slane %v410, 1
        %v6017 = vsel %vm2109, %v6015, %v6016
        %v6018 = vrot.slane %v412, 1
        %v6019 = vsel %vm2109, %v6016, %v6018
        %v6020 = vrot.slane %v414, 1
        %v6021 = vrot.slane %v416, 1
        %v6022 = vsel %vm2109, %v6020, %v6021
        %v6023 = vrot.slane %v418, 1
        %v6024 = vsel %vm2109, %v6021, %v6023
        %v6025 = vrot.slane %v420, 1
        %v6026 = vrot.slane %v422, 1
        %v6027 = vsel %vm2109, %v6025, %v6026
        %v6028 = vrot.slane %v424, 1
        %v6029 = vsel %vm2109, %v6026, %v6028
        %v6030 = vrot.slane %v426, 1
        %v6031 = vrot.slane %v428, 1
        %v6032 = vsel %vm2109, %v6030, %v6031
        %v6033 = vrot.slane %v430, 1
        %v6034 = vsel %vm2109, %v6031, %v6033
        %v6035 = vrot.slane %v432, 1
        %v6036 = vrot.slane %v434, 1
        %v6037 = vsel %vm2109, %v6035, %v6036
        %v6038 = vrot.slane %v436, 1
        %v6039 = vsel %vm2109, %v6036, %v6038
        %v6040 = vrot.slane %v438, 1
        %v6041 = vrot.slane %v440, 1
        %v6042 = vsel %vm2109, %v6040, %v6041
        %v6043 = vrot.slane %v442, 1
        %v6044 = vsel %vm2109, %v6041, %v6043
        %v6045 = vrot.slane %v444, 1
        %v6046 = vrot.slane %v446, 1
        %v6047 = vsel %vm2109, %v6045, %v6046
        %v6048 = vrot.slane %v448, 1
        %v6049 = vsel %vm2109, %v6046, %v6048
        %v6050 = vrot.slane %v450, 1
        %v6051 = vrot.slane %v452, 1
        %v6052 = vsel %vm2109, %v6050, %v6051
        %v6053 = vrot.slane %v454, 1
        %v6054 = vsel %vm2109, %v6051, %v6053
        %v6055 = vrot.slane %v456, 1
        %v6056 = vrot.slane %v458, 1
        %v6057 = vsel %vm2109, %v6055, %v6056
        %v6058 = vrot.slane %v460, 1
        %v6059 = vsel %vm2109, %v6056, %v6058
        %v6060 = vrot.slane %v462, 1
        %v6061 = vrot.slane %v464, 1
        %v6062 = vsel %vm2109, %v6060, %v6061
        %v6063 = vrot.slane %v466, 1
        %v6064 = vsel %vm2109, %v6061, %v6063
        %v6065 = vrot.slane %v468, 1
        %v6066 = vrot.slane %v470, 1
        %v6067 = vsel %vm2109, %v6065, %v6066
        %v6068 = vrot.slane %v472, 1
        %v6069 = vsel %vm2109, %v6066, %v6068
        %v6070 = vrot.slane %v474, 1
        %v6071 = vrot.slane %v476, 1
        %v6072 = vsel %vm2109, %v6070, %v6071
        %v6073 = vrot.slane %v478, 1
        %v6074 = vsel %vm2109, %v6071, %v6073
        %v6075 = vrot.slane %v480, 1
        %v6076 = vrot.slane %v482, 1
        %v6077 = vsel %vm2109, %v6075, %v6076
        %v6078 = vrot.slane %v484, 1
        %v6079 = vsel %vm2109, %v6076, %v6078
        %v6080 = vrot.slane %v486, 1
        %v6081 = vrot.slane %v488, 1
        %v6082 = vsel %vm2109, %v6080, %v6081
        %v6083 = vrot.slane %v490, 1
        %v6084 = vsel %vm2109, %v6081, %v6083
        %v6085 = vrot.slane %v492, 1
        %v6086 = vrot.slane %v494, 1
        %v6087 = vsel %vm2109, %v6085, %v6086
        %v6088 = vrot.slane %v496, 1
        %v6089 = vsel %vm2109, %v6086, %v6088
        %v6090 = vrot.slane %v498, 1
        %v6091 = vrot.slane %v500, 1
        %v6092 = vsel %vm2109, %v6090, %v6091
        %v6093 = vrot.slane %v502, 1
        %v6094 = vsel %vm2109, %v6091, %v6093
        %v6095 = vrot.slane %v504, 1
        %v6096 = vrot.slane %v506, 1
        %v6097 = vsel %vm2109, %v6095, %v6096
        %v6098 = vrot.slane %v508, 1
        %v6099 = vsel %vm2109, %v6096, %v6098
        %v6100 = vrot.slane %v510, 1
        %v6101 = vrot.slane %v512, 1
        %v6102 = vsel %vm2109, %v6100, %v6101
        %v6103 = vrot.slane %v514, 1
        %v6104 = vsel %vm2109, %v6101, %v6103
        %v6105 = vrot.slane %v516, 1
        %v6106 = vrot.slane %v518, 1
        %v6107 = vsel %vm2109, %v6105, %v6106
        %v6108 = vrot.slane %v520, 1
        %v6109 = vsel %vm2109, %v6106, %v6108
        %v6302 = vmul.f32 %v329, %v3177
        %v6303 = vmul.f32 %v330, %v5952
        %v6304 = vmul.f32 %v331, %v3179
        %v6305 = vmul.f32 %v332, %v5954
        %v6306 = vmul.f32 %v333, %v3178
        %v6307 = vmul.f32 %v334, %v5953
        %v6308 = vmul.f32 %v335, %v3182
        %v6309 = vmul.f32 %v336, %v5957
        %v6310 = vmul.f32 %v337, %v3184
        %v6311 = vmul.f32 %v338, %v5959
        %v6312 = vmul.f32 %v339, %v3183
        %v6313 = vmul.f32 %v340, %v5958
        %v6314 = vmul.f32 %v341, %v3187
        %v6315 = vmul.f32 %v342, %v5962
        %v6316 = vmul.f32 %v343, %v3189
        %v6317 = vmul.f32 %v344, %v5964
        %v6318 = vmul.f32 %v345, %v3188
        %v6319 = vmul.f32 %v346, %v5963
        %v6320 = vmul.f32 %v347, %v3192
        %v6321 = vmul.f32 %v348, %v5967
        %v6322 = vmul.f32 %v349, %v3194
        %v6323 = vmul.f32 %v350, %v5969
        %v6324 = vmul.f32 %v351, %v3193
        %v6325 = vmul.f32 %v352, %v5968
        %v6326 = vmul.f32 %v353, %v3197
        %v6327 = vmul.f32 %v354, %v5972
        %v6328 = vmul.f32 %v355, %v3199
        %v6329 = vmul.f32 %v356, %v5974
        %v6330 = vmul.f32 %v357, %v3198
        %v6331 = vmul.f32 %v358, %v5973
        %v6332 = vmul.f32 %v359, %v3202
        %v6333 = vmul.f32 %v360, %v5977
        %v6334 = vmul.f32 %v361, %v3204
        %v6335 = vmul.f32 %v362, %v5979
        %v6336 = vmul.f32 %v363, %v3203
        %v6337 = vmul.f32 %v364, %v5978
        %v6338 = vmul.f32 %v365, %v3207
        %v6339 = vmul.f32 %v366, %v5982
        %v6340 = vmul.f32 %v367, %v3209
        %v6341 = vmul.f32 %v368, %v5984
        %v6342 = vmul.f32 %v369, %v3208
        %v6343 = vmul.f32 %v370, %v5983
        %v6344 = vmul.f32 %v371, %v3212
        %v6345 = vmul.f32 %v372, %v5987
        %v6346 = vmul.f32 %v373, %v3214
        %v6347 = vmul.f32 %v374, %v5989
        %v6348 = vmul.f32 %v375, %v3213
        %v6349 = vmul.f32 %v376, %v5988
        %v6350 = vmul.f32 %v377, %v3217
        %v6351 = vmul.f32 %v378, %v5992
        %v6352 = vmul.f32 %v379, %v3219
        %v6353 = vmul.f32 %v380, %v5994
        %v6354 = vmul.f32 %v381, %v3218
        %v6355 = vmul.f32 %v382, %v5993
        %v6356 = vmul.f32 %v383, %v3222
        %v6357 = vmul.f32 %v384, %v5997
        %v6358 = vmul.f32 %v385, %v3224
        %v6359 = vmul.f32 %v386, %v5999
        %v6360 = vmul.f32 %v387, %v3223
        %v6361 = vmul.f32 %v388, %v5998
        %v6362 = vmul.f32 %v389, %v3227
        %v6363 = vmul.f32 %v390, %v6002
        %v6364 = vmul.f32 %v391, %v3229
        %v6365 = vmul.f32 %v392, %v6004
        %v6366 = vmul.f32 %v393, %v3228
        %v6367 = vmul.f32 %v394, %v6003
        %v6368 = vmul.f32 %v395, %v3232
        %v6369 = vmul.f32 %v396, %v6007
        %v6370 = vmul.f32 %v397, %v3234
        %v6371 = vmul.f32 %v398, %v6009
        %v6372 = vmul.f32 %v399, %v3233
        %v6373 = vmul.f32 %v400, %v6008
        %v6374 = vmul.f32 %v401, %v3237
        %v6375 = vmul.f32 %v402, %v6012
        %v6376 = vmul.f32 %v403, %v3239
        %v6377 = vmul.f32 %v404, %v6014
        %v6378 = vmul.f32 %v405, %v3238
        %v6379 = vmul.f32 %v406, %v6013
        %v6380 = vmul.f32 %v407, %v3242
        %v6381 = vmul.f32 %v408, %v6017
        %v6382 = vmul.f32 %v409, %v3244
        %v6383 = vmul.f32 %v410, %v6019
        %v6384 = vmul.f32 %v411, %v3243
        %v6385 = vmul.f32 %v412, %v6018
        %v6386 = vmul.f32 %v413, %v3247
        %v6387 = vmul.f32 %v414, %v6022
        %v6388 = vmul.f32 %v415, %v3249
        %v6389 = vmul.f32 %v416, %v6024
        %v6390 = vmul.f32 %v417, %v3248
        %v6391 = vmul.f32 %v418, %v6023
        %v6392 = vmul.f32 %v419, %v3252
        %v6393 = vmul.f32 %v420, %v6027
        %v6394 = vmul.f32 %v421, %v3254
        %v6395 = vmul.f32 %v422, %v6029
        %v6396 = vmul.f32 %v423, %v3253
        %v6397 = vmul.f32 %v424, %v6028
        %v6398 = vmul.f32 %v425, %v3257
        %v6399 = vmul.f32 %v426, %v6032
        %v6400 = vmul.f32 %v427, %v3259
        %v6401 = vmul.f32 %v428, %v6034
        %v6402 = vmul.f32 %v429, %v3258
        %v6403 = vmul.f32 %v430, %v6033
        %v6404 = vmul.f32 %v431, %v3262
        %v6405 = vmul.f32 %v432, %v6037
        %v6406 = vmul.f32 %v433, %v3264
        %v6407 = vmul.f32 %v434, %v6039
        %v6408 = vmul.f32 %v435, %v3263
        %v6409 = vmul.f32 %v436, %v6038
        %v6410 = vmul.f32 %v437, %v3267
        %v6411 = vmul.f32 %v438, %v6042
        %v6412 = vmul.f32 %v439, %v3269
        %v6413 = vmul.f32 %v440, %v6044
        %v6414 = vmul.f32 %v441, %v3268
        %v6415 = vmul.f32 %v442, %v6043
        %v6416 = vmul.f32 %v443, %v3272
        %v6417 = vmul.f32 %v444, %v6047
        %v6418 = vmul.f32 %v445, %v3274
        %v6419 = vmul.f32 %v446, %v6049
        %v6420 = vmul.f32 %v447, %v3273
        %v6421 = vmul.f32 %v448, %v6048
        %v6422 = vmul.f32 %v449, %v3277
        %v6423 = vmul.f32 %v450, %v6052
        %v6424 = vmul.f32 %v451, %v3279
        %v6425 = vmul.f32 %v452, %v6054
        %v6426 = vmul.f32 %v453, %v3278
        %v6427 = vmul.f32 %v454, %v6053
        %v6428 = vmul.f32 %v455, %v3282
        %v6429 = vmul.f32 %v456, %v6057
        %v6430 = vmul.f32 %v457, %v3284
        %v6431 = vmul.f32 %v458, %v6059
        %v6432 = vmul.f32 %v459, %v3283
        %v6433 = vmul.f32 %v460, %v6058
        %v6434 = vmul.f32 %v461, %v3287
        %v6435 = vmul.f32 %v462, %v6062
        %v6436 = vmul.f32 %v463, %v3289
        %v6437 = vmul.f32 %v464, %v6064
        %v6438 = vmul.f32 %v465, %v3288
        %v6439 = vmul.f32 %v466, %v6063
        %v6440 = vmul.f32 %v467, %v3292
        %v6441 = vmul.f32 %v468, %v6067
        %v6442 = vmul.f32 %v469, %v3294
        %v6443 = vmul.f32 %v470, %v6069
        %v6444 = vmul.f32 %v471, %v3293
        %v6445 = vmul.f32 %v472, %v6068
        %v6446 = vmul.f32 %v473, %v3297
        %v6447 = vmul.f32 %v474, %v6072
        %v6448 = vmul.f32 %v475, %v3299
        %v6449 = vmul.f32 %v476, %v6074
        %v6450 = vmul.f32 %v477, %v3298
        %v6451 = vmul.f32 %v478, %v6073
        %v6452 = vmul.f32 %v479, %v3302
        %v6453 = vmul.f32 %v480, %v6077
        %v6454 = vmul.f32 %v481, %v3304
        %v6455 = vmul.f32 %v482, %v6079
        %v6456 = vmul.f32 %v483, %v3303
        %v6457 = vmul.f32 %v484, %v6078
        %v6458 = vmul.f32 %v485, %v3307
        %v6459 = vmul.f32 %v486, %v6082
        %v6460 = vmul.f32 %v487, %v3309
        %v6461 = vmul.f32 %v488, %v6084
        %v6462 = vmul.f32 %v489, %v3308
        %v6463 = vmul.f32 %v490, %v6083
        %v6464 = vmul.f32 %v491, %v3312
        %v6465 = vmul.f32 %v492, %v6087
        %v6466 = vmul.f32 %v493, %v3314
        %v6467 = vmul.f32 %v494, %v6089
        %v6468 = vmul.f32 %v495, %v3313
        %v6469 = vmul.f32 %v496, %v6088
        %v6470 = vmul.f32 %v497, %v3317
        %v6471 = vmul.f32 %v498, %v6092
        %v6472 = vmul.f32 %v499, %v3319
        %v6473 = vmul.f32 %v500, %v6094
        %v6474 = vmul.f32 %v501, %v3318
        %v6475 = vmul.f32 %v502, %v6093
        %v6476 = vmul.f32 %v503, %v3322
        %v6477 = vmul.f32 %v504, %v6097
        %v6478 = vmul.f32 %v505, %v3324
        %v6479 = vmul.f32 %v506, %v6099
        %v6480 = vmul.f32 %v507, %v3323
        %v6481 = vmul.f32 %v508, %v6098
        %v6482 = vmul.f32 %v509, %v3327
        %v6483 = vmul.f32 %v510, %v6102
        %v6484 = vmul.f32 %v511, %v3329
        %v6485 = vmul.f32 %v512, %v6104
        %v6486 = vmul.f32 %v513, %v3328
        %v6487 = vmul.f32 %v514, %v6103
        %v6488 = vmul.f32 %v515, %v3332
        %v6489 = vmul.f32 %v516, %v6107
        %v6490 = vmul.f32 %v517, %v3334
        %v6491 = vmul.f32 %v518, %v6109
        %v6492 = vmul.f32 %v519, %v3333
        %v6493 = vmul.f32 %v520, %v6108
        %v6494 = vsel %vm1671, %v6302, 0.0
        %v6495 = vsel %vm1671, %v6308, 0.0
        %v6496 = vadd.f32 %v6494, %v6495
        %v6497 = vsel %vm1671, %v6314, 0.0
        %v6498 = vadd.f32 %v6496, %v6497
        %v6499 = vsel %vm1671, %v6320, 0.0
        %v6500 = vadd.f32 %v6498, %v6499
        %v6501 = vsel %vm1671, %v6326, 0.0
        %v6502 = vadd.f32 %v6500, %v6501
        %v6503 = vsel %vm1671, %v6332, 0.0
        %v6504 = vadd.f32 %v6502, %v6503
        %v6505 = vsel %vm1671, %v6338, 0.0
        %v6506 = vadd.f32 %v6504, %v6505
        %v6507 = vsel %vm1671, %v6344, 0.0
        %v6508 = vadd.f32 %v6506, %v6507
        %v6509 = vsel %vm1671, %v6350, 0.0
        %v6510 = vadd.f32 %v6508, %v6509
        %v6511 = vsel %vm1671, %v6356, 0.0
        %v6512 = vadd.f32 %v6510, %v6511
        %v6513 = vsel %vm1671, %v6362, 0.0
        %v6514 = vadd.f32 %v6512, %v6513
        %v6515 = vsel %vm1671, %v6368, 0.0
        %v6516 = vadd.f32 %v6514, %v6515
        %v6517 = vsel %vm1671, %v6374, 0.0
        %v6518 = vadd.f32 %v6516, %v6517
        %v6519 = vsel %vm1671, %v6380, 0.0
        %v6520 = vadd.f32 %v6518, %v6519
        %v6521 = vsel %vm1671, %v6386, 0.0
        %v6522 = vadd.f32 %v6520, %v6521
        %v6523 = vsel %vm1671, %v6392, 0.0
        %v6524 = vadd.f32 %v6522, %v6523
        %v6525 = vsel %vm1671, %v6398, 0.0
        %v6526 = vadd.f32 %v6524, %v6525
        %v6527 = vsel %vm1671, %v6404, 0.0
        %v6528 = vadd.f32 %v6526, %v6527
        %v6529 = vsel %vm1671, %v6410, 0.0
        %v6530 = vadd.f32 %v6528, %v6529
        %v6531 = vsel %vm1671, %v6416, 0.0
        %v6532 = vadd.f32 %v6530, %v6531
        %v6533 = vsel %vm1671, %v6422, 0.0
        %v6534 = vadd.f32 %v6532, %v6533
        %v6535 = vsel %vm1671, %v6428, 0.0
        %v6536 = vadd.f32 %v6534, %v6535
        %v6537 = vsel %vm1671, %v6434, 0.0
        %v6538 = vadd.f32 %v6536, %v6537
        %v6539 = vsel %vm1671, %v6440, 0.0
        %v6540 = vadd.f32 %v6538, %v6539
        %v6541 = vsel %vm1671, %v6446, 0.0
        %v6542 = vadd.f32 %v6540, %v6541
        %v6543 = vsel %vm1671, %v6452, 0.0
        %v6544 = vadd.f32 %v6542, %v6543
        %v6545 = vsel %vm1671, %v6458, 0.0
        %v6546 = vadd.f32 %v6544, %v6545
        %v6547 = vsel %vm1671, %v6464, 0.0
        %v6548 = vadd.f32 %v6546, %v6547
        %v6549 = vsel %vm1671, %v6470, 0.0
        %v6550 = vadd.f32 %v6548, %v6549
        %v6551 = vsel %vm1671, %v6476, 0.0
        %v6552 = vadd.f32 %v6550, %v6551
        %v6553 = vsel %vm1671, %v6482, 0.0
        %v6554 = vadd.f32 %v6552, %v6553
        %v6555 = vsel %vm1671, %v6488, 0.0
        %v6556 = vadd.f32 %v6554, %v6555
        %v6557 = vsel %vm1735, %v6303, 0.0
        %v6558 = vsel %vm1735, %v6309, 0.0
        %v6559 = vadd.f32 %v6557, %v6558
        %v6560 = vsel %vm1735, %v6315, 0.0
        %v6561 = vadd.f32 %v6559, %v6560
        %v6562 = vsel %vm1735, %v6321, 0.0
        %v6563 = vadd.f32 %v6561, %v6562
        %v6564 = vsel %vm1735, %v6327, 0.0
        %v6565 = vadd.f32 %v6563, %v6564
        %v6566 = vsel %vm1735, %v6333, 0.0
        %v6567 = vadd.f32 %v6565, %v6566
        %v6568 = vsel %vm1735, %v6339, 0.0
        %v6569 = vadd.f32 %v6567, %v6568
        %v6570 = vsel %vm1735, %v6345, 0.0
        %v6571 = vadd.f32 %v6569, %v6570
        %v6572 = vsel %vm1735, %v6351, 0.0
        %v6573 = vadd.f32 %v6571, %v6572
        %v6574 = vsel %vm1735, %v6357, 0.0
        %v6575 = vadd.f32 %v6573, %v6574
        %v6576 = vsel %vm1735, %v6363, 0.0
        %v6577 = vadd.f32 %v6575, %v6576
        %v6578 = vsel %vm1735, %v6369, 0.0
        %v6579 = vadd.f32 %v6577, %v6578
        %v6580 = vsel %vm1735, %v6375, 0.0
        %v6581 = vadd.f32 %v6579, %v6580
        %v6582 = vsel %vm1735, %v6381, 0.0
        %v6583 = vadd.f32 %v6581, %v6582
        %v6584 = vsel %vm1735, %v6387, 0.0
        %v6585 = vadd.f32 %v6583, %v6584
        %v6586 = vsel %vm1735, %v6393, 0.0
        %v6587 = vadd.f32 %v6585, %v6586
        %v6588 = vsel %vm1735, %v6399, 0.0
        %v6589 = vadd.f32 %v6587, %v6588
        %v6590 = vsel %vm1735, %v6405, 0.0
        %v6591 = vadd.f32 %v6589, %v6590
        %v6592 = vsel %vm1735, %v6411, 0.0
        %v6593 = vadd.f32 %v6591, %v6592
        %v6594 = vsel %vm1735, %v6417, 0.0
        %v6595 = vadd.f32 %v6593, %v6594
        %v6596 = vsel %vm1735, %v6423, 0.0
        %v6597 = vadd.f32 %v6595, %v6596
        %v6598 = vsel %vm1735, %v6429, 0.0
        %v6599 = vadd.f32 %v6597, %v6598
        %v6600 = vsel %vm1735, %v6435, 0.0
        %v6601 = vadd.f32 %v6599, %v6600
        %v6602 = vsel %vm1735, %v6441, 0.0
        %v6603 = vadd.f32 %v6601, %v6602
        %v6604 = vsel %vm1735, %v6447, 0.0
        %v6605 = vadd.f32 %v6603, %v6604
        %v6606 = vsel %vm1735, %v6453, 0.0
        %v6607 = vadd.f32 %v6605, %v6606
        %v6608 = vsel %vm1735, %v6459, 0.0
        %v6609 = vadd.f32 %v6607, %v6608
        %v6610 = vsel %vm1735, %v6465, 0.0
        %v6611 = vadd.f32 %v6609, %v6610
        %v6612 = vsel %vm1735, %v6471, 0.0
        %v6613 = vadd.f32 %v6611, %v6612
        %v6614 = vsel %vm1735, %v6477, 0.0
        %v6615 = vadd.f32 %v6613, %v6614
        %v6616 = vsel %vm1735, %v6483, 0.0
        %v6617 = vadd.f32 %v6615, %v6616
        %v6618 = vsel %vm1735, %v6489, 0.0
        %v6619 = vadd.f32 %v6617, %v6618
        %v6620 = vsel %vm1799, %v6304, 0.0
        %v6621 = vsel %vm1799, %v6310, 0.0
        %v6622 = vadd.f32 %v6620, %v6621
        %v6623 = vsel %vm1799, %v6316, 0.0
        %v6624 = vadd.f32 %v6622, %v6623
        %v6625 = vsel %vm1799, %v6322, 0.0
        %v6626 = vadd.f32 %v6624, %v6625
        %v6627 = vsel %vm1799, %v6328, 0.0
        %v6628 = vadd.f32 %v6626, %v6627
        %v6629 = vsel %vm1799, %v6334, 0.0
        %v6630 = vadd.f32 %v6628, %v6629
        %v6631 = vsel %vm1799, %v6340, 0.0
        %v6632 = vadd.f32 %v6630, %v6631
        %v6633 = vsel %vm1799, %v6346, 0.0
        %v6634 = vadd.f32 %v6632, %v6633
        %v6635 = vsel %vm1799, %v6352, 0.0
        %v6636 = vadd.f32 %v6634, %v6635
        %v6637 = vsel %vm1799, %v6358, 0.0
        %v6638 = vadd.f32 %v6636, %v6637
        %v6639 = vsel %vm1799, %v6364, 0.0
        %v6640 = vadd.f32 %v6638, %v6639
        %v6641 = vsel %vm1799, %v6370, 0.0
        %v6642 = vadd.f32 %v6640, %v6641
        %v6643 = vsel %vm1799, %v6376, 0.0
        %v6644 = vadd.f32 %v6642, %v6643
        %v6645 = vsel %vm1799, %v6382, 0.0
        %v6646 = vadd.f32 %v6644, %v6645
        %v6647 = vsel %vm1799, %v6388, 0.0
        %v6648 = vadd.f32 %v6646, %v6647
        %v6649 = vsel %vm1799, %v6394, 0.0
        %v6650 = vadd.f32 %v6648, %v6649
        %v6651 = vsel %vm1799, %v6400, 0.0
        %v6652 = vadd.f32 %v6650, %v6651
        %v6653 = vsel %vm1799, %v6406, 0.0
        %v6654 = vadd.f32 %v6652, %v6653
        %v6655 = vsel %vm1799, %v6412, 0.0
        %v6656 = vadd.f32 %v6654, %v6655
        %v6657 = vsel %vm1799, %v6418, 0.0
        %v6658 = vadd.f32 %v6656, %v6657
        %v6659 = vsel %vm1799, %v6424, 0.0
        %v6660 = vadd.f32 %v6658, %v6659
        %v6661 = vsel %vm1799, %v6430, 0.0
        %v6662 = vadd.f32 %v6660, %v6661
        %v6663 = vsel %vm1799, %v6436, 0.0
        %v6664 = vadd.f32 %v6662, %v6663
        %v6665 = vsel %vm1799, %v6442, 0.0
        %v6666 = vadd.f32 %v6664, %v6665
        %v6667 = vsel %vm1799, %v6448, 0.0
        %v6668 = vadd.f32 %v6666, %v6667
        %v6669 = vsel %vm1799, %v6454, 0.0
        %v6670 = vadd.f32 %v6668, %v6669
        %v6671 = vsel %vm1799, %v6460, 0.0
        %v6672 = vadd.f32 %v6670, %v6671
        %v6673 = vsel %vm1799, %v6466, 0.0
        %v6674 = vadd.f32 %v6672, %v6673
        %v6675 = vsel %vm1799, %v6472, 0.0
        %v6676 = vadd.f32 %v6674, %v6675
        %v6677 = vsel %vm1799, %v6478, 0.0
        %v6678 = vadd.f32 %v6676, %v6677
        %v6679 = vsel %vm1799, %v6484, 0.0
        %v6680 = vadd.f32 %v6678, %v6679
        %v6681 = vsel %vm1799, %v6490, 0.0
        %v6682 = vadd.f32 %v6680, %v6681
        %v6683 = vsel %vm1863, %v6305, 0.0
        %v6684 = vsel %vm1863, %v6311, 0.0
        %v6685 = vadd.f32 %v6683, %v6684
        %v6686 = vsel %vm1863, %v6317, 0.0
        %v6687 = vadd.f32 %v6685, %v6686
        %v6688 = vsel %vm1863, %v6323, 0.0
        %v6689 = vadd.f32 %v6687, %v6688
        %v6690 = vsel %vm1863, %v6329, 0.0
        %v6691 = vadd.f32 %v6689, %v6690
        %v6692 = vsel %vm1863, %v6335, 0.0
        %v6693 = vadd.f32 %v6691, %v6692
        %v6694 = vsel %vm1863, %v6341, 0.0
        %v6695 = vadd.f32 %v6693, %v6694
        %v6696 = vsel %vm1863, %v6347, 0.0
        %v6697 = vadd.f32 %v6695, %v6696
        %v6698 = vsel %vm1863, %v6353, 0.0
        %v6699 = vadd.f32 %v6697, %v6698
        %v6700 = vsel %vm1863, %v6359, 0.0
        %v6701 = vadd.f32 %v6699, %v6700
        %v6702 = vsel %vm1863, %v6365, 0.0
        %v6703 = vadd.f32 %v6701, %v6702
        %v6704 = vsel %vm1863, %v6371, 0.0
        %v6705 = vadd.f32 %v6703, %v6704
        %v6706 = vsel %vm1863, %v6377, 0.0
        %v6707 = vadd.f32 %v6705, %v6706
        %v6708 = vsel %vm1863, %v6383, 0.0
        %v6709 = vadd.f32 %v6707, %v6708
        %v6710 = vsel %vm1863, %v6389, 0.0
        %v6711 = vadd.f32 %v6709, %v6710
        %v6712 = vsel %vm1863, %v6395, 0.0
        %v6713 = vadd.f32 %v6711, %v6712
        %v6714 = vsel %vm1863, %v6401, 0.0
        %v6715 = vadd.f32 %v6713, %v6714
        %v6716 = vsel %vm1863, %v6407, 0.0
        %v6717 = vadd.f32 %v6715, %v6716
        %v6718 = vsel %vm1863, %v6413, 0.0
        %v6719 = vadd.f32 %v6717, %v6718
        %v6720 = vsel %vm1863, %v6419, 0.0
        %v6721 = vadd.f32 %v6719, %v6720
        %v6722 = vsel %vm1863, %v6425, 0.0
        %v6723 = vadd.f32 %v6721, %v6722
        %v6724 = vsel %vm1863, %v6431, 0.0
        %v6725 = vadd.f32 %v6723, %v6724
        %v6726 = vsel %vm1863, %v6437, 0.0
        %v6727 = vadd.f32 %v6725, %v6726
        %v6728 = vsel %vm1863, %v6443, 0.0
        %v6729 = vadd.f32 %v6727, %v6728
        %v6730 = vsel %vm1863, %v6449, 0.0
        %v6731 = vadd.f32 %v6729, %v6730
        %v6732 = vsel %vm1863, %v6455, 0.0
        %v6733 = vadd.f32 %v6731, %v6732
        %v6734 = vsel %vm1863, %v6461, 0.0
        %v6735 = vadd.f32 %v6733, %v6734
        %v6736 = vsel %vm1863, %v6467, 0.0
        %v6737 = vadd.f32 %v6735, %v6736
        %v6738 = vsel %vm1863, %v6473, 0.0
        %v6739 = vadd.f32 %v6737, %v6738
        %v6740 = vsel %vm1863, %v6479, 0.0
        %v6741 = vadd.f32 %v6739, %v6740
        %v6742 = vsel %vm1863, %v6485, 0.0
        %v6743 = vadd.f32 %v6741, %v6742
        %v6744 = vsel %vm1863, %v6491, 0.0
        %v6745 = vadd.f32 %v6743, %v6744
        %v6746 = vsel %vm1927, %v6306, 0.0
        %v6747 = vsel %vm1927, %v6312, 0.0
        %v6748 = vadd.f32 %v6746, %v6747
        %v6749 = vsel %vm1927, %v6318, 0.0
        %v6750 = vadd.f32 %v6748, %v6749
        %v6751 = vsel %vm1927, %v6324, 0.0
        %v6752 = vadd.f32 %v6750, %v6751
        %v6753 = vsel %vm1927, %v6330, 0.0
        %v6754 = vadd.f32 %v6752, %v6753
        %v6755 = vsel %vm1927, %v6336, 0.0
        %v6756 = vadd.f32 %v6754, %v6755
        %v6757 = vsel %vm1927, %v6342, 0.0
        %v6758 = vadd.f32 %v6756, %v6757
        %v6759 = vsel %vm1927, %v6348, 0.0
        %v6760 = vadd.f32 %v6758, %v6759
        %v6761 = vsel %vm1927, %v6354, 0.0
        %v6762 = vadd.f32 %v6760, %v6761
        %v6763 = vsel %vm1927, %v6360, 0.0
        %v6764 = vadd.f32 %v6762, %v6763
        %v6765 = vsel %vm1927, %v6366, 0.0
        %v6766 = vadd.f32 %v6764, %v6765
        %v6767 = vsel %vm1927, %v6372, 0.0
        %v6768 = vadd.f32 %v6766, %v6767
        %v6769 = vsel %vm1927, %v6378, 0.0
        %v6770 = vadd.f32 %v6768, %v6769
        %v6771 = vsel %vm1927, %v6384, 0.0
        %v6772 = vadd.f32 %v6770, %v6771
        %v6773 = vsel %vm1927, %v6390, 0.0
        %v6774 = vadd.f32 %v6772, %v6773
        %v6775 = vsel %vm1927, %v6396, 0.0
        %v6776 = vadd.f32 %v6774, %v6775
        %v6777 = vsel %vm1927, %v6402, 0.0
        %v6778 = vadd.f32 %v6776, %v6777
        %v6779 = vsel %vm1927, %v6408, 0.0
        %v6780 = vadd.f32 %v6778, %v6779
        %v6781 = vsel %vm1927, %v6414, 0.0
        %v6782 = vadd.f32 %v6780, %v6781
        %v6783 = vsel %vm1927, %v6420, 0.0
        %v6784 = vadd.f32 %v6782, %v6783
        %v6785 = vsel %vm1927, %v6426, 0.0
        %v6786 = vadd.f32 %v6784, %v6785
        %v6787 = vsel %vm1927, %v6432, 0.0
        %v6788 = vadd.f32 %v6786, %v6787
        %v6789 = vsel %vm1927, %v6438, 0.0
        %v6790 = vadd.f32 %v6788, %v6789
        %v6791 = vsel %vm1927, %v6444, 0.0
        %v6792 = vadd.f32 %v6790, %v6791
        %v6793 = vsel %vm1927, %v6450, 0.0
        %v6794 = vadd.f32 %v6792, %v6793
        %v6795 = vsel %vm1927, %v6456, 0.0
        %v6796 = vadd.f32 %v6794, %v6795
        %v6797 = vsel %vm1927, %v6462, 0.0
        %v6798 = vadd.f32 %v6796, %v6797
        %v6799 = vsel %vm1927, %v6468, 0.0
        %v6800 = vadd.f32 %v6798, %v6799
        %v6801 = vsel %vm1927, %v6474, 0.0
        %v6802 = vadd.f32 %v6800, %v6801
        %v6803 = vsel %vm1927, %v6480, 0.0
        %v6804 = vadd.f32 %v6802, %v6803
        %v6805 = vsel %vm1927, %v6486, 0.0
        %v6806 = vadd.f32 %v6804, %v6805
        %v6807 = vsel %vm1927, %v6492, 0.0
        %v6808 = vadd.f32 %v6806, %v6807
        %v6809 = vsel %vm1991, %v6307, 0.0
        %v6810 = vsel %vm1991, %v6313, 0.0
        %v6811 = vadd.f32 %v6809, %v6810
        %v6812 = vsel %vm1991, %v6319, 0.0
        %v6813 = vadd.f32 %v6811, %v6812
        %v6814 = vsel %vm1991, %v6325, 0.0
        %v6815 = vadd.f32 %v6813, %v6814
        %v6816 = vsel %vm1991, %v6331, 0.0
        %v6817 = vadd.f32 %v6815, %v6816
        %v6818 = vsel %vm1991, %v6337, 0.0
        %v6819 = vadd.f32 %v6817, %v6818
        %v6820 = vsel %vm1991, %v6343, 0.0
        %v6821 = vadd.f32 %v6819, %v6820
        %v6822 = vsel %vm1991, %v6349, 0.0
        %v6823 = vadd.f32 %v6821, %v6822
        %v6824 = vsel %vm1991, %v6355, 0.0
        %v6825 = vadd.f32 %v6823, %v6824
        %v6826 = vsel %vm1991, %v6361, 0.0
        %v6827 = vadd.f32 %v6825, %v6826
        %v6828 = vsel %vm1991, %v6367, 0.0
        %v6829 = vadd.f32 %v6827, %v6828
        %v6830 = vsel %vm1991, %v6373, 0.0
        %v6831 = vadd.f32 %v6829, %v6830
        %v6832 = vsel %vm1991, %v6379, 0.0
        %v6833 = vadd.f32 %v6831, %v6832
        %v6834 = vsel %vm1991, %v6385, 0.0
        %v6835 = vadd.f32 %v6833, %v6834
        %v6836 = vsel %vm1991, %v6391, 0.0
        %v6837 = vadd.f32 %v6835, %v6836
        %v6838 = vsel %vm1991, %v6397, 0.0
        %v6839 = vadd.f32 %v6837, %v6838
        %v6840 = vsel %vm1991, %v6403, 0.0
        %v6841 = vadd.f32 %v6839, %v6840
        %v6842 = vsel %vm1991, %v6409, 0.0
        %v6843 = vadd.f32 %v6841, %v6842
        %v6844 = vsel %vm1991, %v6415, 0.0
        %v6845 = vadd.f32 %v6843, %v6844
        %v6846 = vsel %vm1991, %v6421, 0.0
        %v6847 = vadd.f32 %v6845, %v6846
        %v6848 = vsel %vm1991, %v6427, 0.0
        %v6849 = vadd.f32 %v6847, %v6848
        %v6850 = vsel %vm1991, %v6433, 0.0
        %v6851 = vadd.f32 %v6849, %v6850
        %v6852 = vsel %vm1991, %v6439, 0.0
        %v6853 = vadd.f32 %v6851, %v6852
        %v6854 = vsel %vm1991, %v6445, 0.0
        %v6855 = vadd.f32 %v6853, %v6854
        %v6856 = vsel %vm1991, %v6451, 0.0
        %v6857 = vadd.f32 %v6855, %v6856
        %v6858 = vsel %vm1991, %v6457, 0.0
        %v6859 = vadd.f32 %v6857, %v6858
        %v6860 = vsel %vm1991, %v6463, 0.0
        %v6861 = vadd.f32 %v6859, %v6860
        %v6862 = vsel %vm1991, %v6469, 0.0
        %v6863 = vadd.f32 %v6861, %v6862
        %v6864 = vsel %vm1991, %v6475, 0.0
        %v6865 = vadd.f32 %v6863, %v6864
        %v6866 = vsel %vm1991, %v6481, 0.0
        %v6867 = vadd.f32 %v6865, %v6866
        %v6868 = vsel %vm1991, %v6487, 0.0
        %v6869 = vadd.f32 %v6867, %v6868
        %v6870 = vsel %vm1991, %v6493, 0.0
        %v6871 = vadd.f32 %v6869, %v6870
        %v6873 = vrot.slane %v2056, 1
        %v6874 = vrot.slane %v2058, 1
        %v6875 = vsel %vm2109, %v6873, %v6874
        %v6876 = vrot.slane %v2060, 1
        %v6877 = vsel %vm2109, %v6874, %v6876
        %v6884 = vmul.f32 %v2055, %v4195
        %v6885 = vmul.f32 %v2056, %v6875
        %v6886 = vmul.f32 %v2057, %v4197
        %v6887 = vmul.f32 %v2058, %v6877
        %v6888 = vmul.f32 %v2059, %v4196
        %v6889 = vmul.f32 %v2060, %v6876
        %v6890 = vrsqrt.pop %v6884
        %v6891 = vrsqrt.pop %v6885
        %v6892 = vrsqrt.pop %v6886
        %v6893 = vrsqrt.pop %v6887
        %v6894 = vrsqrt.pop %v6888
        %v6895 = vrsqrt.pop %v6889
        %v6896 = vmul.f32 %v6556, %v6890
        %v6897 = vmul.f32 %v6619, %v6891
        %v6898 = vmul.f32 %v6682, %v6892
        %v6899 = vmul.f32 %v6745, %v6893
        %v6900 = vmul.f32 %v6808, %v6894
        %v6901 = vmul.f32 %v6871, %v6895
        %6902 = vrot.lane.b32.xlu0 %v4225, 1
        %v6903 = vpop.permute.xlu0 %6902
        %6904 = vrot.lane.b32.xlu0 %v4227, 1
        %v6905 = vpop.permute.xlu0 %6904
        %6906 = vrot.lane.b32.xlu0 %v4226, 1
        %v6907 = vpop.permute.xlu0 %6906
        %vm6908 = vcmp.eq.s32.totalorder %v209, %v6903
        %vm6909 = vcmp.eq.s32.totalorder %v210, %v6903
        %vm6910 = vcmp.eq.s32.totalorder %v211, %v6905
        %vm6911 = vcmp.eq.s32.totalorder %v212, %v6905
        %vm6912 = vcmp.eq.s32.totalorder %v213, %v6907
        %vm6913 = vcmp.eq.s32.totalorder %v214, %v6907
        %6914 = vrot.lane.b32.xlu0 %v4231, 1
        %v6915 = vpop.permute.xlu0 %6914
        %6916 = vrot.lane.b32.xlu0 %v4233, 1
        %v6917 = vpop.permute.xlu0 %6916
        %6918 = vrot.lane.b32.xlu0 %v4232, 1
        %v6919 = vpop.permute.xlu0 %6918
        %vm6920 = vcmp.ne.s32.totalorder %v6915, 0
        %vm6921 = vcmp.ne.s32.totalorder %v6917, 0
        %vm6922 = vcmp.ne.s32.totalorder %v6919, 0
        %vm6923 = vmand %vm6908, %vm6920
        %vm6924 = vmand %vm6909, %vm6920
        %vm6925 = vmand %vm6910, %vm6921
        %vm6926 = vmand %vm6911, %vm6921
        %vm6927 = vmand %vm6912, %vm6922
        %vm6928 = vmand %vm6913, %vm6922
        %v6929 = vadd.f32 %v5816, %v6896
        %v6930 = vadd.f32 %v5817, %v6897
        %v6931 = vadd.f32 %v5818, %v6898
        %v6932 = vadd.f32 %v5819, %v6899
        %v6933 = vadd.f32 %v5820, %v6900
        %v6934 = vadd.f32 %v5821, %v6901
        %v6941 = vrot.slane %v6896, 7
        %v6942 = vrot.slane %v6897, 7
        %v6943 = vrot.slane %v6898, 7
        %v6944 = vsel %vm1094, %v6941, %v6943
        %v6945 = vrot.slane %v6899, 7
        %v6946 = vsel %vm1094, %v6942, %v6945
        %v6947 = vrot.slane %v6900, 7
        %v6948 = vsel %vm1094, %v6943, %v6947
        %v6949 = vrot.slane %v6901, 7
        %v6950 = vsel %vm1094, %v6945, %v6949
        %v6957 = vsel %vm6923, %v6941, 0.0
        %v6958 = vsel %vm6924, %v6942, 0.0
        %v6959 = vsel %vm6925, %v6944, 0.0
        %v6960 = vsel %vm6926, %v6946, 0.0
        %v6961 = vsel %vm6927, %v6948, 0.0
        %v6962 = vsel %vm6928, %v6950, 0.0
        %v6969 = vrot.slane %v6957, 2
        %v6970 = vrot.slane %v6959, 2
        %v6971 = vsel %vm4286, %v6969, %v6970
        %v6972 = vrot.slane %v6958, 2
        %v6973 = vrot.slane %v6960, 2
        %v6974 = vsel %vm4286, %v6972, %v6973
        %v6975 = vrot.slane %v6961, 2
        %v6976 = vsel %vm4286, %v6970, %v6975
        %v6977 = vrot.slane %v6962, 2
        %v6978 = vsel %vm4286, %v6973, %v6977
        %6979 = vrot.lane.b32.xlu0 %v6971, 127
        %v6980 = vpop.permute.xlu0 %6979
        %6981 = vrot.lane.b32.xlu0 %v6974, 127
        %v6982 = vpop.permute.xlu0 %6981
        %6983 = vrot.lane.b32.xlu0 %v6976, 127
        %v6984 = vpop.permute.xlu0 %6983
        %6985 = vrot.lane.b32.xlu0 %v6978, 127
        %v6986 = vpop.permute.xlu0 %6985
        %v6987 = vsel %vm2128, %v6980, %v6982
        %v6988 = vsel %vm2128, %v6984, %v6986
        %v6991 = vadd.f32 %v6987, %v6988
        %6992 = vadd.xlane.f32.xlu0 %v6991
        %v6993 = vpop.xlane.xlu0 %6992
        %v6994 = vrot.slane %v6993, 4
        %v6995 = vadd.f32 %v6993, %v6994
        %v6996 = vrot.slane %v6995, 2
        %v6997 = vadd.f32 %v6995, %v6996
        %v6998 = vrot.slane %v6997, 1
        %v6999 = vadd.f32 %v6997, %v6998
        %s7000 = vtos %v6999
        %s7001 = sadd.f32 %s5866, %s7000
        %v7002 = vsel %vm6923, 1, 0
        %v7003 = vsel %vm6924, 1, 0
        %v7004 = vsel %vm6925, 1, 0
        %v7005 = vsel %vm6926, 1, 0
        %v7006 = vsel %vm6927, 1, 0
        %v7007 = vsel %vm6928, 1, 0
        %v7008 = vcvt.s32.f32 %v7002
        %v7009 = vcvt.s32.f32 %v7003
        %v7010 = vcvt.s32.f32 %v7004
        %v7011 = vcvt.s32.f32 %v7005
        %v7012 = vcvt.s32.f32 %v7006
        %v7013 = vcvt.s32.f32 %v7007
        %v7020 = vrot.slane %v7008, 2
        %v7021 = vrot.slane %v7010, 2
        %v7022 = vsel %vm4286, %v7020, %v7021
        %v7023 = vrot.slane %v7009, 2
        %v7024 = vrot.slane %v7011, 2
        %v7025 = vsel %vm4286, %v7023, %v7024
        %v7026 = vrot.slane %v7012, 2
        %v7027 = vsel %vm4286, %v7021, %v7026
        %v7028 = vrot.slane %v7013, 2
        %v7029 = vsel %vm4286, %v7024, %v7028
        %7030 = vrot.lane.b32.xlu0 %v7022, 127
        %v7031 = vpop.permute.xlu0 %7030
        %7032 = vrot.lane.b32.xlu0 %v7025, 127
        %v7033 = vpop.permute.xlu0 %7032
        %7034 = vrot.lane.b32.xlu0 %v7027, 127
        %v7035 = vpop.permute.xlu0 %7034
        %7036 = vrot.lane.b32.xlu0 %v7029, 127
        %v7037 = vpop.permute.xlu0 %7036
        %v7038 = vsel %vm2128, %v7031, %v7033
        %v7039 = vsel %vm2128, %v7035, %v7037
        %v7042 = vadd.f32 %v7038, %v7039
        %7043 = vadd.xlane.f32.xlu0 %v7042
        %v7044 = vpop.xlane.xlu0 %7043
        %v7045 = vrot.slane %v7044, 4
        %v7046 = vadd.f32 %v7044, %v7045
        %v7047 = vrot.slane %v7046, 2
        %v7048 = vadd.f32 %v7046, %v7047
        %v7049 = vrot.slane %v7048, 1
        %v7050 = vadd.f32 %v7048, %v7049
        %s7051 = vtos %v7050
        %s7052 = sadd.f32 %s5917, %s7051
        %7053 = vrot.lane.b32.xlu0 %v1095, 127
        %v7054 = vpop.permute.xlu0 %7053
        %7055 = vrot.lane.b32.xlu0 %v4396, 127
        %v7056 = vpop.permute.xlu0 %7055
        %7057 = vrot.lane.b32.xlu0 %v1097, 127
        %v7058 = vpop.permute.xlu0 %7057
        %7059 = vrot.lane.b32.xlu0 %v4398, 127
        %v7060 = vpop.permute.xlu0 %7059
        %7061 = vrot.lane.b32.xlu0 %v1096, 127
        %v7062 = vpop.permute.xlu0 %7061
        %7063 = vrot.lane.b32.xlu0 %v4397, 127
        %v7064 = vpop.permute.xlu0 %7063
        %7065 = vrot.lane.b32.xlu0 %v1098, 127
        %v7066 = vpop.permute.xlu0 %7065
        %7067 = vrot.lane.b32.xlu0 %v4399, 127
        %v7068 = vpop.permute.xlu0 %7067
        %7069 = vrot.lane.b32.xlu0 %v1100, 127
        %v7070 = vpop.permute.xlu0 %7069
        %7071 = vrot.lane.b32.xlu0 %v4401, 127
        %v7072 = vpop.permute.xlu0 %7071
        %7073 = vrot.lane.b32.xlu0 %v1099, 127
        %v7074 = vpop.permute.xlu0 %7073
        %7075 = vrot.lane.b32.xlu0 %v4400, 127
        %v7076 = vpop.permute.xlu0 %7075
        %7077 = vrot.lane.b32.xlu0 %v1101, 127
        %v7078 = vpop.permute.xlu0 %7077
        %7079 = vrot.lane.b32.xlu0 %v4402, 127
        %v7080 = vpop.permute.xlu0 %7079
        %7081 = vrot.lane.b32.xlu0 %v1103, 127
        %v7082 = vpop.permute.xlu0 %7081
        %7083 = vrot.lane.b32.xlu0 %v4404, 127
        %v7084 = vpop.permute.xlu0 %7083
        %7085 = vrot.lane.b32.xlu0 %v1102, 127
        %v7086 = vpop.permute.xlu0 %7085
        %7087 = vrot.lane.b32.xlu0 %v4403, 127
        %v7088 = vpop.permute.xlu0 %7087
        %7089 = vrot.lane.b32.xlu0 %v1104, 127
        %v7090 = vpop.permute.xlu0 %7089
        %7091 = vrot.lane.b32.xlu0 %v4405, 127
        %v7092 = vpop.permute.xlu0 %7091
        %7093 = vrot.lane.b32.xlu0 %v1106, 127
        %v7094 = vpop.permute.xlu0 %7093
        %7095 = vrot.lane.b32.xlu0 %v4407, 127
        %v7096 = vpop.permute.xlu0 %7095
        %7097 = vrot.lane.b32.xlu0 %v1105, 127
        %v7098 = vpop.permute.xlu0 %7097
        %7099 = vrot.lane.b32.xlu0 %v4406, 127
        %v7100 = vpop.permute.xlu0 %7099
        %7101 = vrot.lane.b32.xlu0 %v1107, 127
        %v7102 = vpop.permute.xlu0 %7101
        %7103 = vrot.lane.b32.xlu0 %v4408, 127
        %v7104 = vpop.permute.xlu0 %7103
        %7105 = vrot.lane.b32.xlu0 %v1109, 127
        %v7106 = vpop.permute.xlu0 %7105
        %7107 = vrot.lane.b32.xlu0 %v4410, 127
        %v7108 = vpop.permute.xlu0 %7107
        %7109 = vrot.lane.b32.xlu0 %v1108, 127
        %v7110 = vpop.permute.xlu0 %7109
        %7111 = vrot.lane.b32.xlu0 %v4409, 127
        %v7112 = vpop.permute.xlu0 %7111
        %7113 = vrot.lane.b32.xlu0 %v1110, 127
        %v7114 = vpop.permute.xlu0 %7113
        %7115 = vrot.lane.b32.xlu0 %v4411, 127
        %v7116 = vpop.permute.xlu0 %7115
        %7117 = vrot.lane.b32.xlu0 %v1112, 127
        %v7118 = vpop.permute.xlu0 %7117
        %7119 = vrot.lane.b32.xlu0 %v4413, 127
        %v7120 = vpop.permute.xlu0 %7119
        %7121 = vrot.lane.b32.xlu0 %v1111, 127
        %v7122 = vpop.permute.xlu0 %7121
        %7123 = vrot.lane.b32.xlu0 %v4412, 127
        %v7124 = vpop.permute.xlu0 %7123
        %7125 = vrot.lane.b32.xlu0 %v1113, 127
        %v7126 = vpop.permute.xlu0 %7125
        %7127 = vrot.lane.b32.xlu0 %v4414, 127
        %v7128 = vpop.permute.xlu0 %7127
        %7129 = vrot.lane.b32.xlu0 %v1115, 127
        %v7130 = vpop.permute.xlu0 %7129
        %7131 = vrot.lane.b32.xlu0 %v4416, 127
        %v7132 = vpop.permute.xlu0 %7131
        %7133 = vrot.lane.b32.xlu0 %v1114, 127
        %v7134 = vpop.permute.xlu0 %7133
        %7135 = vrot.lane.b32.xlu0 %v4415, 127
        %v7136 = vpop.permute.xlu0 %7135
        %7137 = vrot.lane.b32.xlu0 %v1116, 127
        %v7138 = vpop.permute.xlu0 %7137
        %7139 = vrot.lane.b32.xlu0 %v4417, 127
        %v7140 = vpop.permute.xlu0 %7139
        %7141 = vrot.lane.b32.xlu0 %v1118, 127
        %v7142 = vpop.permute.xlu0 %7141
        %7143 = vrot.lane.b32.xlu0 %v4419, 127
        %v7144 = vpop.permute.xlu0 %7143
        %7145 = vrot.lane.b32.xlu0 %v1117, 127
        %v7146 = vpop.permute.xlu0 %7145
        %7147 = vrot.lane.b32.xlu0 %v4418, 127
        %v7148 = vpop.permute.xlu0 %7147
        %7149 = vrot.lane.b32.xlu0 %v1119, 127
        %v7150 = vpop.permute.xlu0 %7149
        %7151 = vrot.lane.b32.xlu0 %v4420, 127
        %v7152 = vpop.permute.xlu0 %7151
        %7153 = vrot.lane.b32.xlu0 %v1121, 127
        %v7154 = vpop.permute.xlu0 %7153
        %7155 = vrot.lane.b32.xlu0 %v4422, 127
        %v7156 = vpop.permute.xlu0 %7155
        %7157 = vrot.lane.b32.xlu0 %v1120, 127
        %v7158 = vpop.permute.xlu0 %7157
        %7159 = vrot.lane.b32.xlu0 %v4421, 127
        %v7160 = vpop.permute.xlu0 %7159
        %7161 = vrot.lane.b32.xlu0 %v1122, 127
        %v7162 = vpop.permute.xlu0 %7161
        %7163 = vrot.lane.b32.xlu0 %v4423, 127
        %v7164 = vpop.permute.xlu0 %7163
        %7165 = vrot.lane.b32.xlu0 %v1124, 127
        %v7166 = vpop.permute.xlu0 %7165
        %7167 = vrot.lane.b32.xlu0 %v4425, 127
        %v7168 = vpop.permute.xlu0 %7167
        %7169 = vrot.lane.b32.xlu0 %v1123, 127
        %v7170 = vpop.permute.xlu0 %7169
        %7171 = vrot.lane.b32.xlu0 %v4424, 127
        %v7172 = vpop.permute.xlu0 %7171
        %7173 = vrot.lane.b32.xlu0 %v1125, 127
        %v7174 = vpop.permute.xlu0 %7173
        %7175 = vrot.lane.b32.xlu0 %v4426, 127
        %v7176 = vpop.permute.xlu0 %7175
        %7177 = vrot.lane.b32.xlu0 %v1127, 127
        %v7178 = vpop.permute.xlu0 %7177
        %7179 = vrot.lane.b32.xlu0 %v4428, 127
        %v7180 = vpop.permute.xlu0 %7179
        %7181 = vrot.lane.b32.xlu0 %v1126, 127
        %v7182 = vpop.permute.xlu0 %7181
        %7183 = vrot.lane.b32.xlu0 %v4427, 127
        %v7184 = vpop.permute.xlu0 %7183
        %7185 = vrot.lane.b32.xlu0 %v1128, 127
        %v7186 = vpop.permute.xlu0 %7185
        %7187 = vrot.lane.b32.xlu0 %v4429, 127
        %v7188 = vpop.permute.xlu0 %7187
        %7189 = vrot.lane.b32.xlu0 %v1130, 127
        %v7190 = vpop.permute.xlu0 %7189
        %7191 = vrot.lane.b32.xlu0 %v4431, 127
        %v7192 = vpop.permute.xlu0 %7191
        %7193 = vrot.lane.b32.xlu0 %v1129, 127
        %v7194 = vpop.permute.xlu0 %7193
        %7195 = vrot.lane.b32.xlu0 %v4430, 127
        %v7196 = vpop.permute.xlu0 %7195
        %7197 = vrot.lane.b32.xlu0 %v1131, 127
        %v7198 = vpop.permute.xlu0 %7197
        %7199 = vrot.lane.b32.xlu0 %v4432, 127
        %v7200 = vpop.permute.xlu0 %7199
        %7201 = vrot.lane.b32.xlu0 %v1133, 127
        %v7202 = vpop.permute.xlu0 %7201
        %7203 = vrot.lane.b32.xlu0 %v4434, 127
        %v7204 = vpop.permute.xlu0 %7203
        %7205 = vrot.lane.b32.xlu0 %v1132, 127
        %v7206 = vpop.permute.xlu0 %7205
        %7207 = vrot.lane.b32.xlu0 %v4433, 127
        %v7208 = vpop.permute.xlu0 %7207
        %7209 = vrot.lane.b32.xlu0 %v1134, 127
        %v7210 = vpop.permute.xlu0 %7209
        %7211 = vrot.lane.b32.xlu0 %v4435, 127
        %v7212 = vpop.permute.xlu0 %7211
        %7213 = vrot.lane.b32.xlu0 %v1136, 127
        %v7214 = vpop.permute.xlu0 %7213
        %7215 = vrot.lane.b32.xlu0 %v4437, 127
        %v7216 = vpop.permute.xlu0 %7215
        %7217 = vrot.lane.b32.xlu0 %v1135, 127
        %v7218 = vpop.permute.xlu0 %7217
        %7219 = vrot.lane.b32.xlu0 %v4436, 127
        %v7220 = vpop.permute.xlu0 %7219
        %7221 = vrot.lane.b32.xlu0 %v1137, 127
        %v7222 = vpop.permute.xlu0 %7221
        %7223 = vrot.lane.b32.xlu0 %v4438, 127
        %v7224 = vpop.permute.xlu0 %7223
        %7225 = vrot.lane.b32.xlu0 %v1139, 127
        %v7226 = vpop.permute.xlu0 %7225
        %7227 = vrot.lane.b32.xlu0 %v4440, 127
        %v7228 = vpop.permute.xlu0 %7227
        %7229 = vrot.lane.b32.xlu0 %v1138, 127
        %v7230 = vpop.permute.xlu0 %7229
        %7231 = vrot.lane.b32.xlu0 %v4439, 127
        %v7232 = vpop.permute.xlu0 %7231
        %7233 = vrot.lane.b32.xlu0 %v1140, 127
        %v7234 = vpop.permute.xlu0 %7233
        %7235 = vrot.lane.b32.xlu0 %v4441, 127
        %v7236 = vpop.permute.xlu0 %7235
        %7237 = vrot.lane.b32.xlu0 %v1142, 127
        %v7238 = vpop.permute.xlu0 %7237
        %7239 = vrot.lane.b32.xlu0 %v4443, 127
        %v7240 = vpop.permute.xlu0 %7239
        %7241 = vrot.lane.b32.xlu0 %v1141, 127
        %v7242 = vpop.permute.xlu0 %7241
        %7243 = vrot.lane.b32.xlu0 %v4442, 127
        %v7244 = vpop.permute.xlu0 %7243
        %7245 = vrot.lane.b32.xlu0 %v1143, 127
        %v7246 = vpop.permute.xlu0 %7245
        %7247 = vrot.lane.b32.xlu0 %v4444, 127
        %v7248 = vpop.permute.xlu0 %7247
        %7249 = vrot.lane.b32.xlu0 %v1145, 127
        %v7250 = vpop.permute.xlu0 %7249
        %7251 = vrot.lane.b32.xlu0 %v4446, 127
        %v7252 = vpop.permute.xlu0 %7251
        %7253 = vrot.lane.b32.xlu0 %v1144, 127
        %v7254 = vpop.permute.xlu0 %7253
        %7255 = vrot.lane.b32.xlu0 %v4445, 127
        %v7256 = vpop.permute.xlu0 %7255
        %7257 = vrot.lane.b32.xlu0 %v1146, 127
        %v7258 = vpop.permute.xlu0 %7257
        %7259 = vrot.lane.b32.xlu0 %v4447, 127
        %v7260 = vpop.permute.xlu0 %7259
        %7261 = vrot.lane.b32.xlu0 %v1148, 127
        %v7262 = vpop.permute.xlu0 %7261
        %7263 = vrot.lane.b32.xlu0 %v4449, 127
        %v7264 = vpop.permute.xlu0 %7263
        %7265 = vrot.lane.b32.xlu0 %v1147, 127
        %v7266 = vpop.permute.xlu0 %7265
        %7267 = vrot.lane.b32.xlu0 %v4448, 127
        %v7268 = vpop.permute.xlu0 %7267
        %7269 = vrot.lane.b32.xlu0 %v1149, 127
        %v7270 = vpop.permute.xlu0 %7269
        %7271 = vrot.lane.b32.xlu0 %v4450, 127
        %v7272 = vpop.permute.xlu0 %7271
        %7273 = vrot.lane.b32.xlu0 %v1151, 127
        %v7274 = vpop.permute.xlu0 %7273
        %7275 = vrot.lane.b32.xlu0 %v4452, 127
        %v7276 = vpop.permute.xlu0 %7275
        %7277 = vrot.lane.b32.xlu0 %v1150, 127
        %v7278 = vpop.permute.xlu0 %7277
        %7279 = vrot.lane.b32.xlu0 %v4451, 127
        %v7280 = vpop.permute.xlu0 %7279
        %7281 = vrot.lane.b32.xlu0 %v1152, 127
        %v7282 = vpop.permute.xlu0 %7281
        %7283 = vrot.lane.b32.xlu0 %v4453, 127
        %v7284 = vpop.permute.xlu0 %7283
        %7285 = vrot.lane.b32.xlu0 %v1154, 127
        %v7286 = vpop.permute.xlu0 %7285
        %7287 = vrot.lane.b32.xlu0 %v4455, 127
        %v7288 = vpop.permute.xlu0 %7287
        %7289 = vrot.lane.b32.xlu0 %v1153, 127
        %v7290 = vpop.permute.xlu0 %7289
        %7291 = vrot.lane.b32.xlu0 %v4454, 127
        %v7292 = vpop.permute.xlu0 %7291
        %7293 = vrot.lane.b32.xlu0 %v1155, 127
        %v7294 = vpop.permute.xlu0 %7293
        %7295 = vrot.lane.b32.xlu0 %v4456, 127
        %v7296 = vpop.permute.xlu0 %7295
        %7297 = vrot.lane.b32.xlu0 %v1157, 127
        %v7298 = vpop.permute.xlu0 %7297
        %7299 = vrot.lane.b32.xlu0 %v4458, 127
        %v7300 = vpop.permute.xlu0 %7299
        %7301 = vrot.lane.b32.xlu0 %v1156, 127
        %v7302 = vpop.permute.xlu0 %7301
        %7303 = vrot.lane.b32.xlu0 %v4457, 127
        %v7304 = vpop.permute.xlu0 %7303
        %7305 = vrot.lane.b32.xlu0 %v1158, 127
        %v7306 = vpop.permute.xlu0 %7305
        %7307 = vrot.lane.b32.xlu0 %v4459, 127
        %v7308 = vpop.permute.xlu0 %7307
        %7309 = vrot.lane.b32.xlu0 %v1160, 127
        %v7310 = vpop.permute.xlu0 %7309
        %7311 = vrot.lane.b32.xlu0 %v4461, 127
        %v7312 = vpop.permute.xlu0 %7311
        %7313 = vrot.lane.b32.xlu0 %v1159, 127
        %v7314 = vpop.permute.xlu0 %7313
        %7315 = vrot.lane.b32.xlu0 %v4460, 127
        %v7316 = vpop.permute.xlu0 %7315
        %7317 = vrot.lane.b32.xlu0 %v1161, 127
        %v7318 = vpop.permute.xlu0 %7317
        %7319 = vrot.lane.b32.xlu0 %v4462, 127
        %v7320 = vpop.permute.xlu0 %7319
        %7321 = vrot.lane.b32.xlu0 %v1163, 127
        %v7322 = vpop.permute.xlu0 %7321
        %7323 = vrot.lane.b32.xlu0 %v4464, 127
        %v7324 = vpop.permute.xlu0 %7323
        %7325 = vrot.lane.b32.xlu0 %v1162, 127
        %v7326 = vpop.permute.xlu0 %7325
        %7327 = vrot.lane.b32.xlu0 %v4463, 127
        %v7328 = vpop.permute.xlu0 %7327
        %7329 = vrot.lane.b32.xlu0 %v1164, 127
        %v7330 = vpop.permute.xlu0 %7329
        %7331 = vrot.lane.b32.xlu0 %v4465, 127
        %v7332 = vpop.permute.xlu0 %7331
        %7333 = vrot.lane.b32.xlu0 %v1166, 127
        %v7334 = vpop.permute.xlu0 %7333
        %7335 = vrot.lane.b32.xlu0 %v4467, 127
        %v7336 = vpop.permute.xlu0 %7335
        %7337 = vrot.lane.b32.xlu0 %v1165, 127
        %v7338 = vpop.permute.xlu0 %7337
        %7339 = vrot.lane.b32.xlu0 %v4466, 127
        %v7340 = vpop.permute.xlu0 %7339
        %7341 = vrot.lane.b32.xlu0 %v1167, 127
        %v7342 = vpop.permute.xlu0 %7341
        %7343 = vrot.lane.b32.xlu0 %v4468, 127
        %v7344 = vpop.permute.xlu0 %7343
        %7345 = vrot.lane.b32.xlu0 %v1169, 127
        %v7346 = vpop.permute.xlu0 %7345
        %7347 = vrot.lane.b32.xlu0 %v4470, 127
        %v7348 = vpop.permute.xlu0 %7347
        %7349 = vrot.lane.b32.xlu0 %v1168, 127
        %v7350 = vpop.permute.xlu0 %7349
        %7351 = vrot.lane.b32.xlu0 %v4469, 127
        %v7352 = vpop.permute.xlu0 %7351
        %7353 = vrot.lane.b32.xlu0 %v1170, 127
        %v7354 = vpop.permute.xlu0 %7353
        %7355 = vrot.lane.b32.xlu0 %v4471, 127
        %v7356 = vpop.permute.xlu0 %7355
        %7357 = vrot.lane.b32.xlu0 %v1172, 127
        %v7358 = vpop.permute.xlu0 %7357
        %7359 = vrot.lane.b32.xlu0 %v4473, 127
        %v7360 = vpop.permute.xlu0 %7359
        %7361 = vrot.lane.b32.xlu0 %v1171, 127
        %v7362 = vpop.permute.xlu0 %7361
        %7363 = vrot.lane.b32.xlu0 %v4472, 127
        %v7364 = vpop.permute.xlu0 %7363
        %7365 = vrot.lane.b32.xlu0 %v1173, 127
        %v7366 = vpop.permute.xlu0 %7365
        %7367 = vrot.lane.b32.xlu0 %v4474, 127
        %v7368 = vpop.permute.xlu0 %7367
        %7369 = vrot.lane.b32.xlu0 %v1175, 127
        %v7370 = vpop.permute.xlu0 %7369
        %7371 = vrot.lane.b32.xlu0 %v4476, 127
        %v7372 = vpop.permute.xlu0 %7371
        %7373 = vrot.lane.b32.xlu0 %v1174, 127
        %v7374 = vpop.permute.xlu0 %7373
        %7375 = vrot.lane.b32.xlu0 %v4475, 127
        %v7376 = vpop.permute.xlu0 %7375
        %7377 = vrot.lane.b32.xlu0 %v1176, 127
        %v7378 = vpop.permute.xlu0 %7377
        %7379 = vrot.lane.b32.xlu0 %v4477, 127
        %v7380 = vpop.permute.xlu0 %7379
        %7381 = vrot.lane.b32.xlu0 %v1178, 127
        %v7382 = vpop.permute.xlu0 %7381
        %7383 = vrot.lane.b32.xlu0 %v4479, 127
        %v7384 = vpop.permute.xlu0 %7383
        %7385 = vrot.lane.b32.xlu0 %v1177, 127
        %v7386 = vpop.permute.xlu0 %7385
        %7387 = vrot.lane.b32.xlu0 %v4478, 127
        %v7388 = vpop.permute.xlu0 %7387
        %7389 = vrot.lane.b32.xlu0 %v1179, 127
        %v7390 = vpop.permute.xlu0 %7389
        %7391 = vrot.lane.b32.xlu0 %v4480, 127
        %v7392 = vpop.permute.xlu0 %7391
        %7393 = vrot.lane.b32.xlu0 %v1181, 127
        %v7394 = vpop.permute.xlu0 %7393
        %7395 = vrot.lane.b32.xlu0 %v4482, 127
        %v7396 = vpop.permute.xlu0 %7395
        %7397 = vrot.lane.b32.xlu0 %v1180, 127
        %v7398 = vpop.permute.xlu0 %7397
        %7399 = vrot.lane.b32.xlu0 %v4481, 127
        %v7400 = vpop.permute.xlu0 %7399
        %7401 = vrot.lane.b32.xlu0 %v1182, 127
        %v7402 = vpop.permute.xlu0 %7401
        %7403 = vrot.lane.b32.xlu0 %v4483, 127
        %v7404 = vpop.permute.xlu0 %7403
        %7405 = vrot.lane.b32.xlu0 %v1184, 127
        %v7406 = vpop.permute.xlu0 %7405
        %7407 = vrot.lane.b32.xlu0 %v4485, 127
        %v7408 = vpop.permute.xlu0 %7407
        %7409 = vrot.lane.b32.xlu0 %v1183, 127
        %v7410 = vpop.permute.xlu0 %7409
        %7411 = vrot.lane.b32.xlu0 %v4484, 127
        %v7412 = vpop.permute.xlu0 %7411
        %7413 = vrot.lane.b32.xlu0 %v1185, 127
        %v7414 = vpop.permute.xlu0 %7413
        %7415 = vrot.lane.b32.xlu0 %v4486, 127
        %v7416 = vpop.permute.xlu0 %7415
        %7417 = vrot.lane.b32.xlu0 %v1187, 127
        %v7418 = vpop.permute.xlu0 %7417
        %7419 = vrot.lane.b32.xlu0 %v4488, 127
        %v7420 = vpop.permute.xlu0 %7419
        %7421 = vrot.lane.b32.xlu0 %v1186, 127
        %v7422 = vpop.permute.xlu0 %7421
        %7423 = vrot.lane.b32.xlu0 %v4487, 127
        %v7424 = vpop.permute.xlu0 %7423
        %7425 = vrot.lane.b32.xlu0 %v1188, 127
        %v7426 = vpop.permute.xlu0 %7425
        %7427 = vrot.lane.b32.xlu0 %v4489, 127
        %v7428 = vpop.permute.xlu0 %7427
        %7429 = vrot.lane.b32.xlu0 %v1190, 127
        %v7430 = vpop.permute.xlu0 %7429
        %7431 = vrot.lane.b32.xlu0 %v4491, 127
        %v7432 = vpop.permute.xlu0 %7431
        %7433 = vrot.lane.b32.xlu0 %v1189, 127
        %v7434 = vpop.permute.xlu0 %7433
        %7435 = vrot.lane.b32.xlu0 %v4490, 127
        %v7436 = vpop.permute.xlu0 %7435
        %v7437 = vsel %vm2128, %v7054, %v7056
        %v7438 = vsel %vm2128, %v7058, %v7060
        %v7439 = vsel %vm2128, %v7062, %v7064
        %v7440 = vsel %vm2128, %v7066, %v7068
        %v7441 = vsel %vm2128, %v7070, %v7072
        %v7442 = vsel %vm2128, %v7074, %v7076
        %v7443 = vsel %vm2128, %v7078, %v7080
        %v7444 = vsel %vm2128, %v7082, %v7084
        %v7445 = vsel %vm2128, %v7086, %v7088
        %v7446 = vsel %vm2128, %v7090, %v7092
        %v7447 = vsel %vm2128, %v7094, %v7096
        %v7448 = vsel %vm2128, %v7098, %v7100
        %v7449 = vsel %vm2128, %v7102, %v7104
        %v7450 = vsel %vm2128, %v7106, %v7108
        %v7451 = vsel %vm2128, %v7110, %v7112
        %v7452 = vsel %vm2128, %v7114, %v7116
        %v7453 = vsel %vm2128, %v7118, %v7120
        %v7454 = vsel %vm2128, %v7122, %v7124
        %v7455 = vsel %vm2128, %v7126, %v7128
        %v7456 = vsel %vm2128, %v7130, %v7132
        %v7457 = vsel %vm2128, %v7134, %v7136
        %v7458 = vsel %vm2128, %v7138, %v7140
        %v7459 = vsel %vm2128, %v7142, %v7144
        %v7460 = vsel %vm2128, %v7146, %v7148
        %v7461 = vsel %vm2128, %v7150, %v7152
        %v7462 = vsel %vm2128, %v7154, %v7156
        %v7463 = vsel %vm2128, %v7158, %v7160
        %v7464 = vsel %vm2128, %v7162, %v7164
        %v7465 = vsel %vm2128, %v7166, %v7168
        %v7466 = vsel %vm2128, %v7170, %v7172
        %v7467 = vsel %vm2128, %v7174, %v7176
        %v7468 = vsel %vm2128, %v7178, %v7180
        %v7469 = vsel %vm2128, %v7182, %v7184
        %v7470 = vsel %vm2128, %v7186, %v7188
        %v7471 = vsel %vm2128, %v7190, %v7192
        %v7472 = vsel %vm2128, %v7194, %v7196
        %v7473 = vsel %vm2128, %v7198, %v7200
        %v7474 = vsel %vm2128, %v7202, %v7204
        %v7475 = vsel %vm2128, %v7206, %v7208
        %v7476 = vsel %vm2128, %v7210, %v7212
        %v7477 = vsel %vm2128, %v7214, %v7216
        %v7478 = vsel %vm2128, %v7218, %v7220
        %v7479 = vsel %vm2128, %v7222, %v7224
        %v7480 = vsel %vm2128, %v7226, %v7228
        %v7481 = vsel %vm2128, %v7230, %v7232
        %v7482 = vsel %vm2128, %v7234, %v7236
        %v7483 = vsel %vm2128, %v7238, %v7240
        %v7484 = vsel %vm2128, %v7242, %v7244
        %v7485 = vsel %vm2128, %v7246, %v7248
        %v7486 = vsel %vm2128, %v7250, %v7252
        %v7487 = vsel %vm2128, %v7254, %v7256
        %v7488 = vsel %vm2128, %v7258, %v7260
        %v7489 = vsel %vm2128, %v7262, %v7264
        %v7490 = vsel %vm2128, %v7266, %v7268
        %v7491 = vsel %vm2128, %v7270, %v7272
        %v7492 = vsel %vm2128, %v7274, %v7276
        %v7493 = vsel %vm2128, %v7278, %v7280
        %v7494 = vsel %vm2128, %v7282, %v7284
        %v7495 = vsel %vm2128, %v7286, %v7288
        %v7496 = vsel %vm2128, %v7290, %v7292
        %v7497 = vsel %vm2128, %v7294, %v7296
        %v7498 = vsel %vm2128, %v7298, %v7300
        %v7499 = vsel %vm2128, %v7302, %v7304
        %v7500 = vsel %vm2128, %v7306, %v7308
        %v7501 = vsel %vm2128, %v7310, %v7312
        %v7502 = vsel %vm2128, %v7314, %v7316
        %v7503 = vsel %vm2128, %v7318, %v7320
        %v7504 = vsel %vm2128, %v7322, %v7324
        %v7505 = vsel %vm2128, %v7326, %v7328
        %v7506 = vsel %vm2128, %v7330, %v7332
        %v7507 = vsel %vm2128, %v7334, %v7336
        %v7508 = vsel %vm2128, %v7338, %v7340
        %v7509 = vsel %vm2128, %v7342, %v7344
        %v7510 = vsel %vm2128, %v7346, %v7348
        %v7511 = vsel %vm2128, %v7350, %v7352
        %v7512 = vsel %vm2128, %v7354, %v7356
        %v7513 = vsel %vm2128, %v7358, %v7360
        %v7514 = vsel %vm2128, %v7362, %v7364
        %v7515 = vsel %vm2128, %v7366, %v7368
        %v7516 = vsel %vm2128, %v7370, %v7372
        %v7517 = vsel %vm2128, %v7374, %v7376
        %v7518 = vsel %vm2128, %v7378, %v7380
        %v7519 = vsel %vm2128, %v7382, %v7384
        %v7520 = vsel %vm2128, %v7386, %v7388
        %v7521 = vsel %vm2128, %v7390, %v7392
        %v7522 = vsel %vm2128, %v7394, %v7396
        %v7523 = vsel %vm2128, %v7398, %v7400
        %v7524 = vsel %vm2128, %v7402, %v7404
        %v7525 = vsel %vm2128, %v7406, %v7408
        %v7526 = vsel %vm2128, %v7410, %v7412
        %v7527 = vsel %vm2128, %v7414, %v7416
        %v7528 = vsel %vm2128, %v7418, %v7420
        %v7529 = vsel %vm2128, %v7422, %v7424
        %v7530 = vsel %vm2128, %v7426, %v7428
        %v7531 = vsel %vm2128, %v7430, %v7432
        %v7532 = vsel %vm2128, %v7434, %v7436
        %v7725 = vmul.f32 %v329, %v7437
        %v7726 = vmul.f32 %v330, %v7056
        %v7727 = vmul.f32 %v331, %v7438
        %v7728 = vmul.f32 %v332, %v7060
        %v7729 = vmul.f32 %v333, %v7439
        %v7730 = vmul.f32 %v334, %v7064
        %v7731 = vmul.f32 %v335, %v7440
        %v7732 = vmul.f32 %v336, %v7068
        %v7733 = vmul.f32 %v337, %v7441
        %v7734 = vmul.f32 %v338, %v7072
        %v7735 = vmul.f32 %v339, %v7442
        %v7736 = vmul.f32 %v340, %v7076
        %v7737 = vmul.f32 %v341, %v7443
        %v7738 = vmul.f32 %v342, %v7080
        %v7739 = vmul.f32 %v343, %v7444
        %v7740 = vmul.f32 %v344, %v7084
        %v7741 = vmul.f32 %v345, %v7445
        %v7742 = vmul.f32 %v346, %v7088
        %v7743 = vmul.f32 %v347, %v7446
        %v7744 = vmul.f32 %v348, %v7092
        %v7745 = vmul.f32 %v349, %v7447
        %v7746 = vmul.f32 %v350, %v7096
        %v7747 = vmul.f32 %v351, %v7448
        %v7748 = vmul.f32 %v352, %v7100
        %v7749 = vmul.f32 %v353, %v7449
        %v7750 = vmul.f32 %v354, %v7104
        %v7751 = vmul.f32 %v355, %v7450
        %v7752 = vmul.f32 %v356, %v7108
        %v7753 = vmul.f32 %v357, %v7451
        %v7754 = vmul.f32 %v358, %v7112
        %v7755 = vmul.f32 %v359, %v7452
        %v7756 = vmul.f32 %v360, %v7116
        %v7757 = vmul.f32 %v361, %v7453
        %v7758 = vmul.f32 %v362, %v7120
        %v7759 = vmul.f32 %v363, %v7454
        %v7760 = vmul.f32 %v364, %v7124
        %v7761 = vmul.f32 %v365, %v7455
        %v7762 = vmul.f32 %v366, %v7128
        %v7763 = vmul.f32 %v367, %v7456
        %v7764 = vmul.f32 %v368, %v7132
        %v7765 = vmul.f32 %v369, %v7457
        %v7766 = vmul.f32 %v370, %v7136
        %v7767 = vmul.f32 %v371, %v7458
        %v7768 = vmul.f32 %v372, %v7140
        %v7769 = vmul.f32 %v373, %v7459
        %v7770 = vmul.f32 %v374, %v7144
        %v7771 = vmul.f32 %v375, %v7460
        %v7772 = vmul.f32 %v376, %v7148
        %v7773 = vmul.f32 %v377, %v7461
        %v7774 = vmul.f32 %v378, %v7152
        %v7775 = vmul.f32 %v379, %v7462
        %v7776 = vmul.f32 %v380, %v7156
        %v7777 = vmul.f32 %v381, %v7463
        %v7778 = vmul.f32 %v382, %v7160
        %v7779 = vmul.f32 %v383, %v7464
        %v7780 = vmul.f32 %v384, %v7164
        %v7781 = vmul.f32 %v385, %v7465
        %v7782 = vmul.f32 %v386, %v7168
        %v7783 = vmul.f32 %v387, %v7466
        %v7784 = vmul.f32 %v388, %v7172
        %v7785 = vmul.f32 %v389, %v7467
        %v7786 = vmul.f32 %v390, %v7176
        %v7787 = vmul.f32 %v391, %v7468
        %v7788 = vmul.f32 %v392, %v7180
        %v7789 = vmul.f32 %v393, %v7469
        %v7790 = vmul.f32 %v394, %v7184
        %v7791 = vmul.f32 %v395, %v7470
        %v7792 = vmul.f32 %v396, %v7188
        %v7793 = vmul.f32 %v397, %v7471
        %v7794 = vmul.f32 %v398, %v7192
        %v7795 = vmul.f32 %v399, %v7472
        %v7796 = vmul.f32 %v400, %v7196
        %v7797 = vmul.f32 %v401, %v7473
        %v7798 = vmul.f32 %v402, %v7200
        %v7799 = vmul.f32 %v403, %v7474
        %v7800 = vmul.f32 %v404, %v7204
        %v7801 = vmul.f32 %v405, %v7475
        %v7802 = vmul.f32 %v406, %v7208
        %v7803 = vmul.f32 %v407, %v7476
        %v7804 = vmul.f32 %v408, %v7212
        %v7805 = vmul.f32 %v409, %v7477
        %v7806 = vmul.f32 %v410, %v7216
        %v7807 = vmul.f32 %v411, %v7478
        %v7808 = vmul.f32 %v412, %v7220
        %v7809 = vmul.f32 %v413, %v7479
        %v7810 = vmul.f32 %v414, %v7224
        %v7811 = vmul.f32 %v415, %v7480
        %v7812 = vmul.f32 %v416, %v7228
        %v7813 = vmul.f32 %v417, %v7481
        %v7814 = vmul.f32 %v418, %v7232
        %v7815 = vmul.f32 %v419, %v7482
        %v7816 = vmul.f32 %v420, %v7236
        %v7817 = vmul.f32 %v421, %v7483
        %v7818 = vmul.f32 %v422, %v7240
        %v7819 = vmul.f32 %v423, %v7484
        %v7820 = vmul.f32 %v424, %v7244
        %v7821 = vmul.f32 %v425, %v7485
        %v7822 = vmul.f32 %v426, %v7248
        %v7823 = vmul.f32 %v427, %v7486
        %v7824 = vmul.f32 %v428, %v7252
        %v7825 = vmul.f32 %v429, %v7487
        %v7826 = vmul.f32 %v430, %v7256
        %v7827 = vmul.f32 %v431, %v7488
        %v7828 = vmul.f32 %v432, %v7260
        %v7829 = vmul.f32 %v433, %v7489
        %v7830 = vmul.f32 %v434, %v7264
        %v7831 = vmul.f32 %v435, %v7490
        %v7832 = vmul.f32 %v436, %v7268
        %v7833 = vmul.f32 %v437, %v7491
        %v7834 = vmul.f32 %v438, %v7272
        %v7835 = vmul.f32 %v439, %v7492
        %v7836 = vmul.f32 %v440, %v7276
        %v7837 = vmul.f32 %v441, %v7493
        %v7838 = vmul.f32 %v442, %v7280
        %v7839 = vmul.f32 %v443, %v7494
        %v7840 = vmul.f32 %v444, %v7284
        %v7841 = vmul.f32 %v445, %v7495
        %v7842 = vmul.f32 %v446, %v7288
        %v7843 = vmul.f32 %v447, %v7496
        %v7844 = vmul.f32 %v448, %v7292
        %v7845 = vmul.f32 %v449, %v7497
        %v7846 = vmul.f32 %v450, %v7296
        %v7847 = vmul.f32 %v451, %v7498
        %v7848 = vmul.f32 %v452, %v7300
        %v7849 = vmul.f32 %v453, %v7499
        %v7850 = vmul.f32 %v454, %v7304
        %v7851 = vmul.f32 %v455, %v7500
        %v7852 = vmul.f32 %v456, %v7308
        %v7853 = vmul.f32 %v457, %v7501
        %v7854 = vmul.f32 %v458, %v7312
        %v7855 = vmul.f32 %v459, %v7502
        %v7856 = vmul.f32 %v460, %v7316
        %v7857 = vmul.f32 %v461, %v7503
        %v7858 = vmul.f32 %v462, %v7320
        %v7859 = vmul.f32 %v463, %v7504
        %v7860 = vmul.f32 %v464, %v7324
        %v7861 = vmul.f32 %v465, %v7505
        %v7862 = vmul.f32 %v466, %v7328
        %v7863 = vmul.f32 %v467, %v7506
        %v7864 = vmul.f32 %v468, %v7332
        %v7865 = vmul.f32 %v469, %v7507
        %v7866 = vmul.f32 %v470, %v7336
        %v7867 = vmul.f32 %v471, %v7508
        %v7868 = vmul.f32 %v472, %v7340
        %v7869 = vmul.f32 %v473, %v7509
        %v7870 = vmul.f32 %v474, %v7344
        %v7871 = vmul.f32 %v475, %v7510
        %v7872 = vmul.f32 %v476, %v7348
        %v7873 = vmul.f32 %v477, %v7511
        %v7874 = vmul.f32 %v478, %v7352
        %v7875 = vmul.f32 %v479, %v7512
        %v7876 = vmul.f32 %v480, %v7356
        %v7877 = vmul.f32 %v481, %v7513
        %v7878 = vmul.f32 %v482, %v7360
        %v7879 = vmul.f32 %v483, %v7514
        %v7880 = vmul.f32 %v484, %v7364
        %v7881 = vmul.f32 %v485, %v7515
        %v7882 = vmul.f32 %v486, %v7368
        %v7883 = vmul.f32 %v487, %v7516
        %v7884 = vmul.f32 %v488, %v7372
        %v7885 = vmul.f32 %v489, %v7517
        %v7886 = vmul.f32 %v490, %v7376
        %v7887 = vmul.f32 %v491, %v7518
        %v7888 = vmul.f32 %v492, %v7380
        %v7889 = vmul.f32 %v493, %v7519
        %v7890 = vmul.f32 %v494, %v7384
        %v7891 = vmul.f32 %v495, %v7520
        %v7892 = vmul.f32 %v496, %v7388
        %v7893 = vmul.f32 %v497, %v7521
        %v7894 = vmul.f32 %v498, %v7392
        %v7895 = vmul.f32 %v499, %v7522
        %v7896 = vmul.f32 %v500, %v7396
        %v7897 = vmul.f32 %v501, %v7523
        %v7898 = vmul.f32 %v502, %v7400
        %v7899 = vmul.f32 %v503, %v7524
        %v7900 = vmul.f32 %v504, %v7404
        %v7901 = vmul.f32 %v505, %v7525
        %v7902 = vmul.f32 %v506, %v7408
        %v7903 = vmul.f32 %v507, %v7526
        %v7904 = vmul.f32 %v508, %v7412
        %v7905 = vmul.f32 %v509, %v7527
        %v7906 = vmul.f32 %v510, %v7416
        %v7907 = vmul.f32 %v511, %v7528
        %v7908 = vmul.f32 %v512, %v7420
        %v7909 = vmul.f32 %v513, %v7529
        %v7910 = vmul.f32 %v514, %v7424
        %v7911 = vmul.f32 %v515, %v7530
        %v7912 = vmul.f32 %v516, %v7428
        %v7913 = vmul.f32 %v517, %v7531
        %v7914 = vmul.f32 %v518, %v7432
        %v7915 = vmul.f32 %v519, %v7532
        %v7916 = vmul.f32 %v520, %v7436
        %v7917 = vsel %vm1671, %v7725, 0.0
        %v7918 = vsel %vm1671, %v7731, 0.0
        %v7919 = vadd.f32 %v7917, %v7918
        %v7920 = vsel %vm1671, %v7737, 0.0
        %v7921 = vadd.f32 %v7919, %v7920
        %v7922 = vsel %vm1671, %v7743, 0.0
        %v7923 = vadd.f32 %v7921, %v7922
        %v7924 = vsel %vm1671, %v7749, 0.0
        %v7925 = vadd.f32 %v7923, %v7924
        %v7926 = vsel %vm1671, %v7755, 0.0
        %v7927 = vadd.f32 %v7925, %v7926
        %v7928 = vsel %vm1671, %v7761, 0.0
        %v7929 = vadd.f32 %v7927, %v7928
        %v7930 = vsel %vm1671, %v7767, 0.0
        %v7931 = vadd.f32 %v7929, %v7930
        %v7932 = vsel %vm1671, %v7773, 0.0
        %v7933 = vadd.f32 %v7931, %v7932
        %v7934 = vsel %vm1671, %v7779, 0.0
        %v7935 = vadd.f32 %v7933, %v7934
        %v7936 = vsel %vm1671, %v7785, 0.0
        %v7937 = vadd.f32 %v7935, %v7936
        %v7938 = vsel %vm1671, %v7791, 0.0
        %v7939 = vadd.f32 %v7937, %v7938
        %v7940 = vsel %vm1671, %v7797, 0.0
        %v7941 = vadd.f32 %v7939, %v7940
        %v7942 = vsel %vm1671, %v7803, 0.0
        %v7943 = vadd.f32 %v7941, %v7942
        %v7944 = vsel %vm1671, %v7809, 0.0
        %v7945 = vadd.f32 %v7943, %v7944
        %v7946 = vsel %vm1671, %v7815, 0.0
        %v7947 = vadd.f32 %v7945, %v7946
        %v7948 = vsel %vm1671, %v7821, 0.0
        %v7949 = vadd.f32 %v7947, %v7948
        %v7950 = vsel %vm1671, %v7827, 0.0
        %v7951 = vadd.f32 %v7949, %v7950
        %v7952 = vsel %vm1671, %v7833, 0.0
        %v7953 = vadd.f32 %v7951, %v7952
        %v7954 = vsel %vm1671, %v7839, 0.0
        %v7955 = vadd.f32 %v7953, %v7954
        %v7956 = vsel %vm1671, %v7845, 0.0
        %v7957 = vadd.f32 %v7955, %v7956
        %v7958 = vsel %vm1671, %v7851, 0.0
        %v7959 = vadd.f32 %v7957, %v7958
        %v7960 = vsel %vm1671, %v7857, 0.0
        %v7961 = vadd.f32 %v7959, %v7960
        %v7962 = vsel %vm1671, %v7863, 0.0
        %v7963 = vadd.f32 %v7961, %v7962
        %v7964 = vsel %vm1671, %v7869, 0.0
        %v7965 = vadd.f32 %v7963, %v7964
        %v7966 = vsel %vm1671, %v7875, 0.0
        %v7967 = vadd.f32 %v7965, %v7966
        %v7968 = vsel %vm1671, %v7881, 0.0
        %v7969 = vadd.f32 %v7967, %v7968
        %v7970 = vsel %vm1671, %v7887, 0.0
        %v7971 = vadd.f32 %v7969, %v7970
        %v7972 = vsel %vm1671, %v7893, 0.0
        %v7973 = vadd.f32 %v7971, %v7972
        %v7974 = vsel %vm1671, %v7899, 0.0
        %v7975 = vadd.f32 %v7973, %v7974
        %v7976 = vsel %vm1671, %v7905, 0.0
        %v7977 = vadd.f32 %v7975, %v7976
        %v7978 = vsel %vm1671, %v7911, 0.0
        %v7979 = vadd.f32 %v7977, %v7978
        %v7980 = vsel %vm1735, %v7726, 0.0
        %v7981 = vsel %vm1735, %v7732, 0.0
        %v7982 = vadd.f32 %v7980, %v7981
        %v7983 = vsel %vm1735, %v7738, 0.0
        %v7984 = vadd.f32 %v7982, %v7983
        %v7985 = vsel %vm1735, %v7744, 0.0
        %v7986 = vadd.f32 %v7984, %v7985
        %v7987 = vsel %vm1735, %v7750, 0.0
        %v7988 = vadd.f32 %v7986, %v7987
        %v7989 = vsel %vm1735, %v7756, 0.0
        %v7990 = vadd.f32 %v7988, %v7989
        %v7991 = vsel %vm1735, %v7762, 0.0
        %v7992 = vadd.f32 %v7990, %v7991
        %v7993 = vsel %vm1735, %v7768, 0.0
        %v7994 = vadd.f32 %v7992, %v7993
        %v7995 = vsel %vm1735, %v7774, 0.0
        %v7996 = vadd.f32 %v7994, %v7995
        %v7997 = vsel %vm1735, %v7780, 0.0
        %v7998 = vadd.f32 %v7996, %v7997
        %v7999 = vsel %vm1735, %v7786, 0.0
        %v8000 = vadd.f32 %v7998, %v7999
        %v8001 = vsel %vm1735, %v7792, 0.0
        %v8002 = vadd.f32 %v8000, %v8001
        %v8003 = vsel %vm1735, %v7798, 0.0
        %v8004 = vadd.f32 %v8002, %v8003
        %v8005 = vsel %vm1735, %v7804, 0.0
        %v8006 = vadd.f32 %v8004, %v8005
        %v8007 = vsel %vm1735, %v7810, 0.0
        %v8008 = vadd.f32 %v8006, %v8007
        %v8009 = vsel %vm1735, %v7816, 0.0
        %v8010 = vadd.f32 %v8008, %v8009
        %v8011 = vsel %vm1735, %v7822, 0.0
        %v8012 = vadd.f32 %v8010, %v8011
        %v8013 = vsel %vm1735, %v7828, 0.0
        %v8014 = vadd.f32 %v8012, %v8013
        %v8015 = vsel %vm1735, %v7834, 0.0
        %v8016 = vadd.f32 %v8014, %v8015
        %v8017 = vsel %vm1735, %v7840, 0.0
        %v8018 = vadd.f32 %v8016, %v8017
        %v8019 = vsel %vm1735, %v7846, 0.0
        %v8020 = vadd.f32 %v8018, %v8019
        %v8021 = vsel %vm1735, %v7852, 0.0
        %v8022 = vadd.f32 %v8020, %v8021
        %v8023 = vsel %vm1735, %v7858, 0.0
        %v8024 = vadd.f32 %v8022, %v8023
        %v8025 = vsel %vm1735, %v7864, 0.0
        %v8026 = vadd.f32 %v8024, %v8025
        %v8027 = vsel %vm1735, %v7870, 0.0
        %v8028 = vadd.f32 %v8026, %v8027
        %v8029 = vsel %vm1735, %v7876, 0.0
        %v8030 = vadd.f32 %v8028, %v8029
        %v8031 = vsel %vm1735, %v7882, 0.0
        %v8032 = vadd.f32 %v8030, %v8031
        %v8033 = vsel %vm1735, %v7888, 0.0
        %v8034 = vadd.f32 %v8032, %v8033
        %v8035 = vsel %vm1735, %v7894, 0.0
        %v8036 = vadd.f32 %v8034, %v8035
        %v8037 = vsel %vm1735, %v7900, 0.0
        %v8038 = vadd.f32 %v8036, %v8037
        %v8039 = vsel %vm1735, %v7906, 0.0
        %v8040 = vadd.f32 %v8038, %v8039
        %v8041 = vsel %vm1735, %v7912, 0.0
        %v8042 = vadd.f32 %v8040, %v8041
        %v8043 = vsel %vm1799, %v7727, 0.0
        %v8044 = vsel %vm1799, %v7733, 0.0
        %v8045 = vadd.f32 %v8043, %v8044
        %v8046 = vsel %vm1799, %v7739, 0.0
        %v8047 = vadd.f32 %v8045, %v8046
        %v8048 = vsel %vm1799, %v7745, 0.0
        %v8049 = vadd.f32 %v8047, %v8048
        %v8050 = vsel %vm1799, %v7751, 0.0
        %v8051 = vadd.f32 %v8049, %v8050
        %v8052 = vsel %vm1799, %v7757, 0.0
        %v8053 = vadd.f32 %v8051, %v8052
        %v8054 = vsel %vm1799, %v7763, 0.0
        %v8055 = vadd.f32 %v8053, %v8054
        %v8056 = vsel %vm1799, %v7769, 0.0
        %v8057 = vadd.f32 %v8055, %v8056
        %v8058 = vsel %vm1799, %v7775, 0.0
        %v8059 = vadd.f32 %v8057, %v8058
        %v8060 = vsel %vm1799, %v7781, 0.0
        %v8061 = vadd.f32 %v8059, %v8060
        %v8062 = vsel %vm1799, %v7787, 0.0
        %v8063 = vadd.f32 %v8061, %v8062
        %v8064 = vsel %vm1799, %v7793, 0.0
        %v8065 = vadd.f32 %v8063, %v8064
        %v8066 = vsel %vm1799, %v7799, 0.0
        %v8067 = vadd.f32 %v8065, %v8066
        %v8068 = vsel %vm1799, %v7805, 0.0
        %v8069 = vadd.f32 %v8067, %v8068
        %v8070 = vsel %vm1799, %v7811, 0.0
        %v8071 = vadd.f32 %v8069, %v8070
        %v8072 = vsel %vm1799, %v7817, 0.0
        %v8073 = vadd.f32 %v8071, %v8072
        %v8074 = vsel %vm1799, %v7823, 0.0
        %v8075 = vadd.f32 %v8073, %v8074
        %v8076 = vsel %vm1799, %v7829, 0.0
        %v8077 = vadd.f32 %v8075, %v8076
        %v8078 = vsel %vm1799, %v7835, 0.0
        %v8079 = vadd.f32 %v8077, %v8078
        %v8080 = vsel %vm1799, %v7841, 0.0
        %v8081 = vadd.f32 %v8079, %v8080
        %v8082 = vsel %vm1799, %v7847, 0.0
        %v8083 = vadd.f32 %v8081, %v8082
        %v8084 = vsel %vm1799, %v7853, 0.0
        %v8085 = vadd.f32 %v8083, %v8084
        %v8086 = vsel %vm1799, %v7859, 0.0
        %v8087 = vadd.f32 %v8085, %v8086
        %v8088 = vsel %vm1799, %v7865, 0.0
        %v8089 = vadd.f32 %v8087, %v8088
        %v8090 = vsel %vm1799, %v7871, 0.0
        %v8091 = vadd.f32 %v8089, %v8090
        %v8092 = vsel %vm1799, %v7877, 0.0
        %v8093 = vadd.f32 %v8091, %v8092
        %v8094 = vsel %vm1799, %v7883, 0.0
        %v8095 = vadd.f32 %v8093, %v8094
        %v8096 = vsel %vm1799, %v7889, 0.0
        %v8097 = vadd.f32 %v8095, %v8096
        %v8098 = vsel %vm1799, %v7895, 0.0
        %v8099 = vadd.f32 %v8097, %v8098
        %v8100 = vsel %vm1799, %v7901, 0.0
        %v8101 = vadd.f32 %v8099, %v8100
        %v8102 = vsel %vm1799, %v7907, 0.0
        %v8103 = vadd.f32 %v8101, %v8102
        %v8104 = vsel %vm1799, %v7913, 0.0
        %v8105 = vadd.f32 %v8103, %v8104
        %v8106 = vsel %vm1863, %v7728, 0.0
        %v8107 = vsel %vm1863, %v7734, 0.0
        %v8108 = vadd.f32 %v8106, %v8107
        %v8109 = vsel %vm1863, %v7740, 0.0
        %v8110 = vadd.f32 %v8108, %v8109
        %v8111 = vsel %vm1863, %v7746, 0.0
        %v8112 = vadd.f32 %v8110, %v8111
        %v8113 = vsel %vm1863, %v7752, 0.0
        %v8114 = vadd.f32 %v8112, %v8113
        %v8115 = vsel %vm1863, %v7758, 0.0
        %v8116 = vadd.f32 %v8114, %v8115
        %v8117 = vsel %vm1863, %v7764, 0.0
        %v8118 = vadd.f32 %v8116, %v8117
        %v8119 = vsel %vm1863, %v7770, 0.0
        %v8120 = vadd.f32 %v8118, %v8119
        %v8121 = vsel %vm1863, %v7776, 0.0
        %v8122 = vadd.f32 %v8120, %v8121
        %v8123 = vsel %vm1863, %v7782, 0.0
        %v8124 = vadd.f32 %v8122, %v8123
        %v8125 = vsel %vm1863, %v7788, 0.0
        %v8126 = vadd.f32 %v8124, %v8125
        %v8127 = vsel %vm1863, %v7794, 0.0
        %v8128 = vadd.f32 %v8126, %v8127
        %v8129 = vsel %vm1863, %v7800, 0.0
        %v8130 = vadd.f32 %v8128, %v8129
        %v8131 = vsel %vm1863, %v7806, 0.0
        %v8132 = vadd.f32 %v8130, %v8131
        %v8133 = vsel %vm1863, %v7812, 0.0
        %v8134 = vadd.f32 %v8132, %v8133
        %v8135 = vsel %vm1863, %v7818, 0.0
        %v8136 = vadd.f32 %v8134, %v8135
        %v8137 = vsel %vm1863, %v7824, 0.0
        %v8138 = vadd.f32 %v8136, %v8137
        %v8139 = vsel %vm1863, %v7830, 0.0
        %v8140 = vadd.f32 %v8138, %v8139
        %v8141 = vsel %vm1863, %v7836, 0.0
        %v8142 = vadd.f32 %v8140, %v8141
        %v8143 = vsel %vm1863, %v7842, 0.0
        %v8144 = vadd.f32 %v8142, %v8143
        %v8145 = vsel %vm1863, %v7848, 0.0
        %v8146 = vadd.f32 %v8144, %v8145
        %v8147 = vsel %vm1863, %v7854, 0.0
        %v8148 = vadd.f32 %v8146, %v8147
        %v8149 = vsel %vm1863, %v7860, 0.0
        %v8150 = vadd.f32 %v8148, %v8149
        %v8151 = vsel %vm1863, %v7866, 0.0
        %v8152 = vadd.f32 %v8150, %v8151
        %v8153 = vsel %vm1863, %v7872, 0.0
        %v8154 = vadd.f32 %v8152, %v8153
        %v8155 = vsel %vm1863, %v7878, 0.0
        %v8156 = vadd.f32 %v8154, %v8155
        %v8157 = vsel %vm1863, %v7884, 0.0
        %v8158 = vadd.f32 %v8156, %v8157
        %v8159 = vsel %vm1863, %v7890, 0.0
        %v8160 = vadd.f32 %v8158, %v8159
        %v8161 = vsel %vm1863, %v7896, 0.0
        %v8162 = vadd.f32 %v8160, %v8161
        %v8163 = vsel %vm1863, %v7902, 0.0
        %v8164 = vadd.f32 %v8162, %v8163
        %v8165 = vsel %vm1863, %v7908, 0.0
        %v8166 = vadd.f32 %v8164, %v8165
        %v8167 = vsel %vm1863, %v7914, 0.0
        %v8168 = vadd.f32 %v8166, %v8167
        %v8169 = vsel %vm1927, %v7729, 0.0
        %v8170 = vsel %vm1927, %v7735, 0.0
        %v8171 = vadd.f32 %v8169, %v8170
        %v8172 = vsel %vm1927, %v7741, 0.0
        %v8173 = vadd.f32 %v8171, %v8172
        %v8174 = vsel %vm1927, %v7747, 0.0
        %v8175 = vadd.f32 %v8173, %v8174
        %v8176 = vsel %vm1927, %v7753, 0.0
        %v8177 = vadd.f32 %v8175, %v8176
        %v8178 = vsel %vm1927, %v7759, 0.0
        %v8179 = vadd.f32 %v8177, %v8178
        %v8180 = vsel %vm1927, %v7765, 0.0
        %v8181 = vadd.f32 %v8179, %v8180
        %v8182 = vsel %vm1927, %v7771, 0.0
        %v8183 = vadd.f32 %v8181, %v8182
        %v8184 = vsel %vm1927, %v7777, 0.0
        %v8185 = vadd.f32 %v8183, %v8184
        %v8186 = vsel %vm1927, %v7783, 0.0
        %v8187 = vadd.f32 %v8185, %v8186
        %v8188 = vsel %vm1927, %v7789, 0.0
        %v8189 = vadd.f32 %v8187, %v8188
        %v8190 = vsel %vm1927, %v7795, 0.0
        %v8191 = vadd.f32 %v8189, %v8190
        %v8192 = vsel %vm1927, %v7801, 0.0
        %v8193 = vadd.f32 %v8191, %v8192
        %v8194 = vsel %vm1927, %v7807, 0.0
        %v8195 = vadd.f32 %v8193, %v8194
        %v8196 = vsel %vm1927, %v7813, 0.0
        %v8197 = vadd.f32 %v8195, %v8196
        %v8198 = vsel %vm1927, %v7819, 0.0
        %v8199 = vadd.f32 %v8197, %v8198
        %v8200 = vsel %vm1927, %v7825, 0.0
        %v8201 = vadd.f32 %v8199, %v8200
        %v8202 = vsel %vm1927, %v7831, 0.0
        %v8203 = vadd.f32 %v8201, %v8202
        %v8204 = vsel %vm1927, %v7837, 0.0
        %v8205 = vadd.f32 %v8203, %v8204
        %v8206 = vsel %vm1927, %v7843, 0.0
        %v8207 = vadd.f32 %v8205, %v8206
        %v8208 = vsel %vm1927, %v7849, 0.0
        %v8209 = vadd.f32 %v8207, %v8208
        %v8210 = vsel %vm1927, %v7855, 0.0
        %v8211 = vadd.f32 %v8209, %v8210
        %v8212 = vsel %vm1927, %v7861, 0.0
        %v8213 = vadd.f32 %v8211, %v8212
        %v8214 = vsel %vm1927, %v7867, 0.0
        %v8215 = vadd.f32 %v8213, %v8214
        %v8216 = vsel %vm1927, %v7873, 0.0
        %v8217 = vadd.f32 %v8215, %v8216
        %v8218 = vsel %vm1927, %v7879, 0.0
        %v8219 = vadd.f32 %v8217, %v8218
        %v8220 = vsel %vm1927, %v7885, 0.0
        %v8221 = vadd.f32 %v8219, %v8220
        %v8222 = vsel %vm1927, %v7891, 0.0
        %v8223 = vadd.f32 %v8221, %v8222
        %v8224 = vsel %vm1927, %v7897, 0.0
        %v8225 = vadd.f32 %v8223, %v8224
        %v8226 = vsel %vm1927, %v7903, 0.0
        %v8227 = vadd.f32 %v8225, %v8226
        %v8228 = vsel %vm1927, %v7909, 0.0
        %v8229 = vadd.f32 %v8227, %v8228
        %v8230 = vsel %vm1927, %v7915, 0.0
        %v8231 = vadd.f32 %v8229, %v8230
        %v8232 = vsel %vm1991, %v7730, 0.0
        %v8233 = vsel %vm1991, %v7736, 0.0
        %v8234 = vadd.f32 %v8232, %v8233
        %v8235 = vsel %vm1991, %v7742, 0.0
        %v8236 = vadd.f32 %v8234, %v8235
        %v8237 = vsel %vm1991, %v7748, 0.0
        %v8238 = vadd.f32 %v8236, %v8237
        %v8239 = vsel %vm1991, %v7754, 0.0
        %v8240 = vadd.f32 %v8238, %v8239
        %v8241 = vsel %vm1991, %v7760, 0.0
        %v8242 = vadd.f32 %v8240, %v8241
        %v8243 = vsel %vm1991, %v7766, 0.0
        %v8244 = vadd.f32 %v8242, %v8243
        %v8245 = vsel %vm1991, %v7772, 0.0
        %v8246 = vadd.f32 %v8244, %v8245
        %v8247 = vsel %vm1991, %v7778, 0.0
        %v8248 = vadd.f32 %v8246, %v8247
        %v8249 = vsel %vm1991, %v7784, 0.0
        %v8250 = vadd.f32 %v8248, %v8249
        %v8251 = vsel %vm1991, %v7790, 0.0
        %v8252 = vadd.f32 %v8250, %v8251
        %v8253 = vsel %vm1991, %v7796, 0.0
        %v8254 = vadd.f32 %v8252, %v8253
        %v8255 = vsel %vm1991, %v7802, 0.0
        %v8256 = vadd.f32 %v8254, %v8255
        %v8257 = vsel %vm1991, %v7808, 0.0
        %v8258 = vadd.f32 %v8256, %v8257
        %v8259 = vsel %vm1991, %v7814, 0.0
        %v8260 = vadd.f32 %v8258, %v8259
        %v8261 = vsel %vm1991, %v7820, 0.0
        %v8262 = vadd.f32 %v8260, %v8261
        %v8263 = vsel %vm1991, %v7826, 0.0
        %v8264 = vadd.f32 %v8262, %v8263
        %v8265 = vsel %vm1991, %v7832, 0.0
        %v8266 = vadd.f32 %v8264, %v8265
        %v8267 = vsel %vm1991, %v7838, 0.0
        %v8268 = vadd.f32 %v8266, %v8267
        %v8269 = vsel %vm1991, %v7844, 0.0
        %v8270 = vadd.f32 %v8268, %v8269
        %v8271 = vsel %vm1991, %v7850, 0.0
        %v8272 = vadd.f32 %v8270, %v8271
        %v8273 = vsel %vm1991, %v7856, 0.0
        %v8274 = vadd.f32 %v8272, %v8273
        %v8275 = vsel %vm1991, %v7862, 0.0
        %v8276 = vadd.f32 %v8274, %v8275
        %v8277 = vsel %vm1991, %v7868, 0.0
        %v8278 = vadd.f32 %v8276, %v8277
        %v8279 = vsel %vm1991, %v7874, 0.0
        %v8280 = vadd.f32 %v8278, %v8279
        %v8281 = vsel %vm1991, %v7880, 0.0
        %v8282 = vadd.f32 %v8280, %v8281
        %v8283 = vsel %vm1991, %v7886, 0.0
        %v8284 = vadd.f32 %v8282, %v8283
        %v8285 = vsel %vm1991, %v7892, 0.0
        %v8286 = vadd.f32 %v8284, %v8285
        %v8287 = vsel %vm1991, %v7898, 0.0
        %v8288 = vadd.f32 %v8286, %v8287
        %v8289 = vsel %vm1991, %v7904, 0.0
        %v8290 = vadd.f32 %v8288, %v8289
        %v8291 = vsel %vm1991, %v7910, 0.0
        %v8292 = vadd.f32 %v8290, %v8291
        %v8293 = vsel %vm1991, %v7916, 0.0
        %v8294 = vadd.f32 %v8292, %v8293
        %8295 = vrot.lane.b32.xlu0 %v2063, 127
        %v8296 = vpop.permute.xlu0 %8295
        %8297 = vrot.lane.b32.xlu0 %v5256, 127
        %v8298 = vpop.permute.xlu0 %8297
        %8299 = vrot.lane.b32.xlu0 %v2065, 127
        %v8300 = vpop.permute.xlu0 %8299
        %8301 = vrot.lane.b32.xlu0 %v5258, 127
        %v8302 = vpop.permute.xlu0 %8301
        %8303 = vrot.lane.b32.xlu0 %v2064, 127
        %v8304 = vpop.permute.xlu0 %8303
        %8305 = vrot.lane.b32.xlu0 %v5257, 127
        %v8306 = vpop.permute.xlu0 %8305
        %v8307 = vsel %vm2128, %v8296, %v8298
        %v8308 = vsel %vm2128, %v8300, %v8302
        %v8309 = vsel %vm2128, %v8304, %v8306
        %v8316 = vmul.f32 %v2055, %v8307
        %v8317 = vmul.f32 %v2056, %v8298
        %v8318 = vmul.f32 %v2057, %v8308
        %v8319 = vmul.f32 %v2058, %v8302
        %v8320 = vmul.f32 %v2059, %v8309
        %v8321 = vmul.f32 %v2060, %v8306
        %v8322 = vrsqrt.pop %v8316
        %v8323 = vrsqrt.pop %v8317
        %v8324 = vrsqrt.pop %v8318
        %v8325 = vrsqrt.pop %v8319
        %v8326 = vrsqrt.pop %v8320
        %v8327 = vrsqrt.pop %v8321
        %v8328 = vmul.f32 %v7979, %v8322
        %v8329 = vmul.f32 %v8042, %v8323
        %v8330 = vmul.f32 %v8105, %v8324
        %v8331 = vmul.f32 %v8168, %v8325
        %v8332 = vmul.f32 %v8231, %v8326
        %v8333 = vmul.f32 %v8294, %v8327
        %8334 = vrot.lane.b32.xlu0 %v215, 2
        %v8335 = vpop.permute.xlu0 %8334
        %8336 = vrot.lane.b32.xlu0 %v216, 2
        %v8337 = vpop.permute.xlu0 %8336
        %vm8338 = vcmp.eq.s32.totalorder %v209, %v8335
        %vm8339 = vcmp.eq.s32.totalorder %v210, %v8335
        %vm8340 = vcmp.eq.s32.totalorder %v211, %v8337
        %vm8341 = vcmp.eq.s32.totalorder %v212, %v8337
        %8342 = vrot.lane.b32.xlu0 %v219, 2
        %v8343 = vpop.permute.xlu0 %8342
        %8344 = vrot.lane.b32.xlu0 %v220, 2
        %v8345 = vpop.permute.xlu0 %8344
        %vm8346 = vcmp.ne.s32.totalorder %v8343, 0
        %vm8347 = vcmp.ne.s32.totalorder %v8345, 0
        %vm8348 = vmand %vm8338, %vm8346
        %vm8349 = vmand %vm8339, %vm8346
        %vm8350 = vmand %vm8340, %vm8347
        %vm8351 = vmand %vm8341, %vm8347
        %v8352 = vadd.f32 %v6929, %v8328
        %v8353 = vadd.f32 %v6930, %v8329
        %v8354 = vadd.f32 %v6931, %v8330
        %v8355 = vadd.f32 %v6932, %v8331
        %v8356 = vadd.f32 %v6933, %v8332
        %v8357 = vadd.f32 %v6934, %v8333
        %v8364 = vrot.slane %v8328, 1
        %v8365 = vrot.slane %v8330, 1
        %v8366 = vsel %vm2109, %v8364, %v8365
        %v8367 = vrot.slane %v8329, 1
        %v8368 = vrot.slane %v8331, 1
        %v8369 = vsel %vm2109, %v8367, %v8368
        %v8370 = vrot.slane %v8332, 1
        %v8371 = vsel %vm2109, %v8365, %v8370
        %v8372 = vrot.slane %v8333, 1
        %v8373 = vsel %vm2109, %v8368, %v8372
        %8374 = vrot.lane.b32.xlu0 %v8366, 1
        %v8375 = vpop.permute.xlu0 %8374
        %8376 = vrot.lane.b32.xlu0 %v8369, 1
        %v8377 = vpop.permute.xlu0 %8376
        %8378 = vrot.lane.b32.xlu0 %v8371, 1
        %v8379 = vpop.permute.xlu0 %8378
        %8380 = vrot.lane.b32.xlu0 %v8373, 1
        %v8381 = vpop.permute.xlu0 %8380
        %v8382 = vsel %vm1863, %v8375, %v8377
        %v8383 = vsel %vm1863, %v8379, %v8381
        %v8388 = vsel %vm8348, %v8375, 0.0
        %v8389 = vsel %vm8349, %v8382, 0.0
        %v8390 = vsel %vm8350, %v8379, 0.0
        %v8391 = vsel %vm8351, %v8383, 0.0
        %8396 = vrot.lane.b32.xlu0 %v8388, 126
        %v8397 = vpop.permute.xlu0 %8396
        %8398 = vrot.lane.b32.xlu0 %v8389, 126
        %v8399 = vpop.permute.xlu0 %8398
        %8400 = vrot.lane.b32.xlu0 %v8390, 126
        %v8401 = vpop.permute.xlu0 %8400
        %8402 = vrot.lane.b32.xlu0 %v8391, 126
        %v8403 = vpop.permute.xlu0 %8402
        %vm8404 = vcmask 1031168
        %v8405 = vsel %vm8404, %v8397, %v8399
        %v8406 = vsel %vm8404, %v8401, %v8403
        %v8409 = vadd.f32 %v8405, %v8406
        %8410 = vadd.xlane.f32.xlu0 %v8409
        %v8411 = vpop.xlane.xlu0 %8410
        %v8412 = vrot.slane %v8411, 4
        %v8413 = vadd.f32 %v8411, %v8412
        %v8414 = vrot.slane %v8413, 2
        %v8415 = vadd.f32 %v8413, %v8414
        %v8416 = vrot.slane %v8415, 1
        %v8417 = vadd.f32 %v8415, %v8416
        %s8418 = vtos %v8417
        %s8419 = sadd.f32 %s7001, %s8418
        %v8420 = vsel %vm8348, 1, 0
        %v8421 = vsel %vm8349, 1, 0
        %v8422 = vsel %vm8350, 1, 0
        %v8423 = vsel %vm8351, 1, 0
        %v8424 = vcvt.s32.f32 %v8420
        %v8425 = vcvt.s32.f32 %v8421
        %v8426 = vcvt.s32.f32 %v8422
        %v8427 = vcvt.s32.f32 %v8423
        %8432 = vrot.lane.b32.xlu0 %v8424, 126
        %v8433 = vpop.permute.xlu0 %8432
        %8434 = vrot.lane.b32.xlu0 %v8425, 126
        %v8435 = vpop.permute.xlu0 %8434
        %8436 = vrot.lane.b32.xlu0 %v8426, 126
        %v8437 = vpop.permute.xlu0 %8436
        %8438 = vrot.lane.b32.xlu0 %v8427, 126
        %v8439 = vpop.permute.xlu0 %8438
        %v8440 = vsel %vm8404, %v8433, %v8435
        %v8441 = vsel %vm8404, %v8437, %v8439
        %v8444 = vadd.f32 %v8440, %v8441
        %8445 = vadd.xlane.f32.xlu0 %v8444
        %v8446 = vpop.xlane.xlu0 %8445
        %v8447 = vrot.slane %v8446, 4
        %v8448 = vadd.f32 %v8446, %v8447
        %v8449 = vrot.slane %v8448, 2
        %v8450 = vadd.f32 %v8448, %v8449
        %v8451 = vrot.slane %v8450, 1
        %v8452 = vadd.f32 %v8450, %v8451
        %s8453 = vtos %v8452
        %s8454 = sadd.f32 %s7052, %s8453
        %8455 = vrot.lane.b32.xlu0 %v329, 127
        %v8456 = vpop.permute.xlu0 %8455
        %8457 = vrot.lane.b32.xlu0 %v330, 127
        %v8458 = vpop.permute.xlu0 %8457
        %8459 = vrot.lane.b32.xlu0 %v331, 127
        %v8460 = vpop.permute.xlu0 %8459
        %8461 = vrot.lane.b32.xlu0 %v332, 127
        %v8462 = vpop.permute.xlu0 %8461
        %8463 = vrot.lane.b32.xlu0 %v333, 127
        %v8464 = vpop.permute.xlu0 %8463
        %8465 = vrot.lane.b32.xlu0 %v334, 127
        %v8466 = vpop.permute.xlu0 %8465
        %8467 = vrot.lane.b32.xlu0 %v335, 127
        %v8468 = vpop.permute.xlu0 %8467
        %8469 = vrot.lane.b32.xlu0 %v336, 127
        %v8470 = vpop.permute.xlu0 %8469
        %8471 = vrot.lane.b32.xlu0 %v337, 127
        %v8472 = vpop.permute.xlu0 %8471
        %8473 = vrot.lane.b32.xlu0 %v338, 127
        %v8474 = vpop.permute.xlu0 %8473
        %8475 = vrot.lane.b32.xlu0 %v339, 127
        %v8476 = vpop.permute.xlu0 %8475
        %8477 = vrot.lane.b32.xlu0 %v340, 127
        %v8478 = vpop.permute.xlu0 %8477
        %8479 = vrot.lane.b32.xlu0 %v341, 127
        %v8480 = vpop.permute.xlu0 %8479
        %8481 = vrot.lane.b32.xlu0 %v342, 127
        %v8482 = vpop.permute.xlu0 %8481
        %8483 = vrot.lane.b32.xlu0 %v343, 127
        %v8484 = vpop.permute.xlu0 %8483
        %8485 = vrot.lane.b32.xlu0 %v344, 127
        %v8486 = vpop.permute.xlu0 %8485
        %8487 = vrot.lane.b32.xlu0 %v345, 127
        %v8488 = vpop.permute.xlu0 %8487
        %8489 = vrot.lane.b32.xlu0 %v346, 127
        %v8490 = vpop.permute.xlu0 %8489
        %8491 = vrot.lane.b32.xlu0 %v347, 127
        %v8492 = vpop.permute.xlu0 %8491
        %8493 = vrot.lane.b32.xlu0 %v348, 127
        %v8494 = vpop.permute.xlu0 %8493
        %8495 = vrot.lane.b32.xlu0 %v349, 127
        %v8496 = vpop.permute.xlu0 %8495
        %8497 = vrot.lane.b32.xlu0 %v350, 127
        %v8498 = vpop.permute.xlu0 %8497
        %8499 = vrot.lane.b32.xlu0 %v351, 127
        %v8500 = vpop.permute.xlu0 %8499
        %8501 = vrot.lane.b32.xlu0 %v352, 127
        %v8502 = vpop.permute.xlu0 %8501
        %8503 = vrot.lane.b32.xlu0 %v353, 127
        %v8504 = vpop.permute.xlu0 %8503
        %8505 = vrot.lane.b32.xlu0 %v354, 127
        %v8506 = vpop.permute.xlu0 %8505
        %8507 = vrot.lane.b32.xlu0 %v355, 127
        %v8508 = vpop.permute.xlu0 %8507
        %8509 = vrot.lane.b32.xlu0 %v356, 127
        %v8510 = vpop.permute.xlu0 %8509
        %8511 = vrot.lane.b32.xlu0 %v357, 127
        %v8512 = vpop.permute.xlu0 %8511
        %8513 = vrot.lane.b32.xlu0 %v358, 127
        %v8514 = vpop.permute.xlu0 %8513
        %8515 = vrot.lane.b32.xlu0 %v359, 127
        %v8516 = vpop.permute.xlu0 %8515
        %8517 = vrot.lane.b32.xlu0 %v360, 127
        %v8518 = vpop.permute.xlu0 %8517
        %8519 = vrot.lane.b32.xlu0 %v361, 127
        %v8520 = vpop.permute.xlu0 %8519
        %8521 = vrot.lane.b32.xlu0 %v362, 127
        %v8522 = vpop.permute.xlu0 %8521
        %8523 = vrot.lane.b32.xlu0 %v363, 127
        %v8524 = vpop.permute.xlu0 %8523
        %8525 = vrot.lane.b32.xlu0 %v364, 127
        %v8526 = vpop.permute.xlu0 %8525
        %8527 = vrot.lane.b32.xlu0 %v365, 127
        %v8528 = vpop.permute.xlu0 %8527
        %8529 = vrot.lane.b32.xlu0 %v366, 127
        %v8530 = vpop.permute.xlu0 %8529
        %8531 = vrot.lane.b32.xlu0 %v367, 127
        %v8532 = vpop.permute.xlu0 %8531
        %8533 = vrot.lane.b32.xlu0 %v368, 127
        %v8534 = vpop.permute.xlu0 %8533
        %8535 = vrot.lane.b32.xlu0 %v369, 127
        %v8536 = vpop.permute.xlu0 %8535
        %8537 = vrot.lane.b32.xlu0 %v370, 127
        %v8538 = vpop.permute.xlu0 %8537
        %8539 = vrot.lane.b32.xlu0 %v371, 127
        %v8540 = vpop.permute.xlu0 %8539
        %8541 = vrot.lane.b32.xlu0 %v372, 127
        %v8542 = vpop.permute.xlu0 %8541
        %8543 = vrot.lane.b32.xlu0 %v373, 127
        %v8544 = vpop.permute.xlu0 %8543
        %8545 = vrot.lane.b32.xlu0 %v374, 127
        %v8546 = vpop.permute.xlu0 %8545
        %8547 = vrot.lane.b32.xlu0 %v375, 127
        %v8548 = vpop.permute.xlu0 %8547
        %8549 = vrot.lane.b32.xlu0 %v376, 127
        %v8550 = vpop.permute.xlu0 %8549
        %8551 = vrot.lane.b32.xlu0 %v377, 127
        %v8552 = vpop.permute.xlu0 %8551
        %8553 = vrot.lane.b32.xlu0 %v378, 127
        %v8554 = vpop.permute.xlu0 %8553
        %8555 = vrot.lane.b32.xlu0 %v379, 127
        %v8556 = vpop.permute.xlu0 %8555
        %8557 = vrot.lane.b32.xlu0 %v380, 127
        %v8558 = vpop.permute.xlu0 %8557
        %8559 = vrot.lane.b32.xlu0 %v381, 127
        %v8560 = vpop.permute.xlu0 %8559
        %8561 = vrot.lane.b32.xlu0 %v382, 127
        %v8562 = vpop.permute.xlu0 %8561
        %8563 = vrot.lane.b32.xlu0 %v383, 127
        %v8564 = vpop.permute.xlu0 %8563
        %8565 = vrot.lane.b32.xlu0 %v384, 127
        %v8566 = vpop.permute.xlu0 %8565
        %8567 = vrot.lane.b32.xlu0 %v385, 127
        %v8568 = vpop.permute.xlu0 %8567
        %8569 = vrot.lane.b32.xlu0 %v386, 127
        %v8570 = vpop.permute.xlu0 %8569
        %8571 = vrot.lane.b32.xlu0 %v387, 127
        %v8572 = vpop.permute.xlu0 %8571
        %8573 = vrot.lane.b32.xlu0 %v388, 127
        %v8574 = vpop.permute.xlu0 %8573
        %8575 = vrot.lane.b32.xlu0 %v389, 127
        %v8576 = vpop.permute.xlu0 %8575
        %8577 = vrot.lane.b32.xlu0 %v390, 127
        %v8578 = vpop.permute.xlu0 %8577
        %8579 = vrot.lane.b32.xlu0 %v391, 127
        %v8580 = vpop.permute.xlu0 %8579
        %8581 = vrot.lane.b32.xlu0 %v392, 127
        %v8582 = vpop.permute.xlu0 %8581
        %8583 = vrot.lane.b32.xlu0 %v393, 127
        %v8584 = vpop.permute.xlu0 %8583
        %8585 = vrot.lane.b32.xlu0 %v394, 127
        %v8586 = vpop.permute.xlu0 %8585
        %8587 = vrot.lane.b32.xlu0 %v395, 127
        %v8588 = vpop.permute.xlu0 %8587
        %8589 = vrot.lane.b32.xlu0 %v396, 127
        %v8590 = vpop.permute.xlu0 %8589
        %8591 = vrot.lane.b32.xlu0 %v397, 127
        %v8592 = vpop.permute.xlu0 %8591
        %8593 = vrot.lane.b32.xlu0 %v398, 127
        %v8594 = vpop.permute.xlu0 %8593
        %8595 = vrot.lane.b32.xlu0 %v399, 127
        %v8596 = vpop.permute.xlu0 %8595
        %8597 = vrot.lane.b32.xlu0 %v400, 127
        %v8598 = vpop.permute.xlu0 %8597
        %8599 = vrot.lane.b32.xlu0 %v401, 127
        %v8600 = vpop.permute.xlu0 %8599
        %8601 = vrot.lane.b32.xlu0 %v402, 127
        %v8602 = vpop.permute.xlu0 %8601
        %8603 = vrot.lane.b32.xlu0 %v403, 127
        %v8604 = vpop.permute.xlu0 %8603
        %8605 = vrot.lane.b32.xlu0 %v404, 127
        %v8606 = vpop.permute.xlu0 %8605
        %8607 = vrot.lane.b32.xlu0 %v405, 127
        %v8608 = vpop.permute.xlu0 %8607
        %8609 = vrot.lane.b32.xlu0 %v406, 127
        %v8610 = vpop.permute.xlu0 %8609
        %8611 = vrot.lane.b32.xlu0 %v407, 127
        %v8612 = vpop.permute.xlu0 %8611
        %8613 = vrot.lane.b32.xlu0 %v408, 127
        %v8614 = vpop.permute.xlu0 %8613
        %8615 = vrot.lane.b32.xlu0 %v409, 127
        %v8616 = vpop.permute.xlu0 %8615
        %8617 = vrot.lane.b32.xlu0 %v410, 127
        %v8618 = vpop.permute.xlu0 %8617
        %8619 = vrot.lane.b32.xlu0 %v411, 127
        %v8620 = vpop.permute.xlu0 %8619
        %8621 = vrot.lane.b32.xlu0 %v412, 127
        %v8622 = vpop.permute.xlu0 %8621
        %8623 = vrot.lane.b32.xlu0 %v413, 127
        %v8624 = vpop.permute.xlu0 %8623
        %8625 = vrot.lane.b32.xlu0 %v414, 127
        %v8626 = vpop.permute.xlu0 %8625
        %8627 = vrot.lane.b32.xlu0 %v415, 127
        %v8628 = vpop.permute.xlu0 %8627
        %8629 = vrot.lane.b32.xlu0 %v416, 127
        %v8630 = vpop.permute.xlu0 %8629
        %8631 = vrot.lane.b32.xlu0 %v417, 127
        %v8632 = vpop.permute.xlu0 %8631
        %8633 = vrot.lane.b32.xlu0 %v418, 127
        %v8634 = vpop.permute.xlu0 %8633
        %8635 = vrot.lane.b32.xlu0 %v419, 127
        %v8636 = vpop.permute.xlu0 %8635
        %8637 = vrot.lane.b32.xlu0 %v420, 127
        %v8638 = vpop.permute.xlu0 %8637
        %8639 = vrot.lane.b32.xlu0 %v421, 127
        %v8640 = vpop.permute.xlu0 %8639
        %8641 = vrot.lane.b32.xlu0 %v422, 127
        %v8642 = vpop.permute.xlu0 %8641
        %8643 = vrot.lane.b32.xlu0 %v423, 127
        %v8644 = vpop.permute.xlu0 %8643
        %8645 = vrot.lane.b32.xlu0 %v424, 127
        %v8646 = vpop.permute.xlu0 %8645
        %8647 = vrot.lane.b32.xlu0 %v425, 127
        %v8648 = vpop.permute.xlu0 %8647
        %8649 = vrot.lane.b32.xlu0 %v426, 127
        %v8650 = vpop.permute.xlu0 %8649
        %8651 = vrot.lane.b32.xlu0 %v427, 127
        %v8652 = vpop.permute.xlu0 %8651
        %8653 = vrot.lane.b32.xlu0 %v428, 127
        %v8654 = vpop.permute.xlu0 %8653
        %8655 = vrot.lane.b32.xlu0 %v429, 127
        %v8656 = vpop.permute.xlu0 %8655
        %8657 = vrot.lane.b32.xlu0 %v430, 127
        %v8658 = vpop.permute.xlu0 %8657
        %8659 = vrot.lane.b32.xlu0 %v431, 127
        %v8660 = vpop.permute.xlu0 %8659
        %8661 = vrot.lane.b32.xlu0 %v432, 127
        %v8662 = vpop.permute.xlu0 %8661
        %8663 = vrot.lane.b32.xlu0 %v433, 127
        %v8664 = vpop.permute.xlu0 %8663
        %8665 = vrot.lane.b32.xlu0 %v434, 127
        %v8666 = vpop.permute.xlu0 %8665
        %8667 = vrot.lane.b32.xlu0 %v435, 127
        %v8668 = vpop.permute.xlu0 %8667
        %8669 = vrot.lane.b32.xlu0 %v436, 127
        %v8670 = vpop.permute.xlu0 %8669
        %8671 = vrot.lane.b32.xlu0 %v437, 127
        %v8672 = vpop.permute.xlu0 %8671
        %8673 = vrot.lane.b32.xlu0 %v438, 127
        %v8674 = vpop.permute.xlu0 %8673
        %8675 = vrot.lane.b32.xlu0 %v439, 127
        %v8676 = vpop.permute.xlu0 %8675
        %8677 = vrot.lane.b32.xlu0 %v440, 127
        %v8678 = vpop.permute.xlu0 %8677
        %8679 = vrot.lane.b32.xlu0 %v441, 127
        %v8680 = vpop.permute.xlu0 %8679
        %8681 = vrot.lane.b32.xlu0 %v442, 127
        %v8682 = vpop.permute.xlu0 %8681
        %8683 = vrot.lane.b32.xlu0 %v443, 127
        %v8684 = vpop.permute.xlu0 %8683
        %8685 = vrot.lane.b32.xlu0 %v444, 127
        %v8686 = vpop.permute.xlu0 %8685
        %8687 = vrot.lane.b32.xlu0 %v445, 127
        %v8688 = vpop.permute.xlu0 %8687
        %8689 = vrot.lane.b32.xlu0 %v446, 127
        %v8690 = vpop.permute.xlu0 %8689
        %8691 = vrot.lane.b32.xlu0 %v447, 127
        %v8692 = vpop.permute.xlu0 %8691
        %8693 = vrot.lane.b32.xlu0 %v448, 127
        %v8694 = vpop.permute.xlu0 %8693
        %8695 = vrot.lane.b32.xlu0 %v449, 127
        %v8696 = vpop.permute.xlu0 %8695
        %8697 = vrot.lane.b32.xlu0 %v450, 127
        %v8698 = vpop.permute.xlu0 %8697
        %8699 = vrot.lane.b32.xlu0 %v451, 127
        %v8700 = vpop.permute.xlu0 %8699
        %8701 = vrot.lane.b32.xlu0 %v452, 127
        %v8702 = vpop.permute.xlu0 %8701
        %8703 = vrot.lane.b32.xlu0 %v453, 127
        %v8704 = vpop.permute.xlu0 %8703
        %8705 = vrot.lane.b32.xlu0 %v454, 127
        %v8706 = vpop.permute.xlu0 %8705
        %8707 = vrot.lane.b32.xlu0 %v455, 127
        %v8708 = vpop.permute.xlu0 %8707
        %8709 = vrot.lane.b32.xlu0 %v456, 127
        %v8710 = vpop.permute.xlu0 %8709
        %8711 = vrot.lane.b32.xlu0 %v457, 127
        %v8712 = vpop.permute.xlu0 %8711
        %8713 = vrot.lane.b32.xlu0 %v458, 127
        %v8714 = vpop.permute.xlu0 %8713
        %8715 = vrot.lane.b32.xlu0 %v459, 127
        %v8716 = vpop.permute.xlu0 %8715
        %8717 = vrot.lane.b32.xlu0 %v460, 127
        %v8718 = vpop.permute.xlu0 %8717
        %8719 = vrot.lane.b32.xlu0 %v461, 127
        %v8720 = vpop.permute.xlu0 %8719
        %8721 = vrot.lane.b32.xlu0 %v462, 127
        %v8722 = vpop.permute.xlu0 %8721
        %8723 = vrot.lane.b32.xlu0 %v463, 127
        %v8724 = vpop.permute.xlu0 %8723
        %8725 = vrot.lane.b32.xlu0 %v464, 127
        %v8726 = vpop.permute.xlu0 %8725
        %8727 = vrot.lane.b32.xlu0 %v465, 127
        %v8728 = vpop.permute.xlu0 %8727
        %8729 = vrot.lane.b32.xlu0 %v466, 127
        %v8730 = vpop.permute.xlu0 %8729
        %8731 = vrot.lane.b32.xlu0 %v467, 127
        %v8732 = vpop.permute.xlu0 %8731
        %8733 = vrot.lane.b32.xlu0 %v468, 127
        %v8734 = vpop.permute.xlu0 %8733
        %8735 = vrot.lane.b32.xlu0 %v469, 127
        %v8736 = vpop.permute.xlu0 %8735
        %8737 = vrot.lane.b32.xlu0 %v470, 127
        %v8738 = vpop.permute.xlu0 %8737
        %8739 = vrot.lane.b32.xlu0 %v471, 127
        %v8740 = vpop.permute.xlu0 %8739
        %8741 = vrot.lane.b32.xlu0 %v472, 127
        %v8742 = vpop.permute.xlu0 %8741
        %8743 = vrot.lane.b32.xlu0 %v473, 127
        %v8744 = vpop.permute.xlu0 %8743
        %8745 = vrot.lane.b32.xlu0 %v474, 127
        %v8746 = vpop.permute.xlu0 %8745
        %8747 = vrot.lane.b32.xlu0 %v475, 127
        %v8748 = vpop.permute.xlu0 %8747
        %8749 = vrot.lane.b32.xlu0 %v476, 127
        %v8750 = vpop.permute.xlu0 %8749
        %8751 = vrot.lane.b32.xlu0 %v477, 127
        %v8752 = vpop.permute.xlu0 %8751
        %8753 = vrot.lane.b32.xlu0 %v478, 127
        %v8754 = vpop.permute.xlu0 %8753
        %8755 = vrot.lane.b32.xlu0 %v479, 127
        %v8756 = vpop.permute.xlu0 %8755
        %8757 = vrot.lane.b32.xlu0 %v480, 127
        %v8758 = vpop.permute.xlu0 %8757
        %8759 = vrot.lane.b32.xlu0 %v481, 127
        %v8760 = vpop.permute.xlu0 %8759
        %8761 = vrot.lane.b32.xlu0 %v482, 127
        %v8762 = vpop.permute.xlu0 %8761
        %8763 = vrot.lane.b32.xlu0 %v483, 127
        %v8764 = vpop.permute.xlu0 %8763
        %8765 = vrot.lane.b32.xlu0 %v484, 127
        %v8766 = vpop.permute.xlu0 %8765
        %8767 = vrot.lane.b32.xlu0 %v485, 127
        %v8768 = vpop.permute.xlu0 %8767
        %8769 = vrot.lane.b32.xlu0 %v486, 127
        %v8770 = vpop.permute.xlu0 %8769
        %8771 = vrot.lane.b32.xlu0 %v487, 127
        %v8772 = vpop.permute.xlu0 %8771
        %8773 = vrot.lane.b32.xlu0 %v488, 127
        %v8774 = vpop.permute.xlu0 %8773
        %8775 = vrot.lane.b32.xlu0 %v489, 127
        %v8776 = vpop.permute.xlu0 %8775
        %8777 = vrot.lane.b32.xlu0 %v490, 127
        %v8778 = vpop.permute.xlu0 %8777
        %8779 = vrot.lane.b32.xlu0 %v491, 127
        %v8780 = vpop.permute.xlu0 %8779
        %8781 = vrot.lane.b32.xlu0 %v492, 127
        %v8782 = vpop.permute.xlu0 %8781
        %8783 = vrot.lane.b32.xlu0 %v493, 127
        %v8784 = vpop.permute.xlu0 %8783
        %8785 = vrot.lane.b32.xlu0 %v494, 127
        %v8786 = vpop.permute.xlu0 %8785
        %8787 = vrot.lane.b32.xlu0 %v495, 127
        %v8788 = vpop.permute.xlu0 %8787
        %8789 = vrot.lane.b32.xlu0 %v496, 127
        %v8790 = vpop.permute.xlu0 %8789
        %8791 = vrot.lane.b32.xlu0 %v497, 127
        %v8792 = vpop.permute.xlu0 %8791
        %8793 = vrot.lane.b32.xlu0 %v498, 127
        %v8794 = vpop.permute.xlu0 %8793
        %8795 = vrot.lane.b32.xlu0 %v499, 127
        %v8796 = vpop.permute.xlu0 %8795
        %8797 = vrot.lane.b32.xlu0 %v500, 127
        %v8798 = vpop.permute.xlu0 %8797
        %8799 = vrot.lane.b32.xlu0 %v501, 127
        %v8800 = vpop.permute.xlu0 %8799
        %8801 = vrot.lane.b32.xlu0 %v502, 127
        %v8802 = vpop.permute.xlu0 %8801
        %8803 = vrot.lane.b32.xlu0 %v503, 127
        %v8804 = vpop.permute.xlu0 %8803
        %8805 = vrot.lane.b32.xlu0 %v504, 127
        %v8806 = vpop.permute.xlu0 %8805
        %8807 = vrot.lane.b32.xlu0 %v505, 127
        %v8808 = vpop.permute.xlu0 %8807
        %8809 = vrot.lane.b32.xlu0 %v506, 127
        %v8810 = vpop.permute.xlu0 %8809
        %8811 = vrot.lane.b32.xlu0 %v507, 127
        %v8812 = vpop.permute.xlu0 %8811
        %8813 = vrot.lane.b32.xlu0 %v508, 127
        %v8814 = vpop.permute.xlu0 %8813
        %8815 = vrot.lane.b32.xlu0 %v509, 127
        %v8816 = vpop.permute.xlu0 %8815
        %8817 = vrot.lane.b32.xlu0 %v510, 127
        %v8818 = vpop.permute.xlu0 %8817
        %8819 = vrot.lane.b32.xlu0 %v511, 127
        %v8820 = vpop.permute.xlu0 %8819
        %8821 = vrot.lane.b32.xlu0 %v512, 127
        %v8822 = vpop.permute.xlu0 %8821
        %8823 = vrot.lane.b32.xlu0 %v513, 127
        %v8824 = vpop.permute.xlu0 %8823
        %8825 = vrot.lane.b32.xlu0 %v514, 127
        %v8826 = vpop.permute.xlu0 %8825
        %8827 = vrot.lane.b32.xlu0 %v515, 127
        %v8828 = vpop.permute.xlu0 %8827
        %8829 = vrot.lane.b32.xlu0 %v516, 127
        %v8830 = vpop.permute.xlu0 %8829
        %8831 = vrot.lane.b32.xlu0 %v517, 127
        %v8832 = vpop.permute.xlu0 %8831
        %8833 = vrot.lane.b32.xlu0 %v518, 127
        %v8834 = vpop.permute.xlu0 %8833
        %8835 = vrot.lane.b32.xlu0 %v519, 127
        %v8836 = vpop.permute.xlu0 %8835
        %8837 = vrot.lane.b32.xlu0 %v520, 127
        %v8838 = vpop.permute.xlu0 %8837
        %v8839 = vsel %vm2128, %v8456, %v8458
        %v8840 = vsel %vm2128, %v8460, %v8462
        %v8841 = vsel %vm2128, %v8464, %v8466
        %v8842 = vsel %vm2128, %v8468, %v8470
        %v8843 = vsel %vm2128, %v8472, %v8474
        %v8844 = vsel %vm2128, %v8476, %v8478
        %v8845 = vsel %vm2128, %v8480, %v8482
        %v8846 = vsel %vm2128, %v8484, %v8486
        %v8847 = vsel %vm2128, %v8488, %v8490
        %v8848 = vsel %vm2128, %v8492, %v8494
        %v8849 = vsel %vm2128, %v8496, %v8498
        %v8850 = vsel %vm2128, %v8500, %v8502
        %v8851 = vsel %vm2128, %v8504, %v8506
        %v8852 = vsel %vm2128, %v8508, %v8510
        %v8853 = vsel %vm2128, %v8512, %v8514
        %v8854 = vsel %vm2128, %v8516, %v8518
        %v8855 = vsel %vm2128, %v8520, %v8522
        %v8856 = vsel %vm2128, %v8524, %v8526
        %v8857 = vsel %vm2128, %v8528, %v8530
        %v8858 = vsel %vm2128, %v8532, %v8534
        %v8859 = vsel %vm2128, %v8536, %v8538
        %v8860 = vsel %vm2128, %v8540, %v8542
        %v8861 = vsel %vm2128, %v8544, %v8546
        %v8862 = vsel %vm2128, %v8548, %v8550
        %v8863 = vsel %vm2128, %v8552, %v8554
        %v8864 = vsel %vm2128, %v8556, %v8558
        %v8865 = vsel %vm2128, %v8560, %v8562
        %v8866 = vsel %vm2128, %v8564, %v8566
        %v8867 = vsel %vm2128, %v8568, %v8570
        %v8868 = vsel %vm2128, %v8572, %v8574
        %v8869 = vsel %vm2128, %v8576, %v8578
        %v8870 = vsel %vm2128, %v8580, %v8582
        %v8871 = vsel %vm2128, %v8584, %v8586
        %v8872 = vsel %vm2128, %v8588, %v8590
        %v8873 = vsel %vm2128, %v8592, %v8594
        %v8874 = vsel %vm2128, %v8596, %v8598
        %v8875 = vsel %vm2128, %v8600, %v8602
        %v8876 = vsel %vm2128, %v8604, %v8606
        %v8877 = vsel %vm2128, %v8608, %v8610
        %v8878 = vsel %vm2128, %v8612, %v8614
        %v8879 = vsel %vm2128, %v8616, %v8618
        %v8880 = vsel %vm2128, %v8620, %v8622
        %v8881 = vsel %vm2128, %v8624, %v8626
        %v8882 = vsel %vm2128, %v8628, %v8630
        %v8883 = vsel %vm2128, %v8632, %v8634
        %v8884 = vsel %vm2128, %v8636, %v8638
        %v8885 = vsel %vm2128, %v8640, %v8642
        %v8886 = vsel %vm2128, %v8644, %v8646
        %v8887 = vsel %vm2128, %v8648, %v8650
        %v8888 = vsel %vm2128, %v8652, %v8654
        %v8889 = vsel %vm2128, %v8656, %v8658
        %v8890 = vsel %vm2128, %v8660, %v8662
        %v8891 = vsel %vm2128, %v8664, %v8666
        %v8892 = vsel %vm2128, %v8668, %v8670
        %v8893 = vsel %vm2128, %v8672, %v8674
        %v8894 = vsel %vm2128, %v8676, %v8678
        %v8895 = vsel %vm2128, %v8680, %v8682
        %v8896 = vsel %vm2128, %v8684, %v8686
        %v8897 = vsel %vm2128, %v8688, %v8690
        %v8898 = vsel %vm2128, %v8692, %v8694
        %v8899 = vsel %vm2128, %v8696, %v8698
        %v8900 = vsel %vm2128, %v8700, %v8702
        %v8901 = vsel %vm2128, %v8704, %v8706
        %v8902 = vsel %vm2128, %v8708, %v8710
        %v8903 = vsel %vm2128, %v8712, %v8714
        %v8904 = vsel %vm2128, %v8716, %v8718
        %v8905 = vsel %vm2128, %v8720, %v8722
        %v8906 = vsel %vm2128, %v8724, %v8726
        %v8907 = vsel %vm2128, %v8728, %v8730
        %v8908 = vsel %vm2128, %v8732, %v8734
        %v8909 = vsel %vm2128, %v8736, %v8738
        %v8910 = vsel %vm2128, %v8740, %v8742
        %v8911 = vsel %vm2128, %v8744, %v8746
        %v8912 = vsel %vm2128, %v8748, %v8750
        %v8913 = vsel %vm2128, %v8752, %v8754
        %v8914 = vsel %vm2128, %v8756, %v8758
        %v8915 = vsel %vm2128, %v8760, %v8762
        %v8916 = vsel %vm2128, %v8764, %v8766
        %v8917 = vsel %vm2128, %v8768, %v8770
        %v8918 = vsel %vm2128, %v8772, %v8774
        %v8919 = vsel %vm2128, %v8776, %v8778
        %v8920 = vsel %vm2128, %v8780, %v8782
        %v8921 = vsel %vm2128, %v8784, %v8786
        %v8922 = vsel %vm2128, %v8788, %v8790
        %v8923 = vsel %vm2128, %v8792, %v8794
        %v8924 = vsel %vm2128, %v8796, %v8798
        %v8925 = vsel %vm2128, %v8800, %v8802
        %v8926 = vsel %vm2128, %v8804, %v8806
        %v8927 = vsel %vm2128, %v8808, %v8810
        %v8928 = vsel %vm2128, %v8812, %v8814
        %v8929 = vsel %vm2128, %v8816, %v8818
        %v8930 = vsel %vm2128, %v8820, %v8822
        %v8931 = vsel %vm2128, %v8824, %v8826
        %v8932 = vsel %vm2128, %v8828, %v8830
        %v8933 = vsel %vm2128, %v8832, %v8834
        %v8934 = vsel %vm2128, %v8836, %v8838
        %v9127 = vmul.f32 %v329, %v8839
        %v9128 = vmul.f32 %v330, %v8458
        %v9129 = vmul.f32 %v331, %v8840
        %v9130 = vmul.f32 %v332, %v8462
        %v9131 = vmul.f32 %v333, %v8841
        %v9132 = vmul.f32 %v334, %v8466
        %v9133 = vmul.f32 %v335, %v8842
        %v9134 = vmul.f32 %v336, %v8470
        %v9135 = vmul.f32 %v337, %v8843
        %v9136 = vmul.f32 %v338, %v8474
        %v9137 = vmul.f32 %v339, %v8844
        %v9138 = vmul.f32 %v340, %v8478
        %v9139 = vmul.f32 %v341, %v8845
        %v9140 = vmul.f32 %v342, %v8482
        %v9141 = vmul.f32 %v343, %v8846
        %v9142 = vmul.f32 %v344, %v8486
        %v9143 = vmul.f32 %v345, %v8847
        %v9144 = vmul.f32 %v346, %v8490
        %v9145 = vmul.f32 %v347, %v8848
        %v9146 = vmul.f32 %v348, %v8494
        %v9147 = vmul.f32 %v349, %v8849
        %v9148 = vmul.f32 %v350, %v8498
        %v9149 = vmul.f32 %v351, %v8850
        %v9150 = vmul.f32 %v352, %v8502
        %v9151 = vmul.f32 %v353, %v8851
        %v9152 = vmul.f32 %v354, %v8506
        %v9153 = vmul.f32 %v355, %v8852
        %v9154 = vmul.f32 %v356, %v8510
        %v9155 = vmul.f32 %v357, %v8853
        %v9156 = vmul.f32 %v358, %v8514
        %v9157 = vmul.f32 %v359, %v8854
        %v9158 = vmul.f32 %v360, %v8518
        %v9159 = vmul.f32 %v361, %v8855
        %v9160 = vmul.f32 %v362, %v8522
        %v9161 = vmul.f32 %v363, %v8856
        %v9162 = vmul.f32 %v364, %v8526
        %v9163 = vmul.f32 %v365, %v8857
        %v9164 = vmul.f32 %v366, %v8530
        %v9165 = vmul.f32 %v367, %v8858
        %v9166 = vmul.f32 %v368, %v8534
        %v9167 = vmul.f32 %v369, %v8859
        %v9168 = vmul.f32 %v370, %v8538
        %v9169 = vmul.f32 %v371, %v8860
        %v9170 = vmul.f32 %v372, %v8542
        %v9171 = vmul.f32 %v373, %v8861
        %v9172 = vmul.f32 %v374, %v8546
        %v9173 = vmul.f32 %v375, %v8862
        %v9174 = vmul.f32 %v376, %v8550
        %v9175 = vmul.f32 %v377, %v8863
        %v9176 = vmul.f32 %v378, %v8554
        %v9177 = vmul.f32 %v379, %v8864
        %v9178 = vmul.f32 %v380, %v8558
        %v9179 = vmul.f32 %v381, %v8865
        %v9180 = vmul.f32 %v382, %v8562
        %v9181 = vmul.f32 %v383, %v8866
        %v9182 = vmul.f32 %v384, %v8566
        %v9183 = vmul.f32 %v385, %v8867
        %v9184 = vmul.f32 %v386, %v8570
        %v9185 = vmul.f32 %v387, %v8868
        %v9186 = vmul.f32 %v388, %v8574
        %v9187 = vmul.f32 %v389, %v8869
        %v9188 = vmul.f32 %v390, %v8578
        %v9189 = vmul.f32 %v391, %v8870
        %v9190 = vmul.f32 %v392, %v8582
        %v9191 = vmul.f32 %v393, %v8871
        %v9192 = vmul.f32 %v394, %v8586
        %v9193 = vmul.f32 %v395, %v8872
        %v9194 = vmul.f32 %v396, %v8590
        %v9195 = vmul.f32 %v397, %v8873
        %v9196 = vmul.f32 %v398, %v8594
        %v9197 = vmul.f32 %v399, %v8874
        %v9198 = vmul.f32 %v400, %v8598
        %v9199 = vmul.f32 %v401, %v8875
        %v9200 = vmul.f32 %v402, %v8602
        %v9201 = vmul.f32 %v403, %v8876
        %v9202 = vmul.f32 %v404, %v8606
        %v9203 = vmul.f32 %v405, %v8877
        %v9204 = vmul.f32 %v406, %v8610
        %v9205 = vmul.f32 %v407, %v8878
        %v9206 = vmul.f32 %v408, %v8614
        %v9207 = vmul.f32 %v409, %v8879
        %v9208 = vmul.f32 %v410, %v8618
        %v9209 = vmul.f32 %v411, %v8880
        %v9210 = vmul.f32 %v412, %v8622
        %v9211 = vmul.f32 %v413, %v8881
        %v9212 = vmul.f32 %v414, %v8626
        %v9213 = vmul.f32 %v415, %v8882
        %v9214 = vmul.f32 %v416, %v8630
        %v9215 = vmul.f32 %v417, %v8883
        %v9216 = vmul.f32 %v418, %v8634
        %v9217 = vmul.f32 %v419, %v8884
        %v9218 = vmul.f32 %v420, %v8638
        %v9219 = vmul.f32 %v421, %v8885
        %v9220 = vmul.f32 %v422, %v8642
        %v9221 = vmul.f32 %v423, %v8886
        %v9222 = vmul.f32 %v424, %v8646
        %v9223 = vmul.f32 %v425, %v8887
        %v9224 = vmul.f32 %v426, %v8650
        %v9225 = vmul.f32 %v427, %v8888
        %v9226 = vmul.f32 %v428, %v8654
        %v9227 = vmul.f32 %v429, %v8889
        %v9228 = vmul.f32 %v430, %v8658
        %v9229 = vmul.f32 %v431, %v8890
        %v9230 = vmul.f32 %v432, %v8662
        %v9231 = vmul.f32 %v433, %v8891
        %v9232 = vmul.f32 %v434, %v8666
        %v9233 = vmul.f32 %v435, %v8892
        %v9234 = vmul.f32 %v436, %v8670
        %v9235 = vmul.f32 %v437, %v8893
        %v9236 = vmul.f32 %v438, %v8674
        %v9237 = vmul.f32 %v439, %v8894
        %v9238 = vmul.f32 %v440, %v8678
        %v9239 = vmul.f32 %v441, %v8895
        %v9240 = vmul.f32 %v442, %v8682
        %v9241 = vmul.f32 %v443, %v8896
        %v9242 = vmul.f32 %v444, %v8686
        %v9243 = vmul.f32 %v445, %v8897
        %v9244 = vmul.f32 %v446, %v8690
        %v9245 = vmul.f32 %v447, %v8898
        %v9246 = vmul.f32 %v448, %v8694
        %v9247 = vmul.f32 %v449, %v8899
        %v9248 = vmul.f32 %v450, %v8698
        %v9249 = vmul.f32 %v451, %v8900
        %v9250 = vmul.f32 %v452, %v8702
        %v9251 = vmul.f32 %v453, %v8901
        %v9252 = vmul.f32 %v454, %v8706
        %v9253 = vmul.f32 %v455, %v8902
        %v9254 = vmul.f32 %v456, %v8710
        %v9255 = vmul.f32 %v457, %v8903
        %v9256 = vmul.f32 %v458, %v8714
        %v9257 = vmul.f32 %v459, %v8904
        %v9258 = vmul.f32 %v460, %v8718
        %v9259 = vmul.f32 %v461, %v8905
        %v9260 = vmul.f32 %v462, %v8722
        %v9261 = vmul.f32 %v463, %v8906
        %v9262 = vmul.f32 %v464, %v8726
        %v9263 = vmul.f32 %v465, %v8907
        %v9264 = vmul.f32 %v466, %v8730
        %v9265 = vmul.f32 %v467, %v8908
        %v9266 = vmul.f32 %v468, %v8734
        %v9267 = vmul.f32 %v469, %v8909
        %v9268 = vmul.f32 %v470, %v8738
        %v9269 = vmul.f32 %v471, %v8910
        %v9270 = vmul.f32 %v472, %v8742
        %v9271 = vmul.f32 %v473, %v8911
        %v9272 = vmul.f32 %v474, %v8746
        %v9273 = vmul.f32 %v475, %v8912
        %v9274 = vmul.f32 %v476, %v8750
        %v9275 = vmul.f32 %v477, %v8913
        %v9276 = vmul.f32 %v478, %v8754
        %v9277 = vmul.f32 %v479, %v8914
        %v9278 = vmul.f32 %v480, %v8758
        %v9279 = vmul.f32 %v481, %v8915
        %v9280 = vmul.f32 %v482, %v8762
        %v9281 = vmul.f32 %v483, %v8916
        %v9282 = vmul.f32 %v484, %v8766
        %v9283 = vmul.f32 %v485, %v8917
        %v9284 = vmul.f32 %v486, %v8770
        %v9285 = vmul.f32 %v487, %v8918
        %v9286 = vmul.f32 %v488, %v8774
        %v9287 = vmul.f32 %v489, %v8919
        %v9288 = vmul.f32 %v490, %v8778
        %v9289 = vmul.f32 %v491, %v8920
        %v9290 = vmul.f32 %v492, %v8782
        %v9291 = vmul.f32 %v493, %v8921
        %v9292 = vmul.f32 %v494, %v8786
        %v9293 = vmul.f32 %v495, %v8922
        %v9294 = vmul.f32 %v496, %v8790
        %v9295 = vmul.f32 %v497, %v8923
        %v9296 = vmul.f32 %v498, %v8794
        %v9297 = vmul.f32 %v499, %v8924
        %v9298 = vmul.f32 %v500, %v8798
        %v9299 = vmul.f32 %v501, %v8925
        %v9300 = vmul.f32 %v502, %v8802
        %v9301 = vmul.f32 %v503, %v8926
        %v9302 = vmul.f32 %v504, %v8806
        %v9303 = vmul.f32 %v505, %v8927
        %v9304 = vmul.f32 %v506, %v8810
        %v9305 = vmul.f32 %v507, %v8928
        %v9306 = vmul.f32 %v508, %v8814
        %v9307 = vmul.f32 %v509, %v8929
        %v9308 = vmul.f32 %v510, %v8818
        %v9309 = vmul.f32 %v511, %v8930
        %v9310 = vmul.f32 %v512, %v8822
        %v9311 = vmul.f32 %v513, %v8931
        %v9312 = vmul.f32 %v514, %v8826
        %v9313 = vmul.f32 %v515, %v8932
        %v9314 = vmul.f32 %v516, %v8830
        %v9315 = vmul.f32 %v517, %v8933
        %v9316 = vmul.f32 %v518, %v8834
        %v9317 = vmul.f32 %v519, %v8934
        %v9318 = vmul.f32 %v520, %v8838
        %v9319 = vsel %vm1671, %v9127, 0.0
        %v9320 = vsel %vm1671, %v9133, 0.0
        %v9321 = vadd.f32 %v9319, %v9320
        %v9322 = vsel %vm1671, %v9139, 0.0
        %v9323 = vadd.f32 %v9321, %v9322
        %v9324 = vsel %vm1671, %v9145, 0.0
        %v9325 = vadd.f32 %v9323, %v9324
        %v9326 = vsel %vm1671, %v9151, 0.0
        %v9327 = vadd.f32 %v9325, %v9326
        %v9328 = vsel %vm1671, %v9157, 0.0
        %v9329 = vadd.f32 %v9327, %v9328
        %v9330 = vsel %vm1671, %v9163, 0.0
        %v9331 = vadd.f32 %v9329, %v9330
        %v9332 = vsel %vm1671, %v9169, 0.0
        %v9333 = vadd.f32 %v9331, %v9332
        %v9334 = vsel %vm1671, %v9175, 0.0
        %v9335 = vadd.f32 %v9333, %v9334
        %v9336 = vsel %vm1671, %v9181, 0.0
        %v9337 = vadd.f32 %v9335, %v9336
        %v9338 = vsel %vm1671, %v9187, 0.0
        %v9339 = vadd.f32 %v9337, %v9338
        %v9340 = vsel %vm1671, %v9193, 0.0
        %v9341 = vadd.f32 %v9339, %v9340
        %v9342 = vsel %vm1671, %v9199, 0.0
        %v9343 = vadd.f32 %v9341, %v9342
        %v9344 = vsel %vm1671, %v9205, 0.0
        %v9345 = vadd.f32 %v9343, %v9344
        %v9346 = vsel %vm1671, %v9211, 0.0
        %v9347 = vadd.f32 %v9345, %v9346
        %v9348 = vsel %vm1671, %v9217, 0.0
        %v9349 = vadd.f32 %v9347, %v9348
        %v9350 = vsel %vm1671, %v9223, 0.0
        %v9351 = vadd.f32 %v9349, %v9350
        %v9352 = vsel %vm1671, %v9229, 0.0
        %v9353 = vadd.f32 %v9351, %v9352
        %v9354 = vsel %vm1671, %v9235, 0.0
        %v9355 = vadd.f32 %v9353, %v9354
        %v9356 = vsel %vm1671, %v9241, 0.0
        %v9357 = vadd.f32 %v9355, %v9356
        %v9358 = vsel %vm1671, %v9247, 0.0
        %v9359 = vadd.f32 %v9357, %v9358
        %v9360 = vsel %vm1671, %v9253, 0.0
        %v9361 = vadd.f32 %v9359, %v9360
        %v9362 = vsel %vm1671, %v9259, 0.0
        %v9363 = vadd.f32 %v9361, %v9362
        %v9364 = vsel %vm1671, %v9265, 0.0
        %v9365 = vadd.f32 %v9363, %v9364
        %v9366 = vsel %vm1671, %v9271, 0.0
        %v9367 = vadd.f32 %v9365, %v9366
        %v9368 = vsel %vm1671, %v9277, 0.0
        %v9369 = vadd.f32 %v9367, %v9368
        %v9370 = vsel %vm1671, %v9283, 0.0
        %v9371 = vadd.f32 %v9369, %v9370
        %v9372 = vsel %vm1671, %v9289, 0.0
        %v9373 = vadd.f32 %v9371, %v9372
        %v9374 = vsel %vm1671, %v9295, 0.0
        %v9375 = vadd.f32 %v9373, %v9374
        %v9376 = vsel %vm1671, %v9301, 0.0
        %v9377 = vadd.f32 %v9375, %v9376
        %v9378 = vsel %vm1671, %v9307, 0.0
        %v9379 = vadd.f32 %v9377, %v9378
        %v9380 = vsel %vm1671, %v9313, 0.0
        %v9381 = vadd.f32 %v9379, %v9380
        %v9382 = vsel %vm1735, %v9128, 0.0
        %v9383 = vsel %vm1735, %v9134, 0.0
        %v9384 = vadd.f32 %v9382, %v9383
        %v9385 = vsel %vm1735, %v9140, 0.0
        %v9386 = vadd.f32 %v9384, %v9385
        %v9387 = vsel %vm1735, %v9146, 0.0
        %v9388 = vadd.f32 %v9386, %v9387
        %v9389 = vsel %vm1735, %v9152, 0.0
        %v9390 = vadd.f32 %v9388, %v9389
        %v9391 = vsel %vm1735, %v9158, 0.0
        %v9392 = vadd.f32 %v9390, %v9391
        %v9393 = vsel %vm1735, %v9164, 0.0
        %v9394 = vadd.f32 %v9392, %v9393
        %v9395 = vsel %vm1735, %v9170, 0.0
        %v9396 = vadd.f32 %v9394, %v9395
        %v9397 = vsel %vm1735, %v9176, 0.0
        %v9398 = vadd.f32 %v9396, %v9397
        %v9399 = vsel %vm1735, %v9182, 0.0
        %v9400 = vadd.f32 %v9398, %v9399
        %v9401 = vsel %vm1735, %v9188, 0.0
        %v9402 = vadd.f32 %v9400, %v9401
        %v9403 = vsel %vm1735, %v9194, 0.0
        %v9404 = vadd.f32 %v9402, %v9403
        %v9405 = vsel %vm1735, %v9200, 0.0
        %v9406 = vadd.f32 %v9404, %v9405
        %v9407 = vsel %vm1735, %v9206, 0.0
        %v9408 = vadd.f32 %v9406, %v9407
        %v9409 = vsel %vm1735, %v9212, 0.0
        %v9410 = vadd.f32 %v9408, %v9409
        %v9411 = vsel %vm1735, %v9218, 0.0
        %v9412 = vadd.f32 %v9410, %v9411
        %v9413 = vsel %vm1735, %v9224, 0.0
        %v9414 = vadd.f32 %v9412, %v9413
        %v9415 = vsel %vm1735, %v9230, 0.0
        %v9416 = vadd.f32 %v9414, %v9415
        %v9417 = vsel %vm1735, %v9236, 0.0
        %v9418 = vadd.f32 %v9416, %v9417
        %v9419 = vsel %vm1735, %v9242, 0.0
        %v9420 = vadd.f32 %v9418, %v9419
        %v9421 = vsel %vm1735, %v9248, 0.0
        %v9422 = vadd.f32 %v9420, %v9421
        %v9423 = vsel %vm1735, %v9254, 0.0
        %v9424 = vadd.f32 %v9422, %v9423
        %v9425 = vsel %vm1735, %v9260, 0.0
        %v9426 = vadd.f32 %v9424, %v9425
        %v9427 = vsel %vm1735, %v9266, 0.0
        %v9428 = vadd.f32 %v9426, %v9427
        %v9429 = vsel %vm1735, %v9272, 0.0
        %v9430 = vadd.f32 %v9428, %v9429
        %v9431 = vsel %vm1735, %v9278, 0.0
        %v9432 = vadd.f32 %v9430, %v9431
        %v9433 = vsel %vm1735, %v9284, 0.0
        %v9434 = vadd.f32 %v9432, %v9433
        %v9435 = vsel %vm1735, %v9290, 0.0
        %v9436 = vadd.f32 %v9434, %v9435
        %v9437 = vsel %vm1735, %v9296, 0.0
        %v9438 = vadd.f32 %v9436, %v9437
        %v9439 = vsel %vm1735, %v9302, 0.0
        %v9440 = vadd.f32 %v9438, %v9439
        %v9441 = vsel %vm1735, %v9308, 0.0
        %v9442 = vadd.f32 %v9440, %v9441
        %v9443 = vsel %vm1735, %v9314, 0.0
        %v9444 = vadd.f32 %v9442, %v9443
        %v9445 = vsel %vm1799, %v9129, 0.0
        %v9446 = vsel %vm1799, %v9135, 0.0
        %v9447 = vadd.f32 %v9445, %v9446
        %v9448 = vsel %vm1799, %v9141, 0.0
        %v9449 = vadd.f32 %v9447, %v9448
        %v9450 = vsel %vm1799, %v9147, 0.0
        %v9451 = vadd.f32 %v9449, %v9450
        %v9452 = vsel %vm1799, %v9153, 0.0
        %v9453 = vadd.f32 %v9451, %v9452
        %v9454 = vsel %vm1799, %v9159, 0.0
        %v9455 = vadd.f32 %v9453, %v9454
        %v9456 = vsel %vm1799, %v9165, 0.0
        %v9457 = vadd.f32 %v9455, %v9456
        %v9458 = vsel %vm1799, %v9171, 0.0
        %v9459 = vadd.f32 %v9457, %v9458
        %v9460 = vsel %vm1799, %v9177, 0.0
        %v9461 = vadd.f32 %v9459, %v9460
        %v9462 = vsel %vm1799, %v9183, 0.0
        %v9463 = vadd.f32 %v9461, %v9462
        %v9464 = vsel %vm1799, %v9189, 0.0
        %v9465 = vadd.f32 %v9463, %v9464
        %v9466 = vsel %vm1799, %v9195, 0.0
        %v9467 = vadd.f32 %v9465, %v9466
        %v9468 = vsel %vm1799, %v9201, 0.0
        %v9469 = vadd.f32 %v9467, %v9468
        %v9470 = vsel %vm1799, %v9207, 0.0
        %v9471 = vadd.f32 %v9469, %v9470
        %v9472 = vsel %vm1799, %v9213, 0.0
        %v9473 = vadd.f32 %v9471, %v9472
        %v9474 = vsel %vm1799, %v9219, 0.0
        %v9475 = vadd.f32 %v9473, %v9474
        %v9476 = vsel %vm1799, %v9225, 0.0
        %v9477 = vadd.f32 %v9475, %v9476
        %v9478 = vsel %vm1799, %v9231, 0.0
        %v9479 = vadd.f32 %v9477, %v9478
        %v9480 = vsel %vm1799, %v9237, 0.0
        %v9481 = vadd.f32 %v9479, %v9480
        %v9482 = vsel %vm1799, %v9243, 0.0
        %v9483 = vadd.f32 %v9481, %v9482
        %v9484 = vsel %vm1799, %v9249, 0.0
        %v9485 = vadd.f32 %v9483, %v9484
        %v9486 = vsel %vm1799, %v9255, 0.0
        %v9487 = vadd.f32 %v9485, %v9486
        %v9488 = vsel %vm1799, %v9261, 0.0
        %v9489 = vadd.f32 %v9487, %v9488
        %v9490 = vsel %vm1799, %v9267, 0.0
        %v9491 = vadd.f32 %v9489, %v9490
        %v9492 = vsel %vm1799, %v9273, 0.0
        %v9493 = vadd.f32 %v9491, %v9492
        %v9494 = vsel %vm1799, %v9279, 0.0
        %v9495 = vadd.f32 %v9493, %v9494
        %v9496 = vsel %vm1799, %v9285, 0.0
        %v9497 = vadd.f32 %v9495, %v9496
        %v9498 = vsel %vm1799, %v9291, 0.0
        %v9499 = vadd.f32 %v9497, %v9498
        %v9500 = vsel %vm1799, %v9297, 0.0
        %v9501 = vadd.f32 %v9499, %v9500
        %v9502 = vsel %vm1799, %v9303, 0.0
        %v9503 = vadd.f32 %v9501, %v9502
        %v9504 = vsel %vm1799, %v9309, 0.0
        %v9505 = vadd.f32 %v9503, %v9504
        %v9506 = vsel %vm1799, %v9315, 0.0
        %v9507 = vadd.f32 %v9505, %v9506
        %v9508 = vsel %vm1863, %v9130, 0.0
        %v9509 = vsel %vm1863, %v9136, 0.0
        %v9510 = vadd.f32 %v9508, %v9509
        %v9511 = vsel %vm1863, %v9142, 0.0
        %v9512 = vadd.f32 %v9510, %v9511
        %v9513 = vsel %vm1863, %v9148, 0.0
        %v9514 = vadd.f32 %v9512, %v9513
        %v9515 = vsel %vm1863, %v9154, 0.0
        %v9516 = vadd.f32 %v9514, %v9515
        %v9517 = vsel %vm1863, %v9160, 0.0
        %v9518 = vadd.f32 %v9516, %v9517
        %v9519 = vsel %vm1863, %v9166, 0.0
        %v9520 = vadd.f32 %v9518, %v9519
        %v9521 = vsel %vm1863, %v9172, 0.0
        %v9522 = vadd.f32 %v9520, %v9521
        %v9523 = vsel %vm1863, %v9178, 0.0
        %v9524 = vadd.f32 %v9522, %v9523
        %v9525 = vsel %vm1863, %v9184, 0.0
        %v9526 = vadd.f32 %v9524, %v9525
        %v9527 = vsel %vm1863, %v9190, 0.0
        %v9528 = vadd.f32 %v9526, %v9527
        %v9529 = vsel %vm1863, %v9196, 0.0
        %v9530 = vadd.f32 %v9528, %v9529
        %v9531 = vsel %vm1863, %v9202, 0.0
        %v9532 = vadd.f32 %v9530, %v9531
        %v9533 = vsel %vm1863, %v9208, 0.0
        %v9534 = vadd.f32 %v9532, %v9533
        %v9535 = vsel %vm1863, %v9214, 0.0
        %v9536 = vadd.f32 %v9534, %v9535
        %v9537 = vsel %vm1863, %v9220, 0.0
        %v9538 = vadd.f32 %v9536, %v9537
        %v9539 = vsel %vm1863, %v9226, 0.0
        %v9540 = vadd.f32 %v9538, %v9539
        %v9541 = vsel %vm1863, %v9232, 0.0
        %v9542 = vadd.f32 %v9540, %v9541
        %v9543 = vsel %vm1863, %v9238, 0.0
        %v9544 = vadd.f32 %v9542, %v9543
        %v9545 = vsel %vm1863, %v9244, 0.0
        %v9546 = vadd.f32 %v9544, %v9545
        %v9547 = vsel %vm1863, %v9250, 0.0
        %v9548 = vadd.f32 %v9546, %v9547
        %v9549 = vsel %vm1863, %v9256, 0.0
        %v9550 = vadd.f32 %v9548, %v9549
        %v9551 = vsel %vm1863, %v9262, 0.0
        %v9552 = vadd.f32 %v9550, %v9551
        %v9553 = vsel %vm1863, %v9268, 0.0
        %v9554 = vadd.f32 %v9552, %v9553
        %v9555 = vsel %vm1863, %v9274, 0.0
        %v9556 = vadd.f32 %v9554, %v9555
        %v9557 = vsel %vm1863, %v9280, 0.0
        %v9558 = vadd.f32 %v9556, %v9557
        %v9559 = vsel %vm1863, %v9286, 0.0
        %v9560 = vadd.f32 %v9558, %v9559
        %v9561 = vsel %vm1863, %v9292, 0.0
        %v9562 = vadd.f32 %v9560, %v9561
        %v9563 = vsel %vm1863, %v9298, 0.0
        %v9564 = vadd.f32 %v9562, %v9563
        %v9565 = vsel %vm1863, %v9304, 0.0
        %v9566 = vadd.f32 %v9564, %v9565
        %v9567 = vsel %vm1863, %v9310, 0.0
        %v9568 = vadd.f32 %v9566, %v9567
        %v9569 = vsel %vm1863, %v9316, 0.0
        %v9570 = vadd.f32 %v9568, %v9569
        %v9571 = vsel %vm1927, %v9131, 0.0
        %v9572 = vsel %vm1927, %v9137, 0.0
        %v9573 = vadd.f32 %v9571, %v9572
        %v9574 = vsel %vm1927, %v9143, 0.0
        %v9575 = vadd.f32 %v9573, %v9574
        %v9576 = vsel %vm1927, %v9149, 0.0
        %v9577 = vadd.f32 %v9575, %v9576
        %v9578 = vsel %vm1927, %v9155, 0.0
        %v9579 = vadd.f32 %v9577, %v9578
        %v9580 = vsel %vm1927, %v9161, 0.0
        %v9581 = vadd.f32 %v9579, %v9580
        %v9582 = vsel %vm1927, %v9167, 0.0
        %v9583 = vadd.f32 %v9581, %v9582
        %v9584 = vsel %vm1927, %v9173, 0.0
        %v9585 = vadd.f32 %v9583, %v9584
        %v9586 = vsel %vm1927, %v9179, 0.0
        %v9587 = vadd.f32 %v9585, %v9586
        %v9588 = vsel %vm1927, %v9185, 0.0
        %v9589 = vadd.f32 %v9587, %v9588
        %v9590 = vsel %vm1927, %v9191, 0.0
        %v9591 = vadd.f32 %v9589, %v9590
        %v9592 = vsel %vm1927, %v9197, 0.0
        %v9593 = vadd.f32 %v9591, %v9592
        %v9594 = vsel %vm1927, %v9203, 0.0
        %v9595 = vadd.f32 %v9593, %v9594
        %v9596 = vsel %vm1927, %v9209, 0.0
        %v9597 = vadd.f32 %v9595, %v9596
        %v9598 = vsel %vm1927, %v9215, 0.0
        %v9599 = vadd.f32 %v9597, %v9598
        %v9600 = vsel %vm1927, %v9221, 0.0
        %v9601 = vadd.f32 %v9599, %v9600
        %v9602 = vsel %vm1927, %v9227, 0.0
        %v9603 = vadd.f32 %v9601, %v9602
        %v9604 = vsel %vm1927, %v9233, 0.0
        %v9605 = vadd.f32 %v9603, %v9604
        %v9606 = vsel %vm1927, %v9239, 0.0
        %v9607 = vadd.f32 %v9605, %v9606
        %v9608 = vsel %vm1927, %v9245, 0.0
        %v9609 = vadd.f32 %v9607, %v9608
        %v9610 = vsel %vm1927, %v9251, 0.0
        %v9611 = vadd.f32 %v9609, %v9610
        %v9612 = vsel %vm1927, %v9257, 0.0
        %v9613 = vadd.f32 %v9611, %v9612
        %v9614 = vsel %vm1927, %v9263, 0.0
        %v9615 = vadd.f32 %v9613, %v9614
        %v9616 = vsel %vm1927, %v9269, 0.0
        %v9617 = vadd.f32 %v9615, %v9616
        %v9618 = vsel %vm1927, %v9275, 0.0
        %v9619 = vadd.f32 %v9617, %v9618
        %v9620 = vsel %vm1927, %v9281, 0.0
        %v9621 = vadd.f32 %v9619, %v9620
        %v9622 = vsel %vm1927, %v9287, 0.0
        %v9623 = vadd.f32 %v9621, %v9622
        %v9624 = vsel %vm1927, %v9293, 0.0
        %v9625 = vadd.f32 %v9623, %v9624
        %v9626 = vsel %vm1927, %v9299, 0.0
        %v9627 = vadd.f32 %v9625, %v9626
        %v9628 = vsel %vm1927, %v9305, 0.0
        %v9629 = vadd.f32 %v9627, %v9628
        %v9630 = vsel %vm1927, %v9311, 0.0
        %v9631 = vadd.f32 %v9629, %v9630
        %v9632 = vsel %vm1927, %v9317, 0.0
        %v9633 = vadd.f32 %v9631, %v9632
        %v9634 = vsel %vm1991, %v9132, 0.0
        %v9635 = vsel %vm1991, %v9138, 0.0
        %v9636 = vadd.f32 %v9634, %v9635
        %v9637 = vsel %vm1991, %v9144, 0.0
        %v9638 = vadd.f32 %v9636, %v9637
        %v9639 = vsel %vm1991, %v9150, 0.0
        %v9640 = vadd.f32 %v9638, %v9639
        %v9641 = vsel %vm1991, %v9156, 0.0
        %v9642 = vadd.f32 %v9640, %v9641
        %v9643 = vsel %vm1991, %v9162, 0.0
        %v9644 = vadd.f32 %v9642, %v9643
        %v9645 = vsel %vm1991, %v9168, 0.0
        %v9646 = vadd.f32 %v9644, %v9645
        %v9647 = vsel %vm1991, %v9174, 0.0
        %v9648 = vadd.f32 %v9646, %v9647
        %v9649 = vsel %vm1991, %v9180, 0.0
        %v9650 = vadd.f32 %v9648, %v9649
        %v9651 = vsel %vm1991, %v9186, 0.0
        %v9652 = vadd.f32 %v9650, %v9651
        %v9653 = vsel %vm1991, %v9192, 0.0
        %v9654 = vadd.f32 %v9652, %v9653
        %v9655 = vsel %vm1991, %v9198, 0.0
        %v9656 = vadd.f32 %v9654, %v9655
        %v9657 = vsel %vm1991, %v9204, 0.0
        %v9658 = vadd.f32 %v9656, %v9657
        %v9659 = vsel %vm1991, %v9210, 0.0
        %v9660 = vadd.f32 %v9658, %v9659
        %v9661 = vsel %vm1991, %v9216, 0.0
        %v9662 = vadd.f32 %v9660, %v9661
        %v9663 = vsel %vm1991, %v9222, 0.0
        %v9664 = vadd.f32 %v9662, %v9663
        %v9665 = vsel %vm1991, %v9228, 0.0
        %v9666 = vadd.f32 %v9664, %v9665
        %v9667 = vsel %vm1991, %v9234, 0.0
        %v9668 = vadd.f32 %v9666, %v9667
        %v9669 = vsel %vm1991, %v9240, 0.0
        %v9670 = vadd.f32 %v9668, %v9669
        %v9671 = vsel %vm1991, %v9246, 0.0
        %v9672 = vadd.f32 %v9670, %v9671
        %v9673 = vsel %vm1991, %v9252, 0.0
        %v9674 = vadd.f32 %v9672, %v9673
        %v9675 = vsel %vm1991, %v9258, 0.0
        %v9676 = vadd.f32 %v9674, %v9675
        %v9677 = vsel %vm1991, %v9264, 0.0
        %v9678 = vadd.f32 %v9676, %v9677
        %v9679 = vsel %vm1991, %v9270, 0.0
        %v9680 = vadd.f32 %v9678, %v9679
        %v9681 = vsel %vm1991, %v9276, 0.0
        %v9682 = vadd.f32 %v9680, %v9681
        %v9683 = vsel %vm1991, %v9282, 0.0
        %v9684 = vadd.f32 %v9682, %v9683
        %v9685 = vsel %vm1991, %v9288, 0.0
        %v9686 = vadd.f32 %v9684, %v9685
        %v9687 = vsel %vm1991, %v9294, 0.0
        %v9688 = vadd.f32 %v9686, %v9687
        %v9689 = vsel %vm1991, %v9300, 0.0
        %v9690 = vadd.f32 %v9688, %v9689
        %v9691 = vsel %vm1991, %v9306, 0.0
        %v9692 = vadd.f32 %v9690, %v9691
        %v9693 = vsel %vm1991, %v9312, 0.0
        %v9694 = vadd.f32 %v9692, %v9693
        %v9695 = vsel %vm1991, %v9318, 0.0
        %v9696 = vadd.f32 %v9694, %v9695
        %9697 = vrot.lane.b32.xlu0 %v2055, 127
        %v9698 = vpop.permute.xlu0 %9697
        %9699 = vrot.lane.b32.xlu0 %v2056, 127
        %v9700 = vpop.permute.xlu0 %9699
        %9701 = vrot.lane.b32.xlu0 %v2057, 127
        %v9702 = vpop.permute.xlu0 %9701
        %9703 = vrot.lane.b32.xlu0 %v2058, 127
        %v9704 = vpop.permute.xlu0 %9703
        %9705 = vrot.lane.b32.xlu0 %v2059, 127
        %v9706 = vpop.permute.xlu0 %9705
        %9707 = vrot.lane.b32.xlu0 %v2060, 127
        %v9708 = vpop.permute.xlu0 %9707
        %v9709 = vsel %vm2128, %v9698, %v9700
        %v9710 = vsel %vm2128, %v9702, %v9704
        %v9711 = vsel %vm2128, %v9706, %v9708
        %v9718 = vmul.f32 %v2055, %v9709
        %v9719 = vmul.f32 %v2056, %v9700
        %v9720 = vmul.f32 %v2057, %v9710
        %v9721 = vmul.f32 %v2058, %v9704
        %v9722 = vmul.f32 %v2059, %v9711
        %v9723 = vmul.f32 %v2060, %v9708
        %v9724 = vrsqrt.pop %v9718
        %v9725 = vrsqrt.pop %v9719
        %v9726 = vrsqrt.pop %v9720
        %v9727 = vrsqrt.pop %v9721
        %v9728 = vrsqrt.pop %v9722
        %v9729 = vrsqrt.pop %v9723
        %v9730 = vmul.f32 %v9381, %v9724
        %v9731 = vmul.f32 %v9444, %v9725
        %v9732 = vmul.f32 %v9507, %v9726
        %v9733 = vmul.f32 %v9570, %v9727
        %v9734 = vmul.f32 %v9633, %v9728
        %v9735 = vmul.f32 %v9696, %v9729
        %9736 = vrot.lane.b32.xlu0 %v3079, 2
        %v9737 = vpop.permute.xlu0 %9736
        %9738 = vrot.lane.b32.xlu0 %v3081, 2
        %v9739 = vpop.permute.xlu0 %9738
        %9740 = vrot.lane.b32.xlu0 %v3080, 2
        %v9741 = vpop.permute.xlu0 %9740
        %vm9742 = vcmp.eq.s32.totalorder %v209, %v9737
        %vm9743 = vcmp.eq.s32.totalorder %v210, %v9737
        %vm9744 = vcmp.eq.s32.totalorder %v211, %v9739
        %vm9745 = vcmp.eq.s32.totalorder %v212, %v9739
        %vm9746 = vcmp.eq.s32.totalorder %v213, %v9741
        %vm9747 = vcmp.eq.s32.totalorder %v214, %v9741
        %9748 = vrot.lane.b32.xlu0 %v3085, 2
        %v9749 = vpop.permute.xlu0 %9748
        %9750 = vrot.lane.b32.xlu0 %v3087, 2
        %v9751 = vpop.permute.xlu0 %9750
        %9752 = vrot.lane.b32.xlu0 %v3086, 2
        %v9753 = vpop.permute.xlu0 %9752
        %vm9754 = vcmp.ne.s32.totalorder %v9749, 0
        %vm9755 = vcmp.ne.s32.totalorder %v9751, 0
        %vm9756 = vcmp.ne.s32.totalorder %v9753, 0
        %vm9757 = vmand %vm9742, %vm9754
        %vm9758 = vmand %vm9743, %vm9754
        %vm9759 = vmand %vm9744, %vm9755
        %vm9760 = vmand %vm9745, %vm9755
        %vm9761 = vmand %vm9746, %vm9756
        %vm9762 = vmand %vm9747, %vm9756
        %v9763 = vadd.f32 %v8352, %v9730
        %v9764 = vadd.f32 %v8353, %v9731
        %v9765 = vadd.f32 %v8354, %v9732
        %v9766 = vadd.f32 %v8355, %v9733
        %v9767 = vadd.f32 %v8356, %v9734
        %v9768 = vadd.f32 %v8357, %v9735
        %9775 = vrot.lane.b32.xlu0 %v9730, 1
        %v9776 = vpop.permute.xlu0 %9775
        %9777 = vrot.lane.b32.xlu0 %v9731, 1
        %v9778 = vpop.permute.xlu0 %9777
        %9779 = vrot.lane.b32.xlu0 %v9732, 1
        %v9780 = vpop.permute.xlu0 %9779
        %9781 = vrot.lane.b32.xlu0 %v9733, 1
        %v9782 = vpop.permute.xlu0 %9781
        %9783 = vrot.lane.b32.xlu0 %v9734, 1
        %v9784 = vpop.permute.xlu0 %9783
        %9785 = vrot.lane.b32.xlu0 %v9735, 1
        %v9786 = vpop.permute.xlu0 %9785
        %v9787 = vsel %vm1863, %v9776, %v9778
        %v9788 = vsel %vm1863, %v9780, %v9782
        %v9789 = vsel %vm1863, %v9784, %v9786
        %v9796 = vsel %vm9757, %v9776, 0.0
        %v9797 = vsel %vm9758, %v9787, 0.0
        %v9798 = vsel %vm9759, %v9780, 0.0
        %v9799 = vsel %vm9760, %v9788, 0.0
        %v9800 = vsel %vm9761, %v9784, 0.0
        %v9801 = vsel %vm9762, %v9789, 0.0
        %v9808 = vrot.slane %v9796, 1
        %v9809 = vrot.slane %v9798, 1
        %v9810 = vsel %vm2109, %v9808, %v9809
        %v9811 = vrot.slane %v9797, 1
        %v9812 = vrot.slane %v9799, 1
        %v9813 = vsel %vm2109, %v9811, %v9812
        %v9814 = vrot.slane %v9800, 1
        %v9815 = vsel %vm2109, %v9809, %v9814
        %v9816 = vrot.slane %v9801, 1
        %v9817 = vsel %vm2109, %v9812, %v9816
        %9818 = vrot.lane.b32.xlu0 %v9810, 126
        %v9819 = vpop.permute.xlu0 %9818
        %9820 = vrot.lane.b32.xlu0 %v9813, 126
        %v9821 = vpop.permute.xlu0 %9820
        %9822 = vrot.lane.b32.xlu0 %v9815, 126
        %v9823 = vpop.permute.xlu0 %9822
        %9824 = vrot.lane.b32.xlu0 %v9817, 126
        %v9825 = vpop.permute.xlu0 %9824
        %v9826 = vsel %vm8404, %v9819, %v9821
        %v9827 = vsel %vm8404, %v9823, %v9825
        %v9830 = vadd.f32 %v9826, %v9827
        %9831 = vadd.xlane.f32.xlu0 %v9830
        %v9832 = vpop.xlane.xlu0 %9831
        %v9833 = vrot.slane %v9832, 4
        %v9834 = vadd.f32 %v9832, %v9833
        %v9835 = vrot.slane %v9834, 2
        %v9836 = vadd.f32 %v9834, %v9835
        %v9837 = vrot.slane %v9836, 1
        %v9838 = vadd.f32 %v9836, %v9837
        %s9839 = vtos %v9838
        %s9840 = sadd.f32 %s8419, %s9839
        %v9841 = vsel %vm9757, 1, 0
        %v9842 = vsel %vm9758, 1, 0
        %v9843 = vsel %vm9759, 1, 0
        %v9844 = vsel %vm9760, 1, 0
        %v9845 = vsel %vm9761, 1, 0
        %v9846 = vsel %vm9762, 1, 0
        %v9847 = vcvt.s32.f32 %v9841
        %v9848 = vcvt.s32.f32 %v9842
        %v9849 = vcvt.s32.f32 %v9843
        %v9850 = vcvt.s32.f32 %v9844
        %v9851 = vcvt.s32.f32 %v9845
        %v9852 = vcvt.s32.f32 %v9846
        %v9859 = vrot.slane %v9847, 1
        %v9860 = vrot.slane %v9849, 1
        %v9861 = vsel %vm2109, %v9859, %v9860
        %v9862 = vrot.slane %v9848, 1
        %v9863 = vrot.slane %v9850, 1
        %v9864 = vsel %vm2109, %v9862, %v9863
        %v9865 = vrot.slane %v9851, 1
        %v9866 = vsel %vm2109, %v9860, %v9865
        %v9867 = vrot.slane %v9852, 1
        %v9868 = vsel %vm2109, %v9863, %v9867
        %9869 = vrot.lane.b32.xlu0 %v9861, 126
        %v9870 = vpop.permute.xlu0 %9869
        %9871 = vrot.lane.b32.xlu0 %v9864, 126
        %v9872 = vpop.permute.xlu0 %9871
        %9873 = vrot.lane.b32.xlu0 %v9866, 126
        %v9874 = vpop.permute.xlu0 %9873
        %9875 = vrot.lane.b32.xlu0 %v9868, 126
        %v9876 = vpop.permute.xlu0 %9875
        %v9877 = vsel %vm8404, %v9870, %v9872
        %v9878 = vsel %vm8404, %v9874, %v9876
        %v9881 = vadd.f32 %v9877, %v9878
        %9882 = vadd.xlane.f32.xlu0 %v9881
        %v9883 = vpop.xlane.xlu0 %9882
        %v9884 = vrot.slane %v9883, 4
        %v9885 = vadd.f32 %v9883, %v9884
        %v9886 = vrot.slane %v9885, 2
        %v9887 = vadd.f32 %v9885, %v9886
        %v9888 = vrot.slane %v9887, 1
        %v9889 = vadd.f32 %v9887, %v9888
        %s9890 = vtos %v9889
        %s9891 = sadd.f32 %s8454, %s9890
        %9892 = vrot.lane.b32.xlu0 %v3177, 127
        %v9893 = vpop.permute.xlu0 %9892
        %9894 = vrot.lane.b32.xlu0 %v5952, 127
        %v9895 = vpop.permute.xlu0 %9894
        %9896 = vrot.lane.b32.xlu0 %v3179, 127
        %v9897 = vpop.permute.xlu0 %9896
        %9898 = vrot.lane.b32.xlu0 %v5954, 127
        %v9899 = vpop.permute.xlu0 %9898
        %9900 = vrot.lane.b32.xlu0 %v3178, 127
        %v9901 = vpop.permute.xlu0 %9900
        %9902 = vrot.lane.b32.xlu0 %v5953, 127
        %v9903 = vpop.permute.xlu0 %9902
        %9904 = vrot.lane.b32.xlu0 %v3182, 127
        %v9905 = vpop.permute.xlu0 %9904
        %9906 = vrot.lane.b32.xlu0 %v5957, 127
        %v9907 = vpop.permute.xlu0 %9906
        %9908 = vrot.lane.b32.xlu0 %v3184, 127
        %v9909 = vpop.permute.xlu0 %9908
        %9910 = vrot.lane.b32.xlu0 %v5959, 127
        %v9911 = vpop.permute.xlu0 %9910
        %9912 = vrot.lane.b32.xlu0 %v3183, 127
        %v9913 = vpop.permute.xlu0 %9912
        %9914 = vrot.lane.b32.xlu0 %v5958, 127
        %v9915 = vpop.permute.xlu0 %9914
        %9916 = vrot.lane.b32.xlu0 %v3187, 127
        %v9917 = vpop.permute.xlu0 %9916
        %9918 = vrot.lane.b32.xlu0 %v5962, 127
        %v9919 = vpop.permute.xlu0 %9918
        %9920 = vrot.lane.b32.xlu0 %v3189, 127
        %v9921 = vpop.permute.xlu0 %9920
        %9922 = vrot.lane.b32.xlu0 %v5964, 127
        %v9923 = vpop.permute.xlu0 %9922
        %9924 = vrot.lane.b32.xlu0 %v3188, 127
        %v9925 = vpop.permute.xlu0 %9924
        %9926 = vrot.lane.b32.xlu0 %v5963, 127
        %v9927 = vpop.permute.xlu0 %9926
        %9928 = vrot.lane.b32.xlu0 %v3192, 127
        %v9929 = vpop.permute.xlu0 %9928
        %9930 = vrot.lane.b32.xlu0 %v5967, 127
        %v9931 = vpop.permute.xlu0 %9930
        %9932 = vrot.lane.b32.xlu0 %v3194, 127
        %v9933 = vpop.permute.xlu0 %9932
        %9934 = vrot.lane.b32.xlu0 %v5969, 127
        %v9935 = vpop.permute.xlu0 %9934
        %9936 = vrot.lane.b32.xlu0 %v3193, 127
        %v9937 = vpop.permute.xlu0 %9936
        %9938 = vrot.lane.b32.xlu0 %v5968, 127
        %v9939 = vpop.permute.xlu0 %9938
        %9940 = vrot.lane.b32.xlu0 %v3197, 127
        %v9941 = vpop.permute.xlu0 %9940
        %9942 = vrot.lane.b32.xlu0 %v5972, 127
        %v9943 = vpop.permute.xlu0 %9942
        %9944 = vrot.lane.b32.xlu0 %v3199, 127
        %v9945 = vpop.permute.xlu0 %9944
        %9946 = vrot.lane.b32.xlu0 %v5974, 127
        %v9947 = vpop.permute.xlu0 %9946
        %9948 = vrot.lane.b32.xlu0 %v3198, 127
        %v9949 = vpop.permute.xlu0 %9948
        %9950 = vrot.lane.b32.xlu0 %v5973, 127
        %v9951 = vpop.permute.xlu0 %9950
        %9952 = vrot.lane.b32.xlu0 %v3202, 127
        %v9953 = vpop.permute.xlu0 %9952
        %9954 = vrot.lane.b32.xlu0 %v5977, 127
        %v9955 = vpop.permute.xlu0 %9954
        %9956 = vrot.lane.b32.xlu0 %v3204, 127
        %v9957 = vpop.permute.xlu0 %9956
        %9958 = vrot.lane.b32.xlu0 %v5979, 127
        %v9959 = vpop.permute.xlu0 %9958
        %9960 = vrot.lane.b32.xlu0 %v3203, 127
        %v9961 = vpop.permute.xlu0 %9960
        %9962 = vrot.lane.b32.xlu0 %v5978, 127
        %v9963 = vpop.permute.xlu0 %9962
        %9964 = vrot.lane.b32.xlu0 %v3207, 127
        %v9965 = vpop.permute.xlu0 %9964
        %9966 = vrot.lane.b32.xlu0 %v5982, 127
        %v9967 = vpop.permute.xlu0 %9966
        %9968 = vrot.lane.b32.xlu0 %v3209, 127
        %v9969 = vpop.permute.xlu0 %9968
        %9970 = vrot.lane.b32.xlu0 %v5984, 127
        %v9971 = vpop.permute.xlu0 %9970
        %9972 = vrot.lane.b32.xlu0 %v3208, 127
        %v9973 = vpop.permute.xlu0 %9972
        %9974 = vrot.lane.b32.xlu0 %v5983, 127
        %v9975 = vpop.permute.xlu0 %9974
        %9976 = vrot.lane.b32.xlu0 %v3212, 127
        %v9977 = vpop.permute.xlu0 %9976
        %9978 = vrot.lane.b32.xlu0 %v5987, 127
        %v9979 = vpop.permute.xlu0 %9978
        %9980 = vrot.lane.b32.xlu0 %v3214, 127
        %v9981 = vpop.permute.xlu0 %9980
        %9982 = vrot.lane.b32.xlu0 %v5989, 127
        %v9983 = vpop.permute.xlu0 %9982
        %9984 = vrot.lane.b32.xlu0 %v3213, 127
        %v9985 = vpop.permute.xlu0 %9984
        %9986 = vrot.lane.b32.xlu0 %v5988, 127
        %v9987 = vpop.permute.xlu0 %9986
        %9988 = vrot.lane.b32.xlu0 %v3217, 127
        %v9989 = vpop.permute.xlu0 %9988
        %9990 = vrot.lane.b32.xlu0 %v5992, 127
        %v9991 = vpop.permute.xlu0 %9990
        %9992 = vrot.lane.b32.xlu0 %v3219, 127
        %v9993 = vpop.permute.xlu0 %9992
        %9994 = vrot.lane.b32.xlu0 %v5994, 127
        %v9995 = vpop.permute.xlu0 %9994
        %9996 = vrot.lane.b32.xlu0 %v3218, 127
        %v9997 = vpop.permute.xlu0 %9996
        %9998 = vrot.lane.b32.xlu0 %v5993, 127
        %v9999 = vpop.permute.xlu0 %9998
        %10000 = vrot.lane.b32.xlu0 %v3222, 127
        %v10001 = vpop.permute.xlu0 %10000
        %10002 = vrot.lane.b32.xlu0 %v5997, 127
        %v10003 = vpop.permute.xlu0 %10002
        %10004 = vrot.lane.b32.xlu0 %v3224, 127
        %v10005 = vpop.permute.xlu0 %10004
        %10006 = vrot.lane.b32.xlu0 %v5999, 127
        %v10007 = vpop.permute.xlu0 %10006
        %10008 = vrot.lane.b32.xlu0 %v3223, 127
        %v10009 = vpop.permute.xlu0 %10008
        %10010 = vrot.lane.b32.xlu0 %v5998, 127
        %v10011 = vpop.permute.xlu0 %10010
        %10012 = vrot.lane.b32.xlu0 %v3227, 127
        %v10013 = vpop.permute.xlu0 %10012
        %10014 = vrot.lane.b32.xlu0 %v6002, 127
        %v10015 = vpop.permute.xlu0 %10014
        %10016 = vrot.lane.b32.xlu0 %v3229, 127
        %v10017 = vpop.permute.xlu0 %10016
        %10018 = vrot.lane.b32.xlu0 %v6004, 127
        %v10019 = vpop.permute.xlu0 %10018
        %10020 = vrot.lane.b32.xlu0 %v3228, 127
        %v10021 = vpop.permute.xlu0 %10020
        %10022 = vrot.lane.b32.xlu0 %v6003, 127
        %v10023 = vpop.permute.xlu0 %10022
        %10024 = vrot.lane.b32.xlu0 %v3232, 127
        %v10025 = vpop.permute.xlu0 %10024
        %10026 = vrot.lane.b32.xlu0 %v6007, 127
        %v10027 = vpop.permute.xlu0 %10026
        %10028 = vrot.lane.b32.xlu0 %v3234, 127
        %v10029 = vpop.permute.xlu0 %10028
        %10030 = vrot.lane.b32.xlu0 %v6009, 127
        %v10031 = vpop.permute.xlu0 %10030
        %10032 = vrot.lane.b32.xlu0 %v3233, 127
        %v10033 = vpop.permute.xlu0 %10032
        %10034 = vrot.lane.b32.xlu0 %v6008, 127
        %v10035 = vpop.permute.xlu0 %10034
        %10036 = vrot.lane.b32.xlu0 %v3237, 127
        %v10037 = vpop.permute.xlu0 %10036
        %10038 = vrot.lane.b32.xlu0 %v6012, 127
        %v10039 = vpop.permute.xlu0 %10038
        %10040 = vrot.lane.b32.xlu0 %v3239, 127
        %v10041 = vpop.permute.xlu0 %10040
        %10042 = vrot.lane.b32.xlu0 %v6014, 127
        %v10043 = vpop.permute.xlu0 %10042
        %10044 = vrot.lane.b32.xlu0 %v3238, 127
        %v10045 = vpop.permute.xlu0 %10044
        %10046 = vrot.lane.b32.xlu0 %v6013, 127
        %v10047 = vpop.permute.xlu0 %10046
        %10048 = vrot.lane.b32.xlu0 %v3242, 127
        %v10049 = vpop.permute.xlu0 %10048
        %10050 = vrot.lane.b32.xlu0 %v6017, 127
        %v10051 = vpop.permute.xlu0 %10050
        %10052 = vrot.lane.b32.xlu0 %v3244, 127
        %v10053 = vpop.permute.xlu0 %10052
        %10054 = vrot.lane.b32.xlu0 %v6019, 127
        %v10055 = vpop.permute.xlu0 %10054
        %10056 = vrot.lane.b32.xlu0 %v3243, 127
        %v10057 = vpop.permute.xlu0 %10056
        %10058 = vrot.lane.b32.xlu0 %v6018, 127
        %v10059 = vpop.permute.xlu0 %10058
        %10060 = vrot.lane.b32.xlu0 %v3247, 127
        %v10061 = vpop.permute.xlu0 %10060
        %10062 = vrot.lane.b32.xlu0 %v6022, 127
        %v10063 = vpop.permute.xlu0 %10062
        %10064 = vrot.lane.b32.xlu0 %v3249, 127
        %v10065 = vpop.permute.xlu0 %10064
        %10066 = vrot.lane.b32.xlu0 %v6024, 127
        %v10067 = vpop.permute.xlu0 %10066
        %10068 = vrot.lane.b32.xlu0 %v3248, 127
        %v10069 = vpop.permute.xlu0 %10068
        %10070 = vrot.lane.b32.xlu0 %v6023, 127
        %v10071 = vpop.permute.xlu0 %10070
        %10072 = vrot.lane.b32.xlu0 %v3252, 127
        %v10073 = vpop.permute.xlu0 %10072
        %10074 = vrot.lane.b32.xlu0 %v6027, 127
        %v10075 = vpop.permute.xlu0 %10074
        %10076 = vrot.lane.b32.xlu0 %v3254, 127
        %v10077 = vpop.permute.xlu0 %10076
        %10078 = vrot.lane.b32.xlu0 %v6029, 127
        %v10079 = vpop.permute.xlu0 %10078
        %10080 = vrot.lane.b32.xlu0 %v3253, 127
        %v10081 = vpop.permute.xlu0 %10080
        %10082 = vrot.lane.b32.xlu0 %v6028, 127
        %v10083 = vpop.permute.xlu0 %10082
        %10084 = vrot.lane.b32.xlu0 %v3257, 127
        %v10085 = vpop.permute.xlu0 %10084
        %10086 = vrot.lane.b32.xlu0 %v6032, 127
        %v10087 = vpop.permute.xlu0 %10086
        %10088 = vrot.lane.b32.xlu0 %v3259, 127
        %v10089 = vpop.permute.xlu0 %10088
        %10090 = vrot.lane.b32.xlu0 %v6034, 127
        %v10091 = vpop.permute.xlu0 %10090
        %10092 = vrot.lane.b32.xlu0 %v3258, 127
        %v10093 = vpop.permute.xlu0 %10092
        %10094 = vrot.lane.b32.xlu0 %v6033, 127
        %v10095 = vpop.permute.xlu0 %10094
        %10096 = vrot.lane.b32.xlu0 %v3262, 127
        %v10097 = vpop.permute.xlu0 %10096
        %10098 = vrot.lane.b32.xlu0 %v6037, 127
        %v10099 = vpop.permute.xlu0 %10098
        %10100 = vrot.lane.b32.xlu0 %v3264, 127
        %v10101 = vpop.permute.xlu0 %10100
        %10102 = vrot.lane.b32.xlu0 %v6039, 127
        %v10103 = vpop.permute.xlu0 %10102
        %10104 = vrot.lane.b32.xlu0 %v3263, 127
        %v10105 = vpop.permute.xlu0 %10104
        %10106 = vrot.lane.b32.xlu0 %v6038, 127
        %v10107 = vpop.permute.xlu0 %10106
        %10108 = vrot.lane.b32.xlu0 %v3267, 127
        %v10109 = vpop.permute.xlu0 %10108
        %10110 = vrot.lane.b32.xlu0 %v6042, 127
        %v10111 = vpop.permute.xlu0 %10110
        %10112 = vrot.lane.b32.xlu0 %v3269, 127
        %v10113 = vpop.permute.xlu0 %10112
        %10114 = vrot.lane.b32.xlu0 %v6044, 127
        %v10115 = vpop.permute.xlu0 %10114
        %10116 = vrot.lane.b32.xlu0 %v3268, 127
        %v10117 = vpop.permute.xlu0 %10116
        %10118 = vrot.lane.b32.xlu0 %v6043, 127
        %v10119 = vpop.permute.xlu0 %10118
        %10120 = vrot.lane.b32.xlu0 %v3272, 127
        %v10121 = vpop.permute.xlu0 %10120
        %10122 = vrot.lane.b32.xlu0 %v6047, 127
        %v10123 = vpop.permute.xlu0 %10122
        %10124 = vrot.lane.b32.xlu0 %v3274, 127
        %v10125 = vpop.permute.xlu0 %10124
        %10126 = vrot.lane.b32.xlu0 %v6049, 127
        %v10127 = vpop.permute.xlu0 %10126
        %10128 = vrot.lane.b32.xlu0 %v3273, 127
        %v10129 = vpop.permute.xlu0 %10128
        %10130 = vrot.lane.b32.xlu0 %v6048, 127
        %v10131 = vpop.permute.xlu0 %10130
        %10132 = vrot.lane.b32.xlu0 %v3277, 127
        %v10133 = vpop.permute.xlu0 %10132
        %10134 = vrot.lane.b32.xlu0 %v6052, 127
        %v10135 = vpop.permute.xlu0 %10134
        %10136 = vrot.lane.b32.xlu0 %v3279, 127
        %v10137 = vpop.permute.xlu0 %10136
        %10138 = vrot.lane.b32.xlu0 %v6054, 127
        %v10139 = vpop.permute.xlu0 %10138
        %10140 = vrot.lane.b32.xlu0 %v3278, 127
        %v10141 = vpop.permute.xlu0 %10140
        %10142 = vrot.lane.b32.xlu0 %v6053, 127
        %v10143 = vpop.permute.xlu0 %10142
        %10144 = vrot.lane.b32.xlu0 %v3282, 127
        %v10145 = vpop.permute.xlu0 %10144
        %10146 = vrot.lane.b32.xlu0 %v6057, 127
        %v10147 = vpop.permute.xlu0 %10146
        %10148 = vrot.lane.b32.xlu0 %v3284, 127
        %v10149 = vpop.permute.xlu0 %10148
        %10150 = vrot.lane.b32.xlu0 %v6059, 127
        %v10151 = vpop.permute.xlu0 %10150
        %10152 = vrot.lane.b32.xlu0 %v3283, 127
        %v10153 = vpop.permute.xlu0 %10152
        %10154 = vrot.lane.b32.xlu0 %v6058, 127
        %v10155 = vpop.permute.xlu0 %10154
        %10156 = vrot.lane.b32.xlu0 %v3287, 127
        %v10157 = vpop.permute.xlu0 %10156
        %10158 = vrot.lane.b32.xlu0 %v6062, 127
        %v10159 = vpop.permute.xlu0 %10158
        %10160 = vrot.lane.b32.xlu0 %v3289, 127
        %v10161 = vpop.permute.xlu0 %10160
        %10162 = vrot.lane.b32.xlu0 %v6064, 127
        %v10163 = vpop.permute.xlu0 %10162
        %10164 = vrot.lane.b32.xlu0 %v3288, 127
        %v10165 = vpop.permute.xlu0 %10164
        %10166 = vrot.lane.b32.xlu0 %v6063, 127
        %v10167 = vpop.permute.xlu0 %10166
        %10168 = vrot.lane.b32.xlu0 %v3292, 127
        %v10169 = vpop.permute.xlu0 %10168
        %10170 = vrot.lane.b32.xlu0 %v6067, 127
        %v10171 = vpop.permute.xlu0 %10170
        %10172 = vrot.lane.b32.xlu0 %v3294, 127
        %v10173 = vpop.permute.xlu0 %10172
        %10174 = vrot.lane.b32.xlu0 %v6069, 127
        %v10175 = vpop.permute.xlu0 %10174
        %10176 = vrot.lane.b32.xlu0 %v3293, 127
        %v10177 = vpop.permute.xlu0 %10176
        %10178 = vrot.lane.b32.xlu0 %v6068, 127
        %v10179 = vpop.permute.xlu0 %10178
        %10180 = vrot.lane.b32.xlu0 %v3297, 127
        %v10181 = vpop.permute.xlu0 %10180
        %10182 = vrot.lane.b32.xlu0 %v6072, 127
        %v10183 = vpop.permute.xlu0 %10182
        %10184 = vrot.lane.b32.xlu0 %v3299, 127
        %v10185 = vpop.permute.xlu0 %10184
        %10186 = vrot.lane.b32.xlu0 %v6074, 127
        %v10187 = vpop.permute.xlu0 %10186
        %10188 = vrot.lane.b32.xlu0 %v3298, 127
        %v10189 = vpop.permute.xlu0 %10188
        %10190 = vrot.lane.b32.xlu0 %v6073, 127
        %v10191 = vpop.permute.xlu0 %10190
        %10192 = vrot.lane.b32.xlu0 %v3302, 127
        %v10193 = vpop.permute.xlu0 %10192
        %10194 = vrot.lane.b32.xlu0 %v6077, 127
        %v10195 = vpop.permute.xlu0 %10194
        %10196 = vrot.lane.b32.xlu0 %v3304, 127
        %v10197 = vpop.permute.xlu0 %10196
        %10198 = vrot.lane.b32.xlu0 %v6079, 127
        %v10199 = vpop.permute.xlu0 %10198
        %10200 = vrot.lane.b32.xlu0 %v3303, 127
        %v10201 = vpop.permute.xlu0 %10200
        %10202 = vrot.lane.b32.xlu0 %v6078, 127
        %v10203 = vpop.permute.xlu0 %10202
        %10204 = vrot.lane.b32.xlu0 %v3307, 127
        %v10205 = vpop.permute.xlu0 %10204
        %10206 = vrot.lane.b32.xlu0 %v6082, 127
        %v10207 = vpop.permute.xlu0 %10206
        %10208 = vrot.lane.b32.xlu0 %v3309, 127
        %v10209 = vpop.permute.xlu0 %10208
        %10210 = vrot.lane.b32.xlu0 %v6084, 127
        %v10211 = vpop.permute.xlu0 %10210
        %10212 = vrot.lane.b32.xlu0 %v3308, 127
        %v10213 = vpop.permute.xlu0 %10212
        %10214 = vrot.lane.b32.xlu0 %v6083, 127
        %v10215 = vpop.permute.xlu0 %10214
        %10216 = vrot.lane.b32.xlu0 %v3312, 127
        %v10217 = vpop.permute.xlu0 %10216
        %10218 = vrot.lane.b32.xlu0 %v6087, 127
        %v10219 = vpop.permute.xlu0 %10218
        %10220 = vrot.lane.b32.xlu0 %v3314, 127
        %v10221 = vpop.permute.xlu0 %10220
        %10222 = vrot.lane.b32.xlu0 %v6089, 127
        %v10223 = vpop.permute.xlu0 %10222
        %10224 = vrot.lane.b32.xlu0 %v3313, 127
        %v10225 = vpop.permute.xlu0 %10224
        %10226 = vrot.lane.b32.xlu0 %v6088, 127
        %v10227 = vpop.permute.xlu0 %10226
        %10228 = vrot.lane.b32.xlu0 %v3317, 127
        %v10229 = vpop.permute.xlu0 %10228
        %10230 = vrot.lane.b32.xlu0 %v6092, 127
        %v10231 = vpop.permute.xlu0 %10230
        %10232 = vrot.lane.b32.xlu0 %v3319, 127
        %v10233 = vpop.permute.xlu0 %10232
        %10234 = vrot.lane.b32.xlu0 %v6094, 127
        %v10235 = vpop.permute.xlu0 %10234
        %10236 = vrot.lane.b32.xlu0 %v3318, 127
        %v10237 = vpop.permute.xlu0 %10236
        %10238 = vrot.lane.b32.xlu0 %v6093, 127
        %v10239 = vpop.permute.xlu0 %10238
        %10240 = vrot.lane.b32.xlu0 %v3322, 127
        %v10241 = vpop.permute.xlu0 %10240
        %10242 = vrot.lane.b32.xlu0 %v6097, 127
        %v10243 = vpop.permute.xlu0 %10242
        %10244 = vrot.lane.b32.xlu0 %v3324, 127
        %v10245 = vpop.permute.xlu0 %10244
        %10246 = vrot.lane.b32.xlu0 %v6099, 127
        %v10247 = vpop.permute.xlu0 %10246
        %10248 = vrot.lane.b32.xlu0 %v3323, 127
        %v10249 = vpop.permute.xlu0 %10248
        %10250 = vrot.lane.b32.xlu0 %v6098, 127
        %v10251 = vpop.permute.xlu0 %10250
        %10252 = vrot.lane.b32.xlu0 %v3327, 127
        %v10253 = vpop.permute.xlu0 %10252
        %10254 = vrot.lane.b32.xlu0 %v6102, 127
        %v10255 = vpop.permute.xlu0 %10254
        %10256 = vrot.lane.b32.xlu0 %v3329, 127
        %v10257 = vpop.permute.xlu0 %10256
        %10258 = vrot.lane.b32.xlu0 %v6104, 127
        %v10259 = vpop.permute.xlu0 %10258
        %10260 = vrot.lane.b32.xlu0 %v3328, 127
        %v10261 = vpop.permute.xlu0 %10260
        %10262 = vrot.lane.b32.xlu0 %v6103, 127
        %v10263 = vpop.permute.xlu0 %10262
        %10264 = vrot.lane.b32.xlu0 %v3332, 127
        %v10265 = vpop.permute.xlu0 %10264
        %10266 = vrot.lane.b32.xlu0 %v6107, 127
        %v10267 = vpop.permute.xlu0 %10266
        %10268 = vrot.lane.b32.xlu0 %v3334, 127
        %v10269 = vpop.permute.xlu0 %10268
        %10270 = vrot.lane.b32.xlu0 %v6109, 127
        %v10271 = vpop.permute.xlu0 %10270
        %10272 = vrot.lane.b32.xlu0 %v3333, 127
        %v10273 = vpop.permute.xlu0 %10272
        %10274 = vrot.lane.b32.xlu0 %v6108, 127
        %v10275 = vpop.permute.xlu0 %10274
        %v10276 = vsel %vm2128, %v9893, %v9895
        %v10277 = vsel %vm2128, %v9897, %v9899
        %v10278 = vsel %vm2128, %v9901, %v9903
        %v10279 = vsel %vm2128, %v9905, %v9907
        %v10280 = vsel %vm2128, %v9909, %v9911
        %v10281 = vsel %vm2128, %v9913, %v9915
        %v10282 = vsel %vm2128, %v9917, %v9919
        %v10283 = vsel %vm2128, %v9921, %v9923
        %v10284 = vsel %vm2128, %v9925, %v9927
        %v10285 = vsel %vm2128, %v9929, %v9931
        %v10286 = vsel %vm2128, %v9933, %v9935
        %v10287 = vsel %vm2128, %v9937, %v9939
        %v10288 = vsel %vm2128, %v9941, %v9943
        %v10289 = vsel %vm2128, %v9945, %v9947
        %v10290 = vsel %vm2128, %v9949, %v9951
        %v10291 = vsel %vm2128, %v9953, %v9955
        %v10292 = vsel %vm2128, %v9957, %v9959
        %v10293 = vsel %vm2128, %v9961, %v9963
        %v10294 = vsel %vm2128, %v9965, %v9967
        %v10295 = vsel %vm2128, %v9969, %v9971
        %v10296 = vsel %vm2128, %v9973, %v9975
        %v10297 = vsel %vm2128, %v9977, %v9979
        %v10298 = vsel %vm2128, %v9981, %v9983
        %v10299 = vsel %vm2128, %v9985, %v9987
        %v10300 = vsel %vm2128, %v9989, %v9991
        %v10301 = vsel %vm2128, %v9993, %v9995
        %v10302 = vsel %vm2128, %v9997, %v9999
        %v10303 = vsel %vm2128, %v10001, %v10003
        %v10304 = vsel %vm2128, %v10005, %v10007
        %v10305 = vsel %vm2128, %v10009, %v10011
        %v10306 = vsel %vm2128, %v10013, %v10015
        %v10307 = vsel %vm2128, %v10017, %v10019
        %v10308 = vsel %vm2128, %v10021, %v10023
        %v10309 = vsel %vm2128, %v10025, %v10027
        %v10310 = vsel %vm2128, %v10029, %v10031
        %v10311 = vsel %vm2128, %v10033, %v10035
        %v10312 = vsel %vm2128, %v10037, %v10039
        %v10313 = vsel %vm2128, %v10041, %v10043
        %v10314 = vsel %vm2128, %v10045, %v10047
        %v10315 = vsel %vm2128, %v10049, %v10051
        %v10316 = vsel %vm2128, %v10053, %v10055
        %v10317 = vsel %vm2128, %v10057, %v10059
        %v10318 = vsel %vm2128, %v10061, %v10063
        %v10319 = vsel %vm2128, %v10065, %v10067
        %v10320 = vsel %vm2128, %v10069, %v10071
        %v10321 = vsel %vm2128, %v10073, %v10075
        %v10322 = vsel %vm2128, %v10077, %v10079
        %v10323 = vsel %vm2128, %v10081, %v10083
        %v10324 = vsel %vm2128, %v10085, %v10087
        %v10325 = vsel %vm2128, %v10089, %v10091
        %v10326 = vsel %vm2128, %v10093, %v10095
        %v10327 = vsel %vm2128, %v10097, %v10099
        %v10328 = vsel %vm2128, %v10101, %v10103
        %v10329 = vsel %vm2128, %v10105, %v10107
        %v10330 = vsel %vm2128, %v10109, %v10111
        %v10331 = vsel %vm2128, %v10113, %v10115
        %v10332 = vsel %vm2128, %v10117, %v10119
        %v10333 = vsel %vm2128, %v10121, %v10123
        %v10334 = vsel %vm2128, %v10125, %v10127
        %v10335 = vsel %vm2128, %v10129, %v10131
        %v10336 = vsel %vm2128, %v10133, %v10135
        %v10337 = vsel %vm2128, %v10137, %v10139
        %v10338 = vsel %vm2128, %v10141, %v10143
        %v10339 = vsel %vm2128, %v10145, %v10147
        %v10340 = vsel %vm2128, %v10149, %v10151
        %v10341 = vsel %vm2128, %v10153, %v10155
        %v10342 = vsel %vm2128, %v10157, %v10159
        %v10343 = vsel %vm2128, %v10161, %v10163
        %v10344 = vsel %vm2128, %v10165, %v10167
        %v10345 = vsel %vm2128, %v10169, %v10171
        %v10346 = vsel %vm2128, %v10173, %v10175
        %v10347 = vsel %vm2128, %v10177, %v10179
        %v10348 = vsel %vm2128, %v10181, %v10183
        %v10349 = vsel %vm2128, %v10185, %v10187
        %v10350 = vsel %vm2128, %v10189, %v10191
        %v10351 = vsel %vm2128, %v10193, %v10195
        %v10352 = vsel %vm2128, %v10197, %v10199
        %v10353 = vsel %vm2128, %v10201, %v10203
        %v10354 = vsel %vm2128, %v10205, %v10207
        %v10355 = vsel %vm2128, %v10209, %v10211
        %v10356 = vsel %vm2128, %v10213, %v10215
        %v10357 = vsel %vm2128, %v10217, %v10219
        %v10358 = vsel %vm2128, %v10221, %v10223
        %v10359 = vsel %vm2128, %v10225, %v10227
        %v10360 = vsel %vm2128, %v10229, %v10231
        %v10361 = vsel %vm2128, %v10233, %v10235
        %v10362 = vsel %vm2128, %v10237, %v10239
        %v10363 = vsel %vm2128, %v10241, %v10243
        %v10364 = vsel %vm2128, %v10245, %v10247
        %v10365 = vsel %vm2128, %v10249, %v10251
        %v10366 = vsel %vm2128, %v10253, %v10255
        %v10367 = vsel %vm2128, %v10257, %v10259
        %v10368 = vsel %vm2128, %v10261, %v10263
        %v10369 = vsel %vm2128, %v10265, %v10267
        %v10370 = vsel %vm2128, %v10269, %v10271
        %v10371 = vsel %vm2128, %v10273, %v10275
        %v10564 = vmul.f32 %v329, %v10276
        %v10565 = vmul.f32 %v330, %v9895
        %v10566 = vmul.f32 %v331, %v10277
        %v10567 = vmul.f32 %v332, %v9899
        %v10568 = vmul.f32 %v333, %v10278
        %v10569 = vmul.f32 %v334, %v9903
        %v10570 = vmul.f32 %v335, %v10279
        %v10571 = vmul.f32 %v336, %v9907
        %v10572 = vmul.f32 %v337, %v10280
        %v10573 = vmul.f32 %v338, %v9911
        %v10574 = vmul.f32 %v339, %v10281
        %v10575 = vmul.f32 %v340, %v9915
        %v10576 = vmul.f32 %v341, %v10282
        %v10577 = vmul.f32 %v342, %v9919
        %v10578 = vmul.f32 %v343, %v10283
        %v10579 = vmul.f32 %v344, %v9923
        %v10580 = vmul.f32 %v345, %v10284
        %v10581 = vmul.f32 %v346, %v9927
        %v10582 = vmul.f32 %v347, %v10285
        %v10583 = vmul.f32 %v348, %v9931
        %v10584 = vmul.f32 %v349, %v10286
        %v10585 = vmul.f32 %v350, %v9935
        %v10586 = vmul.f32 %v351, %v10287
        %v10587 = vmul.f32 %v352, %v9939
        %v10588 = vmul.f32 %v353, %v10288
        %v10589 = vmul.f32 %v354, %v9943
        %v10590 = vmul.f32 %v355, %v10289
        %v10591 = vmul.f32 %v356, %v9947
        %v10592 = vmul.f32 %v357, %v10290
        %v10593 = vmul.f32 %v358, %v9951
        %v10594 = vmul.f32 %v359, %v10291
        %v10595 = vmul.f32 %v360, %v9955
        %v10596 = vmul.f32 %v361, %v10292
        %v10597 = vmul.f32 %v362, %v9959
        %v10598 = vmul.f32 %v363, %v10293
        %v10599 = vmul.f32 %v364, %v9963
        %v10600 = vmul.f32 %v365, %v10294
        %v10601 = vmul.f32 %v366, %v9967
        %v10602 = vmul.f32 %v367, %v10295
        %v10603 = vmul.f32 %v368, %v9971
        %v10604 = vmul.f32 %v369, %v10296
        %v10605 = vmul.f32 %v370, %v9975
        %v10606 = vmul.f32 %v371, %v10297
        %v10607 = vmul.f32 %v372, %v9979
        %v10608 = vmul.f32 %v373, %v10298
        %v10609 = vmul.f32 %v374, %v9983
        %v10610 = vmul.f32 %v375, %v10299
        %v10611 = vmul.f32 %v376, %v9987
        %v10612 = vmul.f32 %v377, %v10300
        %v10613 = vmul.f32 %v378, %v9991
        %v10614 = vmul.f32 %v379, %v10301
        %v10615 = vmul.f32 %v380, %v9995
        %v10616 = vmul.f32 %v381, %v10302
        %v10617 = vmul.f32 %v382, %v9999
        %v10618 = vmul.f32 %v383, %v10303
        %v10619 = vmul.f32 %v384, %v10003
        %v10620 = vmul.f32 %v385, %v10304
        %v10621 = vmul.f32 %v386, %v10007
        %v10622 = vmul.f32 %v387, %v10305
        %v10623 = vmul.f32 %v388, %v10011
        %v10624 = vmul.f32 %v389, %v10306
        %v10625 = vmul.f32 %v390, %v10015
        %v10626 = vmul.f32 %v391, %v10307
        %v10627 = vmul.f32 %v392, %v10019
        %v10628 = vmul.f32 %v393, %v10308
        %v10629 = vmul.f32 %v394, %v10023
        %v10630 = vmul.f32 %v395, %v10309
        %v10631 = vmul.f32 %v396, %v10027
        %v10632 = vmul.f32 %v397, %v10310
        %v10633 = vmul.f32 %v398, %v10031
        %v10634 = vmul.f32 %v399, %v10311
        %v10635 = vmul.f32 %v400, %v10035
        %v10636 = vmul.f32 %v401, %v10312
        %v10637 = vmul.f32 %v402, %v10039
        %v10638 = vmul.f32 %v403, %v10313
        %v10639 = vmul.f32 %v404, %v10043
        %v10640 = vmul.f32 %v405, %v10314
        %v10641 = vmul.f32 %v406, %v10047
        %v10642 = vmul.f32 %v407, %v10315
        %v10643 = vmul.f32 %v408, %v10051
        %v10644 = vmul.f32 %v409, %v10316
        %v10645 = vmul.f32 %v410, %v10055
        %v10646 = vmul.f32 %v411, %v10317
        %v10647 = vmul.f32 %v412, %v10059
        %v10648 = vmul.f32 %v413, %v10318
        %v10649 = vmul.f32 %v414, %v10063
        %v10650 = vmul.f32 %v415, %v10319
        %v10651 = vmul.f32 %v416, %v10067
        %v10652 = vmul.f32 %v417, %v10320
        %v10653 = vmul.f32 %v418, %v10071
        %v10654 = vmul.f32 %v419, %v10321
        %v10655 = vmul.f32 %v420, %v10075
        %v10656 = vmul.f32 %v421, %v10322
        %v10657 = vmul.f32 %v422, %v10079
        %v10658 = vmul.f32 %v423, %v10323
        %v10659 = vmul.f32 %v424, %v10083
        %v10660 = vmul.f32 %v425, %v10324
        %v10661 = vmul.f32 %v426, %v10087
        %v10662 = vmul.f32 %v427, %v10325
        %v10663 = vmul.f32 %v428, %v10091
        %v10664 = vmul.f32 %v429, %v10326
        %v10665 = vmul.f32 %v430, %v10095
        %v10666 = vmul.f32 %v431, %v10327
        %v10667 = vmul.f32 %v432, %v10099
        %v10668 = vmul.f32 %v433, %v10328
        %v10669 = vmul.f32 %v434, %v10103
        %v10670 = vmul.f32 %v435, %v10329
        %v10671 = vmul.f32 %v436, %v10107
        %v10672 = vmul.f32 %v437, %v10330
        %v10673 = vmul.f32 %v438, %v10111
        %v10674 = vmul.f32 %v439, %v10331
        %v10675 = vmul.f32 %v440, %v10115
        %v10676 = vmul.f32 %v441, %v10332
        %v10677 = vmul.f32 %v442, %v10119
        %v10678 = vmul.f32 %v443, %v10333
        %v10679 = vmul.f32 %v444, %v10123
        %v10680 = vmul.f32 %v445, %v10334
        %v10681 = vmul.f32 %v446, %v10127
        %v10682 = vmul.f32 %v447, %v10335
        %v10683 = vmul.f32 %v448, %v10131
        %v10684 = vmul.f32 %v449, %v10336
        %v10685 = vmul.f32 %v450, %v10135
        %v10686 = vmul.f32 %v451, %v10337
        %v10687 = vmul.f32 %v452, %v10139
        %v10688 = vmul.f32 %v453, %v10338
        %v10689 = vmul.f32 %v454, %v10143
        %v10690 = vmul.f32 %v455, %v10339
        %v10691 = vmul.f32 %v456, %v10147
        %v10692 = vmul.f32 %v457, %v10340
        %v10693 = vmul.f32 %v458, %v10151
        %v10694 = vmul.f32 %v459, %v10341
        %v10695 = vmul.f32 %v460, %v10155
        %v10696 = vmul.f32 %v461, %v10342
        %v10697 = vmul.f32 %v462, %v10159
        %v10698 = vmul.f32 %v463, %v10343
        %v10699 = vmul.f32 %v464, %v10163
        %v10700 = vmul.f32 %v465, %v10344
        %v10701 = vmul.f32 %v466, %v10167
        %v10702 = vmul.f32 %v467, %v10345
        %v10703 = vmul.f32 %v468, %v10171
        %v10704 = vmul.f32 %v469, %v10346
        %v10705 = vmul.f32 %v470, %v10175
        %v10706 = vmul.f32 %v471, %v10347
        %v10707 = vmul.f32 %v472, %v10179
        %v10708 = vmul.f32 %v473, %v10348
        %v10709 = vmul.f32 %v474, %v10183
        %v10710 = vmul.f32 %v475, %v10349
        %v10711 = vmul.f32 %v476, %v10187
        %v10712 = vmul.f32 %v477, %v10350
        %v10713 = vmul.f32 %v478, %v10191
        %v10714 = vmul.f32 %v479, %v10351
        %v10715 = vmul.f32 %v480, %v10195
        %v10716 = vmul.f32 %v481, %v10352
        %v10717 = vmul.f32 %v482, %v10199
        %v10718 = vmul.f32 %v483, %v10353
        %v10719 = vmul.f32 %v484, %v10203
        %v10720 = vmul.f32 %v485, %v10354
        %v10721 = vmul.f32 %v486, %v10207
        %v10722 = vmul.f32 %v487, %v10355
        %v10723 = vmul.f32 %v488, %v10211
        %v10724 = vmul.f32 %v489, %v10356
        %v10725 = vmul.f32 %v490, %v10215
        %v10726 = vmul.f32 %v491, %v10357
        %v10727 = vmul.f32 %v492, %v10219
        %v10728 = vmul.f32 %v493, %v10358
        %v10729 = vmul.f32 %v494, %v10223
        %v10730 = vmul.f32 %v495, %v10359
        %v10731 = vmul.f32 %v496, %v10227
        %v10732 = vmul.f32 %v497, %v10360
        %v10733 = vmul.f32 %v498, %v10231
        %v10734 = vmul.f32 %v499, %v10361
        %v10735 = vmul.f32 %v500, %v10235
        %v10736 = vmul.f32 %v501, %v10362
        %v10737 = vmul.f32 %v502, %v10239
        %v10738 = vmul.f32 %v503, %v10363
        %v10739 = vmul.f32 %v504, %v10243
        %v10740 = vmul.f32 %v505, %v10364
        %v10741 = vmul.f32 %v506, %v10247
        %v10742 = vmul.f32 %v507, %v10365
        %v10743 = vmul.f32 %v508, %v10251
        %v10744 = vmul.f32 %v509, %v10366
        %v10745 = vmul.f32 %v510, %v10255
        %v10746 = vmul.f32 %v511, %v10367
        %v10747 = vmul.f32 %v512, %v10259
        %v10748 = vmul.f32 %v513, %v10368
        %v10749 = vmul.f32 %v514, %v10263
        %v10750 = vmul.f32 %v515, %v10369
        %v10751 = vmul.f32 %v516, %v10267
        %v10752 = vmul.f32 %v517, %v10370
        %v10753 = vmul.f32 %v518, %v10271
        %v10754 = vmul.f32 %v519, %v10371
        %v10755 = vmul.f32 %v520, %v10275
        %v10756 = vsel %vm1671, %v10564, 0.0
        %v10757 = vsel %vm1671, %v10570, 0.0
        %v10758 = vadd.f32 %v10756, %v10757
        %v10759 = vsel %vm1671, %v10576, 0.0
        %v10760 = vadd.f32 %v10758, %v10759
        %v10761 = vsel %vm1671, %v10582, 0.0
        %v10762 = vadd.f32 %v10760, %v10761
        %v10763 = vsel %vm1671, %v10588, 0.0
        %v10764 = vadd.f32 %v10762, %v10763
        %v10765 = vsel %vm1671, %v10594, 0.0
        %v10766 = vadd.f32 %v10764, %v10765
        %v10767 = vsel %vm1671, %v10600, 0.0
        %v10768 = vadd.f32 %v10766, %v10767
        %v10769 = vsel %vm1671, %v10606, 0.0
        %v10770 = vadd.f32 %v10768, %v10769
        %v10771 = vsel %vm1671, %v10612, 0.0
        %v10772 = vadd.f32 %v10770, %v10771
        %v10773 = vsel %vm1671, %v10618, 0.0
        %v10774 = vadd.f32 %v10772, %v10773
        %v10775 = vsel %vm1671, %v10624, 0.0
        %v10776 = vadd.f32 %v10774, %v10775
        %v10777 = vsel %vm1671, %v10630, 0.0
        %v10778 = vadd.f32 %v10776, %v10777
        %v10779 = vsel %vm1671, %v10636, 0.0
        %v10780 = vadd.f32 %v10778, %v10779
        %v10781 = vsel %vm1671, %v10642, 0.0
        %v10782 = vadd.f32 %v10780, %v10781
        %v10783 = vsel %vm1671, %v10648, 0.0
        %v10784 = vadd.f32 %v10782, %v10783
        %v10785 = vsel %vm1671, %v10654, 0.0
        %v10786 = vadd.f32 %v10784, %v10785
        %v10787 = vsel %vm1671, %v10660, 0.0
        %v10788 = vadd.f32 %v10786, %v10787
        %v10789 = vsel %vm1671, %v10666, 0.0
        %v10790 = vadd.f32 %v10788, %v10789
        %v10791 = vsel %vm1671, %v10672, 0.0
        %v10792 = vadd.f32 %v10790, %v10791
        %v10793 = vsel %vm1671, %v10678, 0.0
        %v10794 = vadd.f32 %v10792, %v10793
        %v10795 = vsel %vm1671, %v10684, 0.0
        %v10796 = vadd.f32 %v10794, %v10795
        %v10797 = vsel %vm1671, %v10690, 0.0
        %v10798 = vadd.f32 %v10796, %v10797
        %v10799 = vsel %vm1671, %v10696, 0.0
        %v10800 = vadd.f32 %v10798, %v10799
        %v10801 = vsel %vm1671, %v10702, 0.0
        %v10802 = vadd.f32 %v10800, %v10801
        %v10803 = vsel %vm1671, %v10708, 0.0
        %v10804 = vadd.f32 %v10802, %v10803
        %v10805 = vsel %vm1671, %v10714, 0.0
        %v10806 = vadd.f32 %v10804, %v10805
        %v10807 = vsel %vm1671, %v10720, 0.0
        %v10808 = vadd.f32 %v10806, %v10807
        %v10809 = vsel %vm1671, %v10726, 0.0
        %v10810 = vadd.f32 %v10808, %v10809
        %v10811 = vsel %vm1671, %v10732, 0.0
        %v10812 = vadd.f32 %v10810, %v10811
        %v10813 = vsel %vm1671, %v10738, 0.0
        %v10814 = vadd.f32 %v10812, %v10813
        %v10815 = vsel %vm1671, %v10744, 0.0
        %v10816 = vadd.f32 %v10814, %v10815
        %v10817 = vsel %vm1671, %v10750, 0.0
        %v10818 = vadd.f32 %v10816, %v10817
        %v10819 = vsel %vm1735, %v10565, 0.0
        %v10820 = vsel %vm1735, %v10571, 0.0
        %v10821 = vadd.f32 %v10819, %v10820
        %v10822 = vsel %vm1735, %v10577, 0.0
        %v10823 = vadd.f32 %v10821, %v10822
        %v10824 = vsel %vm1735, %v10583, 0.0
        %v10825 = vadd.f32 %v10823, %v10824
        %v10826 = vsel %vm1735, %v10589, 0.0
        %v10827 = vadd.f32 %v10825, %v10826
        %v10828 = vsel %vm1735, %v10595, 0.0
        %v10829 = vadd.f32 %v10827, %v10828
        %v10830 = vsel %vm1735, %v10601, 0.0
        %v10831 = vadd.f32 %v10829, %v10830
        %v10832 = vsel %vm1735, %v10607, 0.0
        %v10833 = vadd.f32 %v10831, %v10832
        %v10834 = vsel %vm1735, %v10613, 0.0
        %v10835 = vadd.f32 %v10833, %v10834
        %v10836 = vsel %vm1735, %v10619, 0.0
        %v10837 = vadd.f32 %v10835, %v10836
        %v10838 = vsel %vm1735, %v10625, 0.0
        %v10839 = vadd.f32 %v10837, %v10838
        %v10840 = vsel %vm1735, %v10631, 0.0
        %v10841 = vadd.f32 %v10839, %v10840
        %v10842 = vsel %vm1735, %v10637, 0.0
        %v10843 = vadd.f32 %v10841, %v10842
        %v10844 = vsel %vm1735, %v10643, 0.0
        %v10845 = vadd.f32 %v10843, %v10844
        %v10846 = vsel %vm1735, %v10649, 0.0
        %v10847 = vadd.f32 %v10845, %v10846
        %v10848 = vsel %vm1735, %v10655, 0.0
        %v10849 = vadd.f32 %v10847, %v10848
        %v10850 = vsel %vm1735, %v10661, 0.0
        %v10851 = vadd.f32 %v10849, %v10850
        %v10852 = vsel %vm1735, %v10667, 0.0
        %v10853 = vadd.f32 %v10851, %v10852
        %v10854 = vsel %vm1735, %v10673, 0.0
        %v10855 = vadd.f32 %v10853, %v10854
        %v10856 = vsel %vm1735, %v10679, 0.0
        %v10857 = vadd.f32 %v10855, %v10856
        %v10858 = vsel %vm1735, %v10685, 0.0
        %v10859 = vadd.f32 %v10857, %v10858
        %v10860 = vsel %vm1735, %v10691, 0.0
        %v10861 = vadd.f32 %v10859, %v10860
        %v10862 = vsel %vm1735, %v10697, 0.0
        %v10863 = vadd.f32 %v10861, %v10862
        %v10864 = vsel %vm1735, %v10703, 0.0
        %v10865 = vadd.f32 %v10863, %v10864
        %v10866 = vsel %vm1735, %v10709, 0.0
        %v10867 = vadd.f32 %v10865, %v10866
        %v10868 = vsel %vm1735, %v10715, 0.0
        %v10869 = vadd.f32 %v10867, %v10868
        %v10870 = vsel %vm1735, %v10721, 0.0
        %v10871 = vadd.f32 %v10869, %v10870
        %v10872 = vsel %vm1735, %v10727, 0.0
        %v10873 = vadd.f32 %v10871, %v10872
        %v10874 = vsel %vm1735, %v10733, 0.0
        %v10875 = vadd.f32 %v10873, %v10874
        %v10876 = vsel %vm1735, %v10739, 0.0
        %v10877 = vadd.f32 %v10875, %v10876
        %v10878 = vsel %vm1735, %v10745, 0.0
        %v10879 = vadd.f32 %v10877, %v10878
        %v10880 = vsel %vm1735, %v10751, 0.0
        %v10881 = vadd.f32 %v10879, %v10880
        %v10882 = vsel %vm1799, %v10566, 0.0
        %v10883 = vsel %vm1799, %v10572, 0.0
        %v10884 = vadd.f32 %v10882, %v10883
        %v10885 = vsel %vm1799, %v10578, 0.0
        %v10886 = vadd.f32 %v10884, %v10885
        %v10887 = vsel %vm1799, %v10584, 0.0
        %v10888 = vadd.f32 %v10886, %v10887
        %v10889 = vsel %vm1799, %v10590, 0.0
        %v10890 = vadd.f32 %v10888, %v10889
        %v10891 = vsel %vm1799, %v10596, 0.0
        %v10892 = vadd.f32 %v10890, %v10891
        %v10893 = vsel %vm1799, %v10602, 0.0
        %v10894 = vadd.f32 %v10892, %v10893
        %v10895 = vsel %vm1799, %v10608, 0.0
        %v10896 = vadd.f32 %v10894, %v10895
        %v10897 = vsel %vm1799, %v10614, 0.0
        %v10898 = vadd.f32 %v10896, %v10897
        %v10899 = vsel %vm1799, %v10620, 0.0
        %v10900 = vadd.f32 %v10898, %v10899
        %v10901 = vsel %vm1799, %v10626, 0.0
        %v10902 = vadd.f32 %v10900, %v10901
        %v10903 = vsel %vm1799, %v10632, 0.0
        %v10904 = vadd.f32 %v10902, %v10903
        %v10905 = vsel %vm1799, %v10638, 0.0
        %v10906 = vadd.f32 %v10904, %v10905
        %v10907 = vsel %vm1799, %v10644, 0.0
        %v10908 = vadd.f32 %v10906, %v10907
        %v10909 = vsel %vm1799, %v10650, 0.0
        %v10910 = vadd.f32 %v10908, %v10909
        %v10911 = vsel %vm1799, %v10656, 0.0
        %v10912 = vadd.f32 %v10910, %v10911
        %v10913 = vsel %vm1799, %v10662, 0.0
        %v10914 = vadd.f32 %v10912, %v10913
        %v10915 = vsel %vm1799, %v10668, 0.0
        %v10916 = vadd.f32 %v10914, %v10915
        %v10917 = vsel %vm1799, %v10674, 0.0
        %v10918 = vadd.f32 %v10916, %v10917
        %v10919 = vsel %vm1799, %v10680, 0.0
        %v10920 = vadd.f32 %v10918, %v10919
        %v10921 = vsel %vm1799, %v10686, 0.0
        %v10922 = vadd.f32 %v10920, %v10921
        %v10923 = vsel %vm1799, %v10692, 0.0
        %v10924 = vadd.f32 %v10922, %v10923
        %v10925 = vsel %vm1799, %v10698, 0.0
        %v10926 = vadd.f32 %v10924, %v10925
        %v10927 = vsel %vm1799, %v10704, 0.0
        %v10928 = vadd.f32 %v10926, %v10927
        %v10929 = vsel %vm1799, %v10710, 0.0
        %v10930 = vadd.f32 %v10928, %v10929
        %v10931 = vsel %vm1799, %v10716, 0.0
        %v10932 = vadd.f32 %v10930, %v10931
        %v10933 = vsel %vm1799, %v10722, 0.0
        %v10934 = vadd.f32 %v10932, %v10933
        %v10935 = vsel %vm1799, %v10728, 0.0
        %v10936 = vadd.f32 %v10934, %v10935
        %v10937 = vsel %vm1799, %v10734, 0.0
        %v10938 = vadd.f32 %v10936, %v10937
        %v10939 = vsel %vm1799, %v10740, 0.0
        %v10940 = vadd.f32 %v10938, %v10939
        %v10941 = vsel %vm1799, %v10746, 0.0
        %v10942 = vadd.f32 %v10940, %v10941
        %v10943 = vsel %vm1799, %v10752, 0.0
        %v10944 = vadd.f32 %v10942, %v10943
        %v10945 = vsel %vm1863, %v10567, 0.0
        %v10946 = vsel %vm1863, %v10573, 0.0
        %v10947 = vadd.f32 %v10945, %v10946
        %v10948 = vsel %vm1863, %v10579, 0.0
        %v10949 = vadd.f32 %v10947, %v10948
        %v10950 = vsel %vm1863, %v10585, 0.0
        %v10951 = vadd.f32 %v10949, %v10950
        %v10952 = vsel %vm1863, %v10591, 0.0
        %v10953 = vadd.f32 %v10951, %v10952
        %v10954 = vsel %vm1863, %v10597, 0.0
        %v10955 = vadd.f32 %v10953, %v10954
        %v10956 = vsel %vm1863, %v10603, 0.0
        %v10957 = vadd.f32 %v10955, %v10956
        %v10958 = vsel %vm1863, %v10609, 0.0
        %v10959 = vadd.f32 %v10957, %v10958
        %v10960 = vsel %vm1863, %v10615, 0.0
        %v10961 = vadd.f32 %v10959, %v10960
        %v10962 = vsel %vm1863, %v10621, 0.0
        %v10963 = vadd.f32 %v10961, %v10962
        %v10964 = vsel %vm1863, %v10627, 0.0
        %v10965 = vadd.f32 %v10963, %v10964
        %v10966 = vsel %vm1863, %v10633, 0.0
        %v10967 = vadd.f32 %v10965, %v10966
        %v10968 = vsel %vm1863, %v10639, 0.0
        %v10969 = vadd.f32 %v10967, %v10968
        %v10970 = vsel %vm1863, %v10645, 0.0
        %v10971 = vadd.f32 %v10969, %v10970
        %v10972 = vsel %vm1863, %v10651, 0.0
        %v10973 = vadd.f32 %v10971, %v10972
        %v10974 = vsel %vm1863, %v10657, 0.0
        %v10975 = vadd.f32 %v10973, %v10974
        %v10976 = vsel %vm1863, %v10663, 0.0
        %v10977 = vadd.f32 %v10975, %v10976
        %v10978 = vsel %vm1863, %v10669, 0.0
        %v10979 = vadd.f32 %v10977, %v10978
        %v10980 = vsel %vm1863, %v10675, 0.0
        %v10981 = vadd.f32 %v10979, %v10980
        %v10982 = vsel %vm1863, %v10681, 0.0
        %v10983 = vadd.f32 %v10981, %v10982
        %v10984 = vsel %vm1863, %v10687, 0.0
        %v10985 = vadd.f32 %v10983, %v10984
        %v10986 = vsel %vm1863, %v10693, 0.0
        %v10987 = vadd.f32 %v10985, %v10986
        %v10988 = vsel %vm1863, %v10699, 0.0
        %v10989 = vadd.f32 %v10987, %v10988
        %v10990 = vsel %vm1863, %v10705, 0.0
        %v10991 = vadd.f32 %v10989, %v10990
        %v10992 = vsel %vm1863, %v10711, 0.0
        %v10993 = vadd.f32 %v10991, %v10992
        %v10994 = vsel %vm1863, %v10717, 0.0
        %v10995 = vadd.f32 %v10993, %v10994
        %v10996 = vsel %vm1863, %v10723, 0.0
        %v10997 = vadd.f32 %v10995, %v10996
        %v10998 = vsel %vm1863, %v10729, 0.0
        %v10999 = vadd.f32 %v10997, %v10998
        %v11000 = vsel %vm1863, %v10735, 0.0
        %v11001 = vadd.f32 %v10999, %v11000
        %v11002 = vsel %vm1863, %v10741, 0.0
        %v11003 = vadd.f32 %v11001, %v11002
        %v11004 = vsel %vm1863, %v10747, 0.0
        %v11005 = vadd.f32 %v11003, %v11004
        %v11006 = vsel %vm1863, %v10753, 0.0
        %v11007 = vadd.f32 %v11005, %v11006
        %v11008 = vsel %vm1927, %v10568, 0.0
        %v11009 = vsel %vm1927, %v10574, 0.0
        %v11010 = vadd.f32 %v11008, %v11009
        %v11011 = vsel %vm1927, %v10580, 0.0
        %v11012 = vadd.f32 %v11010, %v11011
        %v11013 = vsel %vm1927, %v10586, 0.0
        %v11014 = vadd.f32 %v11012, %v11013
        %v11015 = vsel %vm1927, %v10592, 0.0
        %v11016 = vadd.f32 %v11014, %v11015
        %v11017 = vsel %vm1927, %v10598, 0.0
        %v11018 = vadd.f32 %v11016, %v11017
        %v11019 = vsel %vm1927, %v10604, 0.0
        %v11020 = vadd.f32 %v11018, %v11019
        %v11021 = vsel %vm1927, %v10610, 0.0
        %v11022 = vadd.f32 %v11020, %v11021
        %v11023 = vsel %vm1927, %v10616, 0.0
        %v11024 = vadd.f32 %v11022, %v11023
        %v11025 = vsel %vm1927, %v10622, 0.0
        %v11026 = vadd.f32 %v11024, %v11025
        %v11027 = vsel %vm1927, %v10628, 0.0
        %v11028 = vadd.f32 %v11026, %v11027
        %v11029 = vsel %vm1927, %v10634, 0.0
        %v11030 = vadd.f32 %v11028, %v11029
        %v11031 = vsel %vm1927, %v10640, 0.0
        %v11032 = vadd.f32 %v11030, %v11031
        %v11033 = vsel %vm1927, %v10646, 0.0
        %v11034 = vadd.f32 %v11032, %v11033
        %v11035 = vsel %vm1927, %v10652, 0.0
        %v11036 = vadd.f32 %v11034, %v11035
        %v11037 = vsel %vm1927, %v10658, 0.0
        %v11038 = vadd.f32 %v11036, %v11037
        %v11039 = vsel %vm1927, %v10664, 0.0
        %v11040 = vadd.f32 %v11038, %v11039
        %v11041 = vsel %vm1927, %v10670, 0.0
        %v11042 = vadd.f32 %v11040, %v11041
        %v11043 = vsel %vm1927, %v10676, 0.0
        %v11044 = vadd.f32 %v11042, %v11043
        %v11045 = vsel %vm1927, %v10682, 0.0
        %v11046 = vadd.f32 %v11044, %v11045
        %v11047 = vsel %vm1927, %v10688, 0.0
        %v11048 = vadd.f32 %v11046, %v11047
        %v11049 = vsel %vm1927, %v10694, 0.0
        %v11050 = vadd.f32 %v11048, %v11049
        %v11051 = vsel %vm1927, %v10700, 0.0
        %v11052 = vadd.f32 %v11050, %v11051
        %v11053 = vsel %vm1927, %v10706, 0.0
        %v11054 = vadd.f32 %v11052, %v11053
        %v11055 = vsel %vm1927, %v10712, 0.0
        %v11056 = vadd.f32 %v11054, %v11055
        %v11057 = vsel %vm1927, %v10718, 0.0
        %v11058 = vadd.f32 %v11056, %v11057
        %v11059 = vsel %vm1927, %v10724, 0.0
        %v11060 = vadd.f32 %v11058, %v11059
        %v11061 = vsel %vm1927, %v10730, 0.0
        %v11062 = vadd.f32 %v11060, %v11061
        %v11063 = vsel %vm1927, %v10736, 0.0
        %v11064 = vadd.f32 %v11062, %v11063
        %v11065 = vsel %vm1927, %v10742, 0.0
        %v11066 = vadd.f32 %v11064, %v11065
        %v11067 = vsel %vm1927, %v10748, 0.0
        %v11068 = vadd.f32 %v11066, %v11067
        %v11069 = vsel %vm1927, %v10754, 0.0
        %v11070 = vadd.f32 %v11068, %v11069
        %v11071 = vsel %vm1991, %v10569, 0.0
        %v11072 = vsel %vm1991, %v10575, 0.0
        %v11073 = vadd.f32 %v11071, %v11072
        %v11074 = vsel %vm1991, %v10581, 0.0
        %v11075 = vadd.f32 %v11073, %v11074
        %v11076 = vsel %vm1991, %v10587, 0.0
        %v11077 = vadd.f32 %v11075, %v11076
        %v11078 = vsel %vm1991, %v10593, 0.0
        %v11079 = vadd.f32 %v11077, %v11078
        %v11080 = vsel %vm1991, %v10599, 0.0
        %v11081 = vadd.f32 %v11079, %v11080
        %v11082 = vsel %vm1991, %v10605, 0.0
        %v11083 = vadd.f32 %v11081, %v11082
        %v11084 = vsel %vm1991, %v10611, 0.0
        %v11085 = vadd.f32 %v11083, %v11084
        %v11086 = vsel %vm1991, %v10617, 0.0
        %v11087 = vadd.f32 %v11085, %v11086
        %v11088 = vsel %vm1991, %v10623, 0.0
        %v11089 = vadd.f32 %v11087, %v11088
        %v11090 = vsel %vm1991, %v10629, 0.0
        %v11091 = vadd.f32 %v11089, %v11090
        %v11092 = vsel %vm1991, %v10635, 0.0
        %v11093 = vadd.f32 %v11091, %v11092
        %v11094 = vsel %vm1991, %v10641, 0.0
        %v11095 = vadd.f32 %v11093, %v11094
        %v11096 = vsel %vm1991, %v10647, 0.0
        %v11097 = vadd.f32 %v11095, %v11096
        %v11098 = vsel %vm1991, %v10653, 0.0
        %v11099 = vadd.f32 %v11097, %v11098
        %v11100 = vsel %vm1991, %v10659, 0.0
        %v11101 = vadd.f32 %v11099, %v11100
        %v11102 = vsel %vm1991, %v10665, 0.0
        %v11103 = vadd.f32 %v11101, %v11102
        %v11104 = vsel %vm1991, %v10671, 0.0
        %v11105 = vadd.f32 %v11103, %v11104
        %v11106 = vsel %vm1991, %v10677, 0.0
        %v11107 = vadd.f32 %v11105, %v11106
        %v11108 = vsel %vm1991, %v10683, 0.0
        %v11109 = vadd.f32 %v11107, %v11108
        %v11110 = vsel %vm1991, %v10689, 0.0
        %v11111 = vadd.f32 %v11109, %v11110
        %v11112 = vsel %vm1991, %v10695, 0.0
        %v11113 = vadd.f32 %v11111, %v11112
        %v11114 = vsel %vm1991, %v10701, 0.0
        %v11115 = vadd.f32 %v11113, %v11114
        %v11116 = vsel %vm1991, %v10707, 0.0
        %v11117 = vadd.f32 %v11115, %v11116
        %v11118 = vsel %vm1991, %v10713, 0.0
        %v11119 = vadd.f32 %v11117, %v11118
        %v11120 = vsel %vm1991, %v10719, 0.0
        %v11121 = vadd.f32 %v11119, %v11120
        %v11122 = vsel %vm1991, %v10725, 0.0
        %v11123 = vadd.f32 %v11121, %v11122
        %v11124 = vsel %vm1991, %v10731, 0.0
        %v11125 = vadd.f32 %v11123, %v11124
        %v11126 = vsel %vm1991, %v10737, 0.0
        %v11127 = vadd.f32 %v11125, %v11126
        %v11128 = vsel %vm1991, %v10743, 0.0
        %v11129 = vadd.f32 %v11127, %v11128
        %v11130 = vsel %vm1991, %v10749, 0.0
        %v11131 = vadd.f32 %v11129, %v11130
        %v11132 = vsel %vm1991, %v10755, 0.0
        %v11133 = vadd.f32 %v11131, %v11132
        %11134 = vrot.lane.b32.xlu0 %v4195, 127
        %v11135 = vpop.permute.xlu0 %11134
        %11136 = vrot.lane.b32.xlu0 %v6875, 127
        %v11137 = vpop.permute.xlu0 %11136
        %11138 = vrot.lane.b32.xlu0 %v4197, 127
        %v11139 = vpop.permute.xlu0 %11138
        %11140 = vrot.lane.b32.xlu0 %v6877, 127
        %v11141 = vpop.permute.xlu0 %11140
        %11142 = vrot.lane.b32.xlu0 %v4196, 127
        %v11143 = vpop.permute.xlu0 %11142
        %11144 = vrot.lane.b32.xlu0 %v6876, 127
        %v11145 = vpop.permute.xlu0 %11144
        %v11146 = vsel %vm2128, %v11135, %v11137
        %v11147 = vsel %vm2128, %v11139, %v11141
        %v11148 = vsel %vm2128, %v11143, %v11145
        %v11155 = vmul.f32 %v2055, %v11146
        %v11156 = vmul.f32 %v2056, %v11137
        %v11157 = vmul.f32 %v2057, %v11147
        %v11158 = vmul.f32 %v2058, %v11141
        %v11159 = vmul.f32 %v2059, %v11148
        %v11160 = vmul.f32 %v2060, %v11145
        %v11161 = vrsqrt.pop %v11155
        %v11162 = vrsqrt.pop %v11156
        %v11163 = vrsqrt.pop %v11157
        %v11164 = vrsqrt.pop %v11158
        %v11165 = vrsqrt.pop %v11159
        %v11166 = vrsqrt.pop %v11160
        %v11167 = vmul.f32 %v10818, %v11161
        %v11168 = vmul.f32 %v10881, %v11162
        %v11169 = vmul.f32 %v10944, %v11163
        %v11170 = vmul.f32 %v11007, %v11164
        %v11171 = vmul.f32 %v11070, %v11165
        %v11172 = vmul.f32 %v11133, %v11166
        %11173 = vrot.lane.b32.xlu0 %v4225, 2
        %v11174 = vpop.permute.xlu0 %11173
        %11175 = vrot.lane.b32.xlu0 %v4227, 2
        %v11176 = vpop.permute.xlu0 %11175
        %11177 = vrot.lane.b32.xlu0 %v4226, 2
        %v11178 = vpop.permute.xlu0 %11177
        %vm11179 = vcmp.eq.s32.totalorder %v209, %v11174
        %vm11180 = vcmp.eq.s32.totalorder %v210, %v11174
        %vm11181 = vcmp.eq.s32.totalorder %v211, %v11176
        %vm11182 = vcmp.eq.s32.totalorder %v212, %v11176
        %vm11183 = vcmp.eq.s32.totalorder %v213, %v11178
        %vm11184 = vcmp.eq.s32.totalorder %v214, %v11178
        %11185 = vrot.lane.b32.xlu0 %v4231, 2
        %v11186 = vpop.permute.xlu0 %11185
        %11187 = vrot.lane.b32.xlu0 %v4233, 2
        %v11188 = vpop.permute.xlu0 %11187
        %11189 = vrot.lane.b32.xlu0 %v4232, 2
        %v11190 = vpop.permute.xlu0 %11189
        %vm11191 = vcmp.ne.s32.totalorder %v11186, 0
        %vm11192 = vcmp.ne.s32.totalorder %v11188, 0
        %vm11193 = vcmp.ne.s32.totalorder %v11190, 0
        %vm11194 = vmand %vm11179, %vm11191
        %vm11195 = vmand %vm11180, %vm11191
        %vm11196 = vmand %vm11181, %vm11192
        %vm11197 = vmand %vm11182, %vm11192
        %vm11198 = vmand %vm11183, %vm11193
        %vm11199 = vmand %vm11184, %vm11193
        %v11200 = vadd.f32 %v9763, %v11167
        %v11201 = vadd.f32 %v9764, %v11168
        %v11202 = vadd.f32 %v9765, %v11169
        %v11203 = vadd.f32 %v9766, %v11170
        %v11204 = vadd.f32 %v9767, %v11171
        %v11205 = vadd.f32 %v9768, %v11172
        %v11212 = vrot.slane %v11167, 7
        %v11213 = vrot.slane %v11168, 7
        %v11214 = vrot.slane %v11169, 7
        %v11215 = vsel %vm1094, %v11212, %v11214
        %v11216 = vrot.slane %v11170, 7
        %v11217 = vsel %vm1094, %v11213, %v11216
        %v11218 = vrot.slane %v11171, 7
        %v11219 = vsel %vm1094, %v11214, %v11218
        %v11220 = vrot.slane %v11172, 7
        %v11221 = vsel %vm1094, %v11216, %v11220
        %11222 = vrot.lane.b32.xlu0 %v11212, 1
        %v11223 = vpop.permute.xlu0 %11222
        %11224 = vrot.lane.b32.xlu0 %v11213, 1
        %v11225 = vpop.permute.xlu0 %11224
        %11226 = vrot.lane.b32.xlu0 %v11215, 1
        %v11227 = vpop.permute.xlu0 %11226
        %11228 = vrot.lane.b32.xlu0 %v11217, 1
        %v11229 = vpop.permute.xlu0 %11228
        %11230 = vrot.lane.b32.xlu0 %v11219, 1
        %v11231 = vpop.permute.xlu0 %11230
        %11232 = vrot.lane.b32.xlu0 %v11221, 1
        %v11233 = vpop.permute.xlu0 %11232
        %v11234 = vsel %vm1863, %v11223, %v11225
        %v11235 = vsel %vm1863, %v11227, %v11229
        %v11236 = vsel %vm1863, %v11231, %v11233
        %v11243 = vsel %vm11194, %v11223, 0.0
        %v11244 = vsel %vm11195, %v11234, 0.0
        %v11245 = vsel %vm11196, %v11227, 0.0
        %v11246 = vsel %vm11197, %v11235, 0.0
        %v11247 = vsel %vm11198, %v11231, 0.0
        %v11248 = vsel %vm11199, %v11236, 0.0
        %v11255 = vrot.slane %v11243, 2
        %v11256 = vrot.slane %v11245, 2
        %v11257 = vsel %vm4286, %v11255, %v11256
        %v11258 = vrot.slane %v11244, 2
        %v11259 = vrot.slane %v11246, 2
        %v11260 = vsel %vm4286, %v11258, %v11259
        %v11261 = vrot.slane %v11247, 2
        %v11262 = vsel %vm4286, %v11256, %v11261
        %v11263 = vrot.slane %v11248, 2
        %v11264 = vsel %vm4286, %v11259, %v11263
        %11265 = vrot.lane.b32.xlu0 %v11257, 126
        %v11266 = vpop.permute.xlu0 %11265
        %11267 = vrot.lane.b32.xlu0 %v11260, 126
        %v11268 = vpop.permute.xlu0 %11267
        %11269 = vrot.lane.b32.xlu0 %v11262, 126
        %v11270 = vpop.permute.xlu0 %11269
        %11271 = vrot.lane.b32.xlu0 %v11264, 126
        %v11272 = vpop.permute.xlu0 %11271
        %v11273 = vsel %vm8404, %v11266, %v11268
        %v11274 = vsel %vm8404, %v11270, %v11272
        %v11277 = vadd.f32 %v11273, %v11274
        %11278 = vadd.xlane.f32.xlu0 %v11277
        %v11279 = vpop.xlane.xlu0 %11278
        %v11280 = vrot.slane %v11279, 4
        %v11281 = vadd.f32 %v11279, %v11280
        %v11282 = vrot.slane %v11281, 2
        %v11283 = vadd.f32 %v11281, %v11282
        %v11284 = vrot.slane %v11283, 1
        %v11285 = vadd.f32 %v11283, %v11284
        %s11286 = vtos %v11285
        %s11287 = sadd.f32 %s9840, %s11286
        %v11288 = vsel %vm11194, 1, 0
        %v11289 = vsel %vm11195, 1, 0
        %v11290 = vsel %vm11196, 1, 0
        %v11291 = vsel %vm11197, 1, 0
        %v11292 = vsel %vm11198, 1, 0
        %v11293 = vsel %vm11199, 1, 0
        %v11294 = vcvt.s32.f32 %v11288
        %v11295 = vcvt.s32.f32 %v11289
        %v11296 = vcvt.s32.f32 %v11290
        %v11297 = vcvt.s32.f32 %v11291
        %v11298 = vcvt.s32.f32 %v11292
        %v11299 = vcvt.s32.f32 %v11293
        %v11306 = vrot.slane %v11294, 2
        %v11307 = vrot.slane %v11296, 2
        %v11308 = vsel %vm4286, %v11306, %v11307
        %v11309 = vrot.slane %v11295, 2
        %v11310 = vrot.slane %v11297, 2
        %v11311 = vsel %vm4286, %v11309, %v11310
        %v11312 = vrot.slane %v11298, 2
        %v11313 = vsel %vm4286, %v11307, %v11312
        %v11314 = vrot.slane %v11299, 2
        %v11315 = vsel %vm4286, %v11310, %v11314
        %11316 = vrot.lane.b32.xlu0 %v11308, 126
        %v11317 = vpop.permute.xlu0 %11316
        %11318 = vrot.lane.b32.xlu0 %v11311, 126
        %v11319 = vpop.permute.xlu0 %11318
        %11320 = vrot.lane.b32.xlu0 %v11313, 126
        %v11321 = vpop.permute.xlu0 %11320
        %11322 = vrot.lane.b32.xlu0 %v11315, 126
        %v11323 = vpop.permute.xlu0 %11322
        %v11324 = vsel %vm8404, %v11317, %v11319
        %v11325 = vsel %vm8404, %v11321, %v11323
        %v11328 = vadd.f32 %v11324, %v11325
        %11329 = vadd.xlane.f32.xlu0 %v11328
        %v11330 = vpop.xlane.xlu0 %11329
        %v11331 = vrot.slane %v11330, 4
        %v11332 = vadd.f32 %v11330, %v11331
        %v11333 = vrot.slane %v11332, 2
        %v11334 = vadd.f32 %v11332, %v11333
        %v11335 = vrot.slane %v11334, 1
        %v11336 = vadd.f32 %v11334, %v11335
        %s11337 = vtos %v11336
        %s11338 = sadd.f32 %s9891, %s11337
        %v11345 = vrot.slane %v11200, 1
        %v11346 = vrot.slane %v11202, 1
        %v11347 = vsel %vm2109, %v11345, %v11346
        %v11348 = vrot.slane %v11201, 1
        %v11349 = vrot.slane %v11203, 1
        %v11350 = vsel %vm2109, %v11348, %v11349
        %v11351 = vrot.slane %v11204, 1
        %v11352 = vsel %vm2109, %v11346, %v11351
        %v11353 = vrot.slane %v11205, 1
        %v11354 = vsel %vm2109, %v11349, %v11353
        %11355 = vrot.lane.b32.xlu0 %v11347, 127
        %v11356 = vpop.permute.xlu0 %11355
        %11357 = vrot.lane.b32.xlu0 %v11350, 127
        %v11358 = vpop.permute.xlu0 %11357
        %11359 = vrot.lane.b32.xlu0 %v11352, 127
        %v11360 = vpop.permute.xlu0 %11359
        %11361 = vrot.lane.b32.xlu0 %v11354, 127
        %v11362 = vpop.permute.xlu0 %11361
        %v11363 = vsel %vm2128, %v11356, %v11358
        %v11364 = vsel %vm2128, %v11360, %v11362
        %v11367 = vsel %vm217, %v11363, 0.0
        %v11368 = vsel %vm218, %v11364, 0.0
        %v11369 = vadd.f32 %v11367, %v11368
        %11370 = vadd.xlane.f32.xlu0 %v11369
        %v11371 = vpop.xlane.xlu0 %11370
        %v11372 = vrot.slane %v11371, 4
        %v11373 = vadd.f32 %v11371, %v11372
        %v11374 = vrot.slane %v11373, 2
        %v11375 = vadd.f32 %v11373, %v11374
        %v11376 = vrot.slane %v11375, 1
        %v11377 = vadd.f32 %v11375, %v11376
        %s11378 = vtos %v11377
        %s11379 = ssub.f32 %s11378, %s11287
        %s11380 = smul.f32 %s232, 9.0
        %s11381 = ssub.f32 %s11380, %s11338
        %v11382 = vlaneseq
        %v11383 = vand.u32 %v11382, 127
        %vm11384 = vcmp.eq.s32.totalorder %v11383, 0
        %v11385 = vstv %s11287
        %v11386 = vsel %vm11384, %v11385, 0.0
        %vm11387 = vcmp.eq.s32.totalorder %v11383, 1
        %v11388 = vstv %s11338
        %v11389 = vsel %vm11387, %v11388, 0.0
        %v11390 = vadd.f32 %v11386, %v11389
        %vm11391 = vcmp.eq.s32.totalorder %v11383, 2
        %v11392 = vstv %s11379
        %v11393 = vsel %vm11391, %v11392, 0.0
        %v11394 = vadd.f32 %v11390, %v11393
        %vm11395 = vcmp.eq.s32.totalorder %v11383, 3
        %v11396 = vstv %s11381
        %v11397 = vsel %vm11395, %v11396, 0.0
        %v11398 = vadd.f32 %v11394, %v11397
        %11399 = vst [vmem:[%s193] sm:$0xff] %v11398
        %s11400 = sand.u32 %s103, 1
        %s11401 = scalar_lea.sflag [#allocation3], %s11400
        %s11402 = sand.u32 %s103, 1
        %s11403 = smul.addr %s11402, 8
        %s11404 = scalar_lea.vmem [#allocation2], %s11403
        // Predicated region
        $region33: #{tpu_custom_call.1} parent=31 // pred_check
          %p11405 = pneg %p113
        $region34: #{tpu_custom_call.1} parent=31 // pred_check_branch
          %11407 = sbr.rel (%p11405) target = $region36
        $region35: #{tpu_custom_call.1} parent=31 // pred_region
          %s11409 = ssub.s32 128, 128
          %11410 = vsyncadd %s11401, %s11409
          %s11411 = smul.addr %s17, 128
          %s11412 = scalar_lea.hbm %s3, %s11411
          %s11414 = sshll.u32 %s11404, 4
          %s11415 = int_to_ptr.vmem [resolvable:$true] %s11414
          %11417 = dma.vmem_to_hbm [thread:$0]  %s11415, 128, %s11412, %s11401
        $region36: #{tpu_custom_call.1} parent=31 // pred_fallthru
          _
      $region32: #{tpu_custom_call.1} parent=5 // pred_fallthru
        _
      %p11418 = scmp.le.s32.totalorder 2, %s12
      // Predicated region
      $region37: #{tpu_custom_call.1} parent=5 // pred_check
        %p11419 = pneg %p11418
      $region38: #{tpu_custom_call.1} parent=5 // pred_check_branch
        %11421 = sbr.rel (%p11419) target = $region40
      $region39: #{tpu_custom_call.1} parent=5 // pred_region
        %s11422 = ssub.s32 %s12, 2
        // Predicated region
        $region41: #{tpu_custom_call.1} parent=39 // pred_check
          %p11423 = pneg %p119
        $region42: #{tpu_custom_call.1} parent=39 // pred_check_branch
          %11425 = sbr.rel (%p11423) target = $region44
        $region43: #{tpu_custom_call.1} parent=39 // pred_region
          %s11426 = sand.u32 %s104, 1
          %s11427 = scalar_lea.sflag [#allocation3], %s11426
          %s11428 = sand.u32 %s104, 1
          %s11429 = smul.addr %s11428, 8
          %s11430 = scalar_lea.vmem [#allocation2], %s11429
          %11431 = dma.done %s11427, 128
        $region44: #{tpu_custom_call.1} parent=39 // pred_fallthru
          _
      $region40: #{tpu_custom_call.1} parent=5 // pred_fallthru
        _
    $region6: #{tpu_custom_call.1} parent=1 // loop_footer
      %s16 = sadd.s32 1, %s12
    $region7: #{tpu_custom_call.1} parent=1 // loop_footer_branch
      %11 = sbr.rel target = $region3
    $region8: #{tpu_custom_call.1} parent=1 // loop_exit
      _
    %11432 = vsyncpa [#allocation3], 1
    %s11433 = scalar_lea.sflag [#allocation3], 1
    %11434 = vsyncpa %s11433, 1

</llo_original>
